<compile_context>
chip_gen: v7x
topology: tpu7x:2x2x1
jax: 0.10.0
libtpu: 0.0.40
codegen_flags: <defaults>
</compile_context>

<pallas_src>
import functools
import math

import numpy as np
import jax
import jax.numpy as jnp
from jax.experimental import pallas as pl
from jax.experimental.pallas import tpu as pltpu

EPS = 1e-5      # NewBatchNorm1D eps (and nn.BatchNorm1d eps)
MOM = 0.9       # NewBatchNorm1D momentum


# ----------------------------------------------------------------------------
# Device / chunk sizing helpers.
# ----------------------------------------------------------------------------
def _vmem_capacity_bytes():
    try:
        return int(pltpu.get_tpu_info().vmem_capacity_bytes)
    except Exception:
        return 128 * 1024 * 1024


def _scoped_vmem_bytes():
    # Leave headroom: half the physical VMEM, capped at 64 MiB, floored at the
    # 32 MiB default (v7x has only 64 MiB physical per TensorCore).
    cap = _vmem_capacity_bytes()
    return min(max(cap // 2, 32 * 1024 * 1024), 64 * 1024 * 1024)


def _choose_chunk(T, B, in_feat, H, num_layers, target=8):
    """Time-chunk size: amortize per-grid-step overhead (~0.35us) over `target`
    timesteps, respect the per-chip VMEM budget, and keep the 2-D x-chunk's
    sublane dim 8-aligned when there is more than one chunk."""
    tc = min(T, target)
    budget = max(_vmem_capacity_bytes() // 4, 1 << 20)

    def chunk_bytes(tc_):
        xb = 2 * tc_ * B * max(in_feat, H) * 4        # x chunk (double buffered)
        ob = 2 * tc_ * B * H * 4                      # out chunk (double buffered)
        sb = tc_ * B * H * 4 + 2 * num_layers * B * H * 4   # scratch
        return xb + ob + sb

    while tc > 1 and chunk_bytes(tc) > budget:
        tc = max(1, tc // 2)

    t_pad = -(-T // tc) * tc
    if t_pad // tc > 1 and (tc * B) % 8:
        # BlockSpec rule: second-minor dim of the 2-D x/out chunks must be a
        # multiple of 8 (or the full extent) once there are multiple chunks.
        tc *= 8 // math.gcd(tc * B, 8)
        t_pad = -(-T // tc) * tc
    return tc, t_pad


# ----------------------------------------------------------------------------
# The single fused kernel: per time-chunk, for every layer, one bulk MXU
# matmul for the input projection, then the statically unrolled serial
# recurrence (hidden projection + BNs + gates + cell update).
# ----------------------------------------------------------------------------
def _fused_lstm_kernel(*refs, num_layers, Tc, B, H, T_real, T_pad):
    L = num_layers
    n_in = 3 + 7 * L
    x_ref, h0_ref, c0_ref = refs[0], refs[1], refs[2]
    layer_refs = [refs[3 + 7 * l: 3 + 7 * (l + 1)] for l in range(L)]
    out_ref, hn_ref, cn_ref = refs[n_in], refs[n_in + 1], refs[n_in + 2]
    scr = refs[n_in + 3:]
    h_carr, c_carr = scr[:L], scr[L:2 * L]
    inter_scr = scr[2 * L]                       # (Tc*B, H) inter-layer buffer

    c_idx = pl.program_id(0)
    is_last_chunk = c_idx == pl.num_programs(0) - 1
    inv_bm1 = 1.0 / (B - 1)
    H4 = 4 * H

    @pl.when(c_idx == 0)
    def _init():
        # Every layer's recurrence restarts from the SAME initial (h0, c0),
        # exactly as in the reference module's forward.
        for l in range(L):
            h_carr[l][...] = h0_ref[...].astype(jnp.float32)
            c_carr[l][...] = c0_ref[...].astype(jnp.float32)

    for l in range(L):
        (wi_ref, wh_ref, b_ref, wbni_ref, wbnh_ref,
         wbnc_ref, bbnc_ref) = layer_refs[l]
        last_layer = l == L - 1

        xin = x_ref[...] if l == 0 else inter_scr[...]     # (Tc*B, in_sz) f32

        # One bulk MXU matmul per layer-chunk (bf16 operands, f32 accumulate).
        wx = jnp.dot(xin.astype(jnp.bfloat16),
                     wi_ref[...].astype(jnp.bfloat16),
                     preferred_element_type=jnp.float32)   # (Tc*B, 4H)

        # Hoisted loads / broadcasts (not re-materialized per timestep).
        wh_w = wh_ref[...].astype(jnp.bfloat16)             # (H, 4H)
        bias_b = jnp.broadcast_to(b_ref[...].astype(jnp.float32), (B, H4))
        wbni = wbni_ref[...].astype(jnp.float32)             # (1, 4H)
        wbnh = wbnh_ref[...].astype(jnp.float32)             # (1, 4H)
        wbnc = wbnc_ref[...].astype(jnp.float32)             # (1, H)
        bbnc = bbnc_ref[...].astype(jnp.float32)             # (1, H)

        h_prev = h_carr[l][...]
        c_prev = c_carr[l][...]

        # Statically unrolled recurrence over the chunk (indices are Python
        # ints -> fully static slices/stores).  For much larger Tc*B*H switch
        # to a partially-unrolled lax.fori_loop to bound vreg pressure.
        for t in range(Tc):
            # ---- input-projection BN (depends only on x, not the recurrence)
            wx_t = wx[t * B:(t + 1) * B, :]                  # (B, 4H)
            mx = jnp.mean(wx_t, axis=0, keepdims=True)
            vx = jnp.sum((wx_t - mx) ** 2, axis=0, keepdims=True) * inv_bm1
            sx = wbni * pl.reciprocal(MOM * vx + (1.0 - MOM) + EPS)
            wx_bn = (wx_t - MOM * mx) * sx

            # ---- hidden projection: the only matmul left on the serial path
            wh = jnp.dot(h_prev.astype(jnp.bfloat16), wh_w,
                         preferred_element_type=jnp.float32)  # (B, 4H)
            mh = jnp.mean(wh, axis=0, keepdims=True)
            vh = jnp.sum((wh - mh) ** 2, axis=0, keepdims=True) * inv_bm1
            sh = wbnh * pl.reciprocal(MOM * vh + (1.0 - MOM) + EPS)
            wh_bn = (wh - MOM * mh) * sh

            # ---- gates / cell update
            gates = wh_bn + wx_bn + bias_b                    # (B, 4H)
            sg = jax.nn.sigmoid(gates[:, :3 * H])  # g quarter needs no sigmoid
            f = sg[:, 0:H]
            i = sg[:, H:2 * H]
            o = sg[:, 2 * H:3 * H]
            g = jnp.tanh(gates[:, 3 * H:])

            c1 = f * c_prev + i * g
            mc = jnp.mean(c1, axis=0, keepdims=True)
            vc = jnp.sum((c1 - mc) ** 2, axis=0, keepdims=True) * inv_bm1
            sc = wbnc * pl.reciprocal(MOM * vc + (1.0 - MOM) + EPS)
            bnc = (c1 - MOM * mc) * sc + bbnc
            h1 = o * jnp.tanh(bnc)

            # ---- write timestep output (padded rows are sliced off on host)
            if last_layer:
                out_ref[t] = h1.astype(out_ref.dtype)
            else:
                inter_scr[t * B:(t + 1) * B, :] = h1.astype(inter_scr.dtype)

            # ---- carry update (masked only when T was padded)
            if T_pad != T_real:
                valid = (c_idx * Tc + t) < T_real
                h_prev = jnp.where(valid, h1, h_prev)
                c_prev = jnp.where(valid, c1, c_prev)
            else:
                h_prev, c_prev = h1, c1

        h_carr[l][...] = h_prev
        c_carr[l][...] = c_prev

        if last_layer:
            @pl.when(is_last_chunk)
            def _finalize(h_fin=h_prev, c_fin=c_prev):
                # NOTE: hn/cn use constant-index out BlockSpecs and are only
                # written at the last grid step; the resident output block is
                # flushed to HBM after the final step, so this is correct.
                cn_ref[...] = c_fin.astype(cn_ref.dtype)
                # Fused nn.BatchNorm1d (training stats, biased var, gamma=1,
                # beta=0) + tanh on h_n: no extra kernel launch / HBM trip.
                m = jnp.mean(h_fin, axis=0, keepdims=True)
                v = jnp.mean((h_fin - m) ** 2, axis=0, keepdims=True)
                hn_ref[...] = jnp.tanh(
                    (h_fin - m) * jax.lax.rsqrt(v + EPS)).astype(hn_ref.dtype)


# ----------------------------------------------------------------------------
# Wrapper: one pallas_call for the whole multi-layer forward.
# ----------------------------------------------------------------------------
def lstm_forward(x, h0, c0, params):
    T, B, I = x.shape
    H = h0.shape[1]
    L = len(params)
    assert B > 1, "NewBatchNorm1D 'SD' uses an unbiased std; batch size must be > 1"

    Tc, T_pad = _choose_chunk(T, B, I, H, L)
    nchunks = T_pad // Tc
    if T_pad != T:
        x = jnp.concatenate([x, jnp.zeros((T_pad - T, B, I), x.dtype)], axis=0)
    x2d = x.reshape(T_pad * B, I).astype(jnp.float32)   # free metadata reshape

    kernel = functools.partial(_fused_lstm_kernel, num_layers=L, Tc=Tc, B=B,
                               H=H, T_real=T, T_pad=T_pad)

    in_specs = [
        pl.BlockSpec((Tc * B, I), lambda c: (c, 0)),        # x (time-chunked)
        pl.BlockSpec((B, H), lambda c: (0, 0)),             # h0
        pl.BlockSpec((B, H), lambda c: (0, 0)),             # c0
    ]
    layer_args = []
    for p in params:
        in_sz = p["Wi"].shape[0]
        in_specs += [
            pl.BlockSpec((in_sz, 4 * H), lambda c: (0, 0)),  # Wi
            pl.BlockSpec((H, 4 * H), lambda c: (0, 0)),      # Wh
            pl.BlockSpec((1, 4 * H), lambda c: (0, 0)),      # bias
            pl.BlockSpec((1, 4 * H), lambda c: (0, 0)),      # bn_i.weight
            pl.BlockSpec((1, 4 * H), lambda c: (0, 0)),      # bn_h.weight
            pl.BlockSpec((1, H), lambda c: (0, 0)),          # bn_c.weight
            pl.BlockSpec((1, H), lambda c: (0, 0)),          # bn_c.bias
        ]
        layer_args += [p["Wi"], p["Wh"], p["b"], p["w_bn_i"], p["w_bn_h"],
                       p["w_bn_c"], p["b_bn_c"]]

    out_specs = [
        pl.BlockSpec((Tc, B, H), lambda c: (c, 0, 0)),       # per-time outputs
        pl.BlockSpec((B, H), lambda c: (0, 0)),              # h_n (bn+tanh fused)
        pl.BlockSpec((B, H), lambda c: (0, 0)),              # c_n
    ]

    scratch = ([pltpu.VMEM((B, H), jnp.float32) for _ in range(2 * L)]  # h/c carries
               + [pltpu.VMEM((Tc * B, H), jnp.float32)])                # inter-layer chunk

    grid_spec = pltpu.PrefetchScalarGridSpec(
        num_scalar_prefetch=0, grid=(nchunks,),
        in_specs=in_specs, out_specs=out_specs, scratch_shapes=scratch)

    out_pad, hn, cn = pl.pallas_call(
        kernel,
        out_shape=(jax.ShapeDtypeStruct((T_pad, B, H), jnp.float32),
                   jax.ShapeDtypeStruct((B, H), jnp.float32),
                   jax.ShapeDtypeStruct((B, H), jnp.float32)),
        grid_spec=grid_spec,
        compiler_params=pltpu.CompilerParams(
            dimension_semantics=("arbitrary",),   # serial h/c carry across chunks
            vmem_limit_bytes=_scoped_vmem_bytes()),
    )(x2d, h0, c0, *layer_args)

    out = out_pad[:T] if T_pad != T else out_pad
    return out, (hn, cn)


# ----------------------------------------------------------------------------
# Deterministic parameter init (shapes as in LSTMCell.__init__ /
# NewBatchNorm1D.reset_parameters).
# ----------------------------------------------------------------------------
def init_params(key, input_size, hidden_size, num_layers):
    ortho = jax.nn.initializers.orthogonal()
    params = []
    for layer in range(num_layers):
        in_sz = input_size if layer == 0 else hidden_size
        key, k1, k2 = jax.random.split(key, 3)
        params.append(dict(
            Wi=ortho(k1, (in_sz, 4 * hidden_size), jnp.float32),
            Wh=ortho(k2, (hidden_size, 4 * hidden_size), jnp.float32),
            b=jnp.zeros((1, 4 * hidden_size), jnp.float32),
            w_bn_h=jnp.full((1, 4 * hidden_size), 0.1, jnp.float32),
            w_bn_i=jnp.full((1, 4 * hidden_size), 0.1, jnp.float32),
            w_bn_c=jnp.full((1, hidden_size), 0.1, jnp.float32),
            b_bn_c=jnp.zeros((1, hidden_size), jnp.float32),
        ))
    return params


# ----------------------------------------------------------------------------
# Pure-JAX reference (mirrors the PyTorch forward, with the same bf16 MXU
# operand rounding the kernel uses so the comparison isolates kernel
# structure, not matmul precision).
# ----------------------------------------------------------------------------
def ref_forward(x, h0, c0, params):
    def mm(a, b):
        return jnp.dot(a.astype(jnp.bfloat16), b.astype(jnp.bfloat16),
                       preferred_element_type=jnp.float32)

    def new_bn(v, w, b):
        Bn = v.shape[0]
        mean = jnp.mean(v, axis=0, keepdims=True)
        var = jnp.sum((v - mean) ** 2, axis=0, keepdims=True) / (Bn - 1)
        out = w * (v - MOM * mean) / (MOM * var + (1.0 - MOM) + EPS)
        if b is not None:
            out = out + b
        return out

    inp = x
    h = c = None
    for p in params:
        h, c = h0, c0
        outs = []
        for t in range(inp.shape[0]):
            wh = new_bn(mm(h, p["Wh"]), p["w_bn_h"], None)
            wx = new_bn(mm(inp[t], p["Wi"]), p["w_bn_i"], None)
            gates = wh + wx + p["b"]
            f, i, o, g = jnp.split(gates, 4, axis=1)
            c1 = jax.nn.sigmoid(f) * c + jax.nn.sigmoid(i) * jnp.tanh(g)
            bn_c1 = new_bn(c1, p["w_bn_c"], p["b_bn_c"])
            h1 = jax.nn.sigmoid(o) * jnp.tanh(bn_c1)
            outs.append(h1)
            h, c = h1, c1
        inp = jnp.stack(outs, 0)    # dropout(p=0) is the identity
    m = jnp.mean(h, axis=0, keepdims=True)
    v = jnp.mean((h - m) ** 2, axis=0, keepdims=True)
    h_bn = jnp.tanh((h - m) * jax.lax.rsqrt(v + EPS))
    return inp, (h_bn, c)


if __name__ == "__main__":
    T, B, I, H = 8, 4, 32, 32
    num_layers = 2

    key = jax.random.PRNGKey(0)
    kx, kh, kc, kp = jax.random.split(key, 4)
    x = jax.random.normal(kx, (T, B, I), jnp.float32)
    h0 = jax.random.normal(kh, (B, H), jnp.float32)
    c0 = jax.random.normal(kc, (B, H), jnp.float32)
    params = init_params(kp, I, H, num_layers)

    out, (h_n, c_n) = lstm_forward(x, h0, c0, params)
    jax.block_until_ready((out, h_n, c_n))

    out_r, (h_n_r, c_n_r) = ref_forward(x, h0, c0, params)
    assert np.allclose(np.asarray(out), np.asarray(out_r), atol=5e-3, rtol=5e-3)
    assert np.allclose(np.asarray(h_n), np.asarray(h_n_r), atol=5e-3, rtol=5e-3)
    assert np.allclose(np.asarray(c_n), np.asarray(c_n_r), atol=5e-3, rtol=5e-3)

    print("KERNEL_OK")
</pallas_src>

<mosaic_0001>
module attributes {stable_mosaic.version = 11 : i64} {
  func.func @_fused_lstm_kernel(%arg0: i32, %arg1: memref<32x32xf32, #tpu.memory_space<vmem>>, %arg2: memref<4x32xf32, #tpu.memory_space<vmem>>, %arg3: memref<4x32xf32, #tpu.memory_space<vmem>>, %arg4: memref<32x128xf32, #tpu.memory_space<vmem>>, %arg5: memref<32x128xf32, #tpu.memory_space<vmem>>, %arg6: memref<1x128xf32, #tpu.memory_space<vmem>>, %arg7: memref<1x128xf32, #tpu.memory_space<vmem>>, %arg8: memref<1x128xf32, #tpu.memory_space<vmem>>, %arg9: memref<1x32xf32, #tpu.memory_space<vmem>>, %arg10: memref<1x32xf32, #tpu.memory_space<vmem>>, %arg11: memref<32x128xf32, #tpu.memory_space<vmem>>, %arg12: memref<32x128xf32, #tpu.memory_space<vmem>>, %arg13: memref<1x128xf32, #tpu.memory_space<vmem>>, %arg14: memref<1x128xf32, #tpu.memory_space<vmem>>, %arg15: memref<1x128xf32, #tpu.memory_space<vmem>>, %arg16: memref<1x32xf32, #tpu.memory_space<vmem>>, %arg17: memref<1x32xf32, #tpu.memory_space<vmem>>, %arg18: memref<8x4x32xf32, #tpu.memory_space<vmem>>, %arg19: memref<4x32xf32, #tpu.memory_space<vmem>>, %arg20: memref<4x32xf32, #tpu.memory_space<vmem>>, %arg21: memref<4x32xf32, #tpu.memory_space<vmem>>, %arg22: memref<4x32xf32, #tpu.memory_space<vmem>>, %arg23: memref<4x32xf32, #tpu.memory_space<vmem>>, %arg24: memref<4x32xf32, #tpu.memory_space<vmem>>, %arg25: memref<32x32xf32, #tpu.memory_space<vmem>>) attributes {dimension_semantics = [#tpu.dimension_semantics<arbitrary>], iteration_bounds = array<i64: 1>, scalar_prefetch = 0 : i64, scratch_operands = 5 : i64, tpu.core_type = #tpu.core_type<tc>, window_params = [{transform_indices = @transform_0, window_bounds = array<i64: 32, 32>}, {pipeline_mode = #tpu.pipeline_mode<synchronous>, transform_indices = @transform_1, window_bounds = array<i64: 4, 32>}, {pipeline_mode = #tpu.pipeline_mode<synchronous>, transform_indices = @transform_2, window_bounds = array<i64: 4, 32>}, {pipeline_mode = #tpu.pipeline_mode<synchronous>, transform_indices = @transform_3, window_bounds = array<i64: 32, 128>}, {pipeline_mode = #tpu.pipeline_mode<synchronous>, transform_indices = @transform_4, window_bounds = array<i64: 32, 128>}, {pipeline_mode = #tpu.pipeline_mode<synchronous>, transform_indices = @transform_5, window_bounds = array<i64: 1, 128>}, {pipeline_mode = #tpu.pipeline_mode<synchronous>, transform_indices = @transform_6, window_bounds = array<i64: 1, 128>}, {pipeline_mode = #tpu.pipeline_mode<synchronous>, transform_indices = @transform_7, window_bounds = array<i64: 1, 128>}, {pipeline_mode = #tpu.pipeline_mode<synchronous>, transform_indices = @transform_8, window_bounds = array<i64: 1, 32>}, {pipeline_mode = #tpu.pipeline_mode<synchronous>, transform_indices = @transform_9, window_bounds = array<i64: 1, 32>}, {pipeline_mode = #tpu.pipeline_mode<synchronous>, transform_indices = @transform_10, window_bounds = array<i64: 32, 128>}, {pipeline_mode = #tpu.pipeline_mode<synchronous>, transform_indices = @transform_11, window_bounds = array<i64: 32, 128>}, {pipeline_mode = #tpu.pipeline_mode<synchronous>, transform_indices = @transform_12, window_bounds = array<i64: 1, 128>}, {pipeline_mode = #tpu.pipeline_mode<synchronous>, transform_indices = @transform_13, window_bounds = array<i64: 1, 128>}, {pipeline_mode = #tpu.pipeline_mode<synchronous>, transform_indices = @transform_14, window_bounds = array<i64: 1, 128>}, {pipeline_mode = #tpu.pipeline_mode<synchronous>, transform_indices = @transform_15, window_bounds = array<i64: 1, 32>}, {pipeline_mode = #tpu.pipeline_mode<synchronous>, transform_indices = @transform_16, window_bounds = array<i64: 1, 32>}, {transform_indices = @transform_17, window_bounds = array<i64: 8, 4, 32>}, {pipeline_mode = #tpu.pipeline_mode<synchronous>, transform_indices = @transform_18, window_bounds = array<i64: 4, 32>}, {pipeline_mode = #tpu.pipeline_mode<synchronous>, transform_indices = @transform_19, window_bounds = array<i64: 4, 32>}]} {
    %c0_i32 = arith.constant 0 : i32
    %0 = arith.cmpi eq, %arg0, %c0_i32 : i32
    %c0_i32_0 = arith.constant 0 : i32
    %1 = arith.cmpi eq, %arg0, %c0_i32_0 : i32
    %2 = arith.extui %1 : i1 to i32
    %c0_i32_1 = arith.constant 0 : i32
    %3 = arith.cmpi ne, %2, %c0_i32_1 : i32
    scf.if %3 {
      %c0_494 = arith.constant 0 : index
      %c0_495 = arith.constant 0 : index
      %1642 = vector.load %arg2[%c0_494, %c0_495] : memref<4x32xf32, #tpu.memory_space<vmem>>, vector<4x32xf32>
      %c0_496 = arith.constant 0 : index
      %c0_497 = arith.constant 0 : index
      %1643 = vector.load %arg21[%c0_496, %c0_497] : memref<4x32xf32, #tpu.memory_space<vmem>>, vector<4x32xf32>
      tpu.vector_store %arg21[%c0_496, %c0_497], %1642 {strides = array<i32>} : memref<4x32xf32, #tpu.memory_space<vmem>>, vector<4x32xf32>,
      %c0_498 = arith.constant 0 : index
      %c0_499 = arith.constant 0 : index
      %1644 = vector.load %arg3[%c0_498, %c0_499] : memref<4x32xf32, #tpu.memory_space<vmem>>, vector<4x32xf32>
      %c0_500 = arith.constant 0 : index
      %c0_501 = arith.constant 0 : index
      %1645 = vector.load %arg23[%c0_500, %c0_501] : memref<4x32xf32, #tpu.memory_space<vmem>>, vector<4x32xf32>
      tpu.vector_store %arg23[%c0_500, %c0_501], %1644 {strides = array<i32>} : memref<4x32xf32, #tpu.memory_space<vmem>>, vector<4x32xf32>,
      %c0_502 = arith.constant 0 : index
      %c0_503 = arith.constant 0 : index
      %1646 = vector.load %arg2[%c0_502, %c0_503] : memref<4x32xf32, #tpu.memory_space<vmem>>, vector<4x32xf32>
      %c0_504 = arith.constant 0 : index
      %c0_505 = arith.constant 0 : index
      %1647 = vector.load %arg22[%c0_504, %c0_505] : memref<4x32xf32, #tpu.memory_space<vmem>>, vector<4x32xf32>
      tpu.vector_store %arg22[%c0_504, %c0_505], %1646 {strides = array<i32>} : memref<4x32xf32, #tpu.memory_space<vmem>>, vector<4x32xf32>,
      %c0_506 = arith.constant 0 : index
      %c0_507 = arith.constant 0 : index
      %1648 = vector.load %arg3[%c0_506, %c0_507] : memref<4x32xf32, #tpu.memory_space<vmem>>, vector<4x32xf32>
      %c0_508 = arith.constant 0 : index
      %c0_509 = arith.constant 0 : index
      %1649 = vector.load %arg24[%c0_508, %c0_509] : memref<4x32xf32, #tpu.memory_space<vmem>>, vector<4x32xf32>
      tpu.vector_store %arg24[%c0_508, %c0_509], %1648 {strides = array<i32>} : memref<4x32xf32, #tpu.memory_space<vmem>>, vector<4x32xf32>,
    } else {
    }
    %c0 = arith.constant 0 : index
    %c0_2 = arith.constant 0 : index
    %4 = vector.load %arg1[%c0, %c0_2] : memref<32x32xf32, #tpu.memory_space<vmem>>, vector<32x32xf32>
    %5 = arith.truncf %4 : vector<32x32xf32> to vector<32x32xbf16>
    %c0_3 = arith.constant 0 : index
    %c0_4 = arith.constant 0 : index
    %6 = vector.load %arg4[%c0_3, %c0_4] : memref<32x128xf32, #tpu.memory_space<vmem>>, vector<32x128xf32>
    %7 = arith.truncf %6 : vector<32x128xf32> to vector<32x128xbf16>
    %cst = arith.constant dense<0.000000e+00> : vector<32x128xf32>
    %8 = tpu.matmul %5, %7, %cst {dimension_numbers = #tpu.dot_dimension_numbers<[1], [0], [0], [1], [0, 0, 1, 1], [], []>} : vector<32x32xbf16>, vector<32x128xbf16>, vector<32x128xf32> -> vector<32x128xf32>
    %c0_5 = arith.constant 0 : index
    %c0_6 = arith.constant 0 : index
    %9 = vector.load %arg5[%c0_5, %c0_6] : memref<32x128xf32, #tpu.memory_space<vmem>>, vector<32x128xf32>
    %10 = arith.truncf %9 : vector<32x128xf32> to vector<32x128xbf16>
    %c0_7 = arith.constant 0 : index
    %c0_8 = arith.constant 0 : index
    %11 = vector.load %arg6[%c0_7, %c0_8] : memref<1x128xf32, #tpu.memory_space<vmem>>, vector<1x128xf32>
    %12 = vector.shape_cast %11 : vector<1x128xf32> to vector<1x128xf32>
    %13 = vector.broadcast %12 : vector<1x128xf32> to vector<4x128xf32>
    %c0_9 = arith.constant 0 : index
    %c0_10 = arith.constant 0 : index
    %14 = vector.load %arg7[%c0_9, %c0_10] : memref<1x128xf32, #tpu.memory_space<vmem>>, vector<1x128xf32>
    %c0_11 = arith.constant 0 : index
    %c0_12 = arith.constant 0 : index
    %15 = vector.load %arg8[%c0_11, %c0_12] : memref<1x128xf32, #tpu.memory_space<vmem>>, vector<1x128xf32>
    %c0_13 = arith.constant 0 : index
    %c0_14 = arith.constant 0 : index
    %16 = vector.load %arg9[%c0_13, %c0_14] : memref<1x32xf32, #tpu.memory_space<vmem>>, vector<1x32xf32>
    %c0_15 = arith.constant 0 : index
    %c0_16 = arith.constant 0 : index
    %17 = vector.load %arg10[%c0_15, %c0_16] : memref<1x32xf32, #tpu.memory_space<vmem>>, vector<1x32xf32>
    %c0_17 = arith.constant 0 : index
    %c0_18 = arith.constant 0 : index
    %18 = vector.load %arg21[%c0_17, %c0_18] : memref<4x32xf32, #tpu.memory_space<vmem>>, vector<4x32xf32>
    %c0_19 = arith.constant 0 : index
    %c0_20 = arith.constant 0 : index
    %19 = vector.load %arg23[%c0_19, %c0_20] : memref<4x32xf32, #tpu.memory_space<vmem>>, vector<4x32xf32>
    %20 = vector.extract_strided_slice %8 {offsets = [0, 0], sizes = [4, 128], strides = [1, 1]} : vector<32x128xf32> to vector<4x128xf32>
    %cst_21 = arith.constant dense<0.000000e+00> : vector<128xf32>
    %21 = vector.multi_reduction <add>, %20, %cst_21 [0] : vector<4x128xf32> to vector<128xf32>
    %22 = vector.shape_cast %21 : vector<128xf32> to vector<1x128xf32>
    %cst_22 = arith.constant 4.000000e+00 : f32
    %23 = vector.broadcast %cst_22 : f32 to vector<1x128xf32>
    %24 = arith.divf %22, %23 : vector<1x128xf32>
    %25 = vector.broadcast %24 : vector<1x128xf32> to vector<4x128xf32>
    %26 = arith.subf %20, %25 : vector<4x128xf32>
    %27 = arith.mulf %26, %26 : vector<4x128xf32>
    %cst_23 = arith.constant dense<0.000000e+00> : vector<128xf32>
    %28 = vector.multi_reduction <add>, %27, %cst_23 [0] : vector<4x128xf32> to vector<128xf32>
    %29 = vector.shape_cast %28 : vector<128xf32> to vector<1x128xf32>
    %cst_24 = arith.constant 0.333333343 : f32
    %30 = vector.broadcast %cst_24 : f32 to vector<1x128xf32>
    %31 = arith.mulf %29, %30 : vector<1x128xf32>
    %cst_25 = arith.constant 0.899999976 : f32
    %32 = vector.broadcast %cst_25 : f32 to vector<1x128xf32>
    %33 = arith.mulf %32, %31 : vector<1x128xf32>
    %cst_26 = arith.constant 1.000000e-01 : f32
    %34 = vector.broadcast %cst_26 : f32 to vector<1x128xf32>
    %35 = arith.addf %33, %34 : vector<1x128xf32>
    %cst_27 = arith.constant 9.99999974E-6 : f32
    %36 = vector.broadcast %cst_27 : f32 to vector<1x128xf32>
    %37 = arith.addf %35, %36 : vector<1x128xf32>
    %38 = tpu.reciprocal %37 : vector<1x128xf32> -> vector<1x128xf32>
    %39 = arith.mulf %14, %38 : vector<1x128xf32>
    %cst_28 = arith.constant 0.899999976 : f32
    %40 = vector.broadcast %cst_28 : f32 to vector<1x128xf32>
    %41 = arith.mulf %40, %24 : vector<1x128xf32>
    %42 = vector.broadcast %41 : vector<1x128xf32> to vector<4x128xf32>
    %43 = arith.subf %20, %42 : vector<4x128xf32>
    %44 = vector.broadcast %39 : vector<1x128xf32> to vector<4x128xf32>
    %45 = arith.mulf %43, %44 : vector<4x128xf32>
    %46 = arith.truncf %18 : vector<4x32xf32> to vector<4x32xbf16>
    %cst_29 = arith.constant dense<0.000000e+00> : vector<4x128xf32>
    %47 = tpu.matmul %46, %10, %cst_29 {dimension_numbers = #tpu.dot_dimension_numbers<[1], [0], [0], [1], [0, 0, 1, 1], [], []>} : vector<4x32xbf16>, vector<32x128xbf16>, vector<4x128xf32> -> vector<4x128xf32>
    %cst_30 = arith.constant dense<0.000000e+00> : vector<128xf32>
    %48 = vector.multi_reduction <add>, %47, %cst_30 [0] : vector<4x128xf32> to vector<128xf32>
    %49 = vector.shape_cast %48 : vector<128xf32> to vector<1x128xf32>
    %cst_31 = arith.constant 4.000000e+00 : f32
    %50 = vector.broadcast %cst_31 : f32 to vector<1x128xf32>
    %51 = arith.divf %49, %50 : vector<1x128xf32>
    %52 = vector.broadcast %51 : vector<1x128xf32> to vector<4x128xf32>
    %53 = arith.subf %47, %52 : vector<4x128xf32>
    %54 = arith.mulf %53, %53 : vector<4x128xf32>
    %cst_32 = arith.constant dense<0.000000e+00> : vector<128xf32>
    %55 = vector.multi_reduction <add>, %54, %cst_32 [0] : vector<4x128xf32> to vector<128xf32>
    %56 = vector.shape_cast %55 : vector<128xf32> to vector<1x128xf32>
    %cst_33 = arith.constant 0.333333343 : f32
    %57 = vector.broadcast %cst_33 : f32 to vector<1x128xf32>
    %58 = arith.mulf %56, %57 : vector<1x128xf32>
    %cst_34 = arith.constant 0.899999976 : f32
    %59 = vector.broadcast %cst_34 : f32 to vector<1x128xf32>
    %60 = arith.mulf %59, %58 : vector<1x128xf32>
    %cst_35 = arith.constant 1.000000e-01 : f32
    %61 = vector.broadcast %cst_35 : f32 to vector<1x128xf32>
    %62 = arith.addf %60, %61 : vector<1x128xf32>
    %cst_36 = arith.constant 9.99999974E-6 : f32
    %63 = vector.broadcast %cst_36 : f32 to vector<1x128xf32>
    %64 = arith.addf %62, %63 : vector<1x128xf32>
    %65 = tpu.reciprocal %64 : vector<1x128xf32> -> vector<1x128xf32>
    %66 = arith.mulf %15, %65 : vector<1x128xf32>
    %cst_37 = arith.constant 0.899999976 : f32
    %67 = vector.broadcast %cst_37 : f32 to vector<1x128xf32>
    %68 = arith.mulf %67, %51 : vector<1x128xf32>
    %69 = vector.broadcast %68 : vector<1x128xf32> to vector<4x128xf32>
    %70 = arith.subf %47, %69 : vector<4x128xf32>
    %71 = vector.broadcast %66 : vector<1x128xf32> to vector<4x128xf32>
    %72 = arith.mulf %70, %71 : vector<4x128xf32>
    %73 = arith.addf %72, %45 : vector<4x128xf32>
    %74 = arith.addf %73, %13 : vector<4x128xf32>
    %75 = vector.extract_strided_slice %74 {offsets = [0, 0], sizes = [4, 96], strides = [1, 1]} : vector<4x128xf32> to vector<4x96xf32>
    %76 = arith.negf %75 : vector<4x96xf32>
    %77 = math.exp %76 : vector<4x96xf32>
    %cst_38 = arith.constant 1.000000e+00 : f32
    %78 = vector.broadcast %cst_38 : f32 to vector<4x96xf32>
    %79 = arith.addf %78, %77 : vector<4x96xf32>
    %80 = arith.divf %78, %79 : vector<4x96xf32>
    %81 = vector.extract_strided_slice %80 {offsets = [0, 0], sizes = [4, 32], strides = [1, 1]} : vector<4x96xf32> to vector<4x32xf32>
    %82 = vector.extract_strided_slice %80 {offsets = [0, 32], sizes = [4, 32], strides = [1, 1]} : vector<4x96xf32> to vector<4x32xf32>
    %83 = vector.extract_strided_slice %80 {offsets = [0, 64], sizes = [4, 32], strides = [1, 1]} : vector<4x96xf32> to vector<4x32xf32>
    %84 = vector.extract_strided_slice %74 {offsets = [0, 96], sizes = [4, 32], strides = [1, 1]} : vector<4x128xf32> to vector<4x32xf32>
    %85 = math.tanh %84 : vector<4x32xf32>
    %86 = arith.mulf %81, %19 : vector<4x32xf32>
    %87 = arith.mulf %82, %85 : vector<4x32xf32>
    %88 = arith.addf %86, %87 : vector<4x32xf32>
    %cst_39 = arith.constant dense<0.000000e+00> : vector<32xf32>
    %89 = vector.multi_reduction <add>, %88, %cst_39 [0] : vector<4x32xf32> to vector<32xf32>
    %90 = vector.shape_cast %89 : vector<32xf32> to vector<1x32xf32>
    %cst_40 = arith.constant 4.000000e+00 : f32
    %91 = vector.broadcast %cst_40 : f32 to vector<1x32xf32>
    %92 = arith.divf %90, %91 : vector<1x32xf32>
    %93 = vector.broadcast %92 : vector<1x32xf32> to vector<4x32xf32>
    %94 = arith.subf %88, %93 : vector<4x32xf32>
    %95 = arith.mulf %94, %94 : vector<4x32xf32>
    %cst_41 = arith.constant dense<0.000000e+00> : vector<32xf32>
    %96 = vector.multi_reduction <add>, %95, %cst_41 [0] : vector<4x32xf32> to vector<32xf32>
    %97 = vector.shape_cast %96 : vector<32xf32> to vector<1x32xf32>
    %cst_42 = arith.constant 0.333333343 : f32
    %98 = vector.broadcast %cst_42 : f32 to vector<1x32xf32>
    %99 = arith.mulf %97, %98 : vector<1x32xf32>
    %cst_43 = arith.constant 0.899999976 : f32
    %100 = vector.broadcast %cst_43 : f32 to vector<1x32xf32>
    %101 = arith.mulf %100, %99 : vector<1x32xf32>
    %cst_44 = arith.constant 1.000000e-01 : f32
    %102 = vector.broadcast %cst_44 : f32 to vector<1x32xf32>
    %103 = arith.addf %101, %102 : vector<1x32xf32>
    %cst_45 = arith.constant 9.99999974E-6 : f32
    %104 = vector.broadcast %cst_45 : f32 to vector<1x32xf32>
    %105 = arith.addf %103, %104 : vector<1x32xf32>
    %106 = tpu.reciprocal %105 : vector<1x32xf32> -> vector<1x32xf32>
    %107 = arith.mulf %16, %106 : vector<1x32xf32>
    %cst_46 = arith.constant 0.899999976 : f32
    %108 = vector.broadcast %cst_46 : f32 to vector<1x32xf32>
    %109 = arith.mulf %108, %92 : vector<1x32xf32>
    %110 = vector.broadcast %109 : vector<1x32xf32> to vector<4x32xf32>
    %111 = arith.subf %88, %110 : vector<4x32xf32>
    %112 = vector.broadcast %107 : vector<1x32xf32> to vector<4x32xf32>
    %113 = arith.mulf %111, %112 : vector<4x32xf32>
    %114 = vector.broadcast %17 : vector<1x32xf32> to vector<4x32xf32>
    %115 = arith.addf %113, %114 : vector<4x32xf32>
    %116 = math.tanh %115 : vector<4x32xf32>
    %117 = arith.mulf %83, %116 : vector<4x32xf32>
    %c0_47 = arith.constant 0 : index
    %c0_48 = arith.constant 0 : index
    %118 = vector.load %arg25[%c0_47, %c0_48] : memref<32x32xf32, #tpu.memory_space<vmem>>, vector<4x32xf32>
    tpu.vector_store %arg25[%c0_47, %c0_48], %117 {strides = array<i32>} : memref<32x32xf32, #tpu.memory_space<vmem>>, vector<4x32xf32>,
    %119 = vector.extract_strided_slice %8 {offsets = [4, 0], sizes = [4, 128], strides = [1, 1]} : vector<32x128xf32> to vector<4x128xf32>
    %cst_49 = arith.constant dense<0.000000e+00> : vector<128xf32>
    %120 = vector.multi_reduction <add>, %119, %cst_49 [0] : vector<4x128xf32> to vector<128xf32>
    %121 = vector.shape_cast %120 : vector<128xf32> to vector<1x128xf32>
    %cst_50 = arith.constant 4.000000e+00 : f32
    %122 = vector.broadcast %cst_50 : f32 to vector<1x128xf32>
    %123 = arith.divf %121, %122 : vector<1x128xf32>
    %124 = vector.broadcast %123 : vector<1x128xf32> to vector<4x128xf32>
    %125 = arith.subf %119, %124 : vector<4x128xf32>
    %126 = arith.mulf %125, %125 : vector<4x128xf32>
    %cst_51 = arith.constant dense<0.000000e+00> : vector<128xf32>
    %127 = vector.multi_reduction <add>, %126, %cst_51 [0] : vector<4x128xf32> to vector<128xf32>
    %128 = vector.shape_cast %127 : vector<128xf32> to vector<1x128xf32>
    %cst_52 = arith.constant 0.333333343 : f32
    %129 = vector.broadcast %cst_52 : f32 to vector<1x128xf32>
    %130 = arith.mulf %128, %129 : vector<1x128xf32>
    %cst_53 = arith.constant 0.899999976 : f32
    %131 = vector.broadcast %cst_53 : f32 to vector<1x128xf32>
    %132 = arith.mulf %131, %130 : vector<1x128xf32>
    %cst_54 = arith.constant 1.000000e-01 : f32
    %133 = vector.broadcast %cst_54 : f32 to vector<1x128xf32>
    %134 = arith.addf %132, %133 : vector<1x128xf32>
    %cst_55 = arith.constant 9.99999974E-6 : f32
    %135 = vector.broadcast %cst_55 : f32 to vector<1x128xf32>
    %136 = arith.addf %134, %135 : vector<1x128xf32>
    %137 = tpu.reciprocal %136 : vector<1x128xf32> -> vector<1x128xf32>
    %138 = arith.mulf %14, %137 : vector<1x128xf32>
    %cst_56 = arith.constant 0.899999976 : f32
    %139 = vector.broadcast %cst_56 : f32 to vector<1x128xf32>
    %140 = arith.mulf %139, %123 : vector<1x128xf32>
    %141 = vector.broadcast %140 : vector<1x128xf32> to vector<4x128xf32>
    %142 = arith.subf %119, %141 : vector<4x128xf32>
    %143 = vector.broadcast %138 : vector<1x128xf32> to vector<4x128xf32>
    %144 = arith.mulf %142, %143 : vector<4x128xf32>
    %145 = arith.truncf %117 : vector<4x32xf32> to vector<4x32xbf16>
    %cst_57 = arith.constant dense<0.000000e+00> : vector<4x128xf32>
    %146 = tpu.matmul %145, %10, %cst_57 {dimension_numbers = #tpu.dot_dimension_numbers<[1], [0], [0], [1], [0, 0, 1, 1], [], []>} : vector<4x32xbf16>, vector<32x128xbf16>, vector<4x128xf32> -> vector<4x128xf32>
    %cst_58 = arith.constant dense<0.000000e+00> : vector<128xf32>
    %147 = vector.multi_reduction <add>, %146, %cst_58 [0] : vector<4x128xf32> to vector<128xf32>
    %148 = vector.shape_cast %147 : vector<128xf32> to vector<1x128xf32>
    %cst_59 = arith.constant 4.000000e+00 : f32
    %149 = vector.broadcast %cst_59 : f32 to vector<1x128xf32>
    %150 = arith.divf %148, %149 : vector<1x128xf32>
    %151 = vector.broadcast %150 : vector<1x128xf32> to vector<4x128xf32>
    %152 = arith.subf %146, %151 : vector<4x128xf32>
    %153 = arith.mulf %152, %152 : vector<4x128xf32>
    %cst_60 = arith.constant dense<0.000000e+00> : vector<128xf32>
    %154 = vector.multi_reduction <add>, %153, %cst_60 [0] : vector<4x128xf32> to vector<128xf32>
    %155 = vector.shape_cast %154 : vector<128xf32> to vector<1x128xf32>
    %cst_61 = arith.constant 0.333333343 : f32
    %156 = vector.broadcast %cst_61 : f32 to vector<1x128xf32>
    %157 = arith.mulf %155, %156 : vector<1x128xf32>
    %cst_62 = arith.constant 0.899999976 : f32
    %158 = vector.broadcast %cst_62 : f32 to vector<1x128xf32>
    %159 = arith.mulf %158, %157 : vector<1x128xf32>
    %cst_63 = arith.constant 1.000000e-01 : f32
    %160 = vector.broadcast %cst_63 : f32 to vector<1x128xf32>
    %161 = arith.addf %159, %160 : vector<1x128xf32>
    %cst_64 = arith.constant 9.99999974E-6 : f32
    %162 = vector.broadcast %cst_64 : f32 to vector<1x128xf32>
    %163 = arith.addf %161, %162 : vector<1x128xf32>
    %164 = tpu.reciprocal %163 : vector<1x128xf32> -> vector<1x128xf32>
    %165 = arith.mulf %15, %164 : vector<1x128xf32>
    %cst_65 = arith.constant 0.899999976 : f32
    %166 = vector.broadcast %cst_65 : f32 to vector<1x128xf32>
    %167 = arith.mulf %166, %150 : vector<1x128xf32>
    %168 = vector.broadcast %167 : vector<1x128xf32> to vector<4x128xf32>
    %169 = arith.subf %146, %168 : vector<4x128xf32>
    %170 = vector.broadcast %165 : vector<1x128xf32> to vector<4x128xf32>
    %171 = arith.mulf %169, %170 : vector<4x128xf32>
    %172 = arith.addf %171, %144 : vector<4x128xf32>
    %173 = arith.addf %172, %13 : vector<4x128xf32>
    %174 = vector.extract_strided_slice %173 {offsets = [0, 0], sizes = [4, 96], strides = [1, 1]} : vector<4x128xf32> to vector<4x96xf32>
    %175 = arith.negf %174 : vector<4x96xf32>
    %176 = math.exp %175 : vector<4x96xf32>
    %cst_66 = arith.constant 1.000000e+00 : f32
    %177 = vector.broadcast %cst_66 : f32 to vector<4x96xf32>
    %178 = arith.addf %177, %176 : vector<4x96xf32>
    %179 = arith.divf %177, %178 : vector<4x96xf32>
    %180 = vector.extract_strided_slice %179 {offsets = [0, 0], sizes = [4, 32], strides = [1, 1]} : vector<4x96xf32> to vector<4x32xf32>
    %181 = vector.extract_strided_slice %179 {offsets = [0, 32], sizes = [4, 32], strides = [1, 1]} : vector<4x96xf32> to vector<4x32xf32>
    %182 = vector.extract_strided_slice %179 {offsets = [0, 64], sizes = [4, 32], strides = [1, 1]} : vector<4x96xf32> to vector<4x32xf32>
    %183 = vector.extract_strided_slice %173 {offsets = [0, 96], sizes = [4, 32], strides = [1, 1]} : vector<4x128xf32> to vector<4x32xf32>
    %184 = math.tanh %183 : vector<4x32xf32>
    %185 = arith.mulf %180, %88 : vector<4x32xf32>
    %186 = arith.mulf %181, %184 : vector<4x32xf32>
    %187 = arith.addf %185, %186 : vector<4x32xf32>
    %cst_67 = arith.constant dense<0.000000e+00> : vector<32xf32>
    %188 = vector.multi_reduction <add>, %187, %cst_67 [0] : vector<4x32xf32> to vector<32xf32>
    %189 = vector.shape_cast %188 : vector<32xf32> to vector<1x32xf32>
    %cst_68 = arith.constant 4.000000e+00 : f32
    %190 = vector.broadcast %cst_68 : f32 to vector<1x32xf32>
    %191 = arith.divf %189, %190 : vector<1x32xf32>
    %192 = vector.broadcast %191 : vector<1x32xf32> to vector<4x32xf32>
    %193 = arith.subf %187, %192 : vector<4x32xf32>
    %194 = arith.mulf %193, %193 : vector<4x32xf32>
    %cst_69 = arith.constant dense<0.000000e+00> : vector<32xf32>
    %195 = vector.multi_reduction <add>, %194, %cst_69 [0] : vector<4x32xf32> to vector<32xf32>
    %196 = vector.shape_cast %195 : vector<32xf32> to vector<1x32xf32>
    %cst_70 = arith.constant 0.333333343 : f32
    %197 = vector.broadcast %cst_70 : f32 to vector<1x32xf32>
    %198 = arith.mulf %196, %197 : vector<1x32xf32>
    %cst_71 = arith.constant 0.899999976 : f32
    %199 = vector.broadcast %cst_71 : f32 to vector<1x32xf32>
    %200 = arith.mulf %199, %198 : vector<1x32xf32>
    %cst_72 = arith.constant 1.000000e-01 : f32
    %201 = vector.broadcast %cst_72 : f32 to vector<1x32xf32>
    %202 = arith.addf %200, %201 : vector<1x32xf32>
    %cst_73 = arith.constant 9.99999974E-6 : f32
    %203 = vector.broadcast %cst_73 : f32 to vector<1x32xf32>
    %204 = arith.addf %202, %203 : vector<1x32xf32>
    %205 = tpu.reciprocal %204 : vector<1x32xf32> -> vector<1x32xf32>
    %206 = arith.mulf %16, %205 : vector<1x32xf32>
    %cst_74 = arith.constant 0.899999976 : f32
    %207 = vector.broadcast %cst_74 : f32 to vector<1x32xf32>
    %208 = arith.mulf %207, %191 : vector<1x32xf32>
    %209 = vector.broadcast %208 : vector<1x32xf32> to vector<4x32xf32>
    %210 = arith.subf %187, %209 : vector<4x32xf32>
    %211 = vector.broadcast %206 : vector<1x32xf32> to vector<4x32xf32>
    %212 = arith.mulf %210, %211 : vector<4x32xf32>
    %213 = vector.broadcast %17 : vector<1x32xf32> to vector<4x32xf32>
    %214 = arith.addf %212, %213 : vector<4x32xf32>
    %215 = math.tanh %214 : vector<4x32xf32>
    %216 = arith.mulf %182, %215 : vector<4x32xf32>
    %c4 = arith.constant 4 : index
    %c0_75 = arith.constant 0 : index
    %217 = vector.load %arg25[%c4, %c0_75] : memref<32x32xf32, #tpu.memory_space<vmem>>, vector<4x32xf32>
    tpu.vector_store %arg25[%c4, %c0_75], %216 {strides = array<i32>} : memref<32x32xf32, #tpu.memory_space<vmem>>, vector<4x32xf32>,
    %218 = vector.extract_strided_slice %8 {offsets = [8, 0], sizes = [4, 128], strides = [1, 1]} : vector<32x128xf32> to vector<4x128xf32>
    %cst_76 = arith.constant dense<0.000000e+00> : vector<128xf32>
    %219 = vector.multi_reduction <add>, %218, %cst_76 [0] : vector<4x128xf32> to vector<128xf32>
    %220 = vector.shape_cast %219 : vector<128xf32> to vector<1x128xf32>
    %cst_77 = arith.constant 4.000000e+00 : f32
    %221 = vector.broadcast %cst_77 : f32 to vector<1x128xf32>
    %222 = arith.divf %220, %221 : vector<1x128xf32>
    %223 = vector.broadcast %222 : vector<1x128xf32> to vector<4x128xf32>
    %224 = arith.subf %218, %223 : vector<4x128xf32>
    %225 = arith.mulf %224, %224 : vector<4x128xf32>
    %cst_78 = arith.constant dense<0.000000e+00> : vector<128xf32>
    %226 = vector.multi_reduction <add>, %225, %cst_78 [0] : vector<4x128xf32> to vector<128xf32>
    %227 = vector.shape_cast %226 : vector<128xf32> to vector<1x128xf32>
    %cst_79 = arith.constant 0.333333343 : f32
    %228 = vector.broadcast %cst_79 : f32 to vector<1x128xf32>
    %229 = arith.mulf %227, %228 : vector<1x128xf32>
    %cst_80 = arith.constant 0.899999976 : f32
    %230 = vector.broadcast %cst_80 : f32 to vector<1x128xf32>
    %231 = arith.mulf %230, %229 : vector<1x128xf32>
    %cst_81 = arith.constant 1.000000e-01 : f32
    %232 = vector.broadcast %cst_81 : f32 to vector<1x128xf32>
    %233 = arith.addf %231, %232 : vector<1x128xf32>
    %cst_82 = arith.constant 9.99999974E-6 : f32
    %234 = vector.broadcast %cst_82 : f32 to vector<1x128xf32>
    %235 = arith.addf %233, %234 : vector<1x128xf32>
    %236 = tpu.reciprocal %235 : vector<1x128xf32> -> vector<1x128xf32>
    %237 = arith.mulf %14, %236 : vector<1x128xf32>
    %cst_83 = arith.constant 0.899999976 : f32
    %238 = vector.broadcast %cst_83 : f32 to vector<1x128xf32>
    %239 = arith.mulf %238, %222 : vector<1x128xf32>
    %240 = vector.broadcast %239 : vector<1x128xf32> to vector<4x128xf32>
    %241 = arith.subf %218, %240 : vector<4x128xf32>
    %242 = vector.broadcast %237 : vector<1x128xf32> to vector<4x128xf32>
    %243 = arith.mulf %241, %242 : vector<4x128xf32>
    %244 = arith.truncf %216 : vector<4x32xf32> to vector<4x32xbf16>
    %cst_84 = arith.constant dense<0.000000e+00> : vector<4x128xf32>
    %245 = tpu.matmul %244, %10, %cst_84 {dimension_numbers = #tpu.dot_dimension_numbers<[1], [0], [0], [1], [0, 0, 1, 1], [], []>} : vector<4x32xbf16>, vector<32x128xbf16>, vector<4x128xf32> -> vector<4x128xf32>
    %cst_85 = arith.constant dense<0.000000e+00> : vector<128xf32>
    %246 = vector.multi_reduction <add>, %245, %cst_85 [0] : vector<4x128xf32> to vector<128xf32>
    %247 = vector.shape_cast %246 : vector<128xf32> to vector<1x128xf32>
    %cst_86 = arith.constant 4.000000e+00 : f32
    %248 = vector.broadcast %cst_86 : f32 to vector<1x128xf32>
    %249 = arith.divf %247, %248 : vector<1x128xf32>
    %250 = vector.broadcast %249 : vector<1x128xf32> to vector<4x128xf32>
    %251 = arith.subf %245, %250 : vector<4x128xf32>
    %252 = arith.mulf %251, %251 : vector<4x128xf32>
    %cst_87 = arith.constant dense<0.000000e+00> : vector<128xf32>
    %253 = vector.multi_reduction <add>, %252, %cst_87 [0] : vector<4x128xf32> to vector<128xf32>
    %254 = vector.shape_cast %253 : vector<128xf32> to vector<1x128xf32>
    %cst_88 = arith.constant 0.333333343 : f32
    %255 = vector.broadcast %cst_88 : f32 to vector<1x128xf32>
    %256 = arith.mulf %254, %255 : vector<1x128xf32>
    %cst_89 = arith.constant 0.899999976 : f32
    %257 = vector.broadcast %cst_89 : f32 to vector<1x128xf32>
    %258 = arith.mulf %257, %256 : vector<1x128xf32>
    %cst_90 = arith.constant 1.000000e-01 : f32
    %259 = vector.broadcast %cst_90 : f32 to vector<1x128xf32>
    %260 = arith.addf %258, %259 : vector<1x128xf32>
    %cst_91 = arith.constant 9.99999974E-6 : f32
    %261 = vector.broadcast %cst_91 : f32 to vector<1x128xf32>
    %262 = arith.addf %260, %261 : vector<1x128xf32>
    %263 = tpu.reciprocal %262 : vector<1x128xf32> -> vector<1x128xf32>
    %264 = arith.mulf %15, %263 : vector<1x128xf32>
    %cst_92 = arith.constant 0.899999976 : f32
    %265 = vector.broadcast %cst_92 : f32 to vector<1x128xf32>
    %266 = arith.mulf %265, %249 : vector<1x128xf32>
    %267 = vector.broadcast %266 : vector<1x128xf32> to vector<4x128xf32>
    %268 = arith.subf %245, %267 : vector<4x128xf32>
    %269 = vector.broadcast %264 : vector<1x128xf32> to vector<4x128xf32>
    %270 = arith.mulf %268, %269 : vector<4x128xf32>
    %271 = arith.addf %270, %243 : vector<4x128xf32>
    %272 = arith.addf %271, %13 : vector<4x128xf32>
    %273 = vector.extract_strided_slice %272 {offsets = [0, 0], sizes = [4, 96], strides = [1, 1]} : vector<4x128xf32> to vector<4x96xf32>
    %274 = arith.negf %273 : vector<4x96xf32>
    %275 = math.exp %274 : vector<4x96xf32>
    %cst_93 = arith.constant 1.000000e+00 : f32
    %276 = vector.broadcast %cst_93 : f32 to vector<4x96xf32>
    %277 = arith.addf %276, %275 : vector<4x96xf32>
    %278 = arith.divf %276, %277 : vector<4x96xf32>
    %279 = vector.extract_strided_slice %278 {offsets = [0, 0], sizes = [4, 32], strides = [1, 1]} : vector<4x96xf32> to vector<4x32xf32>
    %280 = vector.extract_strided_slice %278 {offsets = [0, 32], sizes = [4, 32], strides = [1, 1]} : vector<4x96xf32> to vector<4x32xf32>
    %281 = vector.extract_strided_slice %278 {offsets = [0, 64], sizes = [4, 32], strides = [1, 1]} : vector<4x96xf32> to vector<4x32xf32>
    %282 = vector.extract_strided_slice %272 {offsets = [0, 96], sizes = [4, 32], strides = [1, 1]} : vector<4x128xf32> to vector<4x32xf32>
    %283 = math.tanh %282 : vector<4x32xf32>
    %284 = arith.mulf %279, %187 : vector<4x32xf32>
    %285 = arith.mulf %280, %283 : vector<4x32xf32>
    %286 = arith.addf %284, %285 : vector<4x32xf32>
    %cst_94 = arith.constant dense<0.000000e+00> : vector<32xf32>
    %287 = vector.multi_reduction <add>, %286, %cst_94 [0] : vector<4x32xf32> to vector<32xf32>
    %288 = vector.shape_cast %287 : vector<32xf32> to vector<1x32xf32>
    %cst_95 = arith.constant 4.000000e+00 : f32
    %289 = vector.broadcast %cst_95 : f32 to vector<1x32xf32>
    %290 = arith.divf %288, %289 : vector<1x32xf32>
    %291 = vector.broadcast %290 : vector<1x32xf32> to vector<4x32xf32>
    %292 = arith.subf %286, %291 : vector<4x32xf32>
    %293 = arith.mulf %292, %292 : vector<4x32xf32>
    %cst_96 = arith.constant dense<0.000000e+00> : vector<32xf32>
    %294 = vector.multi_reduction <add>, %293, %cst_96 [0] : vector<4x32xf32> to vector<32xf32>
    %295 = vector.shape_cast %294 : vector<32xf32> to vector<1x32xf32>
    %cst_97 = arith.constant 0.333333343 : f32
    %296 = vector.broadcast %cst_97 : f32 to vector<1x32xf32>
    %297 = arith.mulf %295, %296 : vector<1x32xf32>
    %cst_98 = arith.constant 0.899999976 : f32
    %298 = vector.broadcast %cst_98 : f32 to vector<1x32xf32>
    %299 = arith.mulf %298, %297 : vector<1x32xf32>
    %cst_99 = arith.constant 1.000000e-01 : f32
    %300 = vector.broadcast %cst_99 : f32 to vector<1x32xf32>
    %301 = arith.addf %299, %300 : vector<1x32xf32>
    %cst_100 = arith.constant 9.99999974E-6 : f32
    %302 = vector.broadcast %cst_100 : f32 to vector<1x32xf32>
    %303 = arith.addf %301, %302 : vector<1x32xf32>
    %304 = tpu.reciprocal %303 : vector<1x32xf32> -> vector<1x32xf32>
    %305 = arith.mulf %16, %304 : vector<1x32xf32>
    %cst_101 = arith.constant 0.899999976 : f32
    %306 = vector.broadcast %cst_101 : f32 to vector<1x32xf32>
    %307 = arith.mulf %306, %290 : vector<1x32xf32>
    %308 = vector.broadcast %307 : vector<1x32xf32> to vector<4x32xf32>
    %309 = arith.subf %286, %308 : vector<4x32xf32>
    %310 = vector.broadcast %305 : vector<1x32xf32> to vector<4x32xf32>
    %311 = arith.mulf %309, %310 : vector<4x32xf32>
    %312 = vector.broadcast %17 : vector<1x32xf32> to vector<4x32xf32>
    %313 = arith.addf %311, %312 : vector<4x32xf32>
    %314 = math.tanh %313 : vector<4x32xf32>
    %315 = arith.mulf %281, %314 : vector<4x32xf32>
    %c8 = arith.constant 8 : index
    %c0_102 = arith.constant 0 : index
    %316 = vector.load %arg25[%c8, %c0_102] : memref<32x32xf32, #tpu.memory_space<vmem>>, vector<4x32xf32>
    tpu.vector_store %arg25[%c8, %c0_102], %315 {strides = array<i32>} : memref<32x32xf32, #tpu.memory_space<vmem>>, vector<4x32xf32>,
    %317 = vector.extract_strided_slice %8 {offsets = [12, 0], sizes = [4, 128], strides = [1, 1]} : vector<32x128xf32> to vector<4x128xf32>
    %cst_103 = arith.constant dense<0.000000e+00> : vector<128xf32>
    %318 = vector.multi_reduction <add>, %317, %cst_103 [0] : vector<4x128xf32> to vector<128xf32>
    %319 = vector.shape_cast %318 : vector<128xf32> to vector<1x128xf32>
    %cst_104 = arith.constant 4.000000e+00 : f32
    %320 = vector.broadcast %cst_104 : f32 to vector<1x128xf32>
    %321 = arith.divf %319, %320 : vector<1x128xf32>
    %322 = vector.broadcast %321 : vector<1x128xf32> to vector<4x128xf32>
    %323 = arith.subf %317, %322 : vector<4x128xf32>
    %324 = arith.mulf %323, %323 : vector<4x128xf32>
    %cst_105 = arith.constant dense<0.000000e+00> : vector<128xf32>
    %325 = vector.multi_reduction <add>, %324, %cst_105 [0] : vector<4x128xf32> to vector<128xf32>
    %326 = vector.shape_cast %325 : vector<128xf32> to vector<1x128xf32>
    %cst_106 = arith.constant 0.333333343 : f32
    %327 = vector.broadcast %cst_106 : f32 to vector<1x128xf32>
    %328 = arith.mulf %326, %327 : vector<1x128xf32>
    %cst_107 = arith.constant 0.899999976 : f32
    %329 = vector.broadcast %cst_107 : f32 to vector<1x128xf32>
    %330 = arith.mulf %329, %328 : vector<1x128xf32>
    %cst_108 = arith.constant 1.000000e-01 : f32
    %331 = vector.broadcast %cst_108 : f32 to vector<1x128xf32>
    %332 = arith.addf %330, %331 : vector<1x128xf32>
    %cst_109 = arith.constant 9.99999974E-6 : f32
    %333 = vector.broadcast %cst_109 : f32 to vector<1x128xf32>
    %334 = arith.addf %332, %333 : vector<1x128xf32>
    %335 = tpu.reciprocal %334 : vector<1x128xf32> -> vector<1x128xf32>
    %336 = arith.mulf %14, %335 : vector<1x128xf32>
    %cst_110 = arith.constant 0.899999976 : f32
    %337 = vector.broadcast %cst_110 : f32 to vector<1x128xf32>
    %338 = arith.mulf %337, %321 : vector<1x128xf32>
    %339 = vector.broadcast %338 : vector<1x128xf32> to vector<4x128xf32>
    %340 = arith.subf %317, %339 : vector<4x128xf32>
    %341 = vector.broadcast %336 : vector<1x128xf32> to vector<4x128xf32>
    %342 = arith.mulf %340, %341 : vector<4x128xf32>
    %343 = arith.truncf %315 : vector<4x32xf32> to vector<4x32xbf16>
    %cst_111 = arith.constant dense<0.000000e+00> : vector<4x128xf32>
    %344 = tpu.matmul %343, %10, %cst_111 {dimension_numbers = #tpu.dot_dimension_numbers<[1], [0], [0], [1], [0, 0, 1, 1], [], []>} : vector<4x32xbf16>, vector<32x128xbf16>, vector<4x128xf32> -> vector<4x128xf32>
    %cst_112 = arith.constant dense<0.000000e+00> : vector<128xf32>
    %345 = vector.multi_reduction <add>, %344, %cst_112 [0] : vector<4x128xf32> to vector<128xf32>
    %346 = vector.shape_cast %345 : vector<128xf32> to vector<1x128xf32>
    %cst_113 = arith.constant 4.000000e+00 : f32
    %347 = vector.broadcast %cst_113 : f32 to vector<1x128xf32>
    %348 = arith.divf %346, %347 : vector<1x128xf32>
    %349 = vector.broadcast %348 : vector<1x128xf32> to vector<4x128xf32>
    %350 = arith.subf %344, %349 : vector<4x128xf32>
    %351 = arith.mulf %350, %350 : vector<4x128xf32>
    %cst_114 = arith.constant dense<0.000000e+00> : vector<128xf32>
    %352 = vector.multi_reduction <add>, %351, %cst_114 [0] : vector<4x128xf32> to vector<128xf32>
    %353 = vector.shape_cast %352 : vector<128xf32> to vector<1x128xf32>
    %cst_115 = arith.constant 0.333333343 : f32
    %354 = vector.broadcast %cst_115 : f32 to vector<1x128xf32>
    %355 = arith.mulf %353, %354 : vector<1x128xf32>
    %cst_116 = arith.constant 0.899999976 : f32
    %356 = vector.broadcast %cst_116 : f32 to vector<1x128xf32>
    %357 = arith.mulf %356, %355 : vector<1x128xf32>
    %cst_117 = arith.constant 1.000000e-01 : f32
    %358 = vector.broadcast %cst_117 : f32 to vector<1x128xf32>
    %359 = arith.addf %357, %358 : vector<1x128xf32>
    %cst_118 = arith.constant 9.99999974E-6 : f32
    %360 = vector.broadcast %cst_118 : f32 to vector<1x128xf32>
    %361 = arith.addf %359, %360 : vector<1x128xf32>
    %362 = tpu.reciprocal %361 : vector<1x128xf32> -> vector<1x128xf32>
    %363 = arith.mulf %15, %362 : vector<1x128xf32>
    %cst_119 = arith.constant 0.899999976 : f32
    %364 = vector.broadcast %cst_119 : f32 to vector<1x128xf32>
    %365 = arith.mulf %364, %348 : vector<1x128xf32>
    %366 = vector.broadcast %365 : vector<1x128xf32> to vector<4x128xf32>
    %367 = arith.subf %344, %366 : vector<4x128xf32>
    %368 = vector.broadcast %363 : vector<1x128xf32> to vector<4x128xf32>
    %369 = arith.mulf %367, %368 : vector<4x128xf32>
    %370 = arith.addf %369, %342 : vector<4x128xf32>
    %371 = arith.addf %370, %13 : vector<4x128xf32>
    %372 = vector.extract_strided_slice %371 {offsets = [0, 0], sizes = [4, 96], strides = [1, 1]} : vector<4x128xf32> to vector<4x96xf32>
    %373 = arith.negf %372 : vector<4x96xf32>
    %374 = math.exp %373 : vector<4x96xf32>
    %cst_120 = arith.constant 1.000000e+00 : f32
    %375 = vector.broadcast %cst_120 : f32 to vector<4x96xf32>
    %376 = arith.addf %375, %374 : vector<4x96xf32>
    %377 = arith.divf %375, %376 : vector<4x96xf32>
    %378 = vector.extract_strided_slice %377 {offsets = [0, 0], sizes = [4, 32], strides = [1, 1]} : vector<4x96xf32> to vector<4x32xf32>
    %379 = vector.extract_strided_slice %377 {offsets = [0, 32], sizes = [4, 32], strides = [1, 1]} : vector<4x96xf32> to vector<4x32xf32>
    %380 = vector.extract_strided_slice %377 {offsets = [0, 64], sizes = [4, 32], strides = [1, 1]} : vector<4x96xf32> to vector<4x32xf32>
    %381 = vector.extract_strided_slice %371 {offsets = [0, 96], sizes = [4, 32], strides = [1, 1]} : vector<4x128xf32> to vector<4x32xf32>
    %382 = math.tanh %381 : vector<4x32xf32>
    %383 = arith.mulf %378, %286 : vector<4x32xf32>
    %384 = arith.mulf %379, %382 : vector<4x32xf32>
    %385 = arith.addf %383, %384 : vector<4x32xf32>
    %cst_121 = arith.constant dense<0.000000e+00> : vector<32xf32>
    %386 = vector.multi_reduction <add>, %385, %cst_121 [0] : vector<4x32xf32> to vector<32xf32>
    %387 = vector.shape_cast %386 : vector<32xf32> to vector<1x32xf32>
    %cst_122 = arith.constant 4.000000e+00 : f32
    %388 = vector.broadcast %cst_122 : f32 to vector<1x32xf32>
    %389 = arith.divf %387, %388 : vector<1x32xf32>
    %390 = vector.broadcast %389 : vector<1x32xf32> to vector<4x32xf32>
    %391 = arith.subf %385, %390 : vector<4x32xf32>
    %392 = arith.mulf %391, %391 : vector<4x32xf32>
    %cst_123 = arith.constant dense<0.000000e+00> : vector<32xf32>
    %393 = vector.multi_reduction <add>, %392, %cst_123 [0] : vector<4x32xf32> to vector<32xf32>
    %394 = vector.shape_cast %393 : vector<32xf32> to vector<1x32xf32>
    %cst_124 = arith.constant 0.333333343 : f32
    %395 = vector.broadcast %cst_124 : f32 to vector<1x32xf32>
    %396 = arith.mulf %394, %395 : vector<1x32xf32>
    %cst_125 = arith.constant 0.899999976 : f32
    %397 = vector.broadcast %cst_125 : f32 to vector<1x32xf32>
    %398 = arith.mulf %397, %396 : vector<1x32xf32>
    %cst_126 = arith.constant 1.000000e-01 : f32
    %399 = vector.broadcast %cst_126 : f32 to vector<1x32xf32>
    %400 = arith.addf %398, %399 : vector<1x32xf32>
    %cst_127 = arith.constant 9.99999974E-6 : f32
    %401 = vector.broadcast %cst_127 : f32 to vector<1x32xf32>
    %402 = arith.addf %400, %401 : vector<1x32xf32>
    %403 = tpu.reciprocal %402 : vector<1x32xf32> -> vector<1x32xf32>
    %404 = arith.mulf %16, %403 : vector<1x32xf32>
    %cst_128 = arith.constant 0.899999976 : f32
    %405 = vector.broadcast %cst_128 : f32 to vector<1x32xf32>
    %406 = arith.mulf %405, %389 : vector<1x32xf32>
    %407 = vector.broadcast %406 : vector<1x32xf32> to vector<4x32xf32>
    %408 = arith.subf %385, %407 : vector<4x32xf32>
    %409 = vector.broadcast %404 : vector<1x32xf32> to vector<4x32xf32>
    %410 = arith.mulf %408, %409 : vector<4x32xf32>
    %411 = vector.broadcast %17 : vector<1x32xf32> to vector<4x32xf32>
    %412 = arith.addf %410, %411 : vector<4x32xf32>
    %413 = math.tanh %412 : vector<4x32xf32>
    %414 = arith.mulf %380, %413 : vector<4x32xf32>
    %c12 = arith.constant 12 : index
    %c0_129 = arith.constant 0 : index
    %415 = vector.load %arg25[%c12, %c0_129] : memref<32x32xf32, #tpu.memory_space<vmem>>, vector<4x32xf32>
    tpu.vector_store %arg25[%c12, %c0_129], %414 {strides = array<i32>} : memref<32x32xf32, #tpu.memory_space<vmem>>, vector<4x32xf32>,
    %416 = vector.extract_strided_slice %8 {offsets = [16, 0], sizes = [4, 128], strides = [1, 1]} : vector<32x128xf32> to vector<4x128xf32>
    %cst_130 = arith.constant dense<0.000000e+00> : vector<128xf32>
    %417 = vector.multi_reduction <add>, %416, %cst_130 [0] : vector<4x128xf32> to vector<128xf32>
    %418 = vector.shape_cast %417 : vector<128xf32> to vector<1x128xf32>
    %cst_131 = arith.constant 4.000000e+00 : f32
    %419 = vector.broadcast %cst_131 : f32 to vector<1x128xf32>
    %420 = arith.divf %418, %419 : vector<1x128xf32>
    %421 = vector.broadcast %420 : vector<1x128xf32> to vector<4x128xf32>
    %422 = arith.subf %416, %421 : vector<4x128xf32>
    %423 = arith.mulf %422, %422 : vector<4x128xf32>
    %cst_132 = arith.constant dense<0.000000e+00> : vector<128xf32>
    %424 = vector.multi_reduction <add>, %423, %cst_132 [0] : vector<4x128xf32> to vector<128xf32>
    %425 = vector.shape_cast %424 : vector<128xf32> to vector<1x128xf32>
    %cst_133 = arith.constant 0.333333343 : f32
    %426 = vector.broadcast %cst_133 : f32 to vector<1x128xf32>
    %427 = arith.mulf %425, %426 : vector<1x128xf32>
    %cst_134 = arith.constant 0.899999976 : f32
    %428 = vector.broadcast %cst_134 : f32 to vector<1x128xf32>
    %429 = arith.mulf %428, %427 : vector<1x128xf32>
    %cst_135 = arith.constant 1.000000e-01 : f32
    %430 = vector.broadcast %cst_135 : f32 to vector<1x128xf32>
    %431 = arith.addf %429, %430 : vector<1x128xf32>
    %cst_136 = arith.constant 9.99999974E-6 : f32
    %432 = vector.broadcast %cst_136 : f32 to vector<1x128xf32>
    %433 = arith.addf %431, %432 : vector<1x128xf32>
    %434 = tpu.reciprocal %433 : vector<1x128xf32> -> vector<1x128xf32>
    %435 = arith.mulf %14, %434 : vector<1x128xf32>
    %cst_137 = arith.constant 0.899999976 : f32
    %436 = vector.broadcast %cst_137 : f32 to vector<1x128xf32>
    %437 = arith.mulf %436, %420 : vector<1x128xf32>
    %438 = vector.broadcast %437 : vector<1x128xf32> to vector<4x128xf32>
    %439 = arith.subf %416, %438 : vector<4x128xf32>
    %440 = vector.broadcast %435 : vector<1x128xf32> to vector<4x128xf32>
    %441 = arith.mulf %439, %440 : vector<4x128xf32>
    %442 = arith.truncf %414 : vector<4x32xf32> to vector<4x32xbf16>
    %cst_138 = arith.constant dense<0.000000e+00> : vector<4x128xf32>
    %443 = tpu.matmul %442, %10, %cst_138 {dimension_numbers = #tpu.dot_dimension_numbers<[1], [0], [0], [1], [0, 0, 1, 1], [], []>} : vector<4x32xbf16>, vector<32x128xbf16>, vector<4x128xf32> -> vector<4x128xf32>
    %cst_139 = arith.constant dense<0.000000e+00> : vector<128xf32>
    %444 = vector.multi_reduction <add>, %443, %cst_139 [0] : vector<4x128xf32> to vector<128xf32>
    %445 = vector.shape_cast %444 : vector<128xf32> to vector<1x128xf32>
    %cst_140 = arith.constant 4.000000e+00 : f32
    %446 = vector.broadcast %cst_140 : f32 to vector<1x128xf32>
    %447 = arith.divf %445, %446 : vector<1x128xf32>
    %448 = vector.broadcast %447 : vector<1x128xf32> to vector<4x128xf32>
    %449 = arith.subf %443, %448 : vector<4x128xf32>
    %450 = arith.mulf %449, %449 : vector<4x128xf32>
    %cst_141 = arith.constant dense<0.000000e+00> : vector<128xf32>
    %451 = vector.multi_reduction <add>, %450, %cst_141 [0] : vector<4x128xf32> to vector<128xf32>
    %452 = vector.shape_cast %451 : vector<128xf32> to vector<1x128xf32>
    %cst_142 = arith.constant 0.333333343 : f32
    %453 = vector.broadcast %cst_142 : f32 to vector<1x128xf32>
    %454 = arith.mulf %452, %453 : vector<1x128xf32>
    %cst_143 = arith.constant 0.899999976 : f32
    %455 = vector.broadcast %cst_143 : f32 to vector<1x128xf32>
    %456 = arith.mulf %455, %454 : vector<1x128xf32>
    %cst_144 = arith.constant 1.000000e-01 : f32
    %457 = vector.broadcast %cst_144 : f32 to vector<1x128xf32>
    %458 = arith.addf %456, %457 : vector<1x128xf32>
    %cst_145 = arith.constant 9.99999974E-6 : f32
    %459 = vector.broadcast %cst_145 : f32 to vector<1x128xf32>
    %460 = arith.addf %458, %459 : vector<1x128xf32>
    %461 = tpu.reciprocal %460 : vector<1x128xf32> -> vector<1x128xf32>
    %462 = arith.mulf %15, %461 : vector<1x128xf32>
    %cst_146 = arith.constant 0.899999976 : f32
    %463 = vector.broadcast %cst_146 : f32 to vector<1x128xf32>
    %464 = arith.mulf %463, %447 : vector<1x128xf32>
    %465 = vector.broadcast %464 : vector<1x128xf32> to vector<4x128xf32>
    %466 = arith.subf %443, %465 : vector<4x128xf32>
    %467 = vector.broadcast %462 : vector<1x128xf32> to vector<4x128xf32>
    %468 = arith.mulf %466, %467 : vector<4x128xf32>
    %469 = arith.addf %468, %441 : vector<4x128xf32>
    %470 = arith.addf %469, %13 : vector<4x128xf32>
    %471 = vector.extract_strided_slice %470 {offsets = [0, 0], sizes = [4, 96], strides = [1, 1]} : vector<4x128xf32> to vector<4x96xf32>
    %472 = arith.negf %471 : vector<4x96xf32>
    %473 = math.exp %472 : vector<4x96xf32>
    %cst_147 = arith.constant 1.000000e+00 : f32
    %474 = vector.broadcast %cst_147 : f32 to vector<4x96xf32>
    %475 = arith.addf %474, %473 : vector<4x96xf32>
    %476 = arith.divf %474, %475 : vector<4x96xf32>
    %477 = vector.extract_strided_slice %476 {offsets = [0, 0], sizes = [4, 32], strides = [1, 1]} : vector<4x96xf32> to vector<4x32xf32>
    %478 = vector.extract_strided_slice %476 {offsets = [0, 32], sizes = [4, 32], strides = [1, 1]} : vector<4x96xf32> to vector<4x32xf32>
    %479 = vector.extract_strided_slice %476 {offsets = [0, 64], sizes = [4, 32], strides = [1, 1]} : vector<4x96xf32> to vector<4x32xf32>
    %480 = vector.extract_strided_slice %470 {offsets = [0, 96], sizes = [4, 32], strides = [1, 1]} : vector<4x128xf32> to vector<4x32xf32>
    %481 = math.tanh %480 : vector<4x32xf32>
    %482 = arith.mulf %477, %385 : vector<4x32xf32>
    %483 = arith.mulf %478, %481 : vector<4x32xf32>
    %484 = arith.addf %482, %483 : vector<4x32xf32>
    %cst_148 = arith.constant dense<0.000000e+00> : vector<32xf32>
    %485 = vector.multi_reduction <add>, %484, %cst_148 [0] : vector<4x32xf32> to vector<32xf32>
    %486 = vector.shape_cast %485 : vector<32xf32> to vector<1x32xf32>
    %cst_149 = arith.constant 4.000000e+00 : f32
    %487 = vector.broadcast %cst_149 : f32 to vector<1x32xf32>
    %488 = arith.divf %486, %487 : vector<1x32xf32>
    %489 = vector.broadcast %488 : vector<1x32xf32> to vector<4x32xf32>
    %490 = arith.subf %484, %489 : vector<4x32xf32>
    %491 = arith.mulf %490, %490 : vector<4x32xf32>
    %cst_150 = arith.constant dense<0.000000e+00> : vector<32xf32>
    %492 = vector.multi_reduction <add>, %491, %cst_150 [0] : vector<4x32xf32> to vector<32xf32>
    %493 = vector.shape_cast %492 : vector<32xf32> to vector<1x32xf32>
    %cst_151 = arith.constant 0.333333343 : f32
    %494 = vector.broadcast %cst_151 : f32 to vector<1x32xf32>
    %495 = arith.mulf %493, %494 : vector<1x32xf32>
    %cst_152 = arith.constant 0.899999976 : f32
    %496 = vector.broadcast %cst_152 : f32 to vector<1x32xf32>
    %497 = arith.mulf %496, %495 : vector<1x32xf32>
    %cst_153 = arith.constant 1.000000e-01 : f32
    %498 = vector.broadcast %cst_153 : f32 to vector<1x32xf32>
    %499 = arith.addf %497, %498 : vector<1x32xf32>
    %cst_154 = arith.constant 9.99999974E-6 : f32
    %500 = vector.broadcast %cst_154 : f32 to vector<1x32xf32>
    %501 = arith.addf %499, %500 : vector<1x32xf32>
    %502 = tpu.reciprocal %501 : vector<1x32xf32> -> vector<1x32xf32>
    %503 = arith.mulf %16, %502 : vector<1x32xf32>
    %cst_155 = arith.constant 0.899999976 : f32
    %504 = vector.broadcast %cst_155 : f32 to vector<1x32xf32>
    %505 = arith.mulf %504, %488 : vector<1x32xf32>
    %506 = vector.broadcast %505 : vector<1x32xf32> to vector<4x32xf32>
    %507 = arith.subf %484, %506 : vector<4x32xf32>
    %508 = vector.broadcast %503 : vector<1x32xf32> to vector<4x32xf32>
    %509 = arith.mulf %507, %508 : vector<4x32xf32>
    %510 = vector.broadcast %17 : vector<1x32xf32> to vector<4x32xf32>
    %511 = arith.addf %509, %510 : vector<4x32xf32>
    %512 = math.tanh %511 : vector<4x32xf32>
    %513 = arith.mulf %479, %512 : vector<4x32xf32>
    %c16 = arith.constant 16 : index
    %c0_156 = arith.constant 0 : index
    %514 = vector.load %arg25[%c16, %c0_156] : memref<32x32xf32, #tpu.memory_space<vmem>>, vector<4x32xf32>
    tpu.vector_store %arg25[%c16, %c0_156], %513 {strides = array<i32>} : memref<32x32xf32, #tpu.memory_space<vmem>>, vector<4x32xf32>,
    %515 = vector.extract_strided_slice %8 {offsets = [20, 0], sizes = [4, 128], strides = [1, 1]} : vector<32x128xf32> to vector<4x128xf32>
    %cst_157 = arith.constant dense<0.000000e+00> : vector<128xf32>
    %516 = vector.multi_reduction <add>, %515, %cst_157 [0] : vector<4x128xf32> to vector<128xf32>
    %517 = vector.shape_cast %516 : vector<128xf32> to vector<1x128xf32>
    %cst_158 = arith.constant 4.000000e+00 : f32
    %518 = vector.broadcast %cst_158 : f32 to vector<1x128xf32>
    %519 = arith.divf %517, %518 : vector<1x128xf32>
    %520 = vector.broadcast %519 : vector<1x128xf32> to vector<4x128xf32>
    %521 = arith.subf %515, %520 : vector<4x128xf32>
    %522 = arith.mulf %521, %521 : vector<4x128xf32>
    %cst_159 = arith.constant dense<0.000000e+00> : vector<128xf32>
    %523 = vector.multi_reduction <add>, %522, %cst_159 [0] : vector<4x128xf32> to vector<128xf32>
    %524 = vector.shape_cast %523 : vector<128xf32> to vector<1x128xf32>
    %cst_160 = arith.constant 0.333333343 : f32
    %525 = vector.broadcast %cst_160 : f32 to vector<1x128xf32>
    %526 = arith.mulf %524, %525 : vector<1x128xf32>
    %cst_161 = arith.constant 0.899999976 : f32
    %527 = vector.broadcast %cst_161 : f32 to vector<1x128xf32>
    %528 = arith.mulf %527, %526 : vector<1x128xf32>
    %cst_162 = arith.constant 1.000000e-01 : f32
    %529 = vector.broadcast %cst_162 : f32 to vector<1x128xf32>
    %530 = arith.addf %528, %529 : vector<1x128xf32>
    %cst_163 = arith.constant 9.99999974E-6 : f32
    %531 = vector.broadcast %cst_163 : f32 to vector<1x128xf32>
    %532 = arith.addf %530, %531 : vector<1x128xf32>
    %533 = tpu.reciprocal %532 : vector<1x128xf32> -> vector<1x128xf32>
    %534 = arith.mulf %14, %533 : vector<1x128xf32>
    %cst_164 = arith.constant 0.899999976 : f32
    %535 = vector.broadcast %cst_164 : f32 to vector<1x128xf32>
    %536 = arith.mulf %535, %519 : vector<1x128xf32>
    %537 = vector.broadcast %536 : vector<1x128xf32> to vector<4x128xf32>
    %538 = arith.subf %515, %537 : vector<4x128xf32>
    %539 = vector.broadcast %534 : vector<1x128xf32> to vector<4x128xf32>
    %540 = arith.mulf %538, %539 : vector<4x128xf32>
    %541 = arith.truncf %513 : vector<4x32xf32> to vector<4x32xbf16>
    %cst_165 = arith.constant dense<0.000000e+00> : vector<4x128xf32>
    %542 = tpu.matmul %541, %10, %cst_165 {dimension_numbers = #tpu.dot_dimension_numbers<[1], [0], [0], [1], [0, 0, 1, 1], [], []>} : vector<4x32xbf16>, vector<32x128xbf16>, vector<4x128xf32> -> vector<4x128xf32>
    %cst_166 = arith.constant dense<0.000000e+00> : vector<128xf32>
    %543 = vector.multi_reduction <add>, %542, %cst_166 [0] : vector<4x128xf32> to vector<128xf32>
    %544 = vector.shape_cast %543 : vector<128xf32> to vector<1x128xf32>
    %cst_167 = arith.constant 4.000000e+00 : f32
    %545 = vector.broadcast %cst_167 : f32 to vector<1x128xf32>
    %546 = arith.divf %544, %545 : vector<1x128xf32>
    %547 = vector.broadcast %546 : vector<1x128xf32> to vector<4x128xf32>
    %548 = arith.subf %542, %547 : vector<4x128xf32>
    %549 = arith.mulf %548, %548 : vector<4x128xf32>
    %cst_168 = arith.constant dense<0.000000e+00> : vector<128xf32>
    %550 = vector.multi_reduction <add>, %549, %cst_168 [0] : vector<4x128xf32> to vector<128xf32>
    %551 = vector.shape_cast %550 : vector<128xf32> to vector<1x128xf32>
    %cst_169 = arith.constant 0.333333343 : f32
    %552 = vector.broadcast %cst_169 : f32 to vector<1x128xf32>
    %553 = arith.mulf %551, %552 : vector<1x128xf32>
    %cst_170 = arith.constant 0.899999976 : f32
    %554 = vector.broadcast %cst_170 : f32 to vector<1x128xf32>
    %555 = arith.mulf %554, %553 : vector<1x128xf32>
    %cst_171 = arith.constant 1.000000e-01 : f32
    %556 = vector.broadcast %cst_171 : f32 to vector<1x128xf32>
    %557 = arith.addf %555, %556 : vector<1x128xf32>
    %cst_172 = arith.constant 9.99999974E-6 : f32
    %558 = vector.broadcast %cst_172 : f32 to vector<1x128xf32>
    %559 = arith.addf %557, %558 : vector<1x128xf32>
    %560 = tpu.reciprocal %559 : vector<1x128xf32> -> vector<1x128xf32>
    %561 = arith.mulf %15, %560 : vector<1x128xf32>
    %cst_173 = arith.constant 0.899999976 : f32
    %562 = vector.broadcast %cst_173 : f32 to vector<1x128xf32>
    %563 = arith.mulf %562, %546 : vector<1x128xf32>
    %564 = vector.broadcast %563 : vector<1x128xf32> to vector<4x128xf32>
    %565 = arith.subf %542, %564 : vector<4x128xf32>
    %566 = vector.broadcast %561 : vector<1x128xf32> to vector<4x128xf32>
    %567 = arith.mulf %565, %566 : vector<4x128xf32>
    %568 = arith.addf %567, %540 : vector<4x128xf32>
    %569 = arith.addf %568, %13 : vector<4x128xf32>
    %570 = vector.extract_strided_slice %569 {offsets = [0, 0], sizes = [4, 96], strides = [1, 1]} : vector<4x128xf32> to vector<4x96xf32>
    %571 = arith.negf %570 : vector<4x96xf32>
    %572 = math.exp %571 : vector<4x96xf32>
    %cst_174 = arith.constant 1.000000e+00 : f32
    %573 = vector.broadcast %cst_174 : f32 to vector<4x96xf32>
    %574 = arith.addf %573, %572 : vector<4x96xf32>
    %575 = arith.divf %573, %574 : vector<4x96xf32>
    %576 = vector.extract_strided_slice %575 {offsets = [0, 0], sizes = [4, 32], strides = [1, 1]} : vector<4x96xf32> to vector<4x32xf32>
    %577 = vector.extract_strided_slice %575 {offsets = [0, 32], sizes = [4, 32], strides = [1, 1]} : vector<4x96xf32> to vector<4x32xf32>
    %578 = vector.extract_strided_slice %575 {offsets = [0, 64], sizes = [4, 32], strides = [1, 1]} : vector<4x96xf32> to vector<4x32xf32>
    %579 = vector.extract_strided_slice %569 {offsets = [0, 96], sizes = [4, 32], strides = [1, 1]} : vector<4x128xf32> to vector<4x32xf32>
    %580 = math.tanh %579 : vector<4x32xf32>
    %581 = arith.mulf %576, %484 : vector<4x32xf32>
    %582 = arith.mulf %577, %580 : vector<4x32xf32>
    %583 = arith.addf %581, %582 : vector<4x32xf32>
    %cst_175 = arith.constant dense<0.000000e+00> : vector<32xf32>
    %584 = vector.multi_reduction <add>, %583, %cst_175 [0] : vector<4x32xf32> to vector<32xf32>
    %585 = vector.shape_cast %584 : vector<32xf32> to vector<1x32xf32>
    %cst_176 = arith.constant 4.000000e+00 : f32
    %586 = vector.broadcast %cst_176 : f32 to vector<1x32xf32>
    %587 = arith.divf %585, %586 : vector<1x32xf32>
    %588 = vector.broadcast %587 : vector<1x32xf32> to vector<4x32xf32>
    %589 = arith.subf %583, %588 : vector<4x32xf32>
    %590 = arith.mulf %589, %589 : vector<4x32xf32>
    %cst_177 = arith.constant dense<0.000000e+00> : vector<32xf32>
    %591 = vector.multi_reduction <add>, %590, %cst_177 [0] : vector<4x32xf32> to vector<32xf32>
    %592 = vector.shape_cast %591 : vector<32xf32> to vector<1x32xf32>
    %cst_178 = arith.constant 0.333333343 : f32
    %593 = vector.broadcast %cst_178 : f32 to vector<1x32xf32>
    %594 = arith.mulf %592, %593 : vector<1x32xf32>
    %cst_179 = arith.constant 0.899999976 : f32
    %595 = vector.broadcast %cst_179 : f32 to vector<1x32xf32>
    %596 = arith.mulf %595, %594 : vector<1x32xf32>
    %cst_180 = arith.constant 1.000000e-01 : f32
    %597 = vector.broadcast %cst_180 : f32 to vector<1x32xf32>
    %598 = arith.addf %596, %597 : vector<1x32xf32>
    %cst_181 = arith.constant 9.99999974E-6 : f32
    %599 = vector.broadcast %cst_181 : f32 to vector<1x32xf32>
    %600 = arith.addf %598, %599 : vector<1x32xf32>
    %601 = tpu.reciprocal %600 : vector<1x32xf32> -> vector<1x32xf32>
    %602 = arith.mulf %16, %601 : vector<1x32xf32>
    %cst_182 = arith.constant 0.899999976 : f32
    %603 = vector.broadcast %cst_182 : f32 to vector<1x32xf32>
    %604 = arith.mulf %603, %587 : vector<1x32xf32>
    %605 = vector.broadcast %604 : vector<1x32xf32> to vector<4x32xf32>
    %606 = arith.subf %583, %605 : vector<4x32xf32>
    %607 = vector.broadcast %602 : vector<1x32xf32> to vector<4x32xf32>
    %608 = arith.mulf %606, %607 : vector<4x32xf32>
    %609 = vector.broadcast %17 : vector<1x32xf32> to vector<4x32xf32>
    %610 = arith.addf %608, %609 : vector<4x32xf32>
    %611 = math.tanh %610 : vector<4x32xf32>
    %612 = arith.mulf %578, %611 : vector<4x32xf32>
    %c20 = arith.constant 20 : index
    %c0_183 = arith.constant 0 : index
    %613 = vector.load %arg25[%c20, %c0_183] : memref<32x32xf32, #tpu.memory_space<vmem>>, vector<4x32xf32>
    tpu.vector_store %arg25[%c20, %c0_183], %612 {strides = array<i32>} : memref<32x32xf32, #tpu.memory_space<vmem>>, vector<4x32xf32>,
    %614 = vector.extract_strided_slice %8 {offsets = [24, 0], sizes = [4, 128], strides = [1, 1]} : vector<32x128xf32> to vector<4x128xf32>
    %cst_184 = arith.constant dense<0.000000e+00> : vector<128xf32>
    %615 = vector.multi_reduction <add>, %614, %cst_184 [0] : vector<4x128xf32> to vector<128xf32>
    %616 = vector.shape_cast %615 : vector<128xf32> to vector<1x128xf32>
    %cst_185 = arith.constant 4.000000e+00 : f32
    %617 = vector.broadcast %cst_185 : f32 to vector<1x128xf32>
    %618 = arith.divf %616, %617 : vector<1x128xf32>
    %619 = vector.broadcast %618 : vector<1x128xf32> to vector<4x128xf32>
    %620 = arith.subf %614, %619 : vector<4x128xf32>
    %621 = arith.mulf %620, %620 : vector<4x128xf32>
    %cst_186 = arith.constant dense<0.000000e+00> : vector<128xf32>
    %622 = vector.multi_reduction <add>, %621, %cst_186 [0] : vector<4x128xf32> to vector<128xf32>
    %623 = vector.shape_cast %622 : vector<128xf32> to vector<1x128xf32>
    %cst_187 = arith.constant 0.333333343 : f32
    %624 = vector.broadcast %cst_187 : f32 to vector<1x128xf32>
    %625 = arith.mulf %623, %624 : vector<1x128xf32>
    %cst_188 = arith.constant 0.899999976 : f32
    %626 = vector.broadcast %cst_188 : f32 to vector<1x128xf32>
    %627 = arith.mulf %626, %625 : vector<1x128xf32>
    %cst_189 = arith.constant 1.000000e-01 : f32
    %628 = vector.broadcast %cst_189 : f32 to vector<1x128xf32>
    %629 = arith.addf %627, %628 : vector<1x128xf32>
    %cst_190 = arith.constant 9.99999974E-6 : f32
    %630 = vector.broadcast %cst_190 : f32 to vector<1x128xf32>
    %631 = arith.addf %629, %630 : vector<1x128xf32>
    %632 = tpu.reciprocal %631 : vector<1x128xf32> -> vector<1x128xf32>
    %633 = arith.mulf %14, %632 : vector<1x128xf32>
    %cst_191 = arith.constant 0.899999976 : f32
    %634 = vector.broadcast %cst_191 : f32 to vector<1x128xf32>
    %635 = arith.mulf %634, %618 : vector<1x128xf32>
    %636 = vector.broadcast %635 : vector<1x128xf32> to vector<4x128xf32>
    %637 = arith.subf %614, %636 : vector<4x128xf32>
    %638 = vector.broadcast %633 : vector<1x128xf32> to vector<4x128xf32>
    %639 = arith.mulf %637, %638 : vector<4x128xf32>
    %640 = arith.truncf %612 : vector<4x32xf32> to vector<4x32xbf16>
    %cst_192 = arith.constant dense<0.000000e+00> : vector<4x128xf32>
    %641 = tpu.matmul %640, %10, %cst_192 {dimension_numbers = #tpu.dot_dimension_numbers<[1], [0], [0], [1], [0, 0, 1, 1], [], []>} : vector<4x32xbf16>, vector<32x128xbf16>, vector<4x128xf32> -> vector<4x128xf32>
    %cst_193 = arith.constant dense<0.000000e+00> : vector<128xf32>
    %642 = vector.multi_reduction <add>, %641, %cst_193 [0] : vector<4x128xf32> to vector<128xf32>
    %643 = vector.shape_cast %642 : vector<128xf32> to vector<1x128xf32>
    %cst_194 = arith.constant 4.000000e+00 : f32
    %644 = vector.broadcast %cst_194 : f32 to vector<1x128xf32>
    %645 = arith.divf %643, %644 : vector<1x128xf32>
    %646 = vector.broadcast %645 : vector<1x128xf32> to vector<4x128xf32>
    %647 = arith.subf %641, %646 : vector<4x128xf32>
    %648 = arith.mulf %647, %647 : vector<4x128xf32>
    %cst_195 = arith.constant dense<0.000000e+00> : vector<128xf32>
    %649 = vector.multi_reduction <add>, %648, %cst_195 [0] : vector<4x128xf32> to vector<128xf32>
    %650 = vector.shape_cast %649 : vector<128xf32> to vector<1x128xf32>
    %cst_196 = arith.constant 0.333333343 : f32
    %651 = vector.broadcast %cst_196 : f32 to vector<1x128xf32>
    %652 = arith.mulf %650, %651 : vector<1x128xf32>
    %cst_197 = arith.constant 0.899999976 : f32
    %653 = vector.broadcast %cst_197 : f32 to vector<1x128xf32>
    %654 = arith.mulf %653, %652 : vector<1x128xf32>
    %cst_198 = arith.constant 1.000000e-01 : f32
    %655 = vector.broadcast %cst_198 : f32 to vector<1x128xf32>
    %656 = arith.addf %654, %655 : vector<1x128xf32>
    %cst_199 = arith.constant 9.99999974E-6 : f32
    %657 = vector.broadcast %cst_199 : f32 to vector<1x128xf32>
    %658 = arith.addf %656, %657 : vector<1x128xf32>
    %659 = tpu.reciprocal %658 : vector<1x128xf32> -> vector<1x128xf32>
    %660 = arith.mulf %15, %659 : vector<1x128xf32>
    %cst_200 = arith.constant 0.899999976 : f32
    %661 = vector.broadcast %cst_200 : f32 to vector<1x128xf32>
    %662 = arith.mulf %661, %645 : vector<1x128xf32>
    %663 = vector.broadcast %662 : vector<1x128xf32> to vector<4x128xf32>
    %664 = arith.subf %641, %663 : vector<4x128xf32>
    %665 = vector.broadcast %660 : vector<1x128xf32> to vector<4x128xf32>
    %666 = arith.mulf %664, %665 : vector<4x128xf32>
    %667 = arith.addf %666, %639 : vector<4x128xf32>
    %668 = arith.addf %667, %13 : vector<4x128xf32>
    %669 = vector.extract_strided_slice %668 {offsets = [0, 0], sizes = [4, 96], strides = [1, 1]} : vector<4x128xf32> to vector<4x96xf32>
    %670 = arith.negf %669 : vector<4x96xf32>
    %671 = math.exp %670 : vector<4x96xf32>
    %cst_201 = arith.constant 1.000000e+00 : f32
    %672 = vector.broadcast %cst_201 : f32 to vector<4x96xf32>
    %673 = arith.addf %672, %671 : vector<4x96xf32>
    %674 = arith.divf %672, %673 : vector<4x96xf32>
    %675 = vector.extract_strided_slice %674 {offsets = [0, 0], sizes = [4, 32], strides = [1, 1]} : vector<4x96xf32> to vector<4x32xf32>
    %676 = vector.extract_strided_slice %674 {offsets = [0, 32], sizes = [4, 32], strides = [1, 1]} : vector<4x96xf32> to vector<4x32xf32>
    %677 = vector.extract_strided_slice %674 {offsets = [0, 64], sizes = [4, 32], strides = [1, 1]} : vector<4x96xf32> to vector<4x32xf32>
    %678 = vector.extract_strided_slice %668 {offsets = [0, 96], sizes = [4, 32], strides = [1, 1]} : vector<4x128xf32> to vector<4x32xf32>
    %679 = math.tanh %678 : vector<4x32xf32>
    %680 = arith.mulf %675, %583 : vector<4x32xf32>
    %681 = arith.mulf %676, %679 : vector<4x32xf32>
    %682 = arith.addf %680, %681 : vector<4x32xf32>
    %cst_202 = arith.constant dense<0.000000e+00> : vector<32xf32>
    %683 = vector.multi_reduction <add>, %682, %cst_202 [0] : vector<4x32xf32> to vector<32xf32>
    %684 = vector.shape_cast %683 : vector<32xf32> to vector<1x32xf32>
    %cst_203 = arith.constant 4.000000e+00 : f32
    %685 = vector.broadcast %cst_203 : f32 to vector<1x32xf32>
    %686 = arith.divf %684, %685 : vector<1x32xf32>
    %687 = vector.broadcast %686 : vector<1x32xf32> to vector<4x32xf32>
    %688 = arith.subf %682, %687 : vector<4x32xf32>
    %689 = arith.mulf %688, %688 : vector<4x32xf32>
    %cst_204 = arith.constant dense<0.000000e+00> : vector<32xf32>
    %690 = vector.multi_reduction <add>, %689, %cst_204 [0] : vector<4x32xf32> to vector<32xf32>
    %691 = vector.shape_cast %690 : vector<32xf32> to vector<1x32xf32>
    %cst_205 = arith.constant 0.333333343 : f32
    %692 = vector.broadcast %cst_205 : f32 to vector<1x32xf32>
    %693 = arith.mulf %691, %692 : vector<1x32xf32>
    %cst_206 = arith.constant 0.899999976 : f32
    %694 = vector.broadcast %cst_206 : f32 to vector<1x32xf32>
    %695 = arith.mulf %694, %693 : vector<1x32xf32>
    %cst_207 = arith.constant 1.000000e-01 : f32
    %696 = vector.broadcast %cst_207 : f32 to vector<1x32xf32>
    %697 = arith.addf %695, %696 : vector<1x32xf32>
    %cst_208 = arith.constant 9.99999974E-6 : f32
    %698 = vector.broadcast %cst_208 : f32 to vector<1x32xf32>
    %699 = arith.addf %697, %698 : vector<1x32xf32>
    %700 = tpu.reciprocal %699 : vector<1x32xf32> -> vector<1x32xf32>
    %701 = arith.mulf %16, %700 : vector<1x32xf32>
    %cst_209 = arith.constant 0.899999976 : f32
    %702 = vector.broadcast %cst_209 : f32 to vector<1x32xf32>
    %703 = arith.mulf %702, %686 : vector<1x32xf32>
    %704 = vector.broadcast %703 : vector<1x32xf32> to vector<4x32xf32>
    %705 = arith.subf %682, %704 : vector<4x32xf32>
    %706 = vector.broadcast %701 : vector<1x32xf32> to vector<4x32xf32>
    %707 = arith.mulf %705, %706 : vector<4x32xf32>
    %708 = vector.broadcast %17 : vector<1x32xf32> to vector<4x32xf32>
    %709 = arith.addf %707, %708 : vector<4x32xf32>
    %710 = math.tanh %709 : vector<4x32xf32>
    %711 = arith.mulf %677, %710 : vector<4x32xf32>
    %c24 = arith.constant 24 : index
    %c0_210 = arith.constant 0 : index
    %712 = vector.load %arg25[%c24, %c0_210] : memref<32x32xf32, #tpu.memory_space<vmem>>, vector<4x32xf32>
    tpu.vector_store %arg25[%c24, %c0_210], %711 {strides = array<i32>} : memref<32x32xf32, #tpu.memory_space<vmem>>, vector<4x32xf32>,
    %713 = vector.extract_strided_slice %8 {offsets = [28, 0], sizes = [4, 128], strides = [1, 1]} : vector<32x128xf32> to vector<4x128xf32>
    %cst_211 = arith.constant dense<0.000000e+00> : vector<128xf32>
    %714 = vector.multi_reduction <add>, %713, %cst_211 [0] : vector<4x128xf32> to vector<128xf32>
    %715 = vector.shape_cast %714 : vector<128xf32> to vector<1x128xf32>
    %cst_212 = arith.constant 4.000000e+00 : f32
    %716 = vector.broadcast %cst_212 : f32 to vector<1x128xf32>
    %717 = arith.divf %715, %716 : vector<1x128xf32>
    %718 = vector.broadcast %717 : vector<1x128xf32> to vector<4x128xf32>
    %719 = arith.subf %713, %718 : vector<4x128xf32>
    %720 = arith.mulf %719, %719 : vector<4x128xf32>
    %cst_213 = arith.constant dense<0.000000e+00> : vector<128xf32>
    %721 = vector.multi_reduction <add>, %720, %cst_213 [0] : vector<4x128xf32> to vector<128xf32>
    %722 = vector.shape_cast %721 : vector<128xf32> to vector<1x128xf32>
    %cst_214 = arith.constant 0.333333343 : f32
    %723 = vector.broadcast %cst_214 : f32 to vector<1x128xf32>
    %724 = arith.mulf %722, %723 : vector<1x128xf32>
    %cst_215 = arith.constant 0.899999976 : f32
    %725 = vector.broadcast %cst_215 : f32 to vector<1x128xf32>
    %726 = arith.mulf %725, %724 : vector<1x128xf32>
    %cst_216 = arith.constant 1.000000e-01 : f32
    %727 = vector.broadcast %cst_216 : f32 to vector<1x128xf32>
    %728 = arith.addf %726, %727 : vector<1x128xf32>
    %cst_217 = arith.constant 9.99999974E-6 : f32
    %729 = vector.broadcast %cst_217 : f32 to vector<1x128xf32>
    %730 = arith.addf %728, %729 : vector<1x128xf32>
    %731 = tpu.reciprocal %730 : vector<1x128xf32> -> vector<1x128xf32>
    %732 = arith.mulf %14, %731 : vector<1x128xf32>
    %cst_218 = arith.constant 0.899999976 : f32
    %733 = vector.broadcast %cst_218 : f32 to vector<1x128xf32>
    %734 = arith.mulf %733, %717 : vector<1x128xf32>
    %735 = vector.broadcast %734 : vector<1x128xf32> to vector<4x128xf32>
    %736 = arith.subf %713, %735 : vector<4x128xf32>
    %737 = vector.broadcast %732 : vector<1x128xf32> to vector<4x128xf32>
    %738 = arith.mulf %736, %737 : vector<4x128xf32>
    %739 = arith.truncf %711 : vector<4x32xf32> to vector<4x32xbf16>
    %cst_219 = arith.constant dense<0.000000e+00> : vector<4x128xf32>
    %740 = tpu.matmul %739, %10, %cst_219 {dimension_numbers = #tpu.dot_dimension_numbers<[1], [0], [0], [1], [0, 0, 1, 1], [], []>} : vector<4x32xbf16>, vector<32x128xbf16>, vector<4x128xf32> -> vector<4x128xf32>
    %cst_220 = arith.constant dense<0.000000e+00> : vector<128xf32>
    %741 = vector.multi_reduction <add>, %740, %cst_220 [0] : vector<4x128xf32> to vector<128xf32>
    %742 = vector.shape_cast %741 : vector<128xf32> to vector<1x128xf32>
    %cst_221 = arith.constant 4.000000e+00 : f32
    %743 = vector.broadcast %cst_221 : f32 to vector<1x128xf32>
    %744 = arith.divf %742, %743 : vector<1x128xf32>
    %745 = vector.broadcast %744 : vector<1x128xf32> to vector<4x128xf32>
    %746 = arith.subf %740, %745 : vector<4x128xf32>
    %747 = arith.mulf %746, %746 : vector<4x128xf32>
    %cst_222 = arith.constant dense<0.000000e+00> : vector<128xf32>
    %748 = vector.multi_reduction <add>, %747, %cst_222 [0] : vector<4x128xf32> to vector<128xf32>
    %749 = vector.shape_cast %748 : vector<128xf32> to vector<1x128xf32>
    %cst_223 = arith.constant 0.333333343 : f32
    %750 = vector.broadcast %cst_223 : f32 to vector<1x128xf32>
    %751 = arith.mulf %749, %750 : vector<1x128xf32>
    %cst_224 = arith.constant 0.899999976 : f32
    %752 = vector.broadcast %cst_224 : f32 to vector<1x128xf32>
    %753 = arith.mulf %752, %751 : vector<1x128xf32>
    %cst_225 = arith.constant 1.000000e-01 : f32
    %754 = vector.broadcast %cst_225 : f32 to vector<1x128xf32>
    %755 = arith.addf %753, %754 : vector<1x128xf32>
    %cst_226 = arith.constant 9.99999974E-6 : f32
    %756 = vector.broadcast %cst_226 : f32 to vector<1x128xf32>
    %757 = arith.addf %755, %756 : vector<1x128xf32>
    %758 = tpu.reciprocal %757 : vector<1x128xf32> -> vector<1x128xf32>
    %759 = arith.mulf %15, %758 : vector<1x128xf32>
    %cst_227 = arith.constant 0.899999976 : f32
    %760 = vector.broadcast %cst_227 : f32 to vector<1x128xf32>
    %761 = arith.mulf %760, %744 : vector<1x128xf32>
    %762 = vector.broadcast %761 : vector<1x128xf32> to vector<4x128xf32>
    %763 = arith.subf %740, %762 : vector<4x128xf32>
    %764 = vector.broadcast %759 : vector<1x128xf32> to vector<4x128xf32>
    %765 = arith.mulf %763, %764 : vector<4x128xf32>
    %766 = arith.addf %765, %738 : vector<4x128xf32>
    %767 = arith.addf %766, %13 : vector<4x128xf32>
    %768 = vector.extract_strided_slice %767 {offsets = [0, 0], sizes = [4, 96], strides = [1, 1]} : vector<4x128xf32> to vector<4x96xf32>
    %769 = arith.negf %768 : vector<4x96xf32>
    %770 = math.exp %769 : vector<4x96xf32>
    %cst_228 = arith.constant 1.000000e+00 : f32
    %771 = vector.broadcast %cst_228 : f32 to vector<4x96xf32>
    %772 = arith.addf %771, %770 : vector<4x96xf32>
    %773 = arith.divf %771, %772 : vector<4x96xf32>
    %774 = vector.extract_strided_slice %773 {offsets = [0, 0], sizes = [4, 32], strides = [1, 1]} : vector<4x96xf32> to vector<4x32xf32>
    %775 = vector.extract_strided_slice %773 {offsets = [0, 32], sizes = [4, 32], strides = [1, 1]} : vector<4x96xf32> to vector<4x32xf32>
    %776 = vector.extract_strided_slice %773 {offsets = [0, 64], sizes = [4, 32], strides = [1, 1]} : vector<4x96xf32> to vector<4x32xf32>
    %777 = vector.extract_strided_slice %767 {offsets = [0, 96], sizes = [4, 32], strides = [1, 1]} : vector<4x128xf32> to vector<4x32xf32>
    %778 = math.tanh %777 : vector<4x32xf32>
    %779 = arith.mulf %774, %682 : vector<4x32xf32>
    %780 = arith.mulf %775, %778 : vector<4x32xf32>
    %781 = arith.addf %779, %780 : vector<4x32xf32>
    %cst_229 = arith.constant dense<0.000000e+00> : vector<32xf32>
    %782 = vector.multi_reduction <add>, %781, %cst_229 [0] : vector<4x32xf32> to vector<32xf32>
    %783 = vector.shape_cast %782 : vector<32xf32> to vector<1x32xf32>
    %cst_230 = arith.constant 4.000000e+00 : f32
    %784 = vector.broadcast %cst_230 : f32 to vector<1x32xf32>
    %785 = arith.divf %783, %784 : vector<1x32xf32>
    %786 = vector.broadcast %785 : vector<1x32xf32> to vector<4x32xf32>
    %787 = arith.subf %781, %786 : vector<4x32xf32>
    %788 = arith.mulf %787, %787 : vector<4x32xf32>
    %cst_231 = arith.constant dense<0.000000e+00> : vector<32xf32>
    %789 = vector.multi_reduction <add>, %788, %cst_231 [0] : vector<4x32xf32> to vector<32xf32>
    %790 = vector.shape_cast %789 : vector<32xf32> to vector<1x32xf32>
    %cst_232 = arith.constant 0.333333343 : f32
    %791 = vector.broadcast %cst_232 : f32 to vector<1x32xf32>
    %792 = arith.mulf %790, %791 : vector<1x32xf32>
    %cst_233 = arith.constant 0.899999976 : f32
    %793 = vector.broadcast %cst_233 : f32 to vector<1x32xf32>
    %794 = arith.mulf %793, %792 : vector<1x32xf32>
    %cst_234 = arith.constant 1.000000e-01 : f32
    %795 = vector.broadcast %cst_234 : f32 to vector<1x32xf32>
    %796 = arith.addf %794, %795 : vector<1x32xf32>
    %cst_235 = arith.constant 9.99999974E-6 : f32
    %797 = vector.broadcast %cst_235 : f32 to vector<1x32xf32>
    %798 = arith.addf %796, %797 : vector<1x32xf32>
    %799 = tpu.reciprocal %798 : vector<1x32xf32> -> vector<1x32xf32>
    %800 = arith.mulf %16, %799 : vector<1x32xf32>
    %cst_236 = arith.constant 0.899999976 : f32
    %801 = vector.broadcast %cst_236 : f32 to vector<1x32xf32>
    %802 = arith.mulf %801, %785 : vector<1x32xf32>
    %803 = vector.broadcast %802 : vector<1x32xf32> to vector<4x32xf32>
    %804 = arith.subf %781, %803 : vector<4x32xf32>
    %805 = vector.broadcast %800 : vector<1x32xf32> to vector<4x32xf32>
    %806 = arith.mulf %804, %805 : vector<4x32xf32>
    %807 = vector.broadcast %17 : vector<1x32xf32> to vector<4x32xf32>
    %808 = arith.addf %806, %807 : vector<4x32xf32>
    %809 = math.tanh %808 : vector<4x32xf32>
    %810 = arith.mulf %776, %809 : vector<4x32xf32>
    %c28 = arith.constant 28 : index
    %c0_237 = arith.constant 0 : index
    %811 = vector.load %arg25[%c28, %c0_237] : memref<32x32xf32, #tpu.memory_space<vmem>>, vector<4x32xf32>
    tpu.vector_store %arg25[%c28, %c0_237], %810 {strides = array<i32>} : memref<32x32xf32, #tpu.memory_space<vmem>>, vector<4x32xf32>,
    %c0_238 = arith.constant 0 : index
    %c0_239 = arith.constant 0 : index
    %812 = vector.load %arg21[%c0_238, %c0_239] : memref<4x32xf32, #tpu.memory_space<vmem>>, vector<4x32xf32>
    tpu.vector_store %arg21[%c0_238, %c0_239], %810 {strides = array<i32>} : memref<4x32xf32, #tpu.memory_space<vmem>>, vector<4x32xf32>,
    %c0_240 = arith.constant 0 : index
    %c0_241 = arith.constant 0 : index
    %813 = vector.load %arg23[%c0_240, %c0_241] : memref<4x32xf32, #tpu.memory_space<vmem>>, vector<4x32xf32>
    tpu.vector_store %arg23[%c0_240, %c0_241], %781 {strides = array<i32>} : memref<4x32xf32, #tpu.memory_space<vmem>>, vector<4x32xf32>,
    %c0_242 = arith.constant 0 : index
    %c0_243 = arith.constant 0 : index
    %814 = vector.load %arg25[%c0_242, %c0_243] : memref<32x32xf32, #tpu.memory_space<vmem>>, vector<32x32xf32>
    %815 = arith.truncf %814 : vector<32x32xf32> to vector<32x32xbf16>
    %c0_244 = arith.constant 0 : index
    %c0_245 = arith.constant 0 : index
    %816 = vector.load %arg11[%c0_244, %c0_245] : memref<32x128xf32, #tpu.memory_space<vmem>>, vector<32x128xf32>
    %817 = arith.truncf %816 : vector<32x128xf32> to vector<32x128xbf16>
    %cst_246 = arith.constant dense<0.000000e+00> : vector<32x128xf32>
    %818 = tpu.matmul %815, %817, %cst_246 {dimension_numbers = #tpu.dot_dimension_numbers<[1], [0], [0], [1], [0, 0, 1, 1], [], []>} : vector<32x32xbf16>, vector<32x128xbf16>, vector<32x128xf32> -> vector<32x128xf32>
    %c0_247 = arith.constant 0 : index
    %c0_248 = arith.constant 0 : index
    %819 = vector.load %arg12[%c0_247, %c0_248] : memref<32x128xf32, #tpu.memory_space<vmem>>, vector<32x128xf32>
    %820 = arith.truncf %819 : vector<32x128xf32> to vector<32x128xbf16>
    %c0_249 = arith.constant 0 : index
    %c0_250 = arith.constant 0 : index
    %821 = vector.load %arg13[%c0_249, %c0_250] : memref<1x128xf32, #tpu.memory_space<vmem>>, vector<1x128xf32>
    %822 = vector.shape_cast %821 : vector<1x128xf32> to vector<1x128xf32>
    %823 = vector.broadcast %822 : vector<1x128xf32> to vector<4x128xf32>
    %c0_251 = arith.constant 0 : index
    %c0_252 = arith.constant 0 : index
    %824 = vector.load %arg14[%c0_251, %c0_252] : memref<1x128xf32, #tpu.memory_space<vmem>>, vector<1x128xf32>
    %c0_253 = arith.constant 0 : index
    %c0_254 = arith.constant 0 : index
    %825 = vector.load %arg15[%c0_253, %c0_254] : memref<1x128xf32, #tpu.memory_space<vmem>>, vector<1x128xf32>
    %c0_255 = arith.constant 0 : index
    %c0_256 = arith.constant 0 : index
    %826 = vector.load %arg16[%c0_255, %c0_256] : memref<1x32xf32, #tpu.memory_space<vmem>>, vector<1x32xf32>
    %c0_257 = arith.constant 0 : index
    %c0_258 = arith.constant 0 : index
    %827 = vector.load %arg17[%c0_257, %c0_258] : memref<1x32xf32, #tpu.memory_space<vmem>>, vector<1x32xf32>
    %c0_259 = arith.constant 0 : index
    %c0_260 = arith.constant 0 : index
    %828 = vector.load %arg22[%c0_259, %c0_260] : memref<4x32xf32, #tpu.memory_space<vmem>>, vector<4x32xf32>
    %c0_261 = arith.constant 0 : index
    %c0_262 = arith.constant 0 : index
    %829 = vector.load %arg24[%c0_261, %c0_262] : memref<4x32xf32, #tpu.memory_space<vmem>>, vector<4x32xf32>
    %830 = vector.extract_strided_slice %818 {offsets = [0, 0], sizes = [4, 128], strides = [1, 1]} : vector<32x128xf32> to vector<4x128xf32>
    %cst_263 = arith.constant dense<0.000000e+00> : vector<128xf32>
    %831 = vector.multi_reduction <add>, %830, %cst_263 [0] : vector<4x128xf32> to vector<128xf32>
    %832 = vector.shape_cast %831 : vector<128xf32> to vector<1x128xf32>
    %cst_264 = arith.constant 4.000000e+00 : f32
    %833 = vector.broadcast %cst_264 : f32 to vector<1x128xf32>
    %834 = arith.divf %832, %833 : vector<1x128xf32>
    %835 = vector.broadcast %834 : vector<1x128xf32> to vector<4x128xf32>
    %836 = arith.subf %830, %835 : vector<4x128xf32>
    %837 = arith.mulf %836, %836 : vector<4x128xf32>
    %cst_265 = arith.constant dense<0.000000e+00> : vector<128xf32>
    %838 = vector.multi_reduction <add>, %837, %cst_265 [0] : vector<4x128xf32> to vector<128xf32>
    %839 = vector.shape_cast %838 : vector<128xf32> to vector<1x128xf32>
    %cst_266 = arith.constant 0.333333343 : f32
    %840 = vector.broadcast %cst_266 : f32 to vector<1x128xf32>
    %841 = arith.mulf %839, %840 : vector<1x128xf32>
    %cst_267 = arith.constant 0.899999976 : f32
    %842 = vector.broadcast %cst_267 : f32 to vector<1x128xf32>
    %843 = arith.mulf %842, %841 : vector<1x128xf32>
    %cst_268 = arith.constant 1.000000e-01 : f32
    %844 = vector.broadcast %cst_268 : f32 to vector<1x128xf32>
    %845 = arith.addf %843, %844 : vector<1x128xf32>
    %cst_269 = arith.constant 9.99999974E-6 : f32
    %846 = vector.broadcast %cst_269 : f32 to vector<1x128xf32>
    %847 = arith.addf %845, %846 : vector<1x128xf32>
    %848 = tpu.reciprocal %847 : vector<1x128xf32> -> vector<1x128xf32>
    %849 = arith.mulf %824, %848 : vector<1x128xf32>
    %cst_270 = arith.constant 0.899999976 : f32
    %850 = vector.broadcast %cst_270 : f32 to vector<1x128xf32>
    %851 = arith.mulf %850, %834 : vector<1x128xf32>
    %852 = vector.broadcast %851 : vector<1x128xf32> to vector<4x128xf32>
    %853 = arith.subf %830, %852 : vector<4x128xf32>
    %854 = vector.broadcast %849 : vector<1x128xf32> to vector<4x128xf32>
    %855 = arith.mulf %853, %854 : vector<4x128xf32>
    %856 = arith.truncf %828 : vector<4x32xf32> to vector<4x32xbf16>
    %cst_271 = arith.constant dense<0.000000e+00> : vector<4x128xf32>
    %857 = tpu.matmul %856, %820, %cst_271 {dimension_numbers = #tpu.dot_dimension_numbers<[1], [0], [0], [1], [0, 0, 1, 1], [], []>} : vector<4x32xbf16>, vector<32x128xbf16>, vector<4x128xf32> -> vector<4x128xf32>
    %cst_272 = arith.constant dense<0.000000e+00> : vector<128xf32>
    %858 = vector.multi_reduction <add>, %857, %cst_272 [0] : vector<4x128xf32> to vector<128xf32>
    %859 = vector.shape_cast %858 : vector<128xf32> to vector<1x128xf32>
    %cst_273 = arith.constant 4.000000e+00 : f32
    %860 = vector.broadcast %cst_273 : f32 to vector<1x128xf32>
    %861 = arith.divf %859, %860 : vector<1x128xf32>
    %862 = vector.broadcast %861 : vector<1x128xf32> to vector<4x128xf32>
    %863 = arith.subf %857, %862 : vector<4x128xf32>
    %864 = arith.mulf %863, %863 : vector<4x128xf32>
    %cst_274 = arith.constant dense<0.000000e+00> : vector<128xf32>
    %865 = vector.multi_reduction <add>, %864, %cst_274 [0] : vector<4x128xf32> to vector<128xf32>
    %866 = vector.shape_cast %865 : vector<128xf32> to vector<1x128xf32>
    %cst_275 = arith.constant 0.333333343 : f32
    %867 = vector.broadcast %cst_275 : f32 to vector<1x128xf32>
    %868 = arith.mulf %866, %867 : vector<1x128xf32>
    %cst_276 = arith.constant 0.899999976 : f32
    %869 = vector.broadcast %cst_276 : f32 to vector<1x128xf32>
    %870 = arith.mulf %869, %868 : vector<1x128xf32>
    %cst_277 = arith.constant 1.000000e-01 : f32
    %871 = vector.broadcast %cst_277 : f32 to vector<1x128xf32>
    %872 = arith.addf %870, %871 : vector<1x128xf32>
    %cst_278 = arith.constant 9.99999974E-6 : f32
    %873 = vector.broadcast %cst_278 : f32 to vector<1x128xf32>
    %874 = arith.addf %872, %873 : vector<1x128xf32>
    %875 = tpu.reciprocal %874 : vector<1x128xf32> -> vector<1x128xf32>
    %876 = arith.mulf %825, %875 : vector<1x128xf32>
    %cst_279 = arith.constant 0.899999976 : f32
    %877 = vector.broadcast %cst_279 : f32 to vector<1x128xf32>
    %878 = arith.mulf %877, %861 : vector<1x128xf32>
    %879 = vector.broadcast %878 : vector<1x128xf32> to vector<4x128xf32>
    %880 = arith.subf %857, %879 : vector<4x128xf32>
    %881 = vector.broadcast %876 : vector<1x128xf32> to vector<4x128xf32>
    %882 = arith.mulf %880, %881 : vector<4x128xf32>
    %883 = arith.addf %882, %855 : vector<4x128xf32>
    %884 = arith.addf %883, %823 : vector<4x128xf32>
    %885 = vector.extract_strided_slice %884 {offsets = [0, 0], sizes = [4, 96], strides = [1, 1]} : vector<4x128xf32> to vector<4x96xf32>
    %886 = arith.negf %885 : vector<4x96xf32>
    %887 = math.exp %886 : vector<4x96xf32>
    %cst_280 = arith.constant 1.000000e+00 : f32
    %888 = vector.broadcast %cst_280 : f32 to vector<4x96xf32>
    %889 = arith.addf %888, %887 : vector<4x96xf32>
    %890 = arith.divf %888, %889 : vector<4x96xf32>
    %891 = vector.extract_strided_slice %890 {offsets = [0, 0], sizes = [4, 32], strides = [1, 1]} : vector<4x96xf32> to vector<4x32xf32>
    %892 = vector.extract_strided_slice %890 {offsets = [0, 32], sizes = [4, 32], strides = [1, 1]} : vector<4x96xf32> to vector<4x32xf32>
    %893 = vector.extract_strided_slice %890 {offsets = [0, 64], sizes = [4, 32], strides = [1, 1]} : vector<4x96xf32> to vector<4x32xf32>
    %894 = vector.extract_strided_slice %884 {offsets = [0, 96], sizes = [4, 32], strides = [1, 1]} : vector<4x128xf32> to vector<4x32xf32>
    %895 = math.tanh %894 : vector<4x32xf32>
    %896 = arith.mulf %891, %829 : vector<4x32xf32>
    %897 = arith.mulf %892, %895 : vector<4x32xf32>
    %898 = arith.addf %896, %897 : vector<4x32xf32>
    %cst_281 = arith.constant dense<0.000000e+00> : vector<32xf32>
    %899 = vector.multi_reduction <add>, %898, %cst_281 [0] : vector<4x32xf32> to vector<32xf32>
    %900 = vector.shape_cast %899 : vector<32xf32> to vector<1x32xf32>
    %cst_282 = arith.constant 4.000000e+00 : f32
    %901 = vector.broadcast %cst_282 : f32 to vector<1x32xf32>
    %902 = arith.divf %900, %901 : vector<1x32xf32>
    %903 = vector.broadcast %902 : vector<1x32xf32> to vector<4x32xf32>
    %904 = arith.subf %898, %903 : vector<4x32xf32>
    %905 = arith.mulf %904, %904 : vector<4x32xf32>
    %cst_283 = arith.constant dense<0.000000e+00> : vector<32xf32>
    %906 = vector.multi_reduction <add>, %905, %cst_283 [0] : vector<4x32xf32> to vector<32xf32>
    %907 = vector.shape_cast %906 : vector<32xf32> to vector<1x32xf32>
    %cst_284 = arith.constant 0.333333343 : f32
    %908 = vector.broadcast %cst_284 : f32 to vector<1x32xf32>
    %909 = arith.mulf %907, %908 : vector<1x32xf32>
    %cst_285 = arith.constant 0.899999976 : f32
    %910 = vector.broadcast %cst_285 : f32 to vector<1x32xf32>
    %911 = arith.mulf %910, %909 : vector<1x32xf32>
    %cst_286 = arith.constant 1.000000e-01 : f32
    %912 = vector.broadcast %cst_286 : f32 to vector<1x32xf32>
    %913 = arith.addf %911, %912 : vector<1x32xf32>
    %cst_287 = arith.constant 9.99999974E-6 : f32
    %914 = vector.broadcast %cst_287 : f32 to vector<1x32xf32>
    %915 = arith.addf %913, %914 : vector<1x32xf32>
    %916 = tpu.reciprocal %915 : vector<1x32xf32> -> vector<1x32xf32>
    %917 = arith.mulf %826, %916 : vector<1x32xf32>
    %cst_288 = arith.constant 0.899999976 : f32
    %918 = vector.broadcast %cst_288 : f32 to vector<1x32xf32>
    %919 = arith.mulf %918, %902 : vector<1x32xf32>
    %920 = vector.broadcast %919 : vector<1x32xf32> to vector<4x32xf32>
    %921 = arith.subf %898, %920 : vector<4x32xf32>
    %922 = vector.broadcast %917 : vector<1x32xf32> to vector<4x32xf32>
    %923 = arith.mulf %921, %922 : vector<4x32xf32>
    %924 = vector.broadcast %827 : vector<1x32xf32> to vector<4x32xf32>
    %925 = arith.addf %923, %924 : vector<4x32xf32>
    %926 = math.tanh %925 : vector<4x32xf32>
    %927 = arith.mulf %893, %926 : vector<4x32xf32>
    %c0_289 = arith.constant 0 : index
    %c0_290 = arith.constant 0 : index
    %c0_291 = arith.constant 0 : index
    %928 = vector.load %arg18[%c0_289, %c0_290, %c0_291] : memref<8x4x32xf32, #tpu.memory_space<vmem>>, vector<1x4x32xf32>
    %929 = vector.shape_cast %928 : vector<1x4x32xf32> to vector<4x32xf32>
    %930 = vector.shape_cast %927 : vector<4x32xf32> to vector<1x4x32xf32>
    tpu.vector_store %arg18[%c0_289, %c0_290, %c0_291], %930 {strides = array<i32>} : memref<8x4x32xf32, #tpu.memory_space<vmem>>, vector<1x4x32xf32>,
    %931 = vector.extract_strided_slice %818 {offsets = [4, 0], sizes = [4, 128], strides = [1, 1]} : vector<32x128xf32> to vector<4x128xf32>
    %cst_292 = arith.constant dense<0.000000e+00> : vector<128xf32>
    %932 = vector.multi_reduction <add>, %931, %cst_292 [0] : vector<4x128xf32> to vector<128xf32>
    %933 = vector.shape_cast %932 : vector<128xf32> to vector<1x128xf32>
    %cst_293 = arith.constant 4.000000e+00 : f32
    %934 = vector.broadcast %cst_293 : f32 to vector<1x128xf32>
    %935 = arith.divf %933, %934 : vector<1x128xf32>
    %936 = vector.broadcast %935 : vector<1x128xf32> to vector<4x128xf32>
    %937 = arith.subf %931, %936 : vector<4x128xf32>
    %938 = arith.mulf %937, %937 : vector<4x128xf32>
    %cst_294 = arith.constant dense<0.000000e+00> : vector<128xf32>
    %939 = vector.multi_reduction <add>, %938, %cst_294 [0] : vector<4x128xf32> to vector<128xf32>
    %940 = vector.shape_cast %939 : vector<128xf32> to vector<1x128xf32>
    %cst_295 = arith.constant 0.333333343 : f32
    %941 = vector.broadcast %cst_295 : f32 to vector<1x128xf32>
    %942 = arith.mulf %940, %941 : vector<1x128xf32>
    %cst_296 = arith.constant 0.899999976 : f32
    %943 = vector.broadcast %cst_296 : f32 to vector<1x128xf32>
    %944 = arith.mulf %943, %942 : vector<1x128xf32>
    %cst_297 = arith.constant 1.000000e-01 : f32
    %945 = vector.broadcast %cst_297 : f32 to vector<1x128xf32>
    %946 = arith.addf %944, %945 : vector<1x128xf32>
    %cst_298 = arith.constant 9.99999974E-6 : f32
    %947 = vector.broadcast %cst_298 : f32 to vector<1x128xf32>
    %948 = arith.addf %946, %947 : vector<1x128xf32>
    %949 = tpu.reciprocal %948 : vector<1x128xf32> -> vector<1x128xf32>
    %950 = arith.mulf %824, %949 : vector<1x128xf32>
    %cst_299 = arith.constant 0.899999976 : f32
    %951 = vector.broadcast %cst_299 : f32 to vector<1x128xf32>
    %952 = arith.mulf %951, %935 : vector<1x128xf32>
    %953 = vector.broadcast %952 : vector<1x128xf32> to vector<4x128xf32>
    %954 = arith.subf %931, %953 : vector<4x128xf32>
    %955 = vector.broadcast %950 : vector<1x128xf32> to vector<4x128xf32>
    %956 = arith.mulf %954, %955 : vector<4x128xf32>
    %957 = arith.truncf %927 : vector<4x32xf32> to vector<4x32xbf16>
    %cst_300 = arith.constant dense<0.000000e+00> : vector<4x128xf32>
    %958 = tpu.matmul %957, %820, %cst_300 {dimension_numbers = #tpu.dot_dimension_numbers<[1], [0], [0], [1], [0, 0, 1, 1], [], []>} : vector<4x32xbf16>, vector<32x128xbf16>, vector<4x128xf32> -> vector<4x128xf32>
    %cst_301 = arith.constant dense<0.000000e+00> : vector<128xf32>
    %959 = vector.multi_reduction <add>, %958, %cst_301 [0] : vector<4x128xf32> to vector<128xf32>
    %960 = vector.shape_cast %959 : vector<128xf32> to vector<1x128xf32>
    %cst_302 = arith.constant 4.000000e+00 : f32
    %961 = vector.broadcast %cst_302 : f32 to vector<1x128xf32>
    %962 = arith.divf %960, %961 : vector<1x128xf32>
    %963 = vector.broadcast %962 : vector<1x128xf32> to vector<4x128xf32>
    %964 = arith.subf %958, %963 : vector<4x128xf32>
    %965 = arith.mulf %964, %964 : vector<4x128xf32>
    %cst_303 = arith.constant dense<0.000000e+00> : vector<128xf32>
    %966 = vector.multi_reduction <add>, %965, %cst_303 [0] : vector<4x128xf32> to vector<128xf32>
    %967 = vector.shape_cast %966 : vector<128xf32> to vector<1x128xf32>
    %cst_304 = arith.constant 0.333333343 : f32
    %968 = vector.broadcast %cst_304 : f32 to vector<1x128xf32>
    %969 = arith.mulf %967, %968 : vector<1x128xf32>
    %cst_305 = arith.constant 0.899999976 : f32
    %970 = vector.broadcast %cst_305 : f32 to vector<1x128xf32>
    %971 = arith.mulf %970, %969 : vector<1x128xf32>
    %cst_306 = arith.constant 1.000000e-01 : f32
    %972 = vector.broadcast %cst_306 : f32 to vector<1x128xf32>
    %973 = arith.addf %971, %972 : vector<1x128xf32>
    %cst_307 = arith.constant 9.99999974E-6 : f32
    %974 = vector.broadcast %cst_307 : f32 to vector<1x128xf32>
    %975 = arith.addf %973, %974 : vector<1x128xf32>
    %976 = tpu.reciprocal %975 : vector<1x128xf32> -> vector<1x128xf32>
    %977 = arith.mulf %825, %976 : vector<1x128xf32>
    %cst_308 = arith.constant 0.899999976 : f32
    %978 = vector.broadcast %cst_308 : f32 to vector<1x128xf32>
    %979 = arith.mulf %978, %962 : vector<1x128xf32>
    %980 = vector.broadcast %979 : vector<1x128xf32> to vector<4x128xf32>
    %981 = arith.subf %958, %980 : vector<4x128xf32>
    %982 = vector.broadcast %977 : vector<1x128xf32> to vector<4x128xf32>
    %983 = arith.mulf %981, %982 : vector<4x128xf32>
    %984 = arith.addf %983, %956 : vector<4x128xf32>
    %985 = arith.addf %984, %823 : vector<4x128xf32>
    %986 = vector.extract_strided_slice %985 {offsets = [0, 0], sizes = [4, 96], strides = [1, 1]} : vector<4x128xf32> to vector<4x96xf32>
    %987 = arith.negf %986 : vector<4x96xf32>
    %988 = math.exp %987 : vector<4x96xf32>
    %cst_309 = arith.constant 1.000000e+00 : f32
    %989 = vector.broadcast %cst_309 : f32 to vector<4x96xf32>
    %990 = arith.addf %989, %988 : vector<4x96xf32>
    %991 = arith.divf %989, %990 : vector<4x96xf32>
    %992 = vector.extract_strided_slice %991 {offsets = [0, 0], sizes = [4, 32], strides = [1, 1]} : vector<4x96xf32> to vector<4x32xf32>
    %993 = vector.extract_strided_slice %991 {offsets = [0, 32], sizes = [4, 32], strides = [1, 1]} : vector<4x96xf32> to vector<4x32xf32>
    %994 = vector.extract_strided_slice %991 {offsets = [0, 64], sizes = [4, 32], strides = [1, 1]} : vector<4x96xf32> to vector<4x32xf32>
    %995 = vector.extract_strided_slice %985 {offsets = [0, 96], sizes = [4, 32], strides = [1, 1]} : vector<4x128xf32> to vector<4x32xf32>
    %996 = math.tanh %995 : vector<4x32xf32>
    %997 = arith.mulf %992, %898 : vector<4x32xf32>
    %998 = arith.mulf %993, %996 : vector<4x32xf32>
    %999 = arith.addf %997, %998 : vector<4x32xf32>
    %cst_310 = arith.constant dense<0.000000e+00> : vector<32xf32>
    %1000 = vector.multi_reduction <add>, %999, %cst_310 [0] : vector<4x32xf32> to vector<32xf32>
    %1001 = vector.shape_cast %1000 : vector<32xf32> to vector<1x32xf32>
    %cst_311 = arith.constant 4.000000e+00 : f32
    %1002 = vector.broadcast %cst_311 : f32 to vector<1x32xf32>
    %1003 = arith.divf %1001, %1002 : vector<1x32xf32>
    %1004 = vector.broadcast %1003 : vector<1x32xf32> to vector<4x32xf32>
    %1005 = arith.subf %999, %1004 : vector<4x32xf32>
    %1006 = arith.mulf %1005, %1005 : vector<4x32xf32>
    %cst_312 = arith.constant dense<0.000000e+00> : vector<32xf32>
    %1007 = vector.multi_reduction <add>, %1006, %cst_312 [0] : vector<4x32xf32> to vector<32xf32>
    %1008 = vector.shape_cast %1007 : vector<32xf32> to vector<1x32xf32>
    %cst_313 = arith.constant 0.333333343 : f32
    %1009 = vector.broadcast %cst_313 : f32 to vector<1x32xf32>
    %1010 = arith.mulf %1008, %1009 : vector<1x32xf32>
    %cst_314 = arith.constant 0.899999976 : f32
    %1011 = vector.broadcast %cst_314 : f32 to vector<1x32xf32>
    %1012 = arith.mulf %1011, %1010 : vector<1x32xf32>
    %cst_315 = arith.constant 1.000000e-01 : f32
    %1013 = vector.broadcast %cst_315 : f32 to vector<1x32xf32>
    %1014 = arith.addf %1012, %1013 : vector<1x32xf32>
    %cst_316 = arith.constant 9.99999974E-6 : f32
    %1015 = vector.broadcast %cst_316 : f32 to vector<1x32xf32>
    %1016 = arith.addf %1014, %1015 : vector<1x32xf32>
    %1017 = tpu.reciprocal %1016 : vector<1x32xf32> -> vector<1x32xf32>
    %1018 = arith.mulf %826, %1017 : vector<1x32xf32>
    %cst_317 = arith.constant 0.899999976 : f32
    %1019 = vector.broadcast %cst_317 : f32 to vector<1x32xf32>
    %1020 = arith.mulf %1019, %1003 : vector<1x32xf32>
    %1021 = vector.broadcast %1020 : vector<1x32xf32> to vector<4x32xf32>
    %1022 = arith.subf %999, %1021 : vector<4x32xf32>
    %1023 = vector.broadcast %1018 : vector<1x32xf32> to vector<4x32xf32>
    %1024 = arith.mulf %1022, %1023 : vector<4x32xf32>
    %1025 = vector.broadcast %827 : vector<1x32xf32> to vector<4x32xf32>
    %1026 = arith.addf %1024, %1025 : vector<4x32xf32>
    %1027 = math.tanh %1026 : vector<4x32xf32>
    %1028 = arith.mulf %994, %1027 : vector<4x32xf32>
    %c1 = arith.constant 1 : index
    %c0_318 = arith.constant 0 : index
    %c0_319 = arith.constant 0 : index
    %1029 = vector.load %arg18[%c1, %c0_318, %c0_319] : memref<8x4x32xf32, #tpu.memory_space<vmem>>, vector<1x4x32xf32>
    %1030 = vector.shape_cast %1029 : vector<1x4x32xf32> to vector<4x32xf32>
    %1031 = vector.shape_cast %1028 : vector<4x32xf32> to vector<1x4x32xf32>
    tpu.vector_store %arg18[%c1, %c0_318, %c0_319], %1031 {strides = array<i32>} : memref<8x4x32xf32, #tpu.memory_space<vmem>>, vector<1x4x32xf32>,
    %1032 = vector.extract_strided_slice %818 {offsets = [8, 0], sizes = [4, 128], strides = [1, 1]} : vector<32x128xf32> to vector<4x128xf32>
    %cst_320 = arith.constant dense<0.000000e+00> : vector<128xf32>
    %1033 = vector.multi_reduction <add>, %1032, %cst_320 [0] : vector<4x128xf32> to vector<128xf32>
    %1034 = vector.shape_cast %1033 : vector<128xf32> to vector<1x128xf32>
    %cst_321 = arith.constant 4.000000e+00 : f32
    %1035 = vector.broadcast %cst_321 : f32 to vector<1x128xf32>
    %1036 = arith.divf %1034, %1035 : vector<1x128xf32>
    %1037 = vector.broadcast %1036 : vector<1x128xf32> to vector<4x128xf32>
    %1038 = arith.subf %1032, %1037 : vector<4x128xf32>
    %1039 = arith.mulf %1038, %1038 : vector<4x128xf32>
    %cst_322 = arith.constant dense<0.000000e+00> : vector<128xf32>
    %1040 = vector.multi_reduction <add>, %1039, %cst_322 [0] : vector<4x128xf32> to vector<128xf32>
    %1041 = vector.shape_cast %1040 : vector<128xf32> to vector<1x128xf32>
    %cst_323 = arith.constant 0.333333343 : f32
    %1042 = vector.broadcast %cst_323 : f32 to vector<1x128xf32>
    %1043 = arith.mulf %1041, %1042 : vector<1x128xf32>
    %cst_324 = arith.constant 0.899999976 : f32
    %1044 = vector.broadcast %cst_324 : f32 to vector<1x128xf32>
    %1045 = arith.mulf %1044, %1043 : vector<1x128xf32>
    %cst_325 = arith.constant 1.000000e-01 : f32
    %1046 = vector.broadcast %cst_325 : f32 to vector<1x128xf32>
    %1047 = arith.addf %1045, %1046 : vector<1x128xf32>
    %cst_326 = arith.constant 9.99999974E-6 : f32
    %1048 = vector.broadcast %cst_326 : f32 to vector<1x128xf32>
    %1049 = arith.addf %1047, %1048 : vector<1x128xf32>
    %1050 = tpu.reciprocal %1049 : vector<1x128xf32> -> vector<1x128xf32>
    %1051 = arith.mulf %824, %1050 : vector<1x128xf32>
    %cst_327 = arith.constant 0.899999976 : f32
    %1052 = vector.broadcast %cst_327 : f32 to vector<1x128xf32>
    %1053 = arith.mulf %1052, %1036 : vector<1x128xf32>
    %1054 = vector.broadcast %1053 : vector<1x128xf32> to vector<4x128xf32>
    %1055 = arith.subf %1032, %1054 : vector<4x128xf32>
    %1056 = vector.broadcast %1051 : vector<1x128xf32> to vector<4x128xf32>
    %1057 = arith.mulf %1055, %1056 : vector<4x128xf32>
    %1058 = arith.truncf %1028 : vector<4x32xf32> to vector<4x32xbf16>
    %cst_328 = arith.constant dense<0.000000e+00> : vector<4x128xf32>
    %1059 = tpu.matmul %1058, %820, %cst_328 {dimension_numbers = #tpu.dot_dimension_numbers<[1], [0], [0], [1], [0, 0, 1, 1], [], []>} : vector<4x32xbf16>, vector<32x128xbf16>, vector<4x128xf32> -> vector<4x128xf32>
    %cst_329 = arith.constant dense<0.000000e+00> : vector<128xf32>
    %1060 = vector.multi_reduction <add>, %1059, %cst_329 [0] : vector<4x128xf32> to vector<128xf32>
    %1061 = vector.shape_cast %1060 : vector<128xf32> to vector<1x128xf32>
    %cst_330 = arith.constant 4.000000e+00 : f32
    %1062 = vector.broadcast %cst_330 : f32 to vector<1x128xf32>
    %1063 = arith.divf %1061, %1062 : vector<1x128xf32>
    %1064 = vector.broadcast %1063 : vector<1x128xf32> to vector<4x128xf32>
    %1065 = arith.subf %1059, %1064 : vector<4x128xf32>
    %1066 = arith.mulf %1065, %1065 : vector<4x128xf32>
    %cst_331 = arith.constant dense<0.000000e+00> : vector<128xf32>
    %1067 = vector.multi_reduction <add>, %1066, %cst_331 [0] : vector<4x128xf32> to vector<128xf32>
    %1068 = vector.shape_cast %1067 : vector<128xf32> to vector<1x128xf32>
    %cst_332 = arith.constant 0.333333343 : f32
    %1069 = vector.broadcast %cst_332 : f32 to vector<1x128xf32>
    %1070 = arith.mulf %1068, %1069 : vector<1x128xf32>
    %cst_333 = arith.constant 0.899999976 : f32
    %1071 = vector.broadcast %cst_333 : f32 to vector<1x128xf32>
    %1072 = arith.mulf %1071, %1070 : vector<1x128xf32>
    %cst_334 = arith.constant 1.000000e-01 : f32
    %1073 = vector.broadcast %cst_334 : f32 to vector<1x128xf32>
    %1074 = arith.addf %1072, %1073 : vector<1x128xf32>
    %cst_335 = arith.constant 9.99999974E-6 : f32
    %1075 = vector.broadcast %cst_335 : f32 to vector<1x128xf32>
    %1076 = arith.addf %1074, %1075 : vector<1x128xf32>
    %1077 = tpu.reciprocal %1076 : vector<1x128xf32> -> vector<1x128xf32>
    %1078 = arith.mulf %825, %1077 : vector<1x128xf32>
    %cst_336 = arith.constant 0.899999976 : f32
    %1079 = vector.broadcast %cst_336 : f32 to vector<1x128xf32>
    %1080 = arith.mulf %1079, %1063 : vector<1x128xf32>
    %1081 = vector.broadcast %1080 : vector<1x128xf32> to vector<4x128xf32>
    %1082 = arith.subf %1059, %1081 : vector<4x128xf32>
    %1083 = vector.broadcast %1078 : vector<1x128xf32> to vector<4x128xf32>
    %1084 = arith.mulf %1082, %1083 : vector<4x128xf32>
    %1085 = arith.addf %1084, %1057 : vector<4x128xf32>
    %1086 = arith.addf %1085, %823 : vector<4x128xf32>
    %1087 = vector.extract_strided_slice %1086 {offsets = [0, 0], sizes = [4, 96], strides = [1, 1]} : vector<4x128xf32> to vector<4x96xf32>
    %1088 = arith.negf %1087 : vector<4x96xf32>
    %1089 = math.exp %1088 : vector<4x96xf32>
    %cst_337 = arith.constant 1.000000e+00 : f32
    %1090 = vector.broadcast %cst_337 : f32 to vector<4x96xf32>
    %1091 = arith.addf %1090, %1089 : vector<4x96xf32>
    %1092 = arith.divf %1090, %1091 : vector<4x96xf32>
    %1093 = vector.extract_strided_slice %1092 {offsets = [0, 0], sizes = [4, 32], strides = [1, 1]} : vector<4x96xf32> to vector<4x32xf32>
    %1094 = vector.extract_strided_slice %1092 {offsets = [0, 32], sizes = [4, 32], strides = [1, 1]} : vector<4x96xf32> to vector<4x32xf32>
    %1095 = vector.extract_strided_slice %1092 {offsets = [0, 64], sizes = [4, 32], strides = [1, 1]} : vector<4x96xf32> to vector<4x32xf32>
    %1096 = vector.extract_strided_slice %1086 {offsets = [0, 96], sizes = [4, 32], strides = [1, 1]} : vector<4x128xf32> to vector<4x32xf32>
    %1097 = math.tanh %1096 : vector<4x32xf32>
    %1098 = arith.mulf %1093, %999 : vector<4x32xf32>
    %1099 = arith.mulf %1094, %1097 : vector<4x32xf32>
    %1100 = arith.addf %1098, %1099 : vector<4x32xf32>
    %cst_338 = arith.constant dense<0.000000e+00> : vector<32xf32>
    %1101 = vector.multi_reduction <add>, %1100, %cst_338 [0] : vector<4x32xf32> to vector<32xf32>
    %1102 = vector.shape_cast %1101 : vector<32xf32> to vector<1x32xf32>
    %cst_339 = arith.constant 4.000000e+00 : f32
    %1103 = vector.broadcast %cst_339 : f32 to vector<1x32xf32>
    %1104 = arith.divf %1102, %1103 : vector<1x32xf32>
    %1105 = vector.broadcast %1104 : vector<1x32xf32> to vector<4x32xf32>
    %1106 = arith.subf %1100, %1105 : vector<4x32xf32>
    %1107 = arith.mulf %1106, %1106 : vector<4x32xf32>
    %cst_340 = arith.constant dense<0.000000e+00> : vector<32xf32>
    %1108 = vector.multi_reduction <add>, %1107, %cst_340 [0] : vector<4x32xf32> to vector<32xf32>
    %1109 = vector.shape_cast %1108 : vector<32xf32> to vector<1x32xf32>
    %cst_341 = arith.constant 0.333333343 : f32
    %1110 = vector.broadcast %cst_341 : f32 to vector<1x32xf32>
    %1111 = arith.mulf %1109, %1110 : vector<1x32xf32>
    %cst_342 = arith.constant 0.899999976 : f32
    %1112 = vector.broadcast %cst_342 : f32 to vector<1x32xf32>
    %1113 = arith.mulf %1112, %1111 : vector<1x32xf32>
    %cst_343 = arith.constant 1.000000e-01 : f32
    %1114 = vector.broadcast %cst_343 : f32 to vector<1x32xf32>
    %1115 = arith.addf %1113, %1114 : vector<1x32xf32>
    %cst_344 = arith.constant 9.99999974E-6 : f32
    %1116 = vector.broadcast %cst_344 : f32 to vector<1x32xf32>
    %1117 = arith.addf %1115, %1116 : vector<1x32xf32>
    %1118 = tpu.reciprocal %1117 : vector<1x32xf32> -> vector<1x32xf32>
    %1119 = arith.mulf %826, %1118 : vector<1x32xf32>
    %cst_345 = arith.constant 0.899999976 : f32
    %1120 = vector.broadcast %cst_345 : f32 to vector<1x32xf32>
    %1121 = arith.mulf %1120, %1104 : vector<1x32xf32>
    %1122 = vector.broadcast %1121 : vector<1x32xf32> to vector<4x32xf32>
    %1123 = arith.subf %1100, %1122 : vector<4x32xf32>
    %1124 = vector.broadcast %1119 : vector<1x32xf32> to vector<4x32xf32>
    %1125 = arith.mulf %1123, %1124 : vector<4x32xf32>
    %1126 = vector.broadcast %827 : vector<1x32xf32> to vector<4x32xf32>
    %1127 = arith.addf %1125, %1126 : vector<4x32xf32>
    %1128 = math.tanh %1127 : vector<4x32xf32>
    %1129 = arith.mulf %1095, %1128 : vector<4x32xf32>
    %c2 = arith.constant 2 : index
    %c0_346 = arith.constant 0 : index
    %c0_347 = arith.constant 0 : index
    %1130 = vector.load %arg18[%c2, %c0_346, %c0_347] : memref<8x4x32xf32, #tpu.memory_space<vmem>>, vector<1x4x32xf32>
    %1131 = vector.shape_cast %1130 : vector<1x4x32xf32> to vector<4x32xf32>
    %1132 = vector.shape_cast %1129 : vector<4x32xf32> to vector<1x4x32xf32>
    tpu.vector_store %arg18[%c2, %c0_346, %c0_347], %1132 {strides = array<i32>} : memref<8x4x32xf32, #tpu.memory_space<vmem>>, vector<1x4x32xf32>,
    %1133 = vector.extract_strided_slice %818 {offsets = [12, 0], sizes = [4, 128], strides = [1, 1]} : vector<32x128xf32> to vector<4x128xf32>
    %cst_348 = arith.constant dense<0.000000e+00> : vector<128xf32>
    %1134 = vector.multi_reduction <add>, %1133, %cst_348 [0] : vector<4x128xf32> to vector<128xf32>
    %1135 = vector.shape_cast %1134 : vector<128xf32> to vector<1x128xf32>
    %cst_349 = arith.constant 4.000000e+00 : f32
    %1136 = vector.broadcast %cst_349 : f32 to vector<1x128xf32>
    %1137 = arith.divf %1135, %1136 : vector<1x128xf32>
    %1138 = vector.broadcast %1137 : vector<1x128xf32> to vector<4x128xf32>
    %1139 = arith.subf %1133, %1138 : vector<4x128xf32>
    %1140 = arith.mulf %1139, %1139 : vector<4x128xf32>
    %cst_350 = arith.constant dense<0.000000e+00> : vector<128xf32>
    %1141 = vector.multi_reduction <add>, %1140, %cst_350 [0] : vector<4x128xf32> to vector<128xf32>
    %1142 = vector.shape_cast %1141 : vector<128xf32> to vector<1x128xf32>
    %cst_351 = arith.constant 0.333333343 : f32
    %1143 = vector.broadcast %cst_351 : f32 to vector<1x128xf32>
    %1144 = arith.mulf %1142, %1143 : vector<1x128xf32>
    %cst_352 = arith.constant 0.899999976 : f32
    %1145 = vector.broadcast %cst_352 : f32 to vector<1x128xf32>
    %1146 = arith.mulf %1145, %1144 : vector<1x128xf32>
    %cst_353 = arith.constant 1.000000e-01 : f32
    %1147 = vector.broadcast %cst_353 : f32 to vector<1x128xf32>
    %1148 = arith.addf %1146, %1147 : vector<1x128xf32>
    %cst_354 = arith.constant 9.99999974E-6 : f32
    %1149 = vector.broadcast %cst_354 : f32 to vector<1x128xf32>
    %1150 = arith.addf %1148, %1149 : vector<1x128xf32>
    %1151 = tpu.reciprocal %1150 : vector<1x128xf32> -> vector<1x128xf32>
    %1152 = arith.mulf %824, %1151 : vector<1x128xf32>
    %cst_355 = arith.constant 0.899999976 : f32
    %1153 = vector.broadcast %cst_355 : f32 to vector<1x128xf32>
    %1154 = arith.mulf %1153, %1137 : vector<1x128xf32>
    %1155 = vector.broadcast %1154 : vector<1x128xf32> to vector<4x128xf32>
    %1156 = arith.subf %1133, %1155 : vector<4x128xf32>
    %1157 = vector.broadcast %1152 : vector<1x128xf32> to vector<4x128xf32>
    %1158 = arith.mulf %1156, %1157 : vector<4x128xf32>
    %1159 = arith.truncf %1129 : vector<4x32xf32> to vector<4x32xbf16>
    %cst_356 = arith.constant dense<0.000000e+00> : vector<4x128xf32>
    %1160 = tpu.matmul %1159, %820, %cst_356 {dimension_numbers = #tpu.dot_dimension_numbers<[1], [0], [0], [1], [0, 0, 1, 1], [], []>} : vector<4x32xbf16>, vector<32x128xbf16>, vector<4x128xf32> -> vector<4x128xf32>
    %cst_357 = arith.constant dense<0.000000e+00> : vector<128xf32>
    %1161 = vector.multi_reduction <add>, %1160, %cst_357 [0] : vector<4x128xf32> to vector<128xf32>
    %1162 = vector.shape_cast %1161 : vector<128xf32> to vector<1x128xf32>
    %cst_358 = arith.constant 4.000000e+00 : f32
    %1163 = vector.broadcast %cst_358 : f32 to vector<1x128xf32>
    %1164 = arith.divf %1162, %1163 : vector<1x128xf32>
    %1165 = vector.broadcast %1164 : vector<1x128xf32> to vector<4x128xf32>
    %1166 = arith.subf %1160, %1165 : vector<4x128xf32>
    %1167 = arith.mulf %1166, %1166 : vector<4x128xf32>
    %cst_359 = arith.constant dense<0.000000e+00> : vector<128xf32>
    %1168 = vector.multi_reduction <add>, %1167, %cst_359 [0] : vector<4x128xf32> to vector<128xf32>
    %1169 = vector.shape_cast %1168 : vector<128xf32> to vector<1x128xf32>
    %cst_360 = arith.constant 0.333333343 : f32
    %1170 = vector.broadcast %cst_360 : f32 to vector<1x128xf32>
    %1171 = arith.mulf %1169, %1170 : vector<1x128xf32>
    %cst_361 = arith.constant 0.899999976 : f32
    %1172 = vector.broadcast %cst_361 : f32 to vector<1x128xf32>
    %1173 = arith.mulf %1172, %1171 : vector<1x128xf32>
    %cst_362 = arith.constant 1.000000e-01 : f32
    %1174 = vector.broadcast %cst_362 : f32 to vector<1x128xf32>
    %1175 = arith.addf %1173, %1174 : vector<1x128xf32>
    %cst_363 = arith.constant 9.99999974E-6 : f32
    %1176 = vector.broadcast %cst_363 : f32 to vector<1x128xf32>
    %1177 = arith.addf %1175, %1176 : vector<1x128xf32>
    %1178 = tpu.reciprocal %1177 : vector<1x128xf32> -> vector<1x128xf32>
    %1179 = arith.mulf %825, %1178 : vector<1x128xf32>
    %cst_364 = arith.constant 0.899999976 : f32
    %1180 = vector.broadcast %cst_364 : f32 to vector<1x128xf32>
    %1181 = arith.mulf %1180, %1164 : vector<1x128xf32>
    %1182 = vector.broadcast %1181 : vector<1x128xf32> to vector<4x128xf32>
    %1183 = arith.subf %1160, %1182 : vector<4x128xf32>
    %1184 = vector.broadcast %1179 : vector<1x128xf32> to vector<4x128xf32>
    %1185 = arith.mulf %1183, %1184 : vector<4x128xf32>
    %1186 = arith.addf %1185, %1158 : vector<4x128xf32>
    %1187 = arith.addf %1186, %823 : vector<4x128xf32>
    %1188 = vector.extract_strided_slice %1187 {offsets = [0, 0], sizes = [4, 96], strides = [1, 1]} : vector<4x128xf32> to vector<4x96xf32>
    %1189 = arith.negf %1188 : vector<4x96xf32>
    %1190 = math.exp %1189 : vector<4x96xf32>
    %cst_365 = arith.constant 1.000000e+00 : f32
    %1191 = vector.broadcast %cst_365 : f32 to vector<4x96xf32>
    %1192 = arith.addf %1191, %1190 : vector<4x96xf32>
    %1193 = arith.divf %1191, %1192 : vector<4x96xf32>
    %1194 = vector.extract_strided_slice %1193 {offsets = [0, 0], sizes = [4, 32], strides = [1, 1]} : vector<4x96xf32> to vector<4x32xf32>
    %1195 = vector.extract_strided_slice %1193 {offsets = [0, 32], sizes = [4, 32], strides = [1, 1]} : vector<4x96xf32> to vector<4x32xf32>
    %1196 = vector.extract_strided_slice %1193 {offsets = [0, 64], sizes = [4, 32], strides = [1, 1]} : vector<4x96xf32> to vector<4x32xf32>
    %1197 = vector.extract_strided_slice %1187 {offsets = [0, 96], sizes = [4, 32], strides = [1, 1]} : vector<4x128xf32> to vector<4x32xf32>
    %1198 = math.tanh %1197 : vector<4x32xf32>
    %1199 = arith.mulf %1194, %1100 : vector<4x32xf32>
    %1200 = arith.mulf %1195, %1198 : vector<4x32xf32>
    %1201 = arith.addf %1199, %1200 : vector<4x32xf32>
    %cst_366 = arith.constant dense<0.000000e+00> : vector<32xf32>
    %1202 = vector.multi_reduction <add>, %1201, %cst_366 [0] : vector<4x32xf32> to vector<32xf32>
    %1203 = vector.shape_cast %1202 : vector<32xf32> to vector<1x32xf32>
    %cst_367 = arith.constant 4.000000e+00 : f32
    %1204 = vector.broadcast %cst_367 : f32 to vector<1x32xf32>
    %1205 = arith.divf %1203, %1204 : vector<1x32xf32>
    %1206 = vector.broadcast %1205 : vector<1x32xf32> to vector<4x32xf32>
    %1207 = arith.subf %1201, %1206 : vector<4x32xf32>
    %1208 = arith.mulf %1207, %1207 : vector<4x32xf32>
    %cst_368 = arith.constant dense<0.000000e+00> : vector<32xf32>
    %1209 = vector.multi_reduction <add>, %1208, %cst_368 [0] : vector<4x32xf32> to vector<32xf32>
    %1210 = vector.shape_cast %1209 : vector<32xf32> to vector<1x32xf32>
    %cst_369 = arith.constant 0.333333343 : f32
    %1211 = vector.broadcast %cst_369 : f32 to vector<1x32xf32>
    %1212 = arith.mulf %1210, %1211 : vector<1x32xf32>
    %cst_370 = arith.constant 0.899999976 : f32
    %1213 = vector.broadcast %cst_370 : f32 to vector<1x32xf32>
    %1214 = arith.mulf %1213, %1212 : vector<1x32xf32>
    %cst_371 = arith.constant 1.000000e-01 : f32
    %1215 = vector.broadcast %cst_371 : f32 to vector<1x32xf32>
    %1216 = arith.addf %1214, %1215 : vector<1x32xf32>
    %cst_372 = arith.constant 9.99999974E-6 : f32
    %1217 = vector.broadcast %cst_372 : f32 to vector<1x32xf32>
    %1218 = arith.addf %1216, %1217 : vector<1x32xf32>
    %1219 = tpu.reciprocal %1218 : vector<1x32xf32> -> vector<1x32xf32>
    %1220 = arith.mulf %826, %1219 : vector<1x32xf32>
    %cst_373 = arith.constant 0.899999976 : f32
    %1221 = vector.broadcast %cst_373 : f32 to vector<1x32xf32>
    %1222 = arith.mulf %1221, %1205 : vector<1x32xf32>
    %1223 = vector.broadcast %1222 : vector<1x32xf32> to vector<4x32xf32>
    %1224 = arith.subf %1201, %1223 : vector<4x32xf32>
    %1225 = vector.broadcast %1220 : vector<1x32xf32> to vector<4x32xf32>
    %1226 = arith.mulf %1224, %1225 : vector<4x32xf32>
    %1227 = vector.broadcast %827 : vector<1x32xf32> to vector<4x32xf32>
    %1228 = arith.addf %1226, %1227 : vector<4x32xf32>
    %1229 = math.tanh %1228 : vector<4x32xf32>
    %1230 = arith.mulf %1196, %1229 : vector<4x32xf32>
    %c3 = arith.constant 3 : index
    %c0_374 = arith.constant 0 : index
    %c0_375 = arith.constant 0 : index
    %1231 = vector.load %arg18[%c3, %c0_374, %c0_375] : memref<8x4x32xf32, #tpu.memory_space<vmem>>, vector<1x4x32xf32>
    %1232 = vector.shape_cast %1231 : vector<1x4x32xf32> to vector<4x32xf32>
    %1233 = vector.shape_cast %1230 : vector<4x32xf32> to vector<1x4x32xf32>
    tpu.vector_store %arg18[%c3, %c0_374, %c0_375], %1233 {strides = array<i32>} : memref<8x4x32xf32, #tpu.memory_space<vmem>>, vector<1x4x32xf32>,
    %1234 = vector.extract_strided_slice %818 {offsets = [16, 0], sizes = [4, 128], strides = [1, 1]} : vector<32x128xf32> to vector<4x128xf32>
    %cst_376 = arith.constant dense<0.000000e+00> : vector<128xf32>
    %1235 = vector.multi_reduction <add>, %1234, %cst_376 [0] : vector<4x128xf32> to vector<128xf32>
    %1236 = vector.shape_cast %1235 : vector<128xf32> to vector<1x128xf32>
    %cst_377 = arith.constant 4.000000e+00 : f32
    %1237 = vector.broadcast %cst_377 : f32 to vector<1x128xf32>
    %1238 = arith.divf %1236, %1237 : vector<1x128xf32>
    %1239 = vector.broadcast %1238 : vector<1x128xf32> to vector<4x128xf32>
    %1240 = arith.subf %1234, %1239 : vector<4x128xf32>
    %1241 = arith.mulf %1240, %1240 : vector<4x128xf32>
    %cst_378 = arith.constant dense<0.000000e+00> : vector<128xf32>
    %1242 = vector.multi_reduction <add>, %1241, %cst_378 [0] : vector<4x128xf32> to vector<128xf32>
    %1243 = vector.shape_cast %1242 : vector<128xf32> to vector<1x128xf32>
    %cst_379 = arith.constant 0.333333343 : f32
    %1244 = vector.broadcast %cst_379 : f32 to vector<1x128xf32>
    %1245 = arith.mulf %1243, %1244 : vector<1x128xf32>
    %cst_380 = arith.constant 0.899999976 : f32
    %1246 = vector.broadcast %cst_380 : f32 to vector<1x128xf32>
    %1247 = arith.mulf %1246, %1245 : vector<1x128xf32>
    %cst_381 = arith.constant 1.000000e-01 : f32
    %1248 = vector.broadcast %cst_381 : f32 to vector<1x128xf32>
    %1249 = arith.addf %1247, %1248 : vector<1x128xf32>
    %cst_382 = arith.constant 9.99999974E-6 : f32
    %1250 = vector.broadcast %cst_382 : f32 to vector<1x128xf32>
    %1251 = arith.addf %1249, %1250 : vector<1x128xf32>
    %1252 = tpu.reciprocal %1251 : vector<1x128xf32> -> vector<1x128xf32>
    %1253 = arith.mulf %824, %1252 : vector<1x128xf32>
    %cst_383 = arith.constant 0.899999976 : f32
    %1254 = vector.broadcast %cst_383 : f32 to vector<1x128xf32>
    %1255 = arith.mulf %1254, %1238 : vector<1x128xf32>
    %1256 = vector.broadcast %1255 : vector<1x128xf32> to vector<4x128xf32>
    %1257 = arith.subf %1234, %1256 : vector<4x128xf32>
    %1258 = vector.broadcast %1253 : vector<1x128xf32> to vector<4x128xf32>
    %1259 = arith.mulf %1257, %1258 : vector<4x128xf32>
    %1260 = arith.truncf %1230 : vector<4x32xf32> to vector<4x32xbf16>
    %cst_384 = arith.constant dense<0.000000e+00> : vector<4x128xf32>
    %1261 = tpu.matmul %1260, %820, %cst_384 {dimension_numbers = #tpu.dot_dimension_numbers<[1], [0], [0], [1], [0, 0, 1, 1], [], []>} : vector<4x32xbf16>, vector<32x128xbf16>, vector<4x128xf32> -> vector<4x128xf32>
    %cst_385 = arith.constant dense<0.000000e+00> : vector<128xf32>
    %1262 = vector.multi_reduction <add>, %1261, %cst_385 [0] : vector<4x128xf32> to vector<128xf32>
    %1263 = vector.shape_cast %1262 : vector<128xf32> to vector<1x128xf32>
    %cst_386 = arith.constant 4.000000e+00 : f32
    %1264 = vector.broadcast %cst_386 : f32 to vector<1x128xf32>
    %1265 = arith.divf %1263, %1264 : vector<1x128xf32>
    %1266 = vector.broadcast %1265 : vector<1x128xf32> to vector<4x128xf32>
    %1267 = arith.subf %1261, %1266 : vector<4x128xf32>
    %1268 = arith.mulf %1267, %1267 : vector<4x128xf32>
    %cst_387 = arith.constant dense<0.000000e+00> : vector<128xf32>
    %1269 = vector.multi_reduction <add>, %1268, %cst_387 [0] : vector<4x128xf32> to vector<128xf32>
    %1270 = vector.shape_cast %1269 : vector<128xf32> to vector<1x128xf32>
    %cst_388 = arith.constant 0.333333343 : f32
    %1271 = vector.broadcast %cst_388 : f32 to vector<1x128xf32>
    %1272 = arith.mulf %1270, %1271 : vector<1x128xf32>
    %cst_389 = arith.constant 0.899999976 : f32
    %1273 = vector.broadcast %cst_389 : f32 to vector<1x128xf32>
    %1274 = arith.mulf %1273, %1272 : vector<1x128xf32>
    %cst_390 = arith.constant 1.000000e-01 : f32
    %1275 = vector.broadcast %cst_390 : f32 to vector<1x128xf32>
    %1276 = arith.addf %1274, %1275 : vector<1x128xf32>
    %cst_391 = arith.constant 9.99999974E-6 : f32
    %1277 = vector.broadcast %cst_391 : f32 to vector<1x128xf32>
    %1278 = arith.addf %1276, %1277 : vector<1x128xf32>
    %1279 = tpu.reciprocal %1278 : vector<1x128xf32> -> vector<1x128xf32>
    %1280 = arith.mulf %825, %1279 : vector<1x128xf32>
    %cst_392 = arith.constant 0.899999976 : f32
    %1281 = vector.broadcast %cst_392 : f32 to vector<1x128xf32>
    %1282 = arith.mulf %1281, %1265 : vector<1x128xf32>
    %1283 = vector.broadcast %1282 : vector<1x128xf32> to vector<4x128xf32>
    %1284 = arith.subf %1261, %1283 : vector<4x128xf32>
    %1285 = vector.broadcast %1280 : vector<1x128xf32> to vector<4x128xf32>
    %1286 = arith.mulf %1284, %1285 : vector<4x128xf32>
    %1287 = arith.addf %1286, %1259 : vector<4x128xf32>
    %1288 = arith.addf %1287, %823 : vector<4x128xf32>
    %1289 = vector.extract_strided_slice %1288 {offsets = [0, 0], sizes = [4, 96], strides = [1, 1]} : vector<4x128xf32> to vector<4x96xf32>
    %1290 = arith.negf %1289 : vector<4x96xf32>
    %1291 = math.exp %1290 : vector<4x96xf32>
    %cst_393 = arith.constant 1.000000e+00 : f32
    %1292 = vector.broadcast %cst_393 : f32 to vector<4x96xf32>
    %1293 = arith.addf %1292, %1291 : vector<4x96xf32>
    %1294 = arith.divf %1292, %1293 : vector<4x96xf32>
    %1295 = vector.extract_strided_slice %1294 {offsets = [0, 0], sizes = [4, 32], strides = [1, 1]} : vector<4x96xf32> to vector<4x32xf32>
    %1296 = vector.extract_strided_slice %1294 {offsets = [0, 32], sizes = [4, 32], strides = [1, 1]} : vector<4x96xf32> to vector<4x32xf32>
    %1297 = vector.extract_strided_slice %1294 {offsets = [0, 64], sizes = [4, 32], strides = [1, 1]} : vector<4x96xf32> to vector<4x32xf32>
    %1298 = vector.extract_strided_slice %1288 {offsets = [0, 96], sizes = [4, 32], strides = [1, 1]} : vector<4x128xf32> to vector<4x32xf32>
    %1299 = math.tanh %1298 : vector<4x32xf32>
    %1300 = arith.mulf %1295, %1201 : vector<4x32xf32>
    %1301 = arith.mulf %1296, %1299 : vector<4x32xf32>
    %1302 = arith.addf %1300, %1301 : vector<4x32xf32>
    %cst_394 = arith.constant dense<0.000000e+00> : vector<32xf32>
    %1303 = vector.multi_reduction <add>, %1302, %cst_394 [0] : vector<4x32xf32> to vector<32xf32>
    %1304 = vector.shape_cast %1303 : vector<32xf32> to vector<1x32xf32>
    %cst_395 = arith.constant 4.000000e+00 : f32
    %1305 = vector.broadcast %cst_395 : f32 to vector<1x32xf32>
    %1306 = arith.divf %1304, %1305 : vector<1x32xf32>
    %1307 = vector.broadcast %1306 : vector<1x32xf32> to vector<4x32xf32>
    %1308 = arith.subf %1302, %1307 : vector<4x32xf32>
    %1309 = arith.mulf %1308, %1308 : vector<4x32xf32>
    %cst_396 = arith.constant dense<0.000000e+00> : vector<32xf32>
    %1310 = vector.multi_reduction <add>, %1309, %cst_396 [0] : vector<4x32xf32> to vector<32xf32>
    %1311 = vector.shape_cast %1310 : vector<32xf32> to vector<1x32xf32>
    %cst_397 = arith.constant 0.333333343 : f32
    %1312 = vector.broadcast %cst_397 : f32 to vector<1x32xf32>
    %1313 = arith.mulf %1311, %1312 : vector<1x32xf32>
    %cst_398 = arith.constant 0.899999976 : f32
    %1314 = vector.broadcast %cst_398 : f32 to vector<1x32xf32>
    %1315 = arith.mulf %1314, %1313 : vector<1x32xf32>
    %cst_399 = arith.constant 1.000000e-01 : f32
    %1316 = vector.broadcast %cst_399 : f32 to vector<1x32xf32>
    %1317 = arith.addf %1315, %1316 : vector<1x32xf32>
    %cst_400 = arith.constant 9.99999974E-6 : f32
    %1318 = vector.broadcast %cst_400 : f32 to vector<1x32xf32>
    %1319 = arith.addf %1317, %1318 : vector<1x32xf32>
    %1320 = tpu.reciprocal %1319 : vector<1x32xf32> -> vector<1x32xf32>
    %1321 = arith.mulf %826, %1320 : vector<1x32xf32>
    %cst_401 = arith.constant 0.899999976 : f32
    %1322 = vector.broadcast %cst_401 : f32 to vector<1x32xf32>
    %1323 = arith.mulf %1322, %1306 : vector<1x32xf32>
    %1324 = vector.broadcast %1323 : vector<1x32xf32> to vector<4x32xf32>
    %1325 = arith.subf %1302, %1324 : vector<4x32xf32>
    %1326 = vector.broadcast %1321 : vector<1x32xf32> to vector<4x32xf32>
    %1327 = arith.mulf %1325, %1326 : vector<4x32xf32>
    %1328 = vector.broadcast %827 : vector<1x32xf32> to vector<4x32xf32>
    %1329 = arith.addf %1327, %1328 : vector<4x32xf32>
    %1330 = math.tanh %1329 : vector<4x32xf32>
    %1331 = arith.mulf %1297, %1330 : vector<4x32xf32>
    %c4_402 = arith.constant 4 : index
    %c0_403 = arith.constant 0 : index
    %c0_404 = arith.constant 0 : index
    %1332 = vector.load %arg18[%c4_402, %c0_403, %c0_404] : memref<8x4x32xf32, #tpu.memory_space<vmem>>, vector<1x4x32xf32>
    %1333 = vector.shape_cast %1332 : vector<1x4x32xf32> to vector<4x32xf32>
    %1334 = vector.shape_cast %1331 : vector<4x32xf32> to vector<1x4x32xf32>
    tpu.vector_store %arg18[%c4_402, %c0_403, %c0_404], %1334 {strides = array<i32>} : memref<8x4x32xf32, #tpu.memory_space<vmem>>, vector<1x4x32xf32>,
    %1335 = vector.extract_strided_slice %818 {offsets = [20, 0], sizes = [4, 128], strides = [1, 1]} : vector<32x128xf32> to vector<4x128xf32>
    %cst_405 = arith.constant dense<0.000000e+00> : vector<128xf32>
    %1336 = vector.multi_reduction <add>, %1335, %cst_405 [0] : vector<4x128xf32> to vector<128xf32>
    %1337 = vector.shape_cast %1336 : vector<128xf32> to vector<1x128xf32>
    %cst_406 = arith.constant 4.000000e+00 : f32
    %1338 = vector.broadcast %cst_406 : f32 to vector<1x128xf32>
    %1339 = arith.divf %1337, %1338 : vector<1x128xf32>
    %1340 = vector.broadcast %1339 : vector<1x128xf32> to vector<4x128xf32>
    %1341 = arith.subf %1335, %1340 : vector<4x128xf32>
    %1342 = arith.mulf %1341, %1341 : vector<4x128xf32>
    %cst_407 = arith.constant dense<0.000000e+00> : vector<128xf32>
    %1343 = vector.multi_reduction <add>, %1342, %cst_407 [0] : vector<4x128xf32> to vector<128xf32>
    %1344 = vector.shape_cast %1343 : vector<128xf32> to vector<1x128xf32>
    %cst_408 = arith.constant 0.333333343 : f32
    %1345 = vector.broadcast %cst_408 : f32 to vector<1x128xf32>
    %1346 = arith.mulf %1344, %1345 : vector<1x128xf32>
    %cst_409 = arith.constant 0.899999976 : f32
    %1347 = vector.broadcast %cst_409 : f32 to vector<1x128xf32>
    %1348 = arith.mulf %1347, %1346 : vector<1x128xf32>
    %cst_410 = arith.constant 1.000000e-01 : f32
    %1349 = vector.broadcast %cst_410 : f32 to vector<1x128xf32>
    %1350 = arith.addf %1348, %1349 : vector<1x128xf32>
    %cst_411 = arith.constant 9.99999974E-6 : f32
    %1351 = vector.broadcast %cst_411 : f32 to vector<1x128xf32>
    %1352 = arith.addf %1350, %1351 : vector<1x128xf32>
    %1353 = tpu.reciprocal %1352 : vector<1x128xf32> -> vector<1x128xf32>
    %1354 = arith.mulf %824, %1353 : vector<1x128xf32>
    %cst_412 = arith.constant 0.899999976 : f32
    %1355 = vector.broadcast %cst_412 : f32 to vector<1x128xf32>
    %1356 = arith.mulf %1355, %1339 : vector<1x128xf32>
    %1357 = vector.broadcast %1356 : vector<1x128xf32> to vector<4x128xf32>
    %1358 = arith.subf %1335, %1357 : vector<4x128xf32>
    %1359 = vector.broadcast %1354 : vector<1x128xf32> to vector<4x128xf32>
    %1360 = arith.mulf %1358, %1359 : vector<4x128xf32>
    %1361 = arith.truncf %1331 : vector<4x32xf32> to vector<4x32xbf16>
    %cst_413 = arith.constant dense<0.000000e+00> : vector<4x128xf32>
    %1362 = tpu.matmul %1361, %820, %cst_413 {dimension_numbers = #tpu.dot_dimension_numbers<[1], [0], [0], [1], [0, 0, 1, 1], [], []>} : vector<4x32xbf16>, vector<32x128xbf16>, vector<4x128xf32> -> vector<4x128xf32>
    %cst_414 = arith.constant dense<0.000000e+00> : vector<128xf32>
    %1363 = vector.multi_reduction <add>, %1362, %cst_414 [0] : vector<4x128xf32> to vector<128xf32>
    %1364 = vector.shape_cast %1363 : vector<128xf32> to vector<1x128xf32>
    %cst_415 = arith.constant 4.000000e+00 : f32
    %1365 = vector.broadcast %cst_415 : f32 to vector<1x128xf32>
    %1366 = arith.divf %1364, %1365 : vector<1x128xf32>
    %1367 = vector.broadcast %1366 : vector<1x128xf32> to vector<4x128xf32>
    %1368 = arith.subf %1362, %1367 : vector<4x128xf32>
    %1369 = arith.mulf %1368, %1368 : vector<4x128xf32>
    %cst_416 = arith.constant dense<0.000000e+00> : vector<128xf32>
    %1370 = vector.multi_reduction <add>, %1369, %cst_416 [0] : vector<4x128xf32> to vector<128xf32>
    %1371 = vector.shape_cast %1370 : vector<128xf32> to vector<1x128xf32>
    %cst_417 = arith.constant 0.333333343 : f32
    %1372 = vector.broadcast %cst_417 : f32 to vector<1x128xf32>
    %1373 = arith.mulf %1371, %1372 : vector<1x128xf32>
    %cst_418 = arith.constant 0.899999976 : f32
    %1374 = vector.broadcast %cst_418 : f32 to vector<1x128xf32>
    %1375 = arith.mulf %1374, %1373 : vector<1x128xf32>
    %cst_419 = arith.constant 1.000000e-01 : f32
    %1376 = vector.broadcast %cst_419 : f32 to vector<1x128xf32>
    %1377 = arith.addf %1375, %1376 : vector<1x128xf32>
    %cst_420 = arith.constant 9.99999974E-6 : f32
    %1378 = vector.broadcast %cst_420 : f32 to vector<1x128xf32>
    %1379 = arith.addf %1377, %1378 : vector<1x128xf32>
    %1380 = tpu.reciprocal %1379 : vector<1x128xf32> -> vector<1x128xf32>
    %1381 = arith.mulf %825, %1380 : vector<1x128xf32>
    %cst_421 = arith.constant 0.899999976 : f32
    %1382 = vector.broadcast %cst_421 : f32 to vector<1x128xf32>
    %1383 = arith.mulf %1382, %1366 : vector<1x128xf32>
    %1384 = vector.broadcast %1383 : vector<1x128xf32> to vector<4x128xf32>
    %1385 = arith.subf %1362, %1384 : vector<4x128xf32>
    %1386 = vector.broadcast %1381 : vector<1x128xf32> to vector<4x128xf32>
    %1387 = arith.mulf %1385, %1386 : vector<4x128xf32>
    %1388 = arith.addf %1387, %1360 : vector<4x128xf32>
    %1389 = arith.addf %1388, %823 : vector<4x128xf32>
    %1390 = vector.extract_strided_slice %1389 {offsets = [0, 0], sizes = [4, 96], strides = [1, 1]} : vector<4x128xf32> to vector<4x96xf32>
    %1391 = arith.negf %1390 : vector<4x96xf32>
    %1392 = math.exp %1391 : vector<4x96xf32>
    %cst_422 = arith.constant 1.000000e+00 : f32
    %1393 = vector.broadcast %cst_422 : f32 to vector<4x96xf32>
    %1394 = arith.addf %1393, %1392 : vector<4x96xf32>
    %1395 = arith.divf %1393, %1394 : vector<4x96xf32>
    %1396 = vector.extract_strided_slice %1395 {offsets = [0, 0], sizes = [4, 32], strides = [1, 1]} : vector<4x96xf32> to vector<4x32xf32>
    %1397 = vector.extract_strided_slice %1395 {offsets = [0, 32], sizes = [4, 32], strides = [1, 1]} : vector<4x96xf32> to vector<4x32xf32>
    %1398 = vector.extract_strided_slice %1395 {offsets = [0, 64], sizes = [4, 32], strides = [1, 1]} : vector<4x96xf32> to vector<4x32xf32>
    %1399 = vector.extract_strided_slice %1389 {offsets = [0, 96], sizes = [4, 32], strides = [1, 1]} : vector<4x128xf32> to vector<4x32xf32>
    %1400 = math.tanh %1399 : vector<4x32xf32>
    %1401 = arith.mulf %1396, %1302 : vector<4x32xf32>
    %1402 = arith.mulf %1397, %1400 : vector<4x32xf32>
    %1403 = arith.addf %1401, %1402 : vector<4x32xf32>
    %cst_423 = arith.constant dense<0.000000e+00> : vector<32xf32>
    %1404 = vector.multi_reduction <add>, %1403, %cst_423 [0] : vector<4x32xf32> to vector<32xf32>
    %1405 = vector.shape_cast %1404 : vector<32xf32> to vector<1x32xf32>
    %cst_424 = arith.constant 4.000000e+00 : f32
    %1406 = vector.broadcast %cst_424 : f32 to vector<1x32xf32>
    %1407 = arith.divf %1405, %1406 : vector<1x32xf32>
    %1408 = vector.broadcast %1407 : vector<1x32xf32> to vector<4x32xf32>
    %1409 = arith.subf %1403, %1408 : vector<4x32xf32>
    %1410 = arith.mulf %1409, %1409 : vector<4x32xf32>
    %cst_425 = arith.constant dense<0.000000e+00> : vector<32xf32>
    %1411 = vector.multi_reduction <add>, %1410, %cst_425 [0] : vector<4x32xf32> to vector<32xf32>
    %1412 = vector.shape_cast %1411 : vector<32xf32> to vector<1x32xf32>
    %cst_426 = arith.constant 0.333333343 : f32
    %1413 = vector.broadcast %cst_426 : f32 to vector<1x32xf32>
    %1414 = arith.mulf %1412, %1413 : vector<1x32xf32>
    %cst_427 = arith.constant 0.899999976 : f32
    %1415 = vector.broadcast %cst_427 : f32 to vector<1x32xf32>
    %1416 = arith.mulf %1415, %1414 : vector<1x32xf32>
    %cst_428 = arith.constant 1.000000e-01 : f32
    %1417 = vector.broadcast %cst_428 : f32 to vector<1x32xf32>
    %1418 = arith.addf %1416, %1417 : vector<1x32xf32>
    %cst_429 = arith.constant 9.99999974E-6 : f32
    %1419 = vector.broadcast %cst_429 : f32 to vector<1x32xf32>
    %1420 = arith.addf %1418, %1419 : vector<1x32xf32>
    %1421 = tpu.reciprocal %1420 : vector<1x32xf32> -> vector<1x32xf32>
    %1422 = arith.mulf %826, %1421 : vector<1x32xf32>
    %cst_430 = arith.constant 0.899999976 : f32
    %1423 = vector.broadcast %cst_430 : f32 to vector<1x32xf32>
    %1424 = arith.mulf %1423, %1407 : vector<1x32xf32>
    %1425 = vector.broadcast %1424 : vector<1x32xf32> to vector<4x32xf32>
    %1426 = arith.subf %1403, %1425 : vector<4x32xf32>
    %1427 = vector.broadcast %1422 : vector<1x32xf32> to vector<4x32xf32>
    %1428 = arith.mulf %1426, %1427 : vector<4x32xf32>
    %1429 = vector.broadcast %827 : vector<1x32xf32> to vector<4x32xf32>
    %1430 = arith.addf %1428, %1429 : vector<4x32xf32>
    %1431 = math.tanh %1430 : vector<4x32xf32>
    %1432 = arith.mulf %1398, %1431 : vector<4x32xf32>
    %c5 = arith.constant 5 : index
    %c0_431 = arith.constant 0 : index
    %c0_432 = arith.constant 0 : index
    %1433 = vector.load %arg18[%c5, %c0_431, %c0_432] : memref<8x4x32xf32, #tpu.memory_space<vmem>>, vector<1x4x32xf32>
    %1434 = vector.shape_cast %1433 : vector<1x4x32xf32> to vector<4x32xf32>
    %1435 = vector.shape_cast %1432 : vector<4x32xf32> to vector<1x4x32xf32>
    tpu.vector_store %arg18[%c5, %c0_431, %c0_432], %1435 {strides = array<i32>} : memref<8x4x32xf32, #tpu.memory_space<vmem>>, vector<1x4x32xf32>,
    %1436 = vector.extract_strided_slice %818 {offsets = [24, 0], sizes = [4, 128], strides = [1, 1]} : vector<32x128xf32> to vector<4x128xf32>
    %cst_433 = arith.constant dense<0.000000e+00> : vector<128xf32>
    %1437 = vector.multi_reduction <add>, %1436, %cst_433 [0] : vector<4x128xf32> to vector<128xf32>
    %1438 = vector.shape_cast %1437 : vector<128xf32> to vector<1x128xf32>
    %cst_434 = arith.constant 4.000000e+00 : f32
    %1439 = vector.broadcast %cst_434 : f32 to vector<1x128xf32>
    %1440 = arith.divf %1438, %1439 : vector<1x128xf32>
    %1441 = vector.broadcast %1440 : vector<1x128xf32> to vector<4x128xf32>
    %1442 = arith.subf %1436, %1441 : vector<4x128xf32>
    %1443 = arith.mulf %1442, %1442 : vector<4x128xf32>
    %cst_435 = arith.constant dense<0.000000e+00> : vector<128xf32>
    %1444 = vector.multi_reduction <add>, %1443, %cst_435 [0] : vector<4x128xf32> to vector<128xf32>
    %1445 = vector.shape_cast %1444 : vector<128xf32> to vector<1x128xf32>
    %cst_436 = arith.constant 0.333333343 : f32
    %1446 = vector.broadcast %cst_436 : f32 to vector<1x128xf32>
    %1447 = arith.mulf %1445, %1446 : vector<1x128xf32>
    %cst_437 = arith.constant 0.899999976 : f32
    %1448 = vector.broadcast %cst_437 : f32 to vector<1x128xf32>
    %1449 = arith.mulf %1448, %1447 : vector<1x128xf32>
    %cst_438 = arith.constant 1.000000e-01 : f32
    %1450 = vector.broadcast %cst_438 : f32 to vector<1x128xf32>
    %1451 = arith.addf %1449, %1450 : vector<1x128xf32>
    %cst_439 = arith.constant 9.99999974E-6 : f32
    %1452 = vector.broadcast %cst_439 : f32 to vector<1x128xf32>
    %1453 = arith.addf %1451, %1452 : vector<1x128xf32>
    %1454 = tpu.reciprocal %1453 : vector<1x128xf32> -> vector<1x128xf32>
    %1455 = arith.mulf %824, %1454 : vector<1x128xf32>
    %cst_440 = arith.constant 0.899999976 : f32
    %1456 = vector.broadcast %cst_440 : f32 to vector<1x128xf32>
    %1457 = arith.mulf %1456, %1440 : vector<1x128xf32>
    %1458 = vector.broadcast %1457 : vector<1x128xf32> to vector<4x128xf32>
    %1459 = arith.subf %1436, %1458 : vector<4x128xf32>
    %1460 = vector.broadcast %1455 : vector<1x128xf32> to vector<4x128xf32>
    %1461 = arith.mulf %1459, %1460 : vector<4x128xf32>
    %1462 = arith.truncf %1432 : vector<4x32xf32> to vector<4x32xbf16>
    %cst_441 = arith.constant dense<0.000000e+00> : vector<4x128xf32>
    %1463 = tpu.matmul %1462, %820, %cst_441 {dimension_numbers = #tpu.dot_dimension_numbers<[1], [0], [0], [1], [0, 0, 1, 1], [], []>} : vector<4x32xbf16>, vector<32x128xbf16>, vector<4x128xf32> -> vector<4x128xf32>
    %cst_442 = arith.constant dense<0.000000e+00> : vector<128xf32>
    %1464 = vector.multi_reduction <add>, %1463, %cst_442 [0] : vector<4x128xf32> to vector<128xf32>
    %1465 = vector.shape_cast %1464 : vector<128xf32> to vector<1x128xf32>
    %cst_443 = arith.constant 4.000000e+00 : f32
    %1466 = vector.broadcast %cst_443 : f32 to vector<1x128xf32>
    %1467 = arith.divf %1465, %1466 : vector<1x128xf32>
    %1468 = vector.broadcast %1467 : vector<1x128xf32> to vector<4x128xf32>
    %1469 = arith.subf %1463, %1468 : vector<4x128xf32>
    %1470 = arith.mulf %1469, %1469 : vector<4x128xf32>
    %cst_444 = arith.constant dense<0.000000e+00> : vector<128xf32>
    %1471 = vector.multi_reduction <add>, %1470, %cst_444 [0] : vector<4x128xf32> to vector<128xf32>
    %1472 = vector.shape_cast %1471 : vector<128xf32> to vector<1x128xf32>
    %cst_445 = arith.constant 0.333333343 : f32
    %1473 = vector.broadcast %cst_445 : f32 to vector<1x128xf32>
    %1474 = arith.mulf %1472, %1473 : vector<1x128xf32>
    %cst_446 = arith.constant 0.899999976 : f32
    %1475 = vector.broadcast %cst_446 : f32 to vector<1x128xf32>
    %1476 = arith.mulf %1475, %1474 : vector<1x128xf32>
    %cst_447 = arith.constant 1.000000e-01 : f32
    %1477 = vector.broadcast %cst_447 : f32 to vector<1x128xf32>
    %1478 = arith.addf %1476, %1477 : vector<1x128xf32>
    %cst_448 = arith.constant 9.99999974E-6 : f32
    %1479 = vector.broadcast %cst_448 : f32 to vector<1x128xf32>
    %1480 = arith.addf %1478, %1479 : vector<1x128xf32>
    %1481 = tpu.reciprocal %1480 : vector<1x128xf32> -> vector<1x128xf32>
    %1482 = arith.mulf %825, %1481 : vector<1x128xf32>
    %cst_449 = arith.constant 0.899999976 : f32
    %1483 = vector.broadcast %cst_449 : f32 to vector<1x128xf32>
    %1484 = arith.mulf %1483, %1467 : vector<1x128xf32>
    %1485 = vector.broadcast %1484 : vector<1x128xf32> to vector<4x128xf32>
    %1486 = arith.subf %1463, %1485 : vector<4x128xf32>
    %1487 = vector.broadcast %1482 : vector<1x128xf32> to vector<4x128xf32>
    %1488 = arith.mulf %1486, %1487 : vector<4x128xf32>
    %1489 = arith.addf %1488, %1461 : vector<4x128xf32>
    %1490 = arith.addf %1489, %823 : vector<4x128xf32>
    %1491 = vector.extract_strided_slice %1490 {offsets = [0, 0], sizes = [4, 96], strides = [1, 1]} : vector<4x128xf32> to vector<4x96xf32>
    %1492 = arith.negf %1491 : vector<4x96xf32>
    %1493 = math.exp %1492 : vector<4x96xf32>
    %cst_450 = arith.constant 1.000000e+00 : f32
    %1494 = vector.broadcast %cst_450 : f32 to vector<4x96xf32>
    %1495 = arith.addf %1494, %1493 : vector<4x96xf32>
    %1496 = arith.divf %1494, %1495 : vector<4x96xf32>
    %1497 = vector.extract_strided_slice %1496 {offsets = [0, 0], sizes = [4, 32], strides = [1, 1]} : vector<4x96xf32> to vector<4x32xf32>
    %1498 = vector.extract_strided_slice %1496 {offsets = [0, 32], sizes = [4, 32], strides = [1, 1]} : vector<4x96xf32> to vector<4x32xf32>
    %1499 = vector.extract_strided_slice %1496 {offsets = [0, 64], sizes = [4, 32], strides = [1, 1]} : vector<4x96xf32> to vector<4x32xf32>
    %1500 = vector.extract_strided_slice %1490 {offsets = [0, 96], sizes = [4, 32], strides = [1, 1]} : vector<4x128xf32> to vector<4x32xf32>
    %1501 = math.tanh %1500 : vector<4x32xf32>
    %1502 = arith.mulf %1497, %1403 : vector<4x32xf32>
    %1503 = arith.mulf %1498, %1501 : vector<4x32xf32>
    %1504 = arith.addf %1502, %1503 : vector<4x32xf32>
    %cst_451 = arith.constant dense<0.000000e+00> : vector<32xf32>
    %1505 = vector.multi_reduction <add>, %1504, %cst_451 [0] : vector<4x32xf32> to vector<32xf32>
    %1506 = vector.shape_cast %1505 : vector<32xf32> to vector<1x32xf32>
    %cst_452 = arith.constant 4.000000e+00 : f32
    %1507 = vector.broadcast %cst_452 : f32 to vector<1x32xf32>
    %1508 = arith.divf %1506, %1507 : vector<1x32xf32>
    %1509 = vector.broadcast %1508 : vector<1x32xf32> to vector<4x32xf32>
    %1510 = arith.subf %1504, %1509 : vector<4x32xf32>
    %1511 = arith.mulf %1510, %1510 : vector<4x32xf32>
    %cst_453 = arith.constant dense<0.000000e+00> : vector<32xf32>
    %1512 = vector.multi_reduction <add>, %1511, %cst_453 [0] : vector<4x32xf32> to vector<32xf32>
    %1513 = vector.shape_cast %1512 : vector<32xf32> to vector<1x32xf32>
    %cst_454 = arith.constant 0.333333343 : f32
    %1514 = vector.broadcast %cst_454 : f32 to vector<1x32xf32>
    %1515 = arith.mulf %1513, %1514 : vector<1x32xf32>
    %cst_455 = arith.constant 0.899999976 : f32
    %1516 = vector.broadcast %cst_455 : f32 to vector<1x32xf32>
    %1517 = arith.mulf %1516, %1515 : vector<1x32xf32>
    %cst_456 = arith.constant 1.000000e-01 : f32
    %1518 = vector.broadcast %cst_456 : f32 to vector<1x32xf32>
    %1519 = arith.addf %1517, %1518 : vector<1x32xf32>
    %cst_457 = arith.constant 9.99999974E-6 : f32
    %1520 = vector.broadcast %cst_457 : f32 to vector<1x32xf32>
    %1521 = arith.addf %1519, %1520 : vector<1x32xf32>
    %1522 = tpu.reciprocal %1521 : vector<1x32xf32> -> vector<1x32xf32>
    %1523 = arith.mulf %826, %1522 : vector<1x32xf32>
    %cst_458 = arith.constant 0.899999976 : f32
    %1524 = vector.broadcast %cst_458 : f32 to vector<1x32xf32>
    %1525 = arith.mulf %1524, %1508 : vector<1x32xf32>
    %1526 = vector.broadcast %1525 : vector<1x32xf32> to vector<4x32xf32>
    %1527 = arith.subf %1504, %1526 : vector<4x32xf32>
    %1528 = vector.broadcast %1523 : vector<1x32xf32> to vector<4x32xf32>
    %1529 = arith.mulf %1527, %1528 : vector<4x32xf32>
    %1530 = vector.broadcast %827 : vector<1x32xf32> to vector<4x32xf32>
    %1531 = arith.addf %1529, %1530 : vector<4x32xf32>
    %1532 = math.tanh %1531 : vector<4x32xf32>
    %1533 = arith.mulf %1499, %1532 : vector<4x32xf32>
    %c6 = arith.constant 6 : index
    %c0_459 = arith.constant 0 : index
    %c0_460 = arith.constant 0 : index
    %1534 = vector.load %arg18[%c6, %c0_459, %c0_460] : memref<8x4x32xf32, #tpu.memory_space<vmem>>, vector<1x4x32xf32>
    %1535 = vector.shape_cast %1534 : vector<1x4x32xf32> to vector<4x32xf32>
    %1536 = vector.shape_cast %1533 : vector<4x32xf32> to vector<1x4x32xf32>
    tpu.vector_store %arg18[%c6, %c0_459, %c0_460], %1536 {strides = array<i32>} : memref<8x4x32xf32, #tpu.memory_space<vmem>>, vector<1x4x32xf32>,
    %1537 = vector.extract_strided_slice %818 {offsets = [28, 0], sizes = [4, 128], strides = [1, 1]} : vector<32x128xf32> to vector<4x128xf32>
    %cst_461 = arith.constant dense<0.000000e+00> : vector<128xf32>
    %1538 = vector.multi_reduction <add>, %1537, %cst_461 [0] : vector<4x128xf32> to vector<128xf32>
    %1539 = vector.shape_cast %1538 : vector<128xf32> to vector<1x128xf32>
    %cst_462 = arith.constant 4.000000e+00 : f32
    %1540 = vector.broadcast %cst_462 : f32 to vector<1x128xf32>
    %1541 = arith.divf %1539, %1540 : vector<1x128xf32>
    %1542 = vector.broadcast %1541 : vector<1x128xf32> to vector<4x128xf32>
    %1543 = arith.subf %1537, %1542 : vector<4x128xf32>
    %1544 = arith.mulf %1543, %1543 : vector<4x128xf32>
    %cst_463 = arith.constant dense<0.000000e+00> : vector<128xf32>
    %1545 = vector.multi_reduction <add>, %1544, %cst_463 [0] : vector<4x128xf32> to vector<128xf32>
    %1546 = vector.shape_cast %1545 : vector<128xf32> to vector<1x128xf32>
    %cst_464 = arith.constant 0.333333343 : f32
    %1547 = vector.broadcast %cst_464 : f32 to vector<1x128xf32>
    %1548 = arith.mulf %1546, %1547 : vector<1x128xf32>
    %cst_465 = arith.constant 0.899999976 : f32
    %1549 = vector.broadcast %cst_465 : f32 to vector<1x128xf32>
    %1550 = arith.mulf %1549, %1548 : vector<1x128xf32>
    %cst_466 = arith.constant 1.000000e-01 : f32
    %1551 = vector.broadcast %cst_466 : f32 to vector<1x128xf32>
    %1552 = arith.addf %1550, %1551 : vector<1x128xf32>
    %cst_467 = arith.constant 9.99999974E-6 : f32
    %1553 = vector.broadcast %cst_467 : f32 to vector<1x128xf32>
    %1554 = arith.addf %1552, %1553 : vector<1x128xf32>
    %1555 = tpu.reciprocal %1554 : vector<1x128xf32> -> vector<1x128xf32>
    %1556 = arith.mulf %824, %1555 : vector<1x128xf32>
    %cst_468 = arith.constant 0.899999976 : f32
    %1557 = vector.broadcast %cst_468 : f32 to vector<1x128xf32>
    %1558 = arith.mulf %1557, %1541 : vector<1x128xf32>
    %1559 = vector.broadcast %1558 : vector<1x128xf32> to vector<4x128xf32>
    %1560 = arith.subf %1537, %1559 : vector<4x128xf32>
    %1561 = vector.broadcast %1556 : vector<1x128xf32> to vector<4x128xf32>
    %1562 = arith.mulf %1560, %1561 : vector<4x128xf32>
    %1563 = arith.truncf %1533 : vector<4x32xf32> to vector<4x32xbf16>
    %cst_469 = arith.constant dense<0.000000e+00> : vector<4x128xf32>
    %1564 = tpu.matmul %1563, %820, %cst_469 {dimension_numbers = #tpu.dot_dimension_numbers<[1], [0], [0], [1], [0, 0, 1, 1], [], []>} : vector<4x32xbf16>, vector<32x128xbf16>, vector<4x128xf32> -> vector<4x128xf32>
    %cst_470 = arith.constant dense<0.000000e+00> : vector<128xf32>
    %1565 = vector.multi_reduction <add>, %1564, %cst_470 [0] : vector<4x128xf32> to vector<128xf32>
    %1566 = vector.shape_cast %1565 : vector<128xf32> to vector<1x128xf32>
    %cst_471 = arith.constant 4.000000e+00 : f32
    %1567 = vector.broadcast %cst_471 : f32 to vector<1x128xf32>
    %1568 = arith.divf %1566, %1567 : vector<1x128xf32>
    %1569 = vector.broadcast %1568 : vector<1x128xf32> to vector<4x128xf32>
    %1570 = arith.subf %1564, %1569 : vector<4x128xf32>
    %1571 = arith.mulf %1570, %1570 : vector<4x128xf32>
    %cst_472 = arith.constant dense<0.000000e+00> : vector<128xf32>
    %1572 = vector.multi_reduction <add>, %1571, %cst_472 [0] : vector<4x128xf32> to vector<128xf32>
    %1573 = vector.shape_cast %1572 : vector<128xf32> to vector<1x128xf32>
    %cst_473 = arith.constant 0.333333343 : f32
    %1574 = vector.broadcast %cst_473 : f32 to vector<1x128xf32>
    %1575 = arith.mulf %1573, %1574 : vector<1x128xf32>
    %cst_474 = arith.constant 0.899999976 : f32
    %1576 = vector.broadcast %cst_474 : f32 to vector<1x128xf32>
    %1577 = arith.mulf %1576, %1575 : vector<1x128xf32>
    %cst_475 = arith.constant 1.000000e-01 : f32
    %1578 = vector.broadcast %cst_475 : f32 to vector<1x128xf32>
    %1579 = arith.addf %1577, %1578 : vector<1x128xf32>
    %cst_476 = arith.constant 9.99999974E-6 : f32
    %1580 = vector.broadcast %cst_476 : f32 to vector<1x128xf32>
    %1581 = arith.addf %1579, %1580 : vector<1x128xf32>
    %1582 = tpu.reciprocal %1581 : vector<1x128xf32> -> vector<1x128xf32>
    %1583 = arith.mulf %825, %1582 : vector<1x128xf32>
    %cst_477 = arith.constant 0.899999976 : f32
    %1584 = vector.broadcast %cst_477 : f32 to vector<1x128xf32>
    %1585 = arith.mulf %1584, %1568 : vector<1x128xf32>
    %1586 = vector.broadcast %1585 : vector<1x128xf32> to vector<4x128xf32>
    %1587 = arith.subf %1564, %1586 : vector<4x128xf32>
    %1588 = vector.broadcast %1583 : vector<1x128xf32> to vector<4x128xf32>
    %1589 = arith.mulf %1587, %1588 : vector<4x128xf32>
    %1590 = arith.addf %1589, %1562 : vector<4x128xf32>
    %1591 = arith.addf %1590, %823 : vector<4x128xf32>
    %1592 = vector.extract_strided_slice %1591 {offsets = [0, 0], sizes = [4, 96], strides = [1, 1]} : vector<4x128xf32> to vector<4x96xf32>
    %1593 = arith.negf %1592 : vector<4x96xf32>
    %1594 = math.exp %1593 : vector<4x96xf32>
    %cst_478 = arith.constant 1.000000e+00 : f32
    %1595 = vector.broadcast %cst_478 : f32 to vector<4x96xf32>
    %1596 = arith.addf %1595, %1594 : vector<4x96xf32>
    %1597 = arith.divf %1595, %1596 : vector<4x96xf32>
    %1598 = vector.extract_strided_slice %1597 {offsets = [0, 0], sizes = [4, 32], strides = [1, 1]} : vector<4x96xf32> to vector<4x32xf32>
    %1599 = vector.extract_strided_slice %1597 {offsets = [0, 32], sizes = [4, 32], strides = [1, 1]} : vector<4x96xf32> to vector<4x32xf32>
    %1600 = vector.extract_strided_slice %1597 {offsets = [0, 64], sizes = [4, 32], strides = [1, 1]} : vector<4x96xf32> to vector<4x32xf32>
    %1601 = vector.extract_strided_slice %1591 {offsets = [0, 96], sizes = [4, 32], strides = [1, 1]} : vector<4x128xf32> to vector<4x32xf32>
    %1602 = math.tanh %1601 : vector<4x32xf32>
    %1603 = arith.mulf %1598, %1504 : vector<4x32xf32>
    %1604 = arith.mulf %1599, %1602 : vector<4x32xf32>
    %1605 = arith.addf %1603, %1604 : vector<4x32xf32>
    %cst_479 = arith.constant dense<0.000000e+00> : vector<32xf32>
    %1606 = vector.multi_reduction <add>, %1605, %cst_479 [0] : vector<4x32xf32> to vector<32xf32>
    %1607 = vector.shape_cast %1606 : vector<32xf32> to vector<1x32xf32>
    %cst_480 = arith.constant 4.000000e+00 : f32
    %1608 = vector.broadcast %cst_480 : f32 to vector<1x32xf32>
    %1609 = arith.divf %1607, %1608 : vector<1x32xf32>
    %1610 = vector.broadcast %1609 : vector<1x32xf32> to vector<4x32xf32>
    %1611 = arith.subf %1605, %1610 : vector<4x32xf32>
    %1612 = arith.mulf %1611, %1611 : vector<4x32xf32>
    %cst_481 = arith.constant dense<0.000000e+00> : vector<32xf32>
    %1613 = vector.multi_reduction <add>, %1612, %cst_481 [0] : vector<4x32xf32> to vector<32xf32>
    %1614 = vector.shape_cast %1613 : vector<32xf32> to vector<1x32xf32>
    %cst_482 = arith.constant 0.333333343 : f32
    %1615 = vector.broadcast %cst_482 : f32 to vector<1x32xf32>
    %1616 = arith.mulf %1614, %1615 : vector<1x32xf32>
    %cst_483 = arith.constant 0.899999976 : f32
    %1617 = vector.broadcast %cst_483 : f32 to vector<1x32xf32>
    %1618 = arith.mulf %1617, %1616 : vector<1x32xf32>
    %cst_484 = arith.constant 1.000000e-01 : f32
    %1619 = vector.broadcast %cst_484 : f32 to vector<1x32xf32>
    %1620 = arith.addf %1618, %1619 : vector<1x32xf32>
    %cst_485 = arith.constant 9.99999974E-6 : f32
    %1621 = vector.broadcast %cst_485 : f32 to vector<1x32xf32>
    %1622 = arith.addf %1620, %1621 : vector<1x32xf32>
    %1623 = tpu.reciprocal %1622 : vector<1x32xf32> -> vector<1x32xf32>
    %1624 = arith.mulf %826, %1623 : vector<1x32xf32>
    %cst_486 = arith.constant 0.899999976 : f32
    %1625 = vector.broadcast %cst_486 : f32 to vector<1x32xf32>
    %1626 = arith.mulf %1625, %1609 : vector<1x32xf32>
    %1627 = vector.broadcast %1626 : vector<1x32xf32> to vector<4x32xf32>
    %1628 = arith.subf %1605, %1627 : vector<4x32xf32>
    %1629 = vector.broadcast %1624 : vector<1x32xf32> to vector<4x32xf32>
    %1630 = arith.mulf %1628, %1629 : vector<4x32xf32>
    %1631 = vector.broadcast %827 : vector<1x32xf32> to vector<4x32xf32>
    %1632 = arith.addf %1630, %1631 : vector<4x32xf32>
    %1633 = math.tanh %1632 : vector<4x32xf32>
    %1634 = arith.mulf %1600, %1633 : vector<4x32xf32>
    %c7 = arith.constant 7 : index
    %c0_487 = arith.constant 0 : index
    %c0_488 = arith.constant 0 : index
    %1635 = vector.load %arg18[%c7, %c0_487, %c0_488] : memref<8x4x32xf32, #tpu.memory_space<vmem>>, vector<1x4x32xf32>
    %1636 = vector.shape_cast %1635 : vector<1x4x32xf32> to vector<4x32xf32>
    %1637 = vector.shape_cast %1634 : vector<4x32xf32> to vector<1x4x32xf32>
    tpu.vector_store %arg18[%c7, %c0_487, %c0_488], %1637 {strides = array<i32>} : memref<8x4x32xf32, #tpu.memory_space<vmem>>, vector<1x4x32xf32>,
    %c0_489 = arith.constant 0 : index
    %c0_490 = arith.constant 0 : index
    %1638 = vector.load %arg22[%c0_489, %c0_490] : memref<4x32xf32, #tpu.memory_space<vmem>>, vector<4x32xf32>
    tpu.vector_store %arg22[%c0_489, %c0_490], %1634 {strides = array<i32>} : memref<4x32xf32, #tpu.memory_space<vmem>>, vector<4x32xf32>,
    %c0_491 = arith.constant 0 : index
    %c0_492 = arith.constant 0 : index
    %1639 = vector.load %arg24[%c0_491, %c0_492] : memref<4x32xf32, #tpu.memory_space<vmem>>, vector<4x32xf32>
    tpu.vector_store %arg24[%c0_491, %c0_492], %1605 {strides = array<i32>} : memref<4x32xf32, #tpu.memory_space<vmem>>, vector<4x32xf32>,
    %1640 = arith.extui %0 : i1 to i32
    %c0_i32_493 = arith.constant 0 : i32
    %1641 = arith.cmpi ne, %1640, %c0_i32_493 : i32
    scf.if %1641 {
      %c0_494 = arith.constant 0 : index
      %c0_495 = arith.constant 0 : index
      %1642 = vector.load %arg20[%c0_494, %c0_495] : memref<4x32xf32, #tpu.memory_space<vmem>>, vector<4x32xf32>
      tpu.vector_store %arg20[%c0_494, %c0_495], %1605 {strides = array<i32>} : memref<4x32xf32, #tpu.memory_space<vmem>>, vector<4x32xf32>,
      %cst_496 = arith.constant dense<0.000000e+00> : vector<32xf32>
      %1643 = vector.multi_reduction <add>, %1634, %cst_496 [0] : vector<4x32xf32> to vector<32xf32>
      %1644 = vector.shape_cast %1643 : vector<32xf32> to vector<1x32xf32>
      %cst_497 = arith.constant 4.000000e+00 : f32
      %1645 = vector.broadcast %cst_497 : f32 to vector<1x32xf32>
      %1646 = arith.divf %1644, %1645 : vector<1x32xf32>
      %1647 = vector.broadcast %1646 : vector<1x32xf32> to vector<4x32xf32>
      %1648 = arith.subf %1634, %1647 : vector<4x32xf32>
      %1649 = arith.mulf %1648, %1648 : vector<4x32xf32>
      %cst_498 = arith.constant dense<0.000000e+00> : vector<32xf32>
      %1650 = vector.multi_reduction <add>, %1649, %cst_498 [0] : vector<4x32xf32> to vector<32xf32>
      %1651 = vector.shape_cast %1650 : vector<32xf32> to vector<1x32xf32>
      %cst_499 = arith.constant 4.000000e+00 : f32
      %1652 = vector.broadcast %cst_499 : f32 to vector<1x32xf32>
      %1653 = arith.divf %1651, %1652 : vector<1x32xf32>
      %1654 = vector.broadcast %1646 : vector<1x32xf32> to vector<4x32xf32>
      %1655 = arith.subf %1634, %1654 : vector<4x32xf32>
      %cst_500 = arith.constant 9.99999974E-6 : f32
      %1656 = vector.broadcast %cst_500 : f32 to vector<1x32xf32>
      %1657 = arith.addf %1653, %1656 : vector<1x32xf32>
      %1658 = math.rsqrt %1657 : vector<1x32xf32>
      %1659 = vector.broadcast %1658 : vector<1x32xf32> to vector<4x32xf32>
      %1660 = arith.mulf %1655, %1659 : vector<4x32xf32>
      %1661 = math.tanh %1660 : vector<4x32xf32>
      %c0_501 = arith.constant 0 : index
      %c0_502 = arith.constant 0 : index
      %1662 = vector.load %arg19[%c0_501, %c0_502] : memref<4x32xf32, #tpu.memory_space<vmem>>, vector<4x32xf32>
      tpu.vector_store %arg19[%c0_501, %c0_502], %1661 {strides = array<i32>} : memref<4x32xf32, #tpu.memory_space<vmem>>, vector<4x32xf32>,
    } else {
    }
    return
  }
  func.func @transform_0(%arg0: i32) -> (i32, i32) {
    %c0_i32 = arith.constant 0 : i32
    %c0_i32_0 = arith.constant 0 : i32
    return %arg0, %c0_i32 : i32, i32
  }
  func.func @transform_1(%arg0: i32) -> (i32, i32) {
    %c0_i32 = arith.constant 0 : i32
    %c0_i32_0 = arith.constant 0 : i32
    %c0_i32_1 = arith.constant 0 : i32
    return %c0_i32, %c0_i32_0 : i32, i32
  }
  func.func @transform_2(%arg0: i32) -> (i32, i32) {
    %c0_i32 = arith.constant 0 : i32
    %c0_i32_0 = arith.constant 0 : i32
    %c0_i32_1 = arith.constant 0 : i32
    return %c0_i32, %c0_i32_0 : i32, i32
  }
  func.func @transform_3(%arg0: i32) -> (i32, i32) {
    %c0_i32 = arith.constant 0 : i32
    %c0_i32_0 = arith.constant 0 : i32
    %c0_i32_1 = arith.constant 0 : i32
    return %c0_i32, %c0_i32_0 : i32, i32
  }
  func.func @transform_4(%arg0: i32) -> (i32, i32) {
    %c0_i32 = arith.constant 0 : i32
    %c0_i32_0 = arith.constant 0 : i32
    %c0_i32_1 = arith.constant 0 : i32
    return %c0_i32, %c0_i32_0 : i32, i32
  }
  func.func @transform_5(%arg0: i32) -> (i32, i32) {
    %c0_i32 = arith.constant 0 : i32
    %c0_i32_0 = arith.constant 0 : i32
    %c0_i32_1 = arith.constant 0 : i32
    return %c0_i32, %c0_i32_0 : i32, i32
  }
  func.func @transform_6(%arg0: i32) -> (i32, i32) {
    %c0_i32 = arith.constant 0 : i32
    %c0_i32_0 = arith.constant 0 : i32
    %c0_i32_1 = arith.constant 0 : i32
    return %c0_i32, %c0_i32_0 : i32, i32
  }
  func.func @transform_7(%arg0: i32) -> (i32, i32) {
    %c0_i32 = arith.constant 0 : i32
    %c0_i32_0 = arith.constant 0 : i32
    %c0_i32_1 = arith.constant 0 : i32
    return %c0_i32, %c0_i32_0 : i32, i32
  }
  func.func @transform_8(%arg0: i32) -> (i32, i32) {
    %c0_i32 = arith.constant 0 : i32
    %c0_i32_0 = arith.constant 0 : i32
    %c0_i32_1 = arith.constant 0 : i32
    return %c0_i32, %c0_i32_0 : i32, i32
  }
  func.func @transform_9(%arg0: i32) -> (i32, i32) {
    %c0_i32 = arith.constant 0 : i32
    %c0_i32_0 = arith.constant 0 : i32
    %c0_i32_1 = arith.constant 0 : i32
    return %c0_i32, %c0_i32_0 : i32, i32
  }
  func.func @transform_10(%arg0: i32) -> (i32, i32) {
    %c0_i32 = arith.constant 0 : i32
    %c0_i32_0 = arith.constant 0 : i32
    %c0_i32_1 = arith.constant 0 : i32
    return %c0_i32, %c0_i32_0 : i32, i32
  }
  func.func @transform_11(%arg0: i32) -> (i32, i32) {
    %c0_i32 = arith.constant 0 : i32
    %c0_i32_0 = arith.constant 0 : i32
    %c0_i32_1 = arith.constant 0 : i32
    return %c0_i32, %c0_i32_0 : i32, i32
  }
  func.func @transform_12(%arg0: i32) -> (i32, i32) {
    %c0_i32 = arith.constant 0 : i32
    %c0_i32_0 = arith.constant 0 : i32
    %c0_i32_1 = arith.constant 0 : i32
    return %c0_i32, %c0_i32_0 : i32, i32
  }
  func.func @transform_13(%arg0: i32) -> (i32, i32) {
    %c0_i32 = arith.constant 0 : i32
    %c0_i32_0 = arith.constant 0 : i32
    %c0_i32_1 = arith.constant 0 : i32
    return %c0_i32, %c0_i32_0 : i32, i32
  }
  func.func @transform_14(%arg0: i32) -> (i32, i32) {
    %c0_i32 = arith.constant 0 : i32
    %c0_i32_0 = arith.constant 0 : i32
    %c0_i32_1 = arith.constant 0 : i32
    return %c0_i32, %c0_i32_0 : i32, i32
  }
  func.func @transform_15(%arg0: i32) -> (i32, i32) {
    %c0_i32 = arith.constant 0 : i32
    %c0_i32_0 = arith.constant 0 : i32
    %c0_i32_1 = arith.constant 0 : i32
    return %c0_i32, %c0_i32_0 : i32, i32
  }
  func.func @transform_16(%arg0: i32) -> (i32, i32) {
    %c0_i32 = arith.constant 0 : i32
    %c0_i32_0 = arith.constant 0 : i32
    %c0_i32_1 = arith.constant 0 : i32
    return %c0_i32, %c0_i32_0 : i32, i32
  }
  func.func @transform_17(%arg0: i32) -> (i32, i32, i32) {
    %c0_i32 = arith.constant 0 : i32
    %c0_i32_0 = arith.constant 0 : i32
    %c0_i32_1 = arith.constant 0 : i32
    return %arg0, %c0_i32, %c0_i32_0 : i32, i32, i32
  }
  func.func @transform_18(%arg0: i32) -> (i32, i32) {
    %c0_i32 = arith.constant 0 : i32
    %c0_i32_0 = arith.constant 0 : i32
    %c0_i32_1 = arith.constant 0 : i32
    return %c0_i32, %c0_i32_0 : i32, i32
  }
  func.func @transform_19(%arg0: i32) -> (i32, i32) {
    %c0_i32 = arith.constant 0 : i32
    %c0_i32_0 = arith.constant 0 : i32
    %c0_i32_1 = arith.constant 0 : i32
    return %c0_i32, %c0_i32_0 : i32, i32
  }
}

</mosaic_0001>

<llo_original>
// kernel: tpu_custom_call.1
$region0: #{tpu_custom_call.1}
  #allocation0 [shape = 'u32[]', space=smem, size = 0x4, offset = 0x4, fixed_abs, tag = 'smem constant byte address 0x4 - core index']
  #allocation1 [shape = 'u32[144,128]{1,0:T(1,128)}', space=vmem, size = 0x12000, scoped, tag = 'internal scratch']
  #allocation2 [shape = 'f32[4,32]{1,0:T(4,128)}', space=vmem, size = 0x800, scoped, tag = 'scratch operand']
  #allocation3 [shape = 'f32[4,32]{1,0:T(4,128)}', space=vmem, size = 0x800, scoped, tag = 'scratch operand']
  #allocation4 [shape = 'f32[4,32]{1,0:T(4,128)}', space=vmem, size = 0x800, scoped, tag = 'scratch operand']
  #allocation5 [shape = 'f32[4,32]{1,0:T(4,128)}', space=vmem, size = 0x800, scoped, tag = 'scratch operand']
  #allocation6 [shape = 'f32[32,32]{1,0:T(8,128)}', space=vmem, size = 0x4000, scoped, tag = 'scratch operand']
  %s0 = inlined_call_operand.hbm [shape: f32[32,32], index: 0, kind: input, shape index: {}]
  %s1 = inlined_call_operand.hbm [shape: f32[4,32], index: 1, kind: input, shape index: {}]
  %s2 = inlined_call_operand.hbm [shape: f32[4,32], index: 2, kind: input, shape index: {}]
  %s3 = inlined_call_operand.hbm [shape: f32[32,128], index: 3, kind: input, shape index: {}]
  %s4 = inlined_call_operand.hbm [shape: f32[32,128], index: 4, kind: input, shape index: {}]
  %s5 = inlined_call_operand.hbm [shape: f32[1,128], index: 5, kind: input, shape index: {}]
  %s6 = inlined_call_operand.hbm [shape: f32[1,128], index: 6, kind: input, shape index: {}]
  %s7 = inlined_call_operand.hbm [shape: f32[1,128], index: 7, kind: input, shape index: {}]
  %s8 = inlined_call_operand.hbm [shape: f32[1,32], index: 8, kind: input, shape index: {}]
  %s9 = inlined_call_operand.hbm [shape: f32[1,32], index: 9, kind: input, shape index: {}]
  %s10 = inlined_call_operand.hbm [shape: f32[32,128], index: 10, kind: input, shape index: {}]
  %s11 = inlined_call_operand.hbm [shape: f32[32,128], index: 11, kind: input, shape index: {}]
  %s12 = inlined_call_operand.hbm [shape: f32[1,128], index: 12, kind: input, shape index: {}]
  %s13 = inlined_call_operand.hbm [shape: f32[1,128], index: 13, kind: input, shape index: {}]
  %s14 = inlined_call_operand.hbm [shape: f32[1,128], index: 14, kind: input, shape index: {}]
  %s15 = inlined_call_operand.hbm [shape: f32[1,32], index: 15, kind: input, shape index: {}]
  %s16 = inlined_call_operand.hbm [shape: f32[1,32], index: 16, kind: input, shape index: {}]
  %s17 = inlined_call_operand.hbm [shape: f32[8,4,32], index: 17, kind: output, shape index: {0}]
  %s18 = inlined_call_operand.hbm [shape: f32[4,32], index: 18, kind: output, shape index: {1}]
  %s19 = inlined_call_operand.hbm [shape: f32[4,32], index: 19, kind: output, shape index: {2}]
  %20 = xla_tuple %s17, %s18, %s19
  %s21 = sld [smem:[#allocation0]]
  $region170: #{tpu_custom_call.1} parent=0
    _
  %s23 = ssub.s32 1, %s21
  %s24 = scalar_select 0, %s23, %s21
  $region1: #{tpu_custom_call.1} parent=0
    #allocation7 [shape = 'u8[16384]{0}', space=vmem, size = 0x4000, scoped, tag = 'input window, operand 0, single buffered']
    #allocation8 [shape = 's32[1]{0}', space=sflag, size = 0x4, scoped, tag = 'scoped memory for tpu_custom_call.1']
    #allocation9 [shape = 's32[1]{0}', space=sflag, size = 0x4, scoped, tag = 'scoped memory for tpu_custom_call.1']
    #allocation10 [shape = 'u8[2048]{0}', space=vmem, size = 0x800, scoped, tag = 'input window, operand 1, single buffered']
    #allocation11 [shape = 's32[1]{0}', space=sflag, size = 0x4, scoped, tag = 'scoped memory for tpu_custom_call.1']
    #allocation12 [shape = 'u8[2048]{0}', space=vmem, size = 0x800, scoped, tag = 'input window, operand 2, single buffered']
    #allocation13 [shape = 'u8[16384]{0}', space=vmem, size = 0x4000, scoped, tag = 'input window, operand 3, single buffered']
    #allocation14 [shape = 's32[1]{0}', space=sflag, size = 0x4, scoped, tag = 'scoped memory for tpu_custom_call.1']
    #allocation15 [shape = 'u8[16384]{0}', space=vmem, size = 0x4000, scoped, tag = 'input window, operand 4, single buffered']
    #allocation16 [shape = 'u8[512]{0}', space=vmem, size = 0x400, scoped, tag = 'input window, operand 5, single buffered']
    #allocation17 [shape = 's32[1]{0}', space=sflag, size = 0x4, scoped, tag = 'scoped memory for tpu_custom_call.1']
    #allocation18 [shape = 'u8[512]{0}', space=vmem, size = 0x400, scoped, tag = 'input window, operand 6, single buffered']
    #allocation19 [shape = 'u8[512]{0}', space=vmem, size = 0x400, scoped, tag = 'input window, operand 7, single buffered']
    #allocation20 [shape = 's32[1]{0}', space=sflag, size = 0x4, scoped, tag = 'scoped memory for tpu_custom_call.1']
    #allocation21 [shape = 'u8[512]{0}', space=vmem, size = 0x400, scoped, tag = 'input window, operand 8, single buffered']
    #allocation22 [shape = 'u8[512]{0}', space=vmem, size = 0x400, scoped, tag = 'input window, operand 9, single buffered']
    #allocation23 [shape = 's32[1]{0}', space=sflag, size = 0x4, scoped, tag = 'scoped memory for tpu_custom_call.1']
    #allocation24 [shape = 'u8[16384]{0}', space=vmem, size = 0x4000, scoped, tag = 'input window, operand 10, single buffered']
    #allocation25 [shape = 'u8[16384]{0}', space=vmem, size = 0x4000, scoped, tag = 'input window, operand 11, single buffered']
    #allocation26 [shape = 's32[1]{0}', space=sflag, size = 0x4, scoped, tag = 'scoped memory for tpu_custom_call.1']
    #allocation27 [shape = 'u8[512]{0}', space=vmem, size = 0x400, scoped, tag = 'input window, operand 12, single buffered']
    #allocation28 [shape = 'u8[512]{0}', space=vmem, size = 0x400, scoped, tag = 'input window, operand 13, single buffered']
    #allocation29 [shape = 's32[1]{0}', space=sflag, size = 0x4, scoped, tag = 'scoped memory for tpu_custom_call.1']
    #allocation30 [shape = 'u8[512]{0}', space=vmem, size = 0x400, scoped, tag = 'input window, operand 14, single buffered']
    #allocation31 [shape = 'u8[512]{0}', space=vmem, size = 0x400, scoped, tag = 'input window, operand 15, single buffered']
    #allocation32 [shape = 's32[1]{0}', space=sflag, size = 0x4, scoped, tag = 'scoped memory for tpu_custom_call.1']
    #allocation33 [shape = 'u8[512]{0}', space=vmem, size = 0x400, scoped, tag = 'input window, operand 16, single buffered']
    #allocation34 [shape = 'u8[16384]{0}', space=vmem, size = 0x4000, scoped, tag = 'output window, operand 0, single buffered']
    #allocation35 [shape = 'u8[2048]{0}', space=vmem, size = 0x800, scoped, tag = 'output window, operand 1, single buffered']
    #allocation36 [shape = 's32[1]{0}', space=sflag, size = 0x4, scoped, tag = 'scoped memory for tpu_custom_call.1']
    #allocation37 [shape = 'u8[2048]{0}', space=vmem, size = 0x800, scoped, tag = 'output window, operand 2, single buffered']
    %25 = vsyncpa [#allocation8], 0
    %26 = vsyncpa [#allocation11], 0
    %27 = vsyncpa [#allocation14], 0
    %28 = vsyncpa [#allocation17], 0
    %29 = vsyncpa [#allocation20], 0
    %30 = vsyncpa [#allocation23], 0
    %31 = vsyncpa [#allocation26], 0
    %32 = vsyncpa [#allocation29], 0
    %33 = vsyncpa [#allocation32], 0
    %34 = vsyncpa [#allocation9], 0
    %35 = vsyncpa [#allocation36], 0
    // Predicated region
    $region2: #{tpu_custom_call.1} parent=1 // pred_check
      _
    $region3: #{tpu_custom_call.1} parent=1 // pred_check_branch
      %37 = sbr.rel (0) target = $region5
    $region4: #{tpu_custom_call.1} parent=1 // pred_region
      %s39 = ssub.s32 512, 512
      %40 = vsyncadd [#allocation8], %s39
      %s41 = sshll.u32 [#allocation7], 4
      %s42 = int_to_ptr.vmem [resolvable:$true] %s41
      %47 = dma.hbm_to_vmem [thread:$0]  %s0, 512, %s42, [#allocation8], 128, 128, 8
    $region5: #{tpu_custom_call.1} parent=1 // pred_fallthru
      _
    // Predicated region
    $region6: #{tpu_custom_call.1} parent=1 // pred_check
      _
    $region7: #{tpu_custom_call.1} parent=1 // pred_check_branch
      %49 = sbr.rel (0) target = $region9
    $region8: #{tpu_custom_call.1} parent=1 // pred_region
      %s51 = ssub.s32 64, 64
      %52 = vsyncadd [#allocation11], %s51
      %s54 = sshll.u32 [#allocation10], 4
      %s55 = int_to_ptr.vmem [resolvable:$true] %s54
      %57 = dma.hbm_to_vmem [thread:$0]  %s1, 64, %s55, [#allocation11]
    $region9: #{tpu_custom_call.1} parent=1 // pred_fallthru
      _
    // Predicated region
    $region10: #{tpu_custom_call.1} parent=1 // pred_check
      _
    $region11: #{tpu_custom_call.1} parent=1 // pred_check_branch
      %59 = sbr.rel (0) target = $region13
    $region12: #{tpu_custom_call.1} parent=1 // pred_region
      %s61 = ssub.s32 64, 64
      %62 = vsyncadd [#allocation11], %s61
      %s64 = sshll.u32 [#allocation12], 4
      %s65 = int_to_ptr.vmem [resolvable:$true] %s64
      %67 = dma.hbm_to_vmem [thread:$0]  %s2, 64, %s65, [#allocation11]
    $region13: #{tpu_custom_call.1} parent=1 // pred_fallthru
      _
    // Predicated region
    $region14: #{tpu_custom_call.1} parent=1 // pred_check
      _
    $region15: #{tpu_custom_call.1} parent=1 // pred_check_branch
      %69 = sbr.rel (0) target = $region17
    $region16: #{tpu_custom_call.1} parent=1 // pred_region
      %s71 = ssub.s32 512, 512
      %72 = vsyncadd [#allocation14], %s71
      %s73 = sshll.u32 [#allocation13], 4
      %s74 = int_to_ptr.vmem [resolvable:$true] %s73
      %79 = dma.hbm_to_vmem [thread:$0]  %s3, 512, %s74, [#allocation14], 128, 128, 8
    $region17: #{tpu_custom_call.1} parent=1 // pred_fallthru
      _
    // Predicated region
    $region18: #{tpu_custom_call.1} parent=1 // pred_check
      _
    $region19: #{tpu_custom_call.1} parent=1 // pred_check_branch
      %81 = sbr.rel (0) target = $region21
    $region20: #{tpu_custom_call.1} parent=1 // pred_region
      %s83 = ssub.s32 512, 512
      %84 = vsyncadd [#allocation14], %s83
      %s85 = sshll.u32 [#allocation15], 4
      %s86 = int_to_ptr.vmem [resolvable:$true] %s85
      %91 = dma.hbm_to_vmem [thread:$0]  %s4, 512, %s86, [#allocation14], 128, 128, 8
    $region21: #{tpu_custom_call.1} parent=1 // pred_fallthru
      _
    // Predicated region
    $region22: #{tpu_custom_call.1} parent=1 // pred_check
      _
    $region23: #{tpu_custom_call.1} parent=1 // pred_check_branch
      %93 = sbr.rel (0) target = $region25
    $region24: #{tpu_custom_call.1} parent=1 // pred_region
      %s95 = ssub.s32 16, 16
      %96 = vsyncadd [#allocation17], %s95
      %s98 = sshll.u32 [#allocation16], 4
      %s99 = int_to_ptr.vmem [resolvable:$true] %s98
      %101 = dma.hbm_to_vmem [thread:$0]  %s5, 16, %s99, [#allocation17]
    $region25: #{tpu_custom_call.1} parent=1 // pred_fallthru
      _
    // Predicated region
    $region26: #{tpu_custom_call.1} parent=1 // pred_check
      _
    $region27: #{tpu_custom_call.1} parent=1 // pred_check_branch
      %103 = sbr.rel (0) target = $region29
    $region28: #{tpu_custom_call.1} parent=1 // pred_region
      %s105 = ssub.s32 16, 16
      %106 = vsyncadd [#allocation17], %s105
      %s108 = sshll.u32 [#allocation18], 4
      %s109 = int_to_ptr.vmem [resolvable:$true] %s108
      %111 = dma.hbm_to_vmem [thread:$0]  %s6, 16, %s109, [#allocation17]
    $region29: #{tpu_custom_call.1} parent=1 // pred_fallthru
      _
    // Predicated region
    $region30: #{tpu_custom_call.1} parent=1 // pred_check
      _
    $region31: #{tpu_custom_call.1} parent=1 // pred_check_branch
      %113 = sbr.rel (0) target = $region33
    $region32: #{tpu_custom_call.1} parent=1 // pred_region
      %s115 = ssub.s32 16, 16
      %116 = vsyncadd [#allocation20], %s115
      %s118 = sshll.u32 [#allocation19], 4
      %s119 = int_to_ptr.vmem [resolvable:$true] %s118
      %121 = dma.hbm_to_vmem [thread:$0]  %s7, 16, %s119, [#allocation20]
    $region33: #{tpu_custom_call.1} parent=1 // pred_fallthru
      _
    // Predicated region
    $region34: #{tpu_custom_call.1} parent=1 // pred_check
      _
    $region35: #{tpu_custom_call.1} parent=1 // pred_check_branch
      %123 = sbr.rel (0) target = $region37
    $region36: #{tpu_custom_call.1} parent=1 // pred_region
      %s125 = ssub.s32 16, 16
      %126 = vsyncadd [#allocation20], %s125
      %s128 = sshll.u32 [#allocation21], 4
      %s129 = int_to_ptr.vmem [resolvable:$true] %s128
      %131 = dma.hbm_to_vmem [thread:$0]  %s8, 16, %s129, [#allocation20]
    $region37: #{tpu_custom_call.1} parent=1 // pred_fallthru
      _
    // Predicated region
    $region38: #{tpu_custom_call.1} parent=1 // pred_check
      _
    $region39: #{tpu_custom_call.1} parent=1 // pred_check_branch
      %133 = sbr.rel (0) target = $region41
    $region40: #{tpu_custom_call.1} parent=1 // pred_region
      %s135 = ssub.s32 16, 16
      %136 = vsyncadd [#allocation23], %s135
      %s138 = sshll.u32 [#allocation22], 4
      %s139 = int_to_ptr.vmem [resolvable:$true] %s138
      %141 = dma.hbm_to_vmem [thread:$0]  %s9, 16, %s139, [#allocation23]
    $region41: #{tpu_custom_call.1} parent=1 // pred_fallthru
      _
    // Predicated region
    $region42: #{tpu_custom_call.1} parent=1 // pred_check
      _
    $region43: #{tpu_custom_call.1} parent=1 // pred_check_branch
      %143 = sbr.rel (0) target = $region45
    $region44: #{tpu_custom_call.1} parent=1 // pred_region
      %s145 = ssub.s32 512, 512
      %146 = vsyncadd [#allocation23], %s145
      %s147 = sshll.u32 [#allocation24], 4
      %s148 = int_to_ptr.vmem [resolvable:$true] %s147
      %153 = dma.hbm_to_vmem [thread:$0]  %s10, 512, %s148, [#allocation23], 128, 128, 8
    $region45: #{tpu_custom_call.1} parent=1 // pred_fallthru
      _
    // Predicated region
    $region46: #{tpu_custom_call.1} parent=1 // pred_check
      _
    $region47: #{tpu_custom_call.1} parent=1 // pred_check_branch
      %155 = sbr.rel (0) target = $region49
    $region48: #{tpu_custom_call.1} parent=1 // pred_region
      %s157 = ssub.s32 512, 512
      %158 = vsyncadd [#allocation26], %s157
      %s159 = sshll.u32 [#allocation25], 4
      %s160 = int_to_ptr.vmem [resolvable:$true] %s159
      %165 = dma.hbm_to_vmem [thread:$0]  %s11, 512, %s160, [#allocation26], 128, 128, 8
    $region49: #{tpu_custom_call.1} parent=1 // pred_fallthru
      _
    // Predicated region
    $region50: #{tpu_custom_call.1} parent=1 // pred_check
      _
    $region51: #{tpu_custom_call.1} parent=1 // pred_check_branch
      %167 = sbr.rel (0) target = $region53
    $region52: #{tpu_custom_call.1} parent=1 // pred_region
      %s169 = ssub.s32 16, 16
      %170 = vsyncadd [#allocation26], %s169
      %s172 = sshll.u32 [#allocation27], 4
      %s173 = int_to_ptr.vmem [resolvable:$true] %s172
      %175 = dma.hbm_to_vmem [thread:$0]  %s12, 16, %s173, [#allocation26]
    $region53: #{tpu_custom_call.1} parent=1 // pred_fallthru
      _
    // Predicated region
    $region54: #{tpu_custom_call.1} parent=1 // pred_check
      _
    $region55: #{tpu_custom_call.1} parent=1 // pred_check_branch
      %177 = sbr.rel (0) target = $region57
    $region56: #{tpu_custom_call.1} parent=1 // pred_region
      %s179 = ssub.s32 16, 16
      %180 = vsyncadd [#allocation29], %s179
      %s182 = sshll.u32 [#allocation28], 4
      %s183 = int_to_ptr.vmem [resolvable:$true] %s182
      %185 = dma.hbm_to_vmem [thread:$0]  %s13, 16, %s183, [#allocation29]
    $region57: #{tpu_custom_call.1} parent=1 // pred_fallthru
      _
    // Predicated region
    $region58: #{tpu_custom_call.1} parent=1 // pred_check
      _
    $region59: #{tpu_custom_call.1} parent=1 // pred_check_branch
      %187 = sbr.rel (0) target = $region61
    $region60: #{tpu_custom_call.1} parent=1 // pred_region
      %s189 = ssub.s32 16, 16
      %190 = vsyncadd [#allocation29], %s189
      %s192 = sshll.u32 [#allocation30], 4
      %s193 = int_to_ptr.vmem [resolvable:$true] %s192
      %195 = dma.hbm_to_vmem [thread:$0]  %s14, 16, %s193, [#allocation29]
    $region61: #{tpu_custom_call.1} parent=1 // pred_fallthru
      _
    // Predicated region
    $region62: #{tpu_custom_call.1} parent=1 // pred_check
      _
    $region63: #{tpu_custom_call.1} parent=1 // pred_check_branch
      %197 = sbr.rel (0) target = $region65
    $region64: #{tpu_custom_call.1} parent=1 // pred_region
      %s199 = ssub.s32 16, 16
      %200 = vsyncadd [#allocation32], %s199
      %s202 = sshll.u32 [#allocation31], 4
      %s203 = int_to_ptr.vmem [resolvable:$true] %s202
      %205 = dma.hbm_to_vmem [thread:$0]  %s15, 16, %s203, [#allocation32]
    $region65: #{tpu_custom_call.1} parent=1 // pred_fallthru
      _
    // Predicated region
    $region66: #{tpu_custom_call.1} parent=1 // pred_check
      _
    $region67: #{tpu_custom_call.1} parent=1 // pred_check_branch
      %207 = sbr.rel (0) target = $region69
    $region68: #{tpu_custom_call.1} parent=1 // pred_region
      %s209 = ssub.s32 16, 16
      %210 = vsyncadd [#allocation32], %s209
      %s212 = sshll.u32 [#allocation33], 4
      %s213 = int_to_ptr.vmem [resolvable:$true] %s212
      %215 = dma.hbm_to_vmem [thread:$0]  %s16, 16, %s213, [#allocation32]
    $region69: #{tpu_custom_call.1} parent=1 // pred_fallthru
      _
    // Predicated region
    $region70: #{tpu_custom_call.1} parent=1 // pred_check
      _
    $region71: #{tpu_custom_call.1} parent=1 // pred_check_branch
      %217 = sbr.rel (0) target = $region73
    $region72: #{tpu_custom_call.1} parent=1 // pred_region
      %218 = dma.done [#allocation8], 512
    $region73: #{tpu_custom_call.1} parent=1 // pred_fallthru
      _
    // Predicated region
    $region74: #{tpu_custom_call.1} parent=1 // pred_check
      _
    $region75: #{tpu_custom_call.1} parent=1 // pred_check_branch
      %220 = sbr.rel (0) target = $region77
    $region76: #{tpu_custom_call.1} parent=1 // pred_region
      %221 = dma.done [#allocation11], 64
    $region77: #{tpu_custom_call.1} parent=1 // pred_fallthru
      _
    // Predicated region
    $region78: #{tpu_custom_call.1} parent=1 // pred_check
      _
    $region79: #{tpu_custom_call.1} parent=1 // pred_check_branch
      %223 = sbr.rel (0) target = $region81
    $region80: #{tpu_custom_call.1} parent=1 // pred_region
      %224 = dma.done [#allocation11], 64
    $region81: #{tpu_custom_call.1} parent=1 // pred_fallthru
      _
    // Predicated region
    $region82: #{tpu_custom_call.1} parent=1 // pred_check
      _
    $region83: #{tpu_custom_call.1} parent=1 // pred_check_branch
      %226 = sbr.rel (0) target = $region85
    $region84: #{tpu_custom_call.1} parent=1 // pred_region
      %227 = dma.done [#allocation14], 512
    $region85: #{tpu_custom_call.1} parent=1 // pred_fallthru
      _
    // Predicated region
    $region86: #{tpu_custom_call.1} parent=1 // pred_check
      _
    $region87: #{tpu_custom_call.1} parent=1 // pred_check_branch
      %229 = sbr.rel (0) target = $region89
    $region88: #{tpu_custom_call.1} parent=1 // pred_region
      %230 = dma.done [#allocation14], 512
    $region89: #{tpu_custom_call.1} parent=1 // pred_fallthru
      _
    // Predicated region
    $region90: #{tpu_custom_call.1} parent=1 // pred_check
      _
    $region91: #{tpu_custom_call.1} parent=1 // pred_check_branch
      %232 = sbr.rel (0) target = $region93
    $region92: #{tpu_custom_call.1} parent=1 // pred_region
      %233 = dma.done [#allocation17], 16
    $region93: #{tpu_custom_call.1} parent=1 // pred_fallthru
      _
    // Predicated region
    $region94: #{tpu_custom_call.1} parent=1 // pred_check
      _
    $region95: #{tpu_custom_call.1} parent=1 // pred_check_branch
      %235 = sbr.rel (0) target = $region97
    $region96: #{tpu_custom_call.1} parent=1 // pred_region
      %236 = dma.done [#allocation17], 16
    $region97: #{tpu_custom_call.1} parent=1 // pred_fallthru
      _
    // Predicated region
    $region98: #{tpu_custom_call.1} parent=1 // pred_check
      _
    $region99: #{tpu_custom_call.1} parent=1 // pred_check_branch
      %238 = sbr.rel (0) target = $region101
    $region100: #{tpu_custom_call.1} parent=1 // pred_region
      %239 = dma.done [#allocation20], 16
    $region101: #{tpu_custom_call.1} parent=1 // pred_fallthru
      _
    // Predicated region
    $region102: #{tpu_custom_call.1} parent=1 // pred_check
      _
    $region103: #{tpu_custom_call.1} parent=1 // pred_check_branch
      %241 = sbr.rel (0) target = $region105
    $region104: #{tpu_custom_call.1} parent=1 // pred_region
      %242 = dma.done [#allocation20], 16
    $region105: #{tpu_custom_call.1} parent=1 // pred_fallthru
      _
    // Predicated region
    $region106: #{tpu_custom_call.1} parent=1 // pred_check
      _
    $region107: #{tpu_custom_call.1} parent=1 // pred_check_branch
      %244 = sbr.rel (0) target = $region109
    $region108: #{tpu_custom_call.1} parent=1 // pred_region
      %245 = dma.done [#allocation23], 16
    $region109: #{tpu_custom_call.1} parent=1 // pred_fallthru
      _
    // Predicated region
    $region110: #{tpu_custom_call.1} parent=1 // pred_check
      _
    $region111: #{tpu_custom_call.1} parent=1 // pred_check_branch
      %247 = sbr.rel (0) target = $region113
    $region112: #{tpu_custom_call.1} parent=1 // pred_region
      %248 = dma.done [#allocation23], 512
    $region113: #{tpu_custom_call.1} parent=1 // pred_fallthru
      _
    // Predicated region
    $region114: #{tpu_custom_call.1} parent=1 // pred_check
      _
    $region115: #{tpu_custom_call.1} parent=1 // pred_check_branch
      %250 = sbr.rel (0) target = $region117
    $region116: #{tpu_custom_call.1} parent=1 // pred_region
      %251 = dma.done [#allocation26], 512
    $region117: #{tpu_custom_call.1} parent=1 // pred_fallthru
      _
    // Predicated region
    $region118: #{tpu_custom_call.1} parent=1 // pred_check
      _
    $region119: #{tpu_custom_call.1} parent=1 // pred_check_branch
      %253 = sbr.rel (0) target = $region121
    $region120: #{tpu_custom_call.1} parent=1 // pred_region
      %254 = dma.done [#allocation26], 16
    $region121: #{tpu_custom_call.1} parent=1 // pred_fallthru
      _
    // Predicated region
    $region122: #{tpu_custom_call.1} parent=1 // pred_check
      _
    $region123: #{tpu_custom_call.1} parent=1 // pred_check_branch
      %256 = sbr.rel (0) target = $region125
    $region124: #{tpu_custom_call.1} parent=1 // pred_region
      %257 = dma.done [#allocation29], 16
    $region125: #{tpu_custom_call.1} parent=1 // pred_fallthru
      _
    // Predicated region
    $region126: #{tpu_custom_call.1} parent=1 // pred_check
      _
    $region127: #{tpu_custom_call.1} parent=1 // pred_check_branch
      %259 = sbr.rel (0) target = $region129
    $region128: #{tpu_custom_call.1} parent=1 // pred_region
      %260 = dma.done [#allocation29], 16
    $region129: #{tpu_custom_call.1} parent=1 // pred_fallthru
      _
    // Predicated region
    $region130: #{tpu_custom_call.1} parent=1 // pred_check
      _
    $region131: #{tpu_custom_call.1} parent=1 // pred_check_branch
      %262 = sbr.rel (0) target = $region133
    $region132: #{tpu_custom_call.1} parent=1 // pred_region
      %263 = dma.done [#allocation32], 16
    $region133: #{tpu_custom_call.1} parent=1 // pred_fallthru
      _
    // Predicated region
    $region134: #{tpu_custom_call.1} parent=1 // pred_check
      _
    $region135: #{tpu_custom_call.1} parent=1 // pred_check_branch
      %265 = sbr.rel (0) target = $region137
    $region136: #{tpu_custom_call.1} parent=1 // pred_region
      %266 = dma.done [#allocation32], 16
    $region137: #{tpu_custom_call.1} parent=1 // pred_fallthru
      _
    %p268 = scmp.eq.s32.totalorder 0, 0
    // Predicated region
    $region138: #{tpu_custom_call.1} parent=1 // pred_check
      %p269 = pneg %p268
    $region139: #{tpu_custom_call.1} parent=1 // pred_check_branch
      %271 = sbr.rel (%p269) target = $region141
    $region140: #{tpu_custom_call.1} parent=1 // pred_region
      %v272 = vld [vmem:[#allocation10] sm:$0xf]
      %vm273 = vcmask 257024
      %274 = vst.msk [vmem:[#allocation2] sm:$0xf] %vm273, %v272
      %v275 = vld [vmem:[#allocation12] sm:$0xf]
      %276 = vst.msk [vmem:[#allocation4] sm:$0xf] %vm273, %v275
      %v277 = vld [vmem:[#allocation10] sm:$0xf]
      %278 = vst.msk [vmem:[#allocation3] sm:$0xf] %vm273, %v277
      %v279 = vld [vmem:[#allocation12] sm:$0xf]
      %280 = vst.msk [vmem:[#allocation5] sm:$0xf] %vm273, %v279
    $region141: #{tpu_custom_call.1} parent=1 // pred_fallthru
      _
    %v281 = vld [vmem:[#allocation7] sm:$0xff]
    %v282 = vld [vmem:[#allocation7 + $0x8] sm:$0xff]
    %v283 = vld [vmem:[#allocation7 + $0x10] sm:$0xff]
    %v284 = vld [vmem:[#allocation7 + $0x18] sm:$0xff]
    %v285 = vpack.c.bf16 %v282, %v281
    %v286 = vpack.c.bf16 %v284, %v283
    %v287 = vld [vmem:[#allocation13] sm:$0xff]
    %v288 = vld [vmem:[#allocation13 + $0x8] sm:$0xff]
    %v289 = vld [vmem:[#allocation13 + $0x10] sm:$0xff]
    %v290 = vld [vmem:[#allocation13 + $0x18] sm:$0xff]
    %v291 = vpack.c.bf16 %v288, %v287
    %v292 = vpack.c.bf16 %v290, %v289
    %vm293 = vcmask 261120
    %v295 = vsel %vm293, %v285, 0
    %v298 = vsel %vm293, %v286, 0
    %300 = vmatprep.subr.bf16.mxu0 0
    %301 = vmatpush1.bf16.msra.mxu0 %v291
    %302 = vmatprep.subr.bf16.mxu0 0
    %303 = vmatpush1.bf16.msra.mxu0 %v292
    %304 = vmatprep.subr.bf16.mxu0 0
    %305 = vmatpush1.bf16.msra.mxu0 0
    %306 = vmatprep.subr.bf16.mxu0 0
    %307 = vmatpush1.bf16.msra.mxu0 0
    %308 = vmatprep.subr.bf16.mxu0 0
    %309 = vmatpush1.bf16.msra.mxu0 0
    %310 = vmatprep.subr.bf16.mxu0 0
    %311 = vmatpush1.bf16.msra.mxu0 0
    %312 = vmatprep.subr.bf16.mxu0 0
    %313 = vmatpush1.bf16.msra.mxu0 0
    %314 = vmatprep.subr.bf16.mxu0 0
    %315 = vmatpush1.bf16.msra.mxu0 0
    %316 = vmatprep.subr.bf16.mxu0 0
    %317 = vmatpush1.bf16.msra.mxu0 0
    %318 = vmatprep.subr.bf16.mxu0 0
    %319 = vmatpush1.bf16.msra.mxu0 0
    %320 = vmatprep.subr.bf16.mxu0 0
    %321 = vmatpush1.bf16.msra.mxu0 0
    %322 = vmatprep.subr.bf16.mxu0 0
    %323 = vmatpush1.bf16.msra.mxu0 0
    %324 = vmatprep.subr.bf16.mxu0 0
    %325 = vmatpush1.bf16.msra.mxu0 0
    %326 = vmatprep.subr.bf16.mxu0 0
    %327 = vmatpush1.bf16.msra.mxu0 0
    %328 = vmatprep.subr.bf16.mxu0 0
    %329 = vmatpush1.bf16.msra.mxu0 0
    %330 = vmatprep.subr.bf16.mxu0 0
    %331 = vmatpush1.bf16.msra.mxu0 0
    %332 = vmatprep.mubr.bf16.mxu0 0
    %333 = vmatmul.mubr.bf16.gmra.mrb[0].mxu0 %v295
    %v334 = vpop.f32.mrb[0].mxu0
    %v335 = vadd.f32 0.0, %v334
    %v336 = vpop.f32.mrb[0].mxu0
    %v337 = vpop.f32.mrb[0].mxu0
    %v338 = vadd.f32 0.0, %v337
    %v339 = vpop.f32.mrb[0].mxu0
    %340 = vmatprep.mubr.bf16.mxu0 0
    %341 = vmatmul.mubr.bf16.gmra.mrb[0].mxu0 %v298
    %v342 = vpop.f32.mrb[0].mxu0
    %v343 = vadd.f32 0.0, %v342
    %v344 = vpop.f32.mrb[0].mxu0
    %v345 = vpop.f32.mrb[0].mxu0
    %v346 = vadd.f32 0.0, %v345
    %v347 = vpop.f32.mrb[0].mxu0
    %348 = vdwg.mxu0
    %v349 = vld [vmem:[#allocation15] sm:$0xff]
    %v350 = vld [vmem:[#allocation15 + $0x8] sm:$0xff]
    %v351 = vld [vmem:[#allocation15 + $0x10] sm:$0xff]
    %v352 = vld [vmem:[#allocation15 + $0x18] sm:$0xff]
    %v353 = vpack.c.bf16 %v350, %v349
    %v354 = vpack.c.bf16 %v352, %v351
    %v355 = vld [vmem:[#allocation16] sm:$0x1]
    %v357 = vlaneseq
    %v358 = vshrl.u32 %v357, 7
    %v359 = vsub.s32 0, %v358
    %v360 = vrot.slane %v355, %v359
    %v362 = vld [vmem:[#allocation18] sm:$0x1]
    %v363 = vld [vmem:[#allocation19] sm:$0x1]
    %v364 = vld [vmem:[#allocation21] sm:$0x1]
    %v365 = vld [vmem:[#allocation22] sm:$0x1]
    %v366 = vld [vmem:[#allocation2] sm:$0xf]
    %v367 = vld [vmem:[#allocation4] sm:$0xf]
    %vm368 = vcmask 1043456
    %v369 = vsel %vm368, %v335, 0.0
    %v370 = vrot.slane %v369, 4
    %v371 = vadd.f32 %v369, %v370
    %v372 = vrot.slane %v371, 2
    %v373 = vadd.f32 %v371, %v372
    %v374 = vrot.slane %v373, 1
    %v375 = vadd.f32 %v373, %v374
    %v376 = vrcp.pop 4.0
    %v377 = vmul.f32 %v375, %v376
    %v378 = vsub.f32 %v335, %v377
    %v379 = vmul.f32 %v378, %v378
    %v380 = vsel %vm368, %v379, 0.0
    %v381 = vrot.slane %v380, 4
    %v382 = vadd.f32 %v380, %v381
    %v383 = vrot.slane %v382, 2
    %v384 = vadd.f32 %v382, %v383
    %v385 = vrot.slane %v384, 1
    %v386 = vadd.f32 %v384, %v385
    %v387 = vmul.f32 %v386, 0.33333334
    %v388 = vmul.f32 %v387, 0.9
    %v389 = vadd.f32 %v388, 0.1
    %v390 = vadd.f32 %v389, 1e-05
    %v391 = vrcp.pop %v390
    %v392 = vmul.f32 %v362, %v391
    %v393 = vmul.f32 %v377, 0.9
    %v394 = vsub.f32 %v335, %v393
    %v396 = vlaneseq
    %v397 = vshrl.u32 %v396, 7
    %v398 = vsub.s32 0, %v397
    %v399 = vrot.slane %v392, %v398
    %v401 = vmul.f32 %v394, %v399
    %v402 = vpack.c.bf16 %v366, %v366
    %v404 = vsel %vm293, %v402, 0
    %406 = vmatprep.subr.bf16.mxu0 0
    %407 = vmatpush1.bf16.msra.mxu0 %v353
    %408 = vmatprep.subr.bf16.mxu0 0
    %409 = vmatpush1.bf16.msra.mxu0 %v354
    %410 = vmatprep.subr.bf16.mxu0 0
    %411 = vmatpush1.bf16.msra.mxu0 0
    %412 = vmatprep.subr.bf16.mxu0 0
    %413 = vmatpush1.bf16.msra.mxu0 0
    %414 = vmatprep.subr.bf16.mxu0 0
    %415 = vmatpush1.bf16.msra.mxu0 0
    %416 = vmatprep.subr.bf16.mxu0 0
    %417 = vmatpush1.bf16.msra.mxu0 0
    %418 = vmatprep.subr.bf16.mxu0 0
    %419 = vmatpush1.bf16.msra.mxu0 0
    %420 = vmatprep.subr.bf16.mxu0 0
    %421 = vmatpush1.bf16.msra.mxu0 0
    %422 = vmatprep.subr.bf16.mxu0 0
    %423 = vmatpush1.bf16.msra.mxu0 0
    %424 = vmatprep.subr.bf16.mxu0 0
    %425 = vmatpush1.bf16.msra.mxu0 0
    %426 = vmatprep.subr.bf16.mxu0 0
    %427 = vmatpush1.bf16.msra.mxu0 0
    %428 = vmatprep.subr.bf16.mxu0 0
    %429 = vmatpush1.bf16.msra.mxu0 0
    %430 = vmatprep.subr.bf16.mxu0 0
    %431 = vmatpush1.bf16.msra.mxu0 0
    %432 = vmatprep.subr.bf16.mxu0 0
    %433 = vmatpush1.bf16.msra.mxu0 0
    %434 = vmatprep.subr.bf16.mxu0 0
    %435 = vmatpush1.bf16.msra.mxu0 0
    %436 = vmatprep.subr.bf16.mxu0 0
    %437 = vmatpush1.bf16.msra.mxu0 0
    %438 = vmatprep.mubr.bf16.mxu0 0
    %439 = vmatmul.mubr.bf16.gmra.mrb[0].mxu0 %v404
    %v440 = vpop.f32.mrb[0].mxu0
    %v441 = vadd.f32 0.0, %v440
    %v442 = vpop.f32.mrb[0].mxu0
    %v443 = vpop.f32.mrb[0].mxu0
    %v444 = vpop.f32.mrb[0].mxu0
    %445 = vdwg.mxu0
    %v446 = vsel %vm368, %v441, 0.0
    %v447 = vrot.slane %v446, 4
    %v448 = vadd.f32 %v446, %v447
    %v449 = vrot.slane %v448, 2
    %v450 = vadd.f32 %v448, %v449
    %v451 = vrot.slane %v450, 1
    %v452 = vadd.f32 %v450, %v451
    %v453 = vmul.f32 %v452, %v376
    %v454 = vsub.f32 %v441, %v453
    %v455 = vmul.f32 %v454, %v454
    %v456 = vsel %vm368, %v455, 0.0
    %v457 = vrot.slane %v456, 4
    %v458 = vadd.f32 %v456, %v457
    %v459 = vrot.slane %v458, 2
    %v460 = vadd.f32 %v458, %v459
    %v461 = vrot.slane %v460, 1
    %v462 = vadd.f32 %v460, %v461
    %v463 = vmul.f32 %v462, 0.33333334
    %v464 = vmul.f32 %v463, 0.9
    %v465 = vadd.f32 %v464, 0.1
    %v466 = vadd.f32 %v465, 1e-05
    %v467 = vrcp.pop %v466
    %v468 = vmul.f32 %v363, %v467
    %v469 = vmul.f32 %v453, 0.9
    %v470 = vsub.f32 %v441, %v469
    %v472 = vlaneseq
    %v473 = vshrl.u32 %v472, 7
    %v474 = vsub.s32 0, %v473
    %v475 = vrot.slane %v468, %v474
    %v477 = vmul.f32 %v470, %v475
    %v478 = vadd.f32 %v477, %v401
    %v479 = vadd.f32 %v478, %v360
    %v480 = vxor.u32 %v479, 2147483648
    %v481 = vmul.f32 %v480, 1.442695
    %v482 = vpow.pop %v481
    %v483 = vadd.f32 %v482, 1.0
    %v484 = vrcp.pop %v483
    %v485 = vmul.f32 1.0, %v484
    %v486 = vtanh.pop %v479
    %v487 = vmul.f32 %v485, %v367
    %489 = vrot.lane.b32.xlu0 %v486, 64
    %v490 = vpop.permute.xlu0 %489
    %v492 = vmul.f32 %v485, %v490
    %494 = vrot.lane.b32.xlu0 %v492, 96
    %v495 = vpop.permute.xlu0 %494
    %v497 = vadd.f32 %v487, %v495
    %vm498 = vcmask 257024
    %v499 = vsel %vm498, %v497, 0.0
    %v500 = vrot.slane %v499, 4
    %v501 = vadd.f32 %v499, %v500
    %v502 = vrot.slane %v501, 2
    %v503 = vadd.f32 %v501, %v502
    %v504 = vrot.slane %v503, 1
    %v505 = vadd.f32 %v503, %v504
    %v506 = vmul.f32 %v505, %v376
    %v507 = vsub.f32 %v497, %v506
    %v508 = vmul.f32 %v507, %v507
    %v509 = vsel %vm498, %v508, 0.0
    %v510 = vrot.slane %v509, 4
    %v511 = vadd.f32 %v509, %v510
    %v512 = vrot.slane %v511, 2
    %v513 = vadd.f32 %v511, %v512
    %v514 = vrot.slane %v513, 1
    %v515 = vadd.f32 %v513, %v514
    %v516 = vmul.f32 %v515, 0.33333334
    %v517 = vmul.f32 %v516, 0.9
    %v518 = vadd.f32 %v517, 0.1
    %v519 = vadd.f32 %v518, 1e-05
    %v520 = vrcp.pop %v519
    %v521 = vmul.f32 %v364, %v520
    %v522 = vmul.f32 %v506, 0.9
    %v523 = vsub.f32 %v497, %v522
    %v525 = vlaneseq
    %v526 = vshrl.u32 %v525, 7
    %v527 = vsub.s32 0, %v526
    %v528 = vrot.slane %v521, %v527
    %v530 = vmul.f32 %v523, %v528
    %v532 = vlaneseq
    %v533 = vshrl.u32 %v532, 7
    %v534 = vsub.s32 0, %v533
    %v535 = vrot.slane %v365, %v534
    %v537 = vadd.f32 %v530, %v535
    %v538 = vtanh.pop %v537
    %540 = vrot.lane.b32.xlu0 %v538, 64
    %v541 = vpop.permute.xlu0 %540
    %v543 = vmul.f32 %v485, %v541
    %545 = vrot.lane.b32.xlu0 %v543, 64
    %v546 = vpop.permute.xlu0 %545
    %548 = vst.msk [vmem:[#allocation6] sm:$0xf] %vm498, %v546
    %v550 = vrot.slane %v335, 4
    %v552 = vsel %vm368, %v550, 0.0
    %v553 = vrot.slane %v552, 4
    %v554 = vadd.f32 %v552, %v553
    %v555 = vrot.slane %v554, 2
    %v556 = vadd.f32 %v554, %v555
    %v557 = vrot.slane %v556, 1
    %v558 = vadd.f32 %v556, %v557
    %v559 = vmul.f32 %v558, %v376
    %v560 = vsub.f32 %v335, %v559
    %v561 = vmul.f32 %v560, %v560
    %v563 = vrot.slane %v561, 4
    %v565 = vsel %vm368, %v563, 0.0
    %v566 = vrot.slane %v565, 4
    %v567 = vadd.f32 %v565, %v566
    %v568 = vrot.slane %v567, 2
    %v569 = vadd.f32 %v567, %v568
    %v570 = vrot.slane %v569, 1
    %v571 = vadd.f32 %v569, %v570
    %v572 = vmul.f32 %v571, 0.33333334
    %v573 = vmul.f32 %v572, 0.9
    %v574 = vadd.f32 %v573, 0.1
    %v575 = vadd.f32 %v574, 1e-05
    %v576 = vrcp.pop %v575
    %v577 = vmul.f32 %v362, %v576
    %v578 = vmul.f32 %v559, 0.9
    %v579 = vsub.f32 %v335, %v578
    %v581 = vlaneseq
    %v582 = vshrl.u32 %v581, 7
    %v583 = vsub.s32 0, %v582
    %v584 = vrot.slane %v577, %v583
    %v586 = vmul.f32 %v579, %v584
    %v587 = vpack.c.bf16 %v543, %v543
    %589 = vrot.lane.b32.xlu0 %v587, 64
    %v590 = vpop.permute.xlu0 %589
    %v592 = vsel %vm293, %v590, 0
    %594 = vmatprep.subr.bf16.mxu0 0
    %595 = vmatpush1.bf16.msra.mxu0 %v353
    %596 = vmatprep.subr.bf16.mxu0 0
    %597 = vmatpush1.bf16.msra.mxu0 %v354
    %598 = vmatprep.subr.bf16.mxu0 0
    %599 = vmatpush1.bf16.msra.mxu0 0
    %600 = vmatprep.subr.bf16.mxu0 0
    %601 = vmatpush1.bf16.msra.mxu0 0
    %602 = vmatprep.subr.bf16.mxu0 0
    %603 = vmatpush1.bf16.msra.mxu0 0
    %604 = vmatprep.subr.bf16.mxu0 0
    %605 = vmatpush1.bf16.msra.mxu0 0
    %606 = vmatprep.subr.bf16.mxu0 0
    %607 = vmatpush1.bf16.msra.mxu0 0
    %608 = vmatprep.subr.bf16.mxu0 0
    %609 = vmatpush1.bf16.msra.mxu0 0
    %610 = vmatprep.subr.bf16.mxu0 0
    %611 = vmatpush1.bf16.msra.mxu0 0
    %612 = vmatprep.subr.bf16.mxu0 0
    %613 = vmatpush1.bf16.msra.mxu0 0
    %614 = vmatprep.subr.bf16.mxu0 0
    %615 = vmatpush1.bf16.msra.mxu0 0
    %616 = vmatprep.subr.bf16.mxu0 0
    %617 = vmatpush1.bf16.msra.mxu0 0
    %618 = vmatprep.subr.bf16.mxu0 0
    %619 = vmatpush1.bf16.msra.mxu0 0
    %620 = vmatprep.subr.bf16.mxu0 0
    %621 = vmatpush1.bf16.msra.mxu0 0
    %622 = vmatprep.subr.bf16.mxu0 0
    %623 = vmatpush1.bf16.msra.mxu0 0
    %624 = vmatprep.subr.bf16.mxu0 0
    %625 = vmatpush1.bf16.msra.mxu0 0
    %626 = vmatprep.mubr.bf16.mxu0 0
    %627 = vmatmul.mubr.bf16.gmra.mrb[0].mxu0 %v592
    %v628 = vpop.f32.mrb[0].mxu0
    %v629 = vadd.f32 0.0, %v628
    %v630 = vpop.f32.mrb[0].mxu0
    %v631 = vpop.f32.mrb[0].mxu0
    %v632 = vpop.f32.mrb[0].mxu0
    %633 = vdwg.mxu0
    %v634 = vsel %vm368, %v629, 0.0
    %v635 = vrot.slane %v634, 4
    %v636 = vadd.f32 %v634, %v635
    %v637 = vrot.slane %v636, 2
    %v638 = vadd.f32 %v636, %v637
    %v639 = vrot.slane %v638, 1
    %v640 = vadd.f32 %v638, %v639
    %v641 = vmul.f32 %v640, %v376
    %v642 = vsub.f32 %v629, %v641
    %v643 = vmul.f32 %v642, %v642
    %v644 = vsel %vm368, %v643, 0.0
    %v645 = vrot.slane %v644, 4
    %v646 = vadd.f32 %v644, %v645
    %v647 = vrot.slane %v646, 2
    %v648 = vadd.f32 %v646, %v647
    %v649 = vrot.slane %v648, 1
    %v650 = vadd.f32 %v648, %v649
    %v651 = vmul.f32 %v650, 0.33333334
    %v652 = vmul.f32 %v651, 0.9
    %v653 = vadd.f32 %v652, 0.1
    %v654 = vadd.f32 %v653, 1e-05
    %v655 = vrcp.pop %v654
    %v656 = vmul.f32 %v363, %v655
    %v657 = vmul.f32 %v641, 0.9
    %v658 = vsub.f32 %v629, %v657
    %v660 = vlaneseq
    %v661 = vshrl.u32 %v660, 7
    %v662 = vsub.s32 0, %v661
    %v663 = vrot.slane %v656, %v662
    %v665 = vmul.f32 %v658, %v663
    %v667 = vrot.slane %v586, 4
    %v669 = vadd.f32 %v665, %v667
    %v670 = vadd.f32 %v669, %v360
    %v671 = vxor.u32 %v670, 2147483648
    %v672 = vmul.f32 %v671, 1.442695
    %v673 = vpow.pop %v672
    %v674 = vadd.f32 %v673, 1.0
    %v675 = vrcp.pop %v674
    %v676 = vmul.f32 1.0, %v675
    %v677 = vtanh.pop %v670
    %v678 = vmul.f32 %v676, %v497
    %680 = vrot.lane.b32.xlu0 %v677, 64
    %v681 = vpop.permute.xlu0 %680
    %v683 = vmul.f32 %v676, %v681
    %685 = vrot.lane.b32.xlu0 %v683, 96
    %v686 = vpop.permute.xlu0 %685
    %v688 = vadd.f32 %v678, %v686
    %v689 = vsel %vm498, %v688, 0.0
    %v690 = vrot.slane %v689, 4
    %v691 = vadd.f32 %v689, %v690
    %v692 = vrot.slane %v691, 2
    %v693 = vadd.f32 %v691, %v692
    %v694 = vrot.slane %v693, 1
    %v695 = vadd.f32 %v693, %v694
    %v696 = vmul.f32 %v695, %v376
    %v697 = vsub.f32 %v688, %v696
    %v698 = vmul.f32 %v697, %v697
    %v699 = vsel %vm498, %v698, 0.0
    %v700 = vrot.slane %v699, 4
    %v701 = vadd.f32 %v699, %v700
    %v702 = vrot.slane %v701, 2
    %v703 = vadd.f32 %v701, %v702
    %v704 = vrot.slane %v703, 1
    %v705 = vadd.f32 %v703, %v704
    %v706 = vmul.f32 %v705, 0.33333334
    %v707 = vmul.f32 %v706, 0.9
    %v708 = vadd.f32 %v707, 0.1
    %v709 = vadd.f32 %v708, 1e-05
    %v710 = vrcp.pop %v709
    %v711 = vmul.f32 %v364, %v710
    %v712 = vmul.f32 %v696, 0.9
    %v713 = vsub.f32 %v688, %v712
    %v715 = vlaneseq
    %v716 = vshrl.u32 %v715, 7
    %v717 = vsub.s32 0, %v716
    %v718 = vrot.slane %v711, %v717
    %v720 = vmul.f32 %v713, %v718
    %v721 = vadd.f32 %v720, %v535
    %v722 = vtanh.pop %v721
    %724 = vrot.lane.b32.xlu0 %v722, 64
    %v725 = vpop.permute.xlu0 %724
    %v727 = vmul.f32 %v676, %v725
    %729 = vrot.lane.b32.xlu0 %v727, 64
    %v730 = vpop.permute.xlu0 %729
    %732 = vst.msk [vmem:[#allocation6 + $0x4] sm:$0xf] %vm498, %v730
    %v733 = vsel %vm368, %v338, 0.0
    %v734 = vrot.slane %v733, 4
    %v735 = vadd.f32 %v733, %v734
    %v736 = vrot.slane %v735, 2
    %v737 = vadd.f32 %v735, %v736
    %v738 = vrot.slane %v737, 1
    %v739 = vadd.f32 %v737, %v738
    %v740 = vmul.f32 %v739, %v376
    %v741 = vsub.f32 %v338, %v740
    %v742 = vmul.f32 %v741, %v741
    %v743 = vsel %vm368, %v742, 0.0
    %v744 = vrot.slane %v743, 4
    %v745 = vadd.f32 %v743, %v744
    %v746 = vrot.slane %v745, 2
    %v747 = vadd.f32 %v745, %v746
    %v748 = vrot.slane %v747, 1
    %v749 = vadd.f32 %v747, %v748
    %v750 = vmul.f32 %v749, 0.33333334
    %v751 = vmul.f32 %v750, 0.9
    %v752 = vadd.f32 %v751, 0.1
    %v753 = vadd.f32 %v752, 1e-05
    %v754 = vrcp.pop %v753
    %v755 = vmul.f32 %v362, %v754
    %v756 = vmul.f32 %v740, 0.9
    %v757 = vsub.f32 %v338, %v756
    %v759 = vlaneseq
    %v760 = vshrl.u32 %v759, 7
    %v761 = vsub.s32 0, %v760
    %v762 = vrot.slane %v755, %v761
    %v764 = vmul.f32 %v757, %v762
    %v765 = vpack.c.bf16 %v727, %v727
    %767 = vrot.lane.b32.xlu0 %v765, 64
    %v768 = vpop.permute.xlu0 %767
    %v770 = vsel %vm293, %v768, 0
    %772 = vmatprep.subr.bf16.mxu0 0
    %773 = vmatpush1.bf16.msra.mxu0 %v353
    %774 = vmatprep.subr.bf16.mxu0 0
    %775 = vmatpush1.bf16.msra.mxu0 %v354
    %776 = vmatprep.subr.bf16.mxu0 0
    %777 = vmatpush1.bf16.msra.mxu0 0
    %778 = vmatprep.subr.bf16.mxu0 0
    %779 = vmatpush1.bf16.msra.mxu0 0
    %780 = vmatprep.subr.bf16.mxu0 0
    %781 = vmatpush1.bf16.msra.mxu0 0
    %782 = vmatprep.subr.bf16.mxu0 0
    %783 = vmatpush1.bf16.msra.mxu0 0
    %784 = vmatprep.subr.bf16.mxu0 0
    %785 = vmatpush1.bf16.msra.mxu0 0
    %786 = vmatprep.subr.bf16.mxu0 0
    %787 = vmatpush1.bf16.msra.mxu0 0
    %788 = vmatprep.subr.bf16.mxu0 0
    %789 = vmatpush1.bf16.msra.mxu0 0
    %790 = vmatprep.subr.bf16.mxu0 0
    %791 = vmatpush1.bf16.msra.mxu0 0
    %792 = vmatprep.subr.bf16.mxu0 0
    %793 = vmatpush1.bf16.msra.mxu0 0
    %794 = vmatprep.subr.bf16.mxu0 0
    %795 = vmatpush1.bf16.msra.mxu0 0
    %796 = vmatprep.subr.bf16.mxu0 0
    %797 = vmatpush1.bf16.msra.mxu0 0
    %798 = vmatprep.subr.bf16.mxu0 0
    %799 = vmatpush1.bf16.msra.mxu0 0
    %800 = vmatprep.subr.bf16.mxu0 0
    %801 = vmatpush1.bf16.msra.mxu0 0
    %802 = vmatprep.subr.bf16.mxu0 0
    %803 = vmatpush1.bf16.msra.mxu0 0
    %804 = vmatprep.mubr.bf16.mxu0 0
    %805 = vmatmul.mubr.bf16.gmra.mrb[0].mxu0 %v770
    %v806 = vpop.f32.mrb[0].mxu0
    %v807 = vadd.f32 0.0, %v806
    %v808 = vpop.f32.mrb[0].mxu0
    %v809 = vpop.f32.mrb[0].mxu0
    %v810 = vpop.f32.mrb[0].mxu0
    %811 = vdwg.mxu0
    %v812 = vsel %vm368, %v807, 0.0
    %v813 = vrot.slane %v812, 4
    %v814 = vadd.f32 %v812, %v813
    %v815 = vrot.slane %v814, 2
    %v816 = vadd.f32 %v814, %v815
    %v817 = vrot.slane %v816, 1
    %v818 = vadd.f32 %v816, %v817
    %v819 = vmul.f32 %v818, %v376
    %v820 = vsub.f32 %v807, %v819
    %v821 = vmul.f32 %v820, %v820
    %v822 = vsel %vm368, %v821, 0.0
    %v823 = vrot.slane %v822, 4
    %v824 = vadd.f32 %v822, %v823
    %v825 = vrot.slane %v824, 2
    %v826 = vadd.f32 %v824, %v825
    %v827 = vrot.slane %v826, 1
    %v828 = vadd.f32 %v826, %v827
    %v829 = vmul.f32 %v828, 0.33333334
    %v830 = vmul.f32 %v829, 0.9
    %v831 = vadd.f32 %v830, 0.1
    %v832 = vadd.f32 %v831, 1e-05
    %v833 = vrcp.pop %v832
    %v834 = vmul.f32 %v363, %v833
    %v835 = vmul.f32 %v819, 0.9
    %v836 = vsub.f32 %v807, %v835
    %v838 = vlaneseq
    %v839 = vshrl.u32 %v838, 7
    %v840 = vsub.s32 0, %v839
    %v841 = vrot.slane %v834, %v840
    %v843 = vmul.f32 %v836, %v841
    %v844 = vadd.f32 %v843, %v764
    %v845 = vadd.f32 %v844, %v360
    %v846 = vxor.u32 %v845, 2147483648
    %v847 = vmul.f32 %v846, 1.442695
    %v848 = vpow.pop %v847
    %v849 = vadd.f32 %v848, 1.0
    %v850 = vrcp.pop %v849
    %v851 = vmul.f32 1.0, %v850
    %v852 = vtanh.pop %v845
    %v853 = vmul.f32 %v851, %v688
    %855 = vrot.lane.b32.xlu0 %v852, 64
    %v856 = vpop.permute.xlu0 %855
    %v858 = vmul.f32 %v851, %v856
    %860 = vrot.lane.b32.xlu0 %v858, 96
    %v861 = vpop.permute.xlu0 %860
    %v863 = vadd.f32 %v853, %v861
    %v864 = vsel %vm498, %v863, 0.0
    %v865 = vrot.slane %v864, 4
    %v866 = vadd.f32 %v864, %v865
    %v867 = vrot.slane %v866, 2
    %v868 = vadd.f32 %v866, %v867
    %v869 = vrot.slane %v868, 1
    %v870 = vadd.f32 %v868, %v869
    %v871 = vmul.f32 %v870, %v376
    %v872 = vsub.f32 %v863, %v871
    %v873 = vmul.f32 %v872, %v872
    %v874 = vsel %vm498, %v873, 0.0
    %v875 = vrot.slane %v874, 4
    %v876 = vadd.f32 %v874, %v875
    %v877 = vrot.slane %v876, 2
    %v878 = vadd.f32 %v876, %v877
    %v879 = vrot.slane %v878, 1
    %v880 = vadd.f32 %v878, %v879
    %v881 = vmul.f32 %v880, 0.33333334
    %v882 = vmul.f32 %v881, 0.9
    %v883 = vadd.f32 %v882, 0.1
    %v884 = vadd.f32 %v883, 1e-05
    %v885 = vrcp.pop %v884
    %v886 = vmul.f32 %v364, %v885
    %v887 = vmul.f32 %v871, 0.9
    %v888 = vsub.f32 %v863, %v887
    %v890 = vlaneseq
    %v891 = vshrl.u32 %v890, 7
    %v892 = vsub.s32 0, %v891
    %v893 = vrot.slane %v886, %v892
    %v895 = vmul.f32 %v888, %v893
    %v896 = vadd.f32 %v895, %v535
    %v897 = vtanh.pop %v896
    %899 = vrot.lane.b32.xlu0 %v897, 64
    %v900 = vpop.permute.xlu0 %899
    %v902 = vmul.f32 %v851, %v900
    %904 = vrot.lane.b32.xlu0 %v902, 64
    %v905 = vpop.permute.xlu0 %904
    %907 = vst.msk [vmem:[#allocation6 + $0x8] sm:$0xf] %vm498, %v905
    %v909 = vrot.slane %v338, 4
    %v911 = vsel %vm368, %v909, 0.0
    %v912 = vrot.slane %v911, 4
    %v913 = vadd.f32 %v911, %v912
    %v914 = vrot.slane %v913, 2
    %v915 = vadd.f32 %v913, %v914
    %v916 = vrot.slane %v915, 1
    %v917 = vadd.f32 %v915, %v916
    %v918 = vmul.f32 %v917, %v376
    %v919 = vsub.f32 %v338, %v918
    %v920 = vmul.f32 %v919, %v919
    %v922 = vrot.slane %v920, 4
    %v924 = vsel %vm368, %v922, 0.0
    %v925 = vrot.slane %v924, 4
    %v926 = vadd.f32 %v924, %v925
    %v927 = vrot.slane %v926, 2
    %v928 = vadd.f32 %v926, %v927
    %v929 = vrot.slane %v928, 1
    %v930 = vadd.f32 %v928, %v929
    %v931 = vmul.f32 %v930, 0.33333334
    %v932 = vmul.f32 %v931, 0.9
    %v933 = vadd.f32 %v932, 0.1
    %v934 = vadd.f32 %v933, 1e-05
    %v935 = vrcp.pop %v934
    %v936 = vmul.f32 %v362, %v935
    %v937 = vmul.f32 %v918, 0.9
    %v938 = vsub.f32 %v338, %v937
    %v940 = vlaneseq
    %v941 = vshrl.u32 %v940, 7
    %v942 = vsub.s32 0, %v941
    %v943 = vrot.slane %v936, %v942
    %v945 = vmul.f32 %v938, %v943
    %v946 = vpack.c.bf16 %v902, %v902
    %948 = vrot.lane.b32.xlu0 %v946, 64
    %v949 = vpop.permute.xlu0 %948
    %v951 = vsel %vm293, %v949, 0
    %953 = vmatprep.subr.bf16.mxu0 0
    %954 = vmatpush1.bf16.msra.mxu0 %v353
    %955 = vmatprep.subr.bf16.mxu0 0
    %956 = vmatpush1.bf16.msra.mxu0 %v354
    %957 = vmatprep.subr.bf16.mxu0 0
    %958 = vmatpush1.bf16.msra.mxu0 0
    %959 = vmatprep.subr.bf16.mxu0 0
    %960 = vmatpush1.bf16.msra.mxu0 0
    %961 = vmatprep.subr.bf16.mxu0 0
    %962 = vmatpush1.bf16.msra.mxu0 0
    %963 = vmatprep.subr.bf16.mxu0 0
    %964 = vmatpush1.bf16.msra.mxu0 0
    %965 = vmatprep.subr.bf16.mxu0 0
    %966 = vmatpush1.bf16.msra.mxu0 0
    %967 = vmatprep.subr.bf16.mxu0 0
    %968 = vmatpush1.bf16.msra.mxu0 0
    %969 = vmatprep.subr.bf16.mxu0 0
    %970 = vmatpush1.bf16.msra.mxu0 0
    %971 = vmatprep.subr.bf16.mxu0 0
    %972 = vmatpush1.bf16.msra.mxu0 0
    %973 = vmatprep.subr.bf16.mxu0 0
    %974 = vmatpush1.bf16.msra.mxu0 0
    %975 = vmatprep.subr.bf16.mxu0 0
    %976 = vmatpush1.bf16.msra.mxu0 0
    %977 = vmatprep.subr.bf16.mxu0 0
    %978 = vmatpush1.bf16.msra.mxu0 0
    %979 = vmatprep.subr.bf16.mxu0 0
    %980 = vmatpush1.bf16.msra.mxu0 0
    %981 = vmatprep.subr.bf16.mxu0 0
    %982 = vmatpush1.bf16.msra.mxu0 0
    %983 = vmatprep.subr.bf16.mxu0 0
    %984 = vmatpush1.bf16.msra.mxu0 0
    %985 = vmatprep.mubr.bf16.mxu0 0
    %986 = vmatmul.mubr.bf16.gmra.mrb[0].mxu0 %v951
    %v987 = vpop.f32.mrb[0].mxu0
    %v988 = vadd.f32 0.0, %v987
    %v989 = vpop.f32.mrb[0].mxu0
    %v990 = vpop.f32.mrb[0].mxu0
    %v991 = vpop.f32.mrb[0].mxu0
    %992 = vdwg.mxu0
    %v993 = vsel %vm368, %v988, 0.0
    %v994 = vrot.slane %v993, 4
    %v995 = vadd.f32 %v993, %v994
    %v996 = vrot.slane %v995, 2
    %v997 = vadd.f32 %v995, %v996
    %v998 = vrot.slane %v997, 1
    %v999 = vadd.f32 %v997, %v998
    %v1000 = vmul.f32 %v999, %v376
    %v1001 = vsub.f32 %v988, %v1000
    %v1002 = vmul.f32 %v1001, %v1001
    %v1003 = vsel %vm368, %v1002, 0.0
    %v1004 = vrot.slane %v1003, 4
    %v1005 = vadd.f32 %v1003, %v1004
    %v1006 = vrot.slane %v1005, 2
    %v1007 = vadd.f32 %v1005, %v1006
    %v1008 = vrot.slane %v1007, 1
    %v1009 = vadd.f32 %v1007, %v1008
    %v1010 = vmul.f32 %v1009, 0.33333334
    %v1011 = vmul.f32 %v1010, 0.9
    %v1012 = vadd.f32 %v1011, 0.1
    %v1013 = vadd.f32 %v1012, 1e-05
    %v1014 = vrcp.pop %v1013
    %v1015 = vmul.f32 %v363, %v1014
    %v1016 = vmul.f32 %v1000, 0.9
    %v1017 = vsub.f32 %v988, %v1016
    %v1019 = vlaneseq
    %v1020 = vshrl.u32 %v1019, 7
    %v1021 = vsub.s32 0, %v1020
    %v1022 = vrot.slane %v1015, %v1021
    %v1024 = vmul.f32 %v1017, %v1022
    %v1026 = vrot.slane %v945, 4
    %v1028 = vadd.f32 %v1024, %v1026
    %v1029 = vadd.f32 %v1028, %v360
    %v1030 = vxor.u32 %v1029, 2147483648
    %v1031 = vmul.f32 %v1030, 1.442695
    %v1032 = vpow.pop %v1031
    %v1033 = vadd.f32 %v1032, 1.0
    %v1034 = vrcp.pop %v1033
    %v1035 = vmul.f32 1.0, %v1034
    %v1036 = vtanh.pop %v1029
    %v1037 = vmul.f32 %v1035, %v863
    %1039 = vrot.lane.b32.xlu0 %v1036, 64
    %v1040 = vpop.permute.xlu0 %1039
    %v1042 = vmul.f32 %v1035, %v1040
    %1044 = vrot.lane.b32.xlu0 %v1042, 96
    %v1045 = vpop.permute.xlu0 %1044
    %v1047 = vadd.f32 %v1037, %v1045
    %v1048 = vsel %vm498, %v1047, 0.0
    %v1049 = vrot.slane %v1048, 4
    %v1050 = vadd.f32 %v1048, %v1049
    %v1051 = vrot.slane %v1050, 2
    %v1052 = vadd.f32 %v1050, %v1051
    %v1053 = vrot.slane %v1052, 1
    %v1054 = vadd.f32 %v1052, %v1053
    %v1055 = vmul.f32 %v1054, %v376
    %v1056 = vsub.f32 %v1047, %v1055
    %v1057 = vmul.f32 %v1056, %v1056
    %v1058 = vsel %vm498, %v1057, 0.0
    %v1059 = vrot.slane %v1058, 4
    %v1060 = vadd.f32 %v1058, %v1059
    %v1061 = vrot.slane %v1060, 2
    %v1062 = vadd.f32 %v1060, %v1061
    %v1063 = vrot.slane %v1062, 1
    %v1064 = vadd.f32 %v1062, %v1063
    %v1065 = vmul.f32 %v1064, 0.33333334
    %v1066 = vmul.f32 %v1065, 0.9
    %v1067 = vadd.f32 %v1066, 0.1
    %v1068 = vadd.f32 %v1067, 1e-05
    %v1069 = vrcp.pop %v1068
    %v1070 = vmul.f32 %v364, %v1069
    %v1071 = vmul.f32 %v1055, 0.9
    %v1072 = vsub.f32 %v1047, %v1071
    %v1074 = vlaneseq
    %v1075 = vshrl.u32 %v1074, 7
    %v1076 = vsub.s32 0, %v1075
    %v1077 = vrot.slane %v1070, %v1076
    %v1079 = vmul.f32 %v1072, %v1077
    %v1080 = vadd.f32 %v1079, %v535
    %v1081 = vtanh.pop %v1080
    %1083 = vrot.lane.b32.xlu0 %v1081, 64
    %v1084 = vpop.permute.xlu0 %1083
    %v1086 = vmul.f32 %v1035, %v1084
    %1088 = vrot.lane.b32.xlu0 %v1086, 64
    %v1089 = vpop.permute.xlu0 %1088
    %1091 = vst.msk [vmem:[#allocation6 + $0xc] sm:$0xf] %vm498, %v1089
    %v1092 = vsel %vm368, %v343, 0.0
    %v1093 = vrot.slane %v1092, 4
    %v1094 = vadd.f32 %v1092, %v1093
    %v1095 = vrot.slane %v1094, 2
    %v1096 = vadd.f32 %v1094, %v1095
    %v1097 = vrot.slane %v1096, 1
    %v1098 = vadd.f32 %v1096, %v1097
    %v1099 = vmul.f32 %v1098, %v376
    %v1100 = vsub.f32 %v343, %v1099
    %v1101 = vmul.f32 %v1100, %v1100
    %v1102 = vsel %vm368, %v1101, 0.0
    %v1103 = vrot.slane %v1102, 4
    %v1104 = vadd.f32 %v1102, %v1103
    %v1105 = vrot.slane %v1104, 2
    %v1106 = vadd.f32 %v1104, %v1105
    %v1107 = vrot.slane %v1106, 1
    %v1108 = vadd.f32 %v1106, %v1107
    %v1109 = vmul.f32 %v1108, 0.33333334
    %v1110 = vmul.f32 %v1109, 0.9
    %v1111 = vadd.f32 %v1110, 0.1
    %v1112 = vadd.f32 %v1111, 1e-05
    %v1113 = vrcp.pop %v1112
    %v1114 = vmul.f32 %v362, %v1113
    %v1115 = vmul.f32 %v1099, 0.9
    %v1116 = vsub.f32 %v343, %v1115
    %v1118 = vlaneseq
    %v1119 = vshrl.u32 %v1118, 7
    %v1120 = vsub.s32 0, %v1119
    %v1121 = vrot.slane %v1114, %v1120
    %v1123 = vmul.f32 %v1116, %v1121
    %v1124 = vpack.c.bf16 %v1086, %v1086
    %1126 = vrot.lane.b32.xlu0 %v1124, 64
    %v1127 = vpop.permute.xlu0 %1126
    %v1129 = vsel %vm293, %v1127, 0
    %1131 = vmatprep.subr.bf16.mxu0 0
    %1132 = vmatpush1.bf16.msra.mxu0 %v353
    %1133 = vmatprep.subr.bf16.mxu0 0
    %1134 = vmatpush1.bf16.msra.mxu0 %v354
    %1135 = vmatprep.subr.bf16.mxu0 0
    %1136 = vmatpush1.bf16.msra.mxu0 0
    %1137 = vmatprep.subr.bf16.mxu0 0
    %1138 = vmatpush1.bf16.msra.mxu0 0
    %1139 = vmatprep.subr.bf16.mxu0 0
    %1140 = vmatpush1.bf16.msra.mxu0 0
    %1141 = vmatprep.subr.bf16.mxu0 0
    %1142 = vmatpush1.bf16.msra.mxu0 0
    %1143 = vmatprep.subr.bf16.mxu0 0
    %1144 = vmatpush1.bf16.msra.mxu0 0
    %1145 = vmatprep.subr.bf16.mxu0 0
    %1146 = vmatpush1.bf16.msra.mxu0 0
    %1147 = vmatprep.subr.bf16.mxu0 0
    %1148 = vmatpush1.bf16.msra.mxu0 0
    %1149 = vmatprep.subr.bf16.mxu0 0
    %1150 = vmatpush1.bf16.msra.mxu0 0
    %1151 = vmatprep.subr.bf16.mxu0 0
    %1152 = vmatpush1.bf16.msra.mxu0 0
    %1153 = vmatprep.subr.bf16.mxu0 0
    %1154 = vmatpush1.bf16.msra.mxu0 0
    %1155 = vmatprep.subr.bf16.mxu0 0
    %1156 = vmatpush1.bf16.msra.mxu0 0
    %1157 = vmatprep.subr.bf16.mxu0 0
    %1158 = vmatpush1.bf16.msra.mxu0 0
    %1159 = vmatprep.subr.bf16.mxu0 0
    %1160 = vmatpush1.bf16.msra.mxu0 0
    %1161 = vmatprep.subr.bf16.mxu0 0
    %1162 = vmatpush1.bf16.msra.mxu0 0
    %1163 = vmatprep.mubr.bf16.mxu0 0
    %1164 = vmatmul.mubr.bf16.gmra.mrb[0].mxu0 %v1129
    %v1165 = vpop.f32.mrb[0].mxu0
    %v1166 = vadd.f32 0.0, %v1165
    %v1167 = vpop.f32.mrb[0].mxu0
    %v1168 = vpop.f32.mrb[0].mxu0
    %v1169 = vpop.f32.mrb[0].mxu0
    %1170 = vdwg.mxu0
    %v1171 = vsel %vm368, %v1166, 0.0
    %v1172 = vrot.slane %v1171, 4
    %v1173 = vadd.f32 %v1171, %v1172
    %v1174 = vrot.slane %v1173, 2
    %v1175 = vadd.f32 %v1173, %v1174
    %v1176 = vrot.slane %v1175, 1
    %v1177 = vadd.f32 %v1175, %v1176
    %v1178 = vmul.f32 %v1177, %v376
    %v1179 = vsub.f32 %v1166, %v1178
    %v1180 = vmul.f32 %v1179, %v1179
    %v1181 = vsel %vm368, %v1180, 0.0
    %v1182 = vrot.slane %v1181, 4
    %v1183 = vadd.f32 %v1181, %v1182
    %v1184 = vrot.slane %v1183, 2
    %v1185 = vadd.f32 %v1183, %v1184
    %v1186 = vrot.slane %v1185, 1
    %v1187 = vadd.f32 %v1185, %v1186
    %v1188 = vmul.f32 %v1187, 0.33333334
    %v1189 = vmul.f32 %v1188, 0.9
    %v1190 = vadd.f32 %v1189, 0.1
    %v1191 = vadd.f32 %v1190, 1e-05
    %v1192 = vrcp.pop %v1191
    %v1193 = vmul.f32 %v363, %v1192
    %v1194 = vmul.f32 %v1178, 0.9
    %v1195 = vsub.f32 %v1166, %v1194
    %v1197 = vlaneseq
    %v1198 = vshrl.u32 %v1197, 7
    %v1199 = vsub.s32 0, %v1198
    %v1200 = vrot.slane %v1193, %v1199
    %v1202 = vmul.f32 %v1195, %v1200
    %v1203 = vadd.f32 %v1202, %v1123
    %v1204 = vadd.f32 %v1203, %v360
    %v1205 = vxor.u32 %v1204, 2147483648
    %v1206 = vmul.f32 %v1205, 1.442695
    %v1207 = vpow.pop %v1206
    %v1208 = vadd.f32 %v1207, 1.0
    %v1209 = vrcp.pop %v1208
    %v1210 = vmul.f32 1.0, %v1209
    %v1211 = vtanh.pop %v1204
    %v1212 = vmul.f32 %v1210, %v1047
    %1214 = vrot.lane.b32.xlu0 %v1211, 64
    %v1215 = vpop.permute.xlu0 %1214
    %v1217 = vmul.f32 %v1210, %v1215
    %1219 = vrot.lane.b32.xlu0 %v1217, 96
    %v1220 = vpop.permute.xlu0 %1219
    %v1222 = vadd.f32 %v1212, %v1220
    %v1223 = vsel %vm498, %v1222, 0.0
    %v1224 = vrot.slane %v1223, 4
    %v1225 = vadd.f32 %v1223, %v1224
    %v1226 = vrot.slane %v1225, 2
    %v1227 = vadd.f32 %v1225, %v1226
    %v1228 = vrot.slane %v1227, 1
    %v1229 = vadd.f32 %v1227, %v1228
    %v1230 = vmul.f32 %v1229, %v376
    %v1231 = vsub.f32 %v1222, %v1230
    %v1232 = vmul.f32 %v1231, %v1231
    %v1233 = vsel %vm498, %v1232, 0.0
    %v1234 = vrot.slane %v1233, 4
    %v1235 = vadd.f32 %v1233, %v1234
    %v1236 = vrot.slane %v1235, 2
    %v1237 = vadd.f32 %v1235, %v1236
    %v1238 = vrot.slane %v1237, 1
    %v1239 = vadd.f32 %v1237, %v1238
    %v1240 = vmul.f32 %v1239, 0.33333334
    %v1241 = vmul.f32 %v1240, 0.9
    %v1242 = vadd.f32 %v1241, 0.1
    %v1243 = vadd.f32 %v1242, 1e-05
    %v1244 = vrcp.pop %v1243
    %v1245 = vmul.f32 %v364, %v1244
    %v1246 = vmul.f32 %v1230, 0.9
    %v1247 = vsub.f32 %v1222, %v1246
    %v1249 = vlaneseq
    %v1250 = vshrl.u32 %v1249, 7
    %v1251 = vsub.s32 0, %v1250
    %v1252 = vrot.slane %v1245, %v1251
    %v1254 = vmul.f32 %v1247, %v1252
    %v1255 = vadd.f32 %v1254, %v535
    %v1256 = vtanh.pop %v1255
    %1258 = vrot.lane.b32.xlu0 %v1256, 64
    %v1259 = vpop.permute.xlu0 %1258
    %v1261 = vmul.f32 %v1210, %v1259
    %1263 = vrot.lane.b32.xlu0 %v1261, 64
    %v1264 = vpop.permute.xlu0 %1263
    %1266 = vst.msk [vmem:[#allocation6 + $0x10] sm:$0xf] %vm498, %v1264
    %v1268 = vrot.slane %v343, 4
    %v1270 = vsel %vm368, %v1268, 0.0
    %v1271 = vrot.slane %v1270, 4
    %v1272 = vadd.f32 %v1270, %v1271
    %v1273 = vrot.slane %v1272, 2
    %v1274 = vadd.f32 %v1272, %v1273
    %v1275 = vrot.slane %v1274, 1
    %v1276 = vadd.f32 %v1274, %v1275
    %v1277 = vmul.f32 %v1276, %v376
    %v1278 = vsub.f32 %v343, %v1277
    %v1279 = vmul.f32 %v1278, %v1278
    %v1281 = vrot.slane %v1279, 4
    %v1283 = vsel %vm368, %v1281, 0.0
    %v1284 = vrot.slane %v1283, 4
    %v1285 = vadd.f32 %v1283, %v1284
    %v1286 = vrot.slane %v1285, 2
    %v1287 = vadd.f32 %v1285, %v1286
    %v1288 = vrot.slane %v1287, 1
    %v1289 = vadd.f32 %v1287, %v1288
    %v1290 = vmul.f32 %v1289, 0.33333334
    %v1291 = vmul.f32 %v1290, 0.9
    %v1292 = vadd.f32 %v1291, 0.1
    %v1293 = vadd.f32 %v1292, 1e-05
    %v1294 = vrcp.pop %v1293
    %v1295 = vmul.f32 %v362, %v1294
    %v1296 = vmul.f32 %v1277, 0.9
    %v1297 = vsub.f32 %v343, %v1296
    %v1299 = vlaneseq
    %v1300 = vshrl.u32 %v1299, 7
    %v1301 = vsub.s32 0, %v1300
    %v1302 = vrot.slane %v1295, %v1301
    %v1304 = vmul.f32 %v1297, %v1302
    %v1305 = vpack.c.bf16 %v1261, %v1261
    %1307 = vrot.lane.b32.xlu0 %v1305, 64
    %v1308 = vpop.permute.xlu0 %1307
    %v1310 = vsel %vm293, %v1308, 0
    %1312 = vmatprep.subr.bf16.mxu0 0
    %1313 = vmatpush1.bf16.msra.mxu0 %v353
    %1314 = vmatprep.subr.bf16.mxu0 0
    %1315 = vmatpush1.bf16.msra.mxu0 %v354
    %1316 = vmatprep.subr.bf16.mxu0 0
    %1317 = vmatpush1.bf16.msra.mxu0 0
    %1318 = vmatprep.subr.bf16.mxu0 0
    %1319 = vmatpush1.bf16.msra.mxu0 0
    %1320 = vmatprep.subr.bf16.mxu0 0
    %1321 = vmatpush1.bf16.msra.mxu0 0
    %1322 = vmatprep.subr.bf16.mxu0 0
    %1323 = vmatpush1.bf16.msra.mxu0 0
    %1324 = vmatprep.subr.bf16.mxu0 0
    %1325 = vmatpush1.bf16.msra.mxu0 0
    %1326 = vmatprep.subr.bf16.mxu0 0
    %1327 = vmatpush1.bf16.msra.mxu0 0
    %1328 = vmatprep.subr.bf16.mxu0 0
    %1329 = vmatpush1.bf16.msra.mxu0 0
    %1330 = vmatprep.subr.bf16.mxu0 0
    %1331 = vmatpush1.bf16.msra.mxu0 0
    %1332 = vmatprep.subr.bf16.mxu0 0
    %1333 = vmatpush1.bf16.msra.mxu0 0
    %1334 = vmatprep.subr.bf16.mxu0 0
    %1335 = vmatpush1.bf16.msra.mxu0 0
    %1336 = vmatprep.subr.bf16.mxu0 0
    %1337 = vmatpush1.bf16.msra.mxu0 0
    %1338 = vmatprep.subr.bf16.mxu0 0
    %1339 = vmatpush1.bf16.msra.mxu0 0
    %1340 = vmatprep.subr.bf16.mxu0 0
    %1341 = vmatpush1.bf16.msra.mxu0 0
    %1342 = vmatprep.subr.bf16.mxu0 0
    %1343 = vmatpush1.bf16.msra.mxu0 0
    %1344 = vmatprep.mubr.bf16.mxu0 0
    %1345 = vmatmul.mubr.bf16.gmra.mrb[0].mxu0 %v1310
    %v1346 = vpop.f32.mrb[0].mxu0
    %v1347 = vadd.f32 0.0, %v1346
    %v1348 = vpop.f32.mrb[0].mxu0
    %v1349 = vpop.f32.mrb[0].mxu0
    %v1350 = vpop.f32.mrb[0].mxu0
    %1351 = vdwg.mxu0
    %v1352 = vsel %vm368, %v1347, 0.0
    %v1353 = vrot.slane %v1352, 4
    %v1354 = vadd.f32 %v1352, %v1353
    %v1355 = vrot.slane %v1354, 2
    %v1356 = vadd.f32 %v1354, %v1355
    %v1357 = vrot.slane %v1356, 1
    %v1358 = vadd.f32 %v1356, %v1357
    %v1359 = vmul.f32 %v1358, %v376
    %v1360 = vsub.f32 %v1347, %v1359
    %v1361 = vmul.f32 %v1360, %v1360
    %v1362 = vsel %vm368, %v1361, 0.0
    %v1363 = vrot.slane %v1362, 4
    %v1364 = vadd.f32 %v1362, %v1363
    %v1365 = vrot.slane %v1364, 2
    %v1366 = vadd.f32 %v1364, %v1365
    %v1367 = vrot.slane %v1366, 1
    %v1368 = vadd.f32 %v1366, %v1367
    %v1369 = vmul.f32 %v1368, 0.33333334
    %v1370 = vmul.f32 %v1369, 0.9
    %v1371 = vadd.f32 %v1370, 0.1
    %v1372 = vadd.f32 %v1371, 1e-05
    %v1373 = vrcp.pop %v1372
    %v1374 = vmul.f32 %v363, %v1373
    %v1375 = vmul.f32 %v1359, 0.9
    %v1376 = vsub.f32 %v1347, %v1375
    %v1378 = vlaneseq
    %v1379 = vshrl.u32 %v1378, 7
    %v1380 = vsub.s32 0, %v1379
    %v1381 = vrot.slane %v1374, %v1380
    %v1383 = vmul.f32 %v1376, %v1381
    %v1385 = vrot.slane %v1304, 4
    %v1387 = vadd.f32 %v1383, %v1385
    %v1388 = vadd.f32 %v1387, %v360
    %v1389 = vxor.u32 %v1388, 2147483648
    %v1390 = vmul.f32 %v1389, 1.442695
    %v1391 = vpow.pop %v1390
    %v1392 = vadd.f32 %v1391, 1.0
    %v1393 = vrcp.pop %v1392
    %v1394 = vmul.f32 1.0, %v1393
    %v1395 = vtanh.pop %v1388
    %v1396 = vmul.f32 %v1394, %v1222
    %1398 = vrot.lane.b32.xlu0 %v1395, 64
    %v1399 = vpop.permute.xlu0 %1398
    %v1401 = vmul.f32 %v1394, %v1399
    %1403 = vrot.lane.b32.xlu0 %v1401, 96
    %v1404 = vpop.permute.xlu0 %1403
    %v1406 = vadd.f32 %v1396, %v1404
    %v1407 = vsel %vm498, %v1406, 0.0
    %v1408 = vrot.slane %v1407, 4
    %v1409 = vadd.f32 %v1407, %v1408
    %v1410 = vrot.slane %v1409, 2
    %v1411 = vadd.f32 %v1409, %v1410
    %v1412 = vrot.slane %v1411, 1
    %v1413 = vadd.f32 %v1411, %v1412
    %v1414 = vmul.f32 %v1413, %v376
    %v1415 = vsub.f32 %v1406, %v1414
    %v1416 = vmul.f32 %v1415, %v1415
    %v1417 = vsel %vm498, %v1416, 0.0
    %v1418 = vrot.slane %v1417, 4
    %v1419 = vadd.f32 %v1417, %v1418
    %v1420 = vrot.slane %v1419, 2
    %v1421 = vadd.f32 %v1419, %v1420
    %v1422 = vrot.slane %v1421, 1
    %v1423 = vadd.f32 %v1421, %v1422
    %v1424 = vmul.f32 %v1423, 0.33333334
    %v1425 = vmul.f32 %v1424, 0.9
    %v1426 = vadd.f32 %v1425, 0.1
    %v1427 = vadd.f32 %v1426, 1e-05
    %v1428 = vrcp.pop %v1427
    %v1429 = vmul.f32 %v364, %v1428
    %v1430 = vmul.f32 %v1414, 0.9
    %v1431 = vsub.f32 %v1406, %v1430
    %v1433 = vlaneseq
    %v1434 = vshrl.u32 %v1433, 7
    %v1435 = vsub.s32 0, %v1434
    %v1436 = vrot.slane %v1429, %v1435
    %v1438 = vmul.f32 %v1431, %v1436
    %v1439 = vadd.f32 %v1438, %v535
    %v1440 = vtanh.pop %v1439
    %1442 = vrot.lane.b32.xlu0 %v1440, 64
    %v1443 = vpop.permute.xlu0 %1442
    %v1445 = vmul.f32 %v1394, %v1443
    %1447 = vrot.lane.b32.xlu0 %v1445, 64
    %v1448 = vpop.permute.xlu0 %1447
    %1450 = vst.msk [vmem:[#allocation6 + $0x14] sm:$0xf] %vm498, %v1448
    %v1451 = vsel %vm368, %v346, 0.0
    %v1452 = vrot.slane %v1451, 4
    %v1453 = vadd.f32 %v1451, %v1452
    %v1454 = vrot.slane %v1453, 2
    %v1455 = vadd.f32 %v1453, %v1454
    %v1456 = vrot.slane %v1455, 1
    %v1457 = vadd.f32 %v1455, %v1456
    %v1458 = vmul.f32 %v1457, %v376
    %v1459 = vsub.f32 %v346, %v1458
    %v1460 = vmul.f32 %v1459, %v1459
    %v1461 = vsel %vm368, %v1460, 0.0
    %v1462 = vrot.slane %v1461, 4
    %v1463 = vadd.f32 %v1461, %v1462
    %v1464 = vrot.slane %v1463, 2
    %v1465 = vadd.f32 %v1463, %v1464
    %v1466 = vrot.slane %v1465, 1
    %v1467 = vadd.f32 %v1465, %v1466
    %v1468 = vmul.f32 %v1467, 0.33333334
    %v1469 = vmul.f32 %v1468, 0.9
    %v1470 = vadd.f32 %v1469, 0.1
    %v1471 = vadd.f32 %v1470, 1e-05
    %v1472 = vrcp.pop %v1471
    %v1473 = vmul.f32 %v362, %v1472
    %v1474 = vmul.f32 %v1458, 0.9
    %v1475 = vsub.f32 %v346, %v1474
    %v1477 = vlaneseq
    %v1478 = vshrl.u32 %v1477, 7
    %v1479 = vsub.s32 0, %v1478
    %v1480 = vrot.slane %v1473, %v1479
    %v1482 = vmul.f32 %v1475, %v1480
    %v1483 = vpack.c.bf16 %v1445, %v1445
    %1485 = vrot.lane.b32.xlu0 %v1483, 64
    %v1486 = vpop.permute.xlu0 %1485
    %v1488 = vsel %vm293, %v1486, 0
    %1490 = vmatprep.subr.bf16.mxu0 0
    %1491 = vmatpush1.bf16.msra.mxu0 %v353
    %1492 = vmatprep.subr.bf16.mxu0 0
    %1493 = vmatpush1.bf16.msra.mxu0 %v354
    %1494 = vmatprep.subr.bf16.mxu0 0
    %1495 = vmatpush1.bf16.msra.mxu0 0
    %1496 = vmatprep.subr.bf16.mxu0 0
    %1497 = vmatpush1.bf16.msra.mxu0 0
    %1498 = vmatprep.subr.bf16.mxu0 0
    %1499 = vmatpush1.bf16.msra.mxu0 0
    %1500 = vmatprep.subr.bf16.mxu0 0
    %1501 = vmatpush1.bf16.msra.mxu0 0
    %1502 = vmatprep.subr.bf16.mxu0 0
    %1503 = vmatpush1.bf16.msra.mxu0 0
    %1504 = vmatprep.subr.bf16.mxu0 0
    %1505 = vmatpush1.bf16.msra.mxu0 0
    %1506 = vmatprep.subr.bf16.mxu0 0
    %1507 = vmatpush1.bf16.msra.mxu0 0
    %1508 = vmatprep.subr.bf16.mxu0 0
    %1509 = vmatpush1.bf16.msra.mxu0 0
    %1510 = vmatprep.subr.bf16.mxu0 0
    %1511 = vmatpush1.bf16.msra.mxu0 0
    %1512 = vmatprep.subr.bf16.mxu0 0
    %1513 = vmatpush1.bf16.msra.mxu0 0
    %1514 = vmatprep.subr.bf16.mxu0 0
    %1515 = vmatpush1.bf16.msra.mxu0 0
    %1516 = vmatprep.subr.bf16.mxu0 0
    %1517 = vmatpush1.bf16.msra.mxu0 0
    %1518 = vmatprep.subr.bf16.mxu0 0
    %1519 = vmatpush1.bf16.msra.mxu0 0
    %1520 = vmatprep.subr.bf16.mxu0 0
    %1521 = vmatpush1.bf16.msra.mxu0 0
    %1522 = vmatprep.mubr.bf16.mxu0 0
    %1523 = vmatmul.mubr.bf16.gmra.mrb[0].mxu0 %v1488
    %v1524 = vpop.f32.mrb[0].mxu0
    %v1525 = vadd.f32 0.0, %v1524
    %v1526 = vpop.f32.mrb[0].mxu0
    %v1527 = vpop.f32.mrb[0].mxu0
    %v1528 = vpop.f32.mrb[0].mxu0
    %1529 = vdwg.mxu0
    %v1530 = vsel %vm368, %v1525, 0.0
    %v1531 = vrot.slane %v1530, 4
    %v1532 = vadd.f32 %v1530, %v1531
    %v1533 = vrot.slane %v1532, 2
    %v1534 = vadd.f32 %v1532, %v1533
    %v1535 = vrot.slane %v1534, 1
    %v1536 = vadd.f32 %v1534, %v1535
    %v1537 = vmul.f32 %v1536, %v376
    %v1538 = vsub.f32 %v1525, %v1537
    %v1539 = vmul.f32 %v1538, %v1538
    %v1540 = vsel %vm368, %v1539, 0.0
    %v1541 = vrot.slane %v1540, 4
    %v1542 = vadd.f32 %v1540, %v1541
    %v1543 = vrot.slane %v1542, 2
    %v1544 = vadd.f32 %v1542, %v1543
    %v1545 = vrot.slane %v1544, 1
    %v1546 = vadd.f32 %v1544, %v1545
    %v1547 = vmul.f32 %v1546, 0.33333334
    %v1548 = vmul.f32 %v1547, 0.9
    %v1549 = vadd.f32 %v1548, 0.1
    %v1550 = vadd.f32 %v1549, 1e-05
    %v1551 = vrcp.pop %v1550
    %v1552 = vmul.f32 %v363, %v1551
    %v1553 = vmul.f32 %v1537, 0.9
    %v1554 = vsub.f32 %v1525, %v1553
    %v1556 = vlaneseq
    %v1557 = vshrl.u32 %v1556, 7
    %v1558 = vsub.s32 0, %v1557
    %v1559 = vrot.slane %v1552, %v1558
    %v1561 = vmul.f32 %v1554, %v1559
    %v1562 = vadd.f32 %v1561, %v1482
    %v1563 = vadd.f32 %v1562, %v360
    %v1564 = vxor.u32 %v1563, 2147483648
    %v1565 = vmul.f32 %v1564, 1.442695
    %v1566 = vpow.pop %v1565
    %v1567 = vadd.f32 %v1566, 1.0
    %v1568 = vrcp.pop %v1567
    %v1569 = vmul.f32 1.0, %v1568
    %v1570 = vtanh.pop %v1563
    %v1571 = vmul.f32 %v1569, %v1406
    %1573 = vrot.lane.b32.xlu0 %v1570, 64
    %v1574 = vpop.permute.xlu0 %1573
    %v1576 = vmul.f32 %v1569, %v1574
    %1578 = vrot.lane.b32.xlu0 %v1576, 96
    %v1579 = vpop.permute.xlu0 %1578
    %v1581 = vadd.f32 %v1571, %v1579
    %v1582 = vsel %vm498, %v1581, 0.0
    %v1583 = vrot.slane %v1582, 4
    %v1584 = vadd.f32 %v1582, %v1583
    %v1585 = vrot.slane %v1584, 2
    %v1586 = vadd.f32 %v1584, %v1585
    %v1587 = vrot.slane %v1586, 1
    %v1588 = vadd.f32 %v1586, %v1587
    %v1589 = vmul.f32 %v1588, %v376
    %v1590 = vsub.f32 %v1581, %v1589
    %v1591 = vmul.f32 %v1590, %v1590
    %v1592 = vsel %vm498, %v1591, 0.0
    %v1593 = vrot.slane %v1592, 4
    %v1594 = vadd.f32 %v1592, %v1593
    %v1595 = vrot.slane %v1594, 2
    %v1596 = vadd.f32 %v1594, %v1595
    %v1597 = vrot.slane %v1596, 1
    %v1598 = vadd.f32 %v1596, %v1597
    %v1599 = vmul.f32 %v1598, 0.33333334
    %v1600 = vmul.f32 %v1599, 0.9
    %v1601 = vadd.f32 %v1600, 0.1
    %v1602 = vadd.f32 %v1601, 1e-05
    %v1603 = vrcp.pop %v1602
    %v1604 = vmul.f32 %v364, %v1603
    %v1605 = vmul.f32 %v1589, 0.9
    %v1606 = vsub.f32 %v1581, %v1605
    %v1608 = vlaneseq
    %v1609 = vshrl.u32 %v1608, 7
    %v1610 = vsub.s32 0, %v1609
    %v1611 = vrot.slane %v1604, %v1610
    %v1613 = vmul.f32 %v1606, %v1611
    %v1614 = vadd.f32 %v1613, %v535
    %v1615 = vtanh.pop %v1614
    %1617 = vrot.lane.b32.xlu0 %v1615, 64
    %v1618 = vpop.permute.xlu0 %1617
    %v1620 = vmul.f32 %v1569, %v1618
    %1622 = vrot.lane.b32.xlu0 %v1620, 64
    %v1623 = vpop.permute.xlu0 %1622
    %1625 = vst.msk [vmem:[#allocation6 + $0x18] sm:$0xf] %vm498, %v1623
    %v1627 = vrot.slane %v346, 4
    %v1629 = vsel %vm368, %v1627, 0.0
    %v1630 = vrot.slane %v1629, 4
    %v1631 = vadd.f32 %v1629, %v1630
    %v1632 = vrot.slane %v1631, 2
    %v1633 = vadd.f32 %v1631, %v1632
    %v1634 = vrot.slane %v1633, 1
    %v1635 = vadd.f32 %v1633, %v1634
    %v1636 = vmul.f32 %v1635, %v376
    %v1637 = vsub.f32 %v346, %v1636
    %v1638 = vmul.f32 %v1637, %v1637
    %v1640 = vrot.slane %v1638, 4
    %v1642 = vsel %vm368, %v1640, 0.0
    %v1643 = vrot.slane %v1642, 4
    %v1644 = vadd.f32 %v1642, %v1643
    %v1645 = vrot.slane %v1644, 2
    %v1646 = vadd.f32 %v1644, %v1645
    %v1647 = vrot.slane %v1646, 1
    %v1648 = vadd.f32 %v1646, %v1647
    %v1649 = vmul.f32 %v1648, 0.33333334
    %v1650 = vmul.f32 %v1649, 0.9
    %v1651 = vadd.f32 %v1650, 0.1
    %v1652 = vadd.f32 %v1651, 1e-05
    %v1653 = vrcp.pop %v1652
    %v1654 = vmul.f32 %v362, %v1653
    %v1655 = vmul.f32 %v1636, 0.9
    %v1656 = vsub.f32 %v346, %v1655
    %v1658 = vlaneseq
    %v1659 = vshrl.u32 %v1658, 7
    %v1660 = vsub.s32 0, %v1659
    %v1661 = vrot.slane %v1654, %v1660
    %v1663 = vmul.f32 %v1656, %v1661
    %v1664 = vpack.c.bf16 %v1620, %v1620
    %1666 = vrot.lane.b32.xlu0 %v1664, 64
    %v1667 = vpop.permute.xlu0 %1666
    %v1669 = vsel %vm293, %v1667, 0
    %1671 = vmatprep.subr.bf16.mxu0 0
    %1672 = vmatpush1.bf16.msra.mxu0 %v353
    %1673 = vmatprep.subr.bf16.mxu0 0
    %1674 = vmatpush1.bf16.msra.mxu0 %v354
    %1675 = vmatprep.subr.bf16.mxu0 0
    %1676 = vmatpush1.bf16.msra.mxu0 0
    %1677 = vmatprep.subr.bf16.mxu0 0
    %1678 = vmatpush1.bf16.msra.mxu0 0
    %1679 = vmatprep.subr.bf16.mxu0 0
    %1680 = vmatpush1.bf16.msra.mxu0 0
    %1681 = vmatprep.subr.bf16.mxu0 0
    %1682 = vmatpush1.bf16.msra.mxu0 0
    %1683 = vmatprep.subr.bf16.mxu0 0
    %1684 = vmatpush1.bf16.msra.mxu0 0
    %1685 = vmatprep.subr.bf16.mxu0 0
    %1686 = vmatpush1.bf16.msra.mxu0 0
    %1687 = vmatprep.subr.bf16.mxu0 0
    %1688 = vmatpush1.bf16.msra.mxu0 0
    %1689 = vmatprep.subr.bf16.mxu0 0
    %1690 = vmatpush1.bf16.msra.mxu0 0
    %1691 = vmatprep.subr.bf16.mxu0 0
    %1692 = vmatpush1.bf16.msra.mxu0 0
    %1693 = vmatprep.subr.bf16.mxu0 0
    %1694 = vmatpush1.bf16.msra.mxu0 0
    %1695 = vmatprep.subr.bf16.mxu0 0
    %1696 = vmatpush1.bf16.msra.mxu0 0
    %1697 = vmatprep.subr.bf16.mxu0 0
    %1698 = vmatpush1.bf16.msra.mxu0 0
    %1699 = vmatprep.subr.bf16.mxu0 0
    %1700 = vmatpush1.bf16.msra.mxu0 0
    %1701 = vmatprep.subr.bf16.mxu0 0
    %1702 = vmatpush1.bf16.msra.mxu0 0
    %1703 = vmatprep.mubr.bf16.mxu0 0
    %1704 = vmatmul.mubr.bf16.gmra.mrb[0].mxu0 %v1669
    %v1705 = vpop.f32.mrb[0].mxu0
    %v1706 = vadd.f32 0.0, %v1705
    %v1707 = vpop.f32.mrb[0].mxu0
    %v1708 = vpop.f32.mrb[0].mxu0
    %v1709 = vpop.f32.mrb[0].mxu0
    %1710 = vdwg.mxu0
    %v1711 = vsel %vm368, %v1706, 0.0
    %v1712 = vrot.slane %v1711, 4
    %v1713 = vadd.f32 %v1711, %v1712
    %v1714 = vrot.slane %v1713, 2
    %v1715 = vadd.f32 %v1713, %v1714
    %v1716 = vrot.slane %v1715, 1
    %v1717 = vadd.f32 %v1715, %v1716
    %v1718 = vmul.f32 %v1717, %v376
    %v1719 = vsub.f32 %v1706, %v1718
    %v1720 = vmul.f32 %v1719, %v1719
    %v1721 = vsel %vm368, %v1720, 0.0
    %v1722 = vrot.slane %v1721, 4
    %v1723 = vadd.f32 %v1721, %v1722
    %v1724 = vrot.slane %v1723, 2
    %v1725 = vadd.f32 %v1723, %v1724
    %v1726 = vrot.slane %v1725, 1
    %v1727 = vadd.f32 %v1725, %v1726
    %v1728 = vmul.f32 %v1727, 0.33333334
    %v1729 = vmul.f32 %v1728, 0.9
    %v1730 = vadd.f32 %v1729, 0.1
    %v1731 = vadd.f32 %v1730, 1e-05
    %v1732 = vrcp.pop %v1731
    %v1733 = vmul.f32 %v363, %v1732
    %v1734 = vmul.f32 %v1718, 0.9
    %v1735 = vsub.f32 %v1706, %v1734
    %v1737 = vlaneseq
    %v1738 = vshrl.u32 %v1737, 7
    %v1739 = vsub.s32 0, %v1738
    %v1740 = vrot.slane %v1733, %v1739
    %v1742 = vmul.f32 %v1735, %v1740
    %v1744 = vrot.slane %v1663, 4
    %v1746 = vadd.f32 %v1742, %v1744
    %v1747 = vadd.f32 %v1746, %v360
    %v1748 = vxor.u32 %v1747, 2147483648
    %v1749 = vmul.f32 %v1748, 1.442695
    %v1750 = vpow.pop %v1749
    %v1751 = vadd.f32 %v1750, 1.0
    %v1752 = vrcp.pop %v1751
    %v1753 = vmul.f32 1.0, %v1752
    %v1754 = vtanh.pop %v1747
    %v1755 = vmul.f32 %v1753, %v1581
    %1757 = vrot.lane.b32.xlu0 %v1754, 64
    %v1758 = vpop.permute.xlu0 %1757
    %v1760 = vmul.f32 %v1753, %v1758
    %1762 = vrot.lane.b32.xlu0 %v1760, 96
    %v1763 = vpop.permute.xlu0 %1762
    %v1765 = vadd.f32 %v1755, %v1763
    %v1766 = vsel %vm498, %v1765, 0.0
    %v1767 = vrot.slane %v1766, 4
    %v1768 = vadd.f32 %v1766, %v1767
    %v1769 = vrot.slane %v1768, 2
    %v1770 = vadd.f32 %v1768, %v1769
    %v1771 = vrot.slane %v1770, 1
    %v1772 = vadd.f32 %v1770, %v1771
    %v1773 = vmul.f32 %v1772, %v376
    %v1774 = vsub.f32 %v1765, %v1773
    %v1775 = vmul.f32 %v1774, %v1774
    %v1776 = vsel %vm498, %v1775, 0.0
    %v1777 = vrot.slane %v1776, 4
    %v1778 = vadd.f32 %v1776, %v1777
    %v1779 = vrot.slane %v1778, 2
    %v1780 = vadd.f32 %v1778, %v1779
    %v1781 = vrot.slane %v1780, 1
    %v1782 = vadd.f32 %v1780, %v1781
    %v1783 = vmul.f32 %v1782, 0.33333334
    %v1784 = vmul.f32 %v1783, 0.9
    %v1785 = vadd.f32 %v1784, 0.1
    %v1786 = vadd.f32 %v1785, 1e-05
    %v1787 = vrcp.pop %v1786
    %v1788 = vmul.f32 %v364, %v1787
    %v1789 = vmul.f32 %v1773, 0.9
    %v1790 = vsub.f32 %v1765, %v1789
    %v1792 = vlaneseq
    %v1793 = vshrl.u32 %v1792, 7
    %v1794 = vsub.s32 0, %v1793
    %v1795 = vrot.slane %v1788, %v1794
    %v1797 = vmul.f32 %v1790, %v1795
    %v1798 = vadd.f32 %v1797, %v535
    %v1799 = vtanh.pop %v1798
    %1801 = vrot.lane.b32.xlu0 %v1799, 64
    %v1802 = vpop.permute.xlu0 %1801
    %v1804 = vmul.f32 %v1753, %v1802
    %1806 = vrot.lane.b32.xlu0 %v1804, 64
    %v1807 = vpop.permute.xlu0 %1806
    %1809 = vst.msk [vmem:[#allocation6 + $0x1c] sm:$0xf] %vm498, %v1807
    %1810 = vst.msk [vmem:[#allocation2] sm:$0xf] %vm498, %v1807
    %1811 = vst.msk [vmem:[#allocation4] sm:$0xf] %vm498, %v1765
    %v1812 = vld [vmem:[#allocation6] sm:$0xff]
    %v1813 = vld [vmem:[#allocation6 + $0x8] sm:$0xff]
    %v1814 = vld [vmem:[#allocation6 + $0x10] sm:$0xff]
    %v1815 = vld [vmem:[#allocation6 + $0x18] sm:$0xff]
    %v1816 = vpack.c.bf16 %v1813, %v1812
    %v1817 = vpack.c.bf16 %v1815, %v1814
    %v1818 = vld [vmem:[#allocation24] sm:$0xff]
    %v1819 = vld [vmem:[#allocation24 + $0x8] sm:$0xff]
    %v1820 = vld [vmem:[#allocation24 + $0x10] sm:$0xff]
    %v1821 = vld [vmem:[#allocation24 + $0x18] sm:$0xff]
    %v1822 = vpack.c.bf16 %v1819, %v1818
    %v1823 = vpack.c.bf16 %v1821, %v1820
    %v1825 = vsel %vm293, %v1816, 0
    %v1828 = vsel %vm293, %v1817, 0
    %1830 = vmatprep.subr.bf16.mxu0 0
    %1831 = vmatpush1.bf16.msra.mxu0 %v1822
    %1832 = vmatprep.subr.bf16.mxu0 0
    %1833 = vmatpush1.bf16.msra.mxu0 %v1823
    %1834 = vmatprep.subr.bf16.mxu0 0
    %1835 = vmatpush1.bf16.msra.mxu0 0
    %1836 = vmatprep.subr.bf16.mxu0 0
    %1837 = vmatpush1.bf16.msra.mxu0 0
    %1838 = vmatprep.subr.bf16.mxu0 0
    %1839 = vmatpush1.bf16.msra.mxu0 0
    %1840 = vmatprep.subr.bf16.mxu0 0
    %1841 = vmatpush1.bf16.msra.mxu0 0
    %1842 = vmatprep.subr.bf16.mxu0 0
    %1843 = vmatpush1.bf16.msra.mxu0 0
    %1844 = vmatprep.subr.bf16.mxu0 0
    %1845 = vmatpush1.bf16.msra.mxu0 0
    %1846 = vmatprep.subr.bf16.mxu0 0
    %1847 = vmatpush1.bf16.msra.mxu0 0
    %1848 = vmatprep.subr.bf16.mxu0 0
    %1849 = vmatpush1.bf16.msra.mxu0 0
    %1850 = vmatprep.subr.bf16.mxu0 0
    %1851 = vmatpush1.bf16.msra.mxu0 0
    %1852 = vmatprep.subr.bf16.mxu0 0
    %1853 = vmatpush1.bf16.msra.mxu0 0
    %1854 = vmatprep.subr.bf16.mxu0 0
    %1855 = vmatpush1.bf16.msra.mxu0 0
    %1856 = vmatprep.subr.bf16.mxu0 0
    %1857 = vmatpush1.bf16.msra.mxu0 0
    %1858 = vmatprep.subr.bf16.mxu0 0
    %1859 = vmatpush1.bf16.msra.mxu0 0
    %1860 = vmatprep.subr.bf16.mxu0 0
    %1861 = vmatpush1.bf16.msra.mxu0 0
    %1862 = vmatprep.mubr.bf16.mxu0 0
    %1863 = vmatmul.mubr.bf16.gmra.mrb[0].mxu0 %v1825
    %v1864 = vpop.f32.mrb[0].mxu0
    %v1865 = vadd.f32 0.0, %v1864
    %v1866 = vpop.f32.mrb[0].mxu0
    %v1867 = vpop.f32.mrb[0].mxu0
    %v1868 = vadd.f32 0.0, %v1867
    %v1869 = vpop.f32.mrb[0].mxu0
    %1870 = vmatprep.mubr.bf16.mxu0 0
    %1871 = vmatmul.mubr.bf16.gmra.mrb[0].mxu0 %v1828
    %v1872 = vpop.f32.mrb[0].mxu0
    %v1873 = vadd.f32 0.0, %v1872
    %v1874 = vpop.f32.mrb[0].mxu0
    %v1875 = vpop.f32.mrb[0].mxu0
    %v1876 = vadd.f32 0.0, %v1875
    %v1877 = vpop.f32.mrb[0].mxu0
    %1878 = vdwg.mxu0
    %v1879 = vld [vmem:[#allocation25] sm:$0xff]
    %v1880 = vld [vmem:[#allocation25 + $0x8] sm:$0xff]
    %v1881 = vld [vmem:[#allocation25 + $0x10] sm:$0xff]
    %v1882 = vld [vmem:[#allocation25 + $0x18] sm:$0xff]
    %v1883 = vpack.c.bf16 %v1880, %v1879
    %v1884 = vpack.c.bf16 %v1882, %v1881
    %v1885 = vld [vmem:[#allocation27] sm:$0x1]
    %v1887 = vlaneseq
    %v1888 = vshrl.u32 %v1887, 7
    %v1889 = vsub.s32 0, %v1888
    %v1890 = vrot.slane %v1885, %v1889
    %v1892 = vld [vmem:[#allocation28] sm:$0x1]
    %v1893 = vld [vmem:[#allocation30] sm:$0x1]
    %v1894 = vld [vmem:[#allocation31] sm:$0x1]
    %v1895 = vld [vmem:[#allocation33] sm:$0x1]
    %v1896 = vld [vmem:[#allocation3] sm:$0xf]
    %v1897 = vld [vmem:[#allocation5] sm:$0xf]
    %v1898 = vsel %vm368, %v1865, 0.0
    %v1899 = vrot.slane %v1898, 4
    %v1900 = vadd.f32 %v1898, %v1899
    %v1901 = vrot.slane %v1900, 2
    %v1902 = vadd.f32 %v1900, %v1901
    %v1903 = vrot.slane %v1902, 1
    %v1904 = vadd.f32 %v1902, %v1903
    %v1905 = vmul.f32 %v1904, %v376
    %v1906 = vsub.f32 %v1865, %v1905
    %v1907 = vmul.f32 %v1906, %v1906
    %v1908 = vsel %vm368, %v1907, 0.0
    %v1909 = vrot.slane %v1908, 4
    %v1910 = vadd.f32 %v1908, %v1909
    %v1911 = vrot.slane %v1910, 2
    %v1912 = vadd.f32 %v1910, %v1911
    %v1913 = vrot.slane %v1912, 1
    %v1914 = vadd.f32 %v1912, %v1913
    %v1915 = vmul.f32 %v1914, 0.33333334
    %v1916 = vmul.f32 %v1915, 0.9
    %v1917 = vadd.f32 %v1916, 0.1
    %v1918 = vadd.f32 %v1917, 1e-05
    %v1919 = vrcp.pop %v1918
    %v1920 = vmul.f32 %v1892, %v1919
    %v1921 = vmul.f32 %v1905, 0.9
    %v1922 = vsub.f32 %v1865, %v1921
    %v1924 = vlaneseq
    %v1925 = vshrl.u32 %v1924, 7
    %v1926 = vsub.s32 0, %v1925
    %v1927 = vrot.slane %v1920, %v1926
    %v1929 = vmul.f32 %v1922, %v1927
    %v1930 = vpack.c.bf16 %v1896, %v1896
    %v1932 = vsel %vm293, %v1930, 0
    %1934 = vmatprep.subr.bf16.mxu0 0
    %1935 = vmatpush1.bf16.msra.mxu0 %v1883
    %1936 = vmatprep.subr.bf16.mxu0 0
    %1937 = vmatpush1.bf16.msra.mxu0 %v1884
    %1938 = vmatprep.subr.bf16.mxu0 0
    %1939 = vmatpush1.bf16.msra.mxu0 0
    %1940 = vmatprep.subr.bf16.mxu0 0
    %1941 = vmatpush1.bf16.msra.mxu0 0
    %1942 = vmatprep.subr.bf16.mxu0 0
    %1943 = vmatpush1.bf16.msra.mxu0 0
    %1944 = vmatprep.subr.bf16.mxu0 0
    %1945 = vmatpush1.bf16.msra.mxu0 0
    %1946 = vmatprep.subr.bf16.mxu0 0
    %1947 = vmatpush1.bf16.msra.mxu0 0
    %1948 = vmatprep.subr.bf16.mxu0 0
    %1949 = vmatpush1.bf16.msra.mxu0 0
    %1950 = vmatprep.subr.bf16.mxu0 0
    %1951 = vmatpush1.bf16.msra.mxu0 0
    %1952 = vmatprep.subr.bf16.mxu0 0
    %1953 = vmatpush1.bf16.msra.mxu0 0
    %1954 = vmatprep.subr.bf16.mxu0 0
    %1955 = vmatpush1.bf16.msra.mxu0 0
    %1956 = vmatprep.subr.bf16.mxu0 0
    %1957 = vmatpush1.bf16.msra.mxu0 0
    %1958 = vmatprep.subr.bf16.mxu0 0
    %1959 = vmatpush1.bf16.msra.mxu0 0
    %1960 = vmatprep.subr.bf16.mxu0 0
    %1961 = vmatpush1.bf16.msra.mxu0 0
    %1962 = vmatprep.subr.bf16.mxu0 0
    %1963 = vmatpush1.bf16.msra.mxu0 0
    %1964 = vmatprep.subr.bf16.mxu0 0
    %1965 = vmatpush1.bf16.msra.mxu0 0
    %1966 = vmatprep.mubr.bf16.mxu0 0
    %1967 = vmatmul.mubr.bf16.gmra.mrb[0].mxu0 %v1932
    %v1968 = vpop.f32.mrb[0].mxu0
    %v1969 = vadd.f32 0.0, %v1968
    %v1970 = vpop.f32.mrb[0].mxu0
    %v1971 = vpop.f32.mrb[0].mxu0
    %v1972 = vpop.f32.mrb[0].mxu0
    %1973 = vdwg.mxu0
    %v1974 = vsel %vm368, %v1969, 0.0
    %v1975 = vrot.slane %v1974, 4
    %v1976 = vadd.f32 %v1974, %v1975
    %v1977 = vrot.slane %v1976, 2
    %v1978 = vadd.f32 %v1976, %v1977
    %v1979 = vrot.slane %v1978, 1
    %v1980 = vadd.f32 %v1978, %v1979
    %v1981 = vmul.f32 %v1980, %v376
    %v1982 = vsub.f32 %v1969, %v1981
    %v1983 = vmul.f32 %v1982, %v1982
    %v1984 = vsel %vm368, %v1983, 0.0
    %v1985 = vrot.slane %v1984, 4
    %v1986 = vadd.f32 %v1984, %v1985
    %v1987 = vrot.slane %v1986, 2
    %v1988 = vadd.f32 %v1986, %v1987
    %v1989 = vrot.slane %v1988, 1
    %v1990 = vadd.f32 %v1988, %v1989
    %v1991 = vmul.f32 %v1990, 0.33333334
    %v1992 = vmul.f32 %v1991, 0.9
    %v1993 = vadd.f32 %v1992, 0.1
    %v1994 = vadd.f32 %v1993, 1e-05
    %v1995 = vrcp.pop %v1994
    %v1996 = vmul.f32 %v1893, %v1995
    %v1997 = vmul.f32 %v1981, 0.9
    %v1998 = vsub.f32 %v1969, %v1997
    %v2000 = vlaneseq
    %v2001 = vshrl.u32 %v2000, 7
    %v2002 = vsub.s32 0, %v2001
    %v2003 = vrot.slane %v1996, %v2002
    %v2005 = vmul.f32 %v1998, %v2003
    %v2006 = vadd.f32 %v2005, %v1929
    %v2007 = vadd.f32 %v2006, %v1890
    %v2008 = vxor.u32 %v2007, 2147483648
    %v2009 = vmul.f32 %v2008, 1.442695
    %v2010 = vpow.pop %v2009
    %v2011 = vadd.f32 %v2010, 1.0
    %v2012 = vrcp.pop %v2011
    %v2013 = vmul.f32 1.0, %v2012
    %v2014 = vtanh.pop %v2007
    %v2015 = vmul.f32 %v2013, %v1897
    %2017 = vrot.lane.b32.xlu0 %v2014, 64
    %v2018 = vpop.permute.xlu0 %2017
    %v2020 = vmul.f32 %v2013, %v2018
    %2022 = vrot.lane.b32.xlu0 %v2020, 96
    %v2023 = vpop.permute.xlu0 %2022
    %v2025 = vadd.f32 %v2015, %v2023
    %v2026 = vsel %vm498, %v2025, 0.0
    %v2027 = vrot.slane %v2026, 4
    %v2028 = vadd.f32 %v2026, %v2027
    %v2029 = vrot.slane %v2028, 2
    %v2030 = vadd.f32 %v2028, %v2029
    %v2031 = vrot.slane %v2030, 1
    %v2032 = vadd.f32 %v2030, %v2031
    %v2033 = vmul.f32 %v2032, %v376
    %v2034 = vsub.f32 %v2025, %v2033
    %v2035 = vmul.f32 %v2034, %v2034
    %v2036 = vsel %vm498, %v2035, 0.0
    %v2037 = vrot.slane %v2036, 4
    %v2038 = vadd.f32 %v2036, %v2037
    %v2039 = vrot.slane %v2038, 2
    %v2040 = vadd.f32 %v2038, %v2039
    %v2041 = vrot.slane %v2040, 1
    %v2042 = vadd.f32 %v2040, %v2041
    %v2043 = vmul.f32 %v2042, 0.33333334
    %v2044 = vmul.f32 %v2043, 0.9
    %v2045 = vadd.f32 %v2044, 0.1
    %v2046 = vadd.f32 %v2045, 1e-05
    %v2047 = vrcp.pop %v2046
    %v2048 = vmul.f32 %v1894, %v2047
    %v2049 = vmul.f32 %v2033, 0.9
    %v2050 = vsub.f32 %v2025, %v2049
    %v2052 = vlaneseq
    %v2053 = vshrl.u32 %v2052, 7
    %v2054 = vsub.s32 0, %v2053
    %v2055 = vrot.slane %v2048, %v2054
    %v2057 = vmul.f32 %v2050, %v2055
    %v2059 = vlaneseq
    %v2060 = vshrl.u32 %v2059, 7
    %v2061 = vsub.s32 0, %v2060
    %v2062 = vrot.slane %v1895, %v2061
    %v2064 = vadd.f32 %v2057, %v2062
    %v2065 = vtanh.pop %v2064
    %2067 = vrot.lane.b32.xlu0 %v2065, 64
    %v2068 = vpop.permute.xlu0 %2067
    %v2070 = vmul.f32 %v2013, %v2068
    %2072 = vrot.lane.b32.xlu0 %v2070, 64
    %v2073 = vpop.permute.xlu0 %2072
    %2075 = vst.msk [vmem:[#allocation34] sm:$0xf] %vm498, %v2073
    %v2077 = vrot.slane %v1865, 4
    %v2079 = vsel %vm368, %v2077, 0.0
    %v2080 = vrot.slane %v2079, 4
    %v2081 = vadd.f32 %v2079, %v2080
    %v2082 = vrot.slane %v2081, 2
    %v2083 = vadd.f32 %v2081, %v2082
    %v2084 = vrot.slane %v2083, 1
    %v2085 = vadd.f32 %v2083, %v2084
    %v2086 = vmul.f32 %v2085, %v376
    %v2087 = vsub.f32 %v1865, %v2086
    %v2088 = vmul.f32 %v2087, %v2087
    %v2090 = vrot.slane %v2088, 4
    %v2092 = vsel %vm368, %v2090, 0.0
    %v2093 = vrot.slane %v2092, 4
    %v2094 = vadd.f32 %v2092, %v2093
    %v2095 = vrot.slane %v2094, 2
    %v2096 = vadd.f32 %v2094, %v2095
    %v2097 = vrot.slane %v2096, 1
    %v2098 = vadd.f32 %v2096, %v2097
    %v2099 = vmul.f32 %v2098, 0.33333334
    %v2100 = vmul.f32 %v2099, 0.9
    %v2101 = vadd.f32 %v2100, 0.1
    %v2102 = vadd.f32 %v2101, 1e-05
    %v2103 = vrcp.pop %v2102
    %v2104 = vmul.f32 %v1892, %v2103
    %v2105 = vmul.f32 %v2086, 0.9
    %v2106 = vsub.f32 %v1865, %v2105
    %v2108 = vlaneseq
    %v2109 = vshrl.u32 %v2108, 7
    %v2110 = vsub.s32 0, %v2109
    %v2111 = vrot.slane %v2104, %v2110
    %v2113 = vmul.f32 %v2106, %v2111
    %v2114 = vpack.c.bf16 %v2070, %v2070
    %2116 = vrot.lane.b32.xlu0 %v2114, 64
    %v2117 = vpop.permute.xlu0 %2116
    %v2119 = vsel %vm293, %v2117, 0
    %2121 = vmatprep.subr.bf16.mxu0 0
    %2122 = vmatpush1.bf16.msra.mxu0 %v1883
    %2123 = vmatprep.subr.bf16.mxu0 0
    %2124 = vmatpush1.bf16.msra.mxu0 %v1884
    %2125 = vmatprep.subr.bf16.mxu0 0
    %2126 = vmatpush1.bf16.msra.mxu0 0
    %2127 = vmatprep.subr.bf16.mxu0 0
    %2128 = vmatpush1.bf16.msra.mxu0 0
    %2129 = vmatprep.subr.bf16.mxu0 0
    %2130 = vmatpush1.bf16.msra.mxu0 0
    %2131 = vmatprep.subr.bf16.mxu0 0
    %2132 = vmatpush1.bf16.msra.mxu0 0
    %2133 = vmatprep.subr.bf16.mxu0 0
    %2134 = vmatpush1.bf16.msra.mxu0 0
    %2135 = vmatprep.subr.bf16.mxu0 0
    %2136 = vmatpush1.bf16.msra.mxu0 0
    %2137 = vmatprep.subr.bf16.mxu0 0
    %2138 = vmatpush1.bf16.msra.mxu0 0
    %2139 = vmatprep.subr.bf16.mxu0 0
    %2140 = vmatpush1.bf16.msra.mxu0 0
    %2141 = vmatprep.subr.bf16.mxu0 0
    %2142 = vmatpush1.bf16.msra.mxu0 0
    %2143 = vmatprep.subr.bf16.mxu0 0
    %2144 = vmatpush1.bf16.msra.mxu0 0
    %2145 = vmatprep.subr.bf16.mxu0 0
    %2146 = vmatpush1.bf16.msra.mxu0 0
    %2147 = vmatprep.subr.bf16.mxu0 0
    %2148 = vmatpush1.bf16.msra.mxu0 0
    %2149 = vmatprep.subr.bf16.mxu0 0
    %2150 = vmatpush1.bf16.msra.mxu0 0
    %2151 = vmatprep.subr.bf16.mxu0 0
    %2152 = vmatpush1.bf16.msra.mxu0 0
    %2153 = vmatprep.mubr.bf16.mxu0 0
    %2154 = vmatmul.mubr.bf16.gmra.mrb[0].mxu0 %v2119
    %v2155 = vpop.f32.mrb[0].mxu0
    %v2156 = vadd.f32 0.0, %v2155
    %v2157 = vpop.f32.mrb[0].mxu0
    %v2158 = vpop.f32.mrb[0].mxu0
    %v2159 = vpop.f32.mrb[0].mxu0
    %2160 = vdwg.mxu0
    %v2161 = vsel %vm368, %v2156, 0.0
    %v2162 = vrot.slane %v2161, 4
    %v2163 = vadd.f32 %v2161, %v2162
    %v2164 = vrot.slane %v2163, 2
    %v2165 = vadd.f32 %v2163, %v2164
    %v2166 = vrot.slane %v2165, 1
    %v2167 = vadd.f32 %v2165, %v2166
    %v2168 = vmul.f32 %v2167, %v376
    %v2169 = vsub.f32 %v2156, %v2168
    %v2170 = vmul.f32 %v2169, %v2169
    %v2171 = vsel %vm368, %v2170, 0.0
    %v2172 = vrot.slane %v2171, 4
    %v2173 = vadd.f32 %v2171, %v2172
    %v2174 = vrot.slane %v2173, 2
    %v2175 = vadd.f32 %v2173, %v2174
    %v2176 = vrot.slane %v2175, 1
    %v2177 = vadd.f32 %v2175, %v2176
    %v2178 = vmul.f32 %v2177, 0.33333334
    %v2179 = vmul.f32 %v2178, 0.9
    %v2180 = vadd.f32 %v2179, 0.1
    %v2181 = vadd.f32 %v2180, 1e-05
    %v2182 = vrcp.pop %v2181
    %v2183 = vmul.f32 %v1893, %v2182
    %v2184 = vmul.f32 %v2168, 0.9
    %v2185 = vsub.f32 %v2156, %v2184
    %v2187 = vlaneseq
    %v2188 = vshrl.u32 %v2187, 7
    %v2189 = vsub.s32 0, %v2188
    %v2190 = vrot.slane %v2183, %v2189
    %v2192 = vmul.f32 %v2185, %v2190
    %v2194 = vrot.slane %v2113, 4
    %v2196 = vadd.f32 %v2192, %v2194
    %v2197 = vadd.f32 %v2196, %v1890
    %v2198 = vxor.u32 %v2197, 2147483648
    %v2199 = vmul.f32 %v2198, 1.442695
    %v2200 = vpow.pop %v2199
    %v2201 = vadd.f32 %v2200, 1.0
    %v2202 = vrcp.pop %v2201
    %v2203 = vmul.f32 1.0, %v2202
    %v2204 = vtanh.pop %v2197
    %v2205 = vmul.f32 %v2203, %v2025
    %2207 = vrot.lane.b32.xlu0 %v2204, 64
    %v2208 = vpop.permute.xlu0 %2207
    %v2210 = vmul.f32 %v2203, %v2208
    %2212 = vrot.lane.b32.xlu0 %v2210, 96
    %v2213 = vpop.permute.xlu0 %2212
    %v2215 = vadd.f32 %v2205, %v2213
    %v2216 = vsel %vm498, %v2215, 0.0
    %v2217 = vrot.slane %v2216, 4
    %v2218 = vadd.f32 %v2216, %v2217
    %v2219 = vrot.slane %v2218, 2
    %v2220 = vadd.f32 %v2218, %v2219
    %v2221 = vrot.slane %v2220, 1
    %v2222 = vadd.f32 %v2220, %v2221
    %v2223 = vmul.f32 %v2222, %v376
    %v2224 = vsub.f32 %v2215, %v2223
    %v2225 = vmul.f32 %v2224, %v2224
    %v2226 = vsel %vm498, %v2225, 0.0
    %v2227 = vrot.slane %v2226, 4
    %v2228 = vadd.f32 %v2226, %v2227
    %v2229 = vrot.slane %v2228, 2
    %v2230 = vadd.f32 %v2228, %v2229
    %v2231 = vrot.slane %v2230, 1
    %v2232 = vadd.f32 %v2230, %v2231
    %v2233 = vmul.f32 %v2232, 0.33333334
    %v2234 = vmul.f32 %v2233, 0.9
    %v2235 = vadd.f32 %v2234, 0.1
    %v2236 = vadd.f32 %v2235, 1e-05
    %v2237 = vrcp.pop %v2236
    %v2238 = vmul.f32 %v1894, %v2237
    %v2239 = vmul.f32 %v2223, 0.9
    %v2240 = vsub.f32 %v2215, %v2239
    %v2242 = vlaneseq
    %v2243 = vshrl.u32 %v2242, 7
    %v2244 = vsub.s32 0, %v2243
    %v2245 = vrot.slane %v2238, %v2244
    %v2247 = vmul.f32 %v2240, %v2245
    %v2248 = vadd.f32 %v2247, %v2062
    %v2249 = vtanh.pop %v2248
    %2251 = vrot.lane.b32.xlu0 %v2249, 64
    %v2252 = vpop.permute.xlu0 %2251
    %v2254 = vmul.f32 %v2203, %v2252
    %2256 = vrot.lane.b32.xlu0 %v2254, 64
    %v2257 = vpop.permute.xlu0 %2256
    %s2259 = scalar_lea.vmem [#allocation34], 4
    %2260 = vst.msk [vmem:[%s2259] sm:$0xf] %vm498, %v2257
    %v2261 = vsel %vm368, %v1868, 0.0
    %v2262 = vrot.slane %v2261, 4
    %v2263 = vadd.f32 %v2261, %v2262
    %v2264 = vrot.slane %v2263, 2
    %v2265 = vadd.f32 %v2263, %v2264
    %v2266 = vrot.slane %v2265, 1
    %v2267 = vadd.f32 %v2265, %v2266
    %v2268 = vmul.f32 %v2267, %v376
    %v2269 = vsub.f32 %v1868, %v2268
    %v2270 = vmul.f32 %v2269, %v2269
    %v2271 = vsel %vm368, %v2270, 0.0
    %v2272 = vrot.slane %v2271, 4
    %v2273 = vadd.f32 %v2271, %v2272
    %v2274 = vrot.slane %v2273, 2
    %v2275 = vadd.f32 %v2273, %v2274
    %v2276 = vrot.slane %v2275, 1
    %v2277 = vadd.f32 %v2275, %v2276
    %v2278 = vmul.f32 %v2277, 0.33333334
    %v2279 = vmul.f32 %v2278, 0.9
    %v2280 = vadd.f32 %v2279, 0.1
    %v2281 = vadd.f32 %v2280, 1e-05
    %v2282 = vrcp.pop %v2281
    %v2283 = vmul.f32 %v1892, %v2282
    %v2284 = vmul.f32 %v2268, 0.9
    %v2285 = vsub.f32 %v1868, %v2284
    %v2287 = vlaneseq
    %v2288 = vshrl.u32 %v2287, 7
    %v2289 = vsub.s32 0, %v2288
    %v2290 = vrot.slane %v2283, %v2289
    %v2292 = vmul.f32 %v2285, %v2290
    %v2293 = vpack.c.bf16 %v2254, %v2254
    %2295 = vrot.lane.b32.xlu0 %v2293, 64
    %v2296 = vpop.permute.xlu0 %2295
    %v2298 = vsel %vm293, %v2296, 0
    %2300 = vmatprep.subr.bf16.mxu0 0
    %2301 = vmatpush1.bf16.msra.mxu0 %v1883
    %2302 = vmatprep.subr.bf16.mxu0 0
    %2303 = vmatpush1.bf16.msra.mxu0 %v1884
    %2304 = vmatprep.subr.bf16.mxu0 0
    %2305 = vmatpush1.bf16.msra.mxu0 0
    %2306 = vmatprep.subr.bf16.mxu0 0
    %2307 = vmatpush1.bf16.msra.mxu0 0
    %2308 = vmatprep.subr.bf16.mxu0 0
    %2309 = vmatpush1.bf16.msra.mxu0 0
    %2310 = vmatprep.subr.bf16.mxu0 0
    %2311 = vmatpush1.bf16.msra.mxu0 0
    %2312 = vmatprep.subr.bf16.mxu0 0
    %2313 = vmatpush1.bf16.msra.mxu0 0
    %2314 = vmatprep.subr.bf16.mxu0 0
    %2315 = vmatpush1.bf16.msra.mxu0 0
    %2316 = vmatprep.subr.bf16.mxu0 0
    %2317 = vmatpush1.bf16.msra.mxu0 0
    %2318 = vmatprep.subr.bf16.mxu0 0
    %2319 = vmatpush1.bf16.msra.mxu0 0
    %2320 = vmatprep.subr.bf16.mxu0 0
    %2321 = vmatpush1.bf16.msra.mxu0 0
    %2322 = vmatprep.subr.bf16.mxu0 0
    %2323 = vmatpush1.bf16.msra.mxu0 0
    %2324 = vmatprep.subr.bf16.mxu0 0
    %2325 = vmatpush1.bf16.msra.mxu0 0
    %2326 = vmatprep.subr.bf16.mxu0 0
    %2327 = vmatpush1.bf16.msra.mxu0 0
    %2328 = vmatprep.subr.bf16.mxu0 0
    %2329 = vmatpush1.bf16.msra.mxu0 0
    %2330 = vmatprep.subr.bf16.mxu0 0
    %2331 = vmatpush1.bf16.msra.mxu0 0
    %2332 = vmatprep.mubr.bf16.mxu0 0
    %2333 = vmatmul.mubr.bf16.gmra.mrb[0].mxu0 %v2298
    %v2334 = vpop.f32.mrb[0].mxu0
    %v2335 = vadd.f32 0.0, %v2334
    %v2336 = vpop.f32.mrb[0].mxu0
    %v2337 = vpop.f32.mrb[0].mxu0
    %v2338 = vpop.f32.mrb[0].mxu0
    %2339 = vdwg.mxu0
    %v2340 = vsel %vm368, %v2335, 0.0
    %v2341 = vrot.slane %v2340, 4
    %v2342 = vadd.f32 %v2340, %v2341
    %v2343 = vrot.slane %v2342, 2
    %v2344 = vadd.f32 %v2342, %v2343
    %v2345 = vrot.slane %v2344, 1
    %v2346 = vadd.f32 %v2344, %v2345
    %v2347 = vmul.f32 %v2346, %v376
    %v2348 = vsub.f32 %v2335, %v2347
    %v2349 = vmul.f32 %v2348, %v2348
    %v2350 = vsel %vm368, %v2349, 0.0
    %v2351 = vrot.slane %v2350, 4
    %v2352 = vadd.f32 %v2350, %v2351
    %v2353 = vrot.slane %v2352, 2
    %v2354 = vadd.f32 %v2352, %v2353
    %v2355 = vrot.slane %v2354, 1
    %v2356 = vadd.f32 %v2354, %v2355
    %v2357 = vmul.f32 %v2356, 0.33333334
    %v2358 = vmul.f32 %v2357, 0.9
    %v2359 = vadd.f32 %v2358, 0.1
    %v2360 = vadd.f32 %v2359, 1e-05
    %v2361 = vrcp.pop %v2360
    %v2362 = vmul.f32 %v1893, %v2361
    %v2363 = vmul.f32 %v2347, 0.9
    %v2364 = vsub.f32 %v2335, %v2363
    %v2366 = vlaneseq
    %v2367 = vshrl.u32 %v2366, 7
    %v2368 = vsub.s32 0, %v2367
    %v2369 = vrot.slane %v2362, %v2368
    %v2371 = vmul.f32 %v2364, %v2369
    %v2372 = vadd.f32 %v2371, %v2292
    %v2373 = vadd.f32 %v2372, %v1890
    %v2374 = vxor.u32 %v2373, 2147483648
    %v2375 = vmul.f32 %v2374, 1.442695
    %v2376 = vpow.pop %v2375
    %v2377 = vadd.f32 %v2376, 1.0
    %v2378 = vrcp.pop %v2377
    %v2379 = vmul.f32 1.0, %v2378
    %v2380 = vtanh.pop %v2373
    %v2381 = vmul.f32 %v2379, %v2215
    %2383 = vrot.lane.b32.xlu0 %v2380, 64
    %v2384 = vpop.permute.xlu0 %2383
    %v2386 = vmul.f32 %v2379, %v2384
    %2388 = vrot.lane.b32.xlu0 %v2386, 96
    %v2389 = vpop.permute.xlu0 %2388
    %v2391 = vadd.f32 %v2381, %v2389
    %v2392 = vsel %vm498, %v2391, 0.0
    %v2393 = vrot.slane %v2392, 4
    %v2394 = vadd.f32 %v2392, %v2393
    %v2395 = vrot.slane %v2394, 2
    %v2396 = vadd.f32 %v2394, %v2395
    %v2397 = vrot.slane %v2396, 1
    %v2398 = vadd.f32 %v2396, %v2397
    %v2399 = vmul.f32 %v2398, %v376
    %v2400 = vsub.f32 %v2391, %v2399
    %v2401 = vmul.f32 %v2400, %v2400
    %v2402 = vsel %vm498, %v2401, 0.0
    %v2403 = vrot.slane %v2402, 4
    %v2404 = vadd.f32 %v2402, %v2403
    %v2405 = vrot.slane %v2404, 2
    %v2406 = vadd.f32 %v2404, %v2405
    %v2407 = vrot.slane %v2406, 1
    %v2408 = vadd.f32 %v2406, %v2407
    %v2409 = vmul.f32 %v2408, 0.33333334
    %v2410 = vmul.f32 %v2409, 0.9
    %v2411 = vadd.f32 %v2410, 0.1
    %v2412 = vadd.f32 %v2411, 1e-05
    %v2413 = vrcp.pop %v2412
    %v2414 = vmul.f32 %v1894, %v2413
    %v2415 = vmul.f32 %v2399, 0.9
    %v2416 = vsub.f32 %v2391, %v2415
    %v2418 = vlaneseq
    %v2419 = vshrl.u32 %v2418, 7
    %v2420 = vsub.s32 0, %v2419
    %v2421 = vrot.slane %v2414, %v2420
    %v2423 = vmul.f32 %v2416, %v2421
    %v2424 = vadd.f32 %v2423, %v2062
    %v2425 = vtanh.pop %v2424
    %2427 = vrot.lane.b32.xlu0 %v2425, 64
    %v2428 = vpop.permute.xlu0 %2427
    %v2430 = vmul.f32 %v2379, %v2428
    %2432 = vrot.lane.b32.xlu0 %v2430, 64
    %v2433 = vpop.permute.xlu0 %2432
    %s2435 = scalar_lea.vmem [#allocation34], 8
    %2436 = vst.msk [vmem:[%s2435] sm:$0xf] %vm498, %v2433
    %v2438 = vrot.slane %v1868, 4
    %v2440 = vsel %vm368, %v2438, 0.0
    %v2441 = vrot.slane %v2440, 4
    %v2442 = vadd.f32 %v2440, %v2441
    %v2443 = vrot.slane %v2442, 2
    %v2444 = vadd.f32 %v2442, %v2443
    %v2445 = vrot.slane %v2444, 1
    %v2446 = vadd.f32 %v2444, %v2445
    %v2447 = vmul.f32 %v2446, %v376
    %v2448 = vsub.f32 %v1868, %v2447
    %v2449 = vmul.f32 %v2448, %v2448
    %v2451 = vrot.slane %v2449, 4
    %v2453 = vsel %vm368, %v2451, 0.0
    %v2454 = vrot.slane %v2453, 4
    %v2455 = vadd.f32 %v2453, %v2454
    %v2456 = vrot.slane %v2455, 2
    %v2457 = vadd.f32 %v2455, %v2456
    %v2458 = vrot.slane %v2457, 1
    %v2459 = vadd.f32 %v2457, %v2458
    %v2460 = vmul.f32 %v2459, 0.33333334
    %v2461 = vmul.f32 %v2460, 0.9
    %v2462 = vadd.f32 %v2461, 0.1
    %v2463 = vadd.f32 %v2462, 1e-05
    %v2464 = vrcp.pop %v2463
    %v2465 = vmul.f32 %v1892, %v2464
    %v2466 = vmul.f32 %v2447, 0.9
    %v2467 = vsub.f32 %v1868, %v2466
    %v2469 = vlaneseq
    %v2470 = vshrl.u32 %v2469, 7
    %v2471 = vsub.s32 0, %v2470
    %v2472 = vrot.slane %v2465, %v2471
    %v2474 = vmul.f32 %v2467, %v2472
    %v2475 = vpack.c.bf16 %v2430, %v2430
    %2477 = vrot.lane.b32.xlu0 %v2475, 64
    %v2478 = vpop.permute.xlu0 %2477
    %v2480 = vsel %vm293, %v2478, 0
    %2482 = vmatprep.subr.bf16.mxu0 0
    %2483 = vmatpush1.bf16.msra.mxu0 %v1883
    %2484 = vmatprep.subr.bf16.mxu0 0
    %2485 = vmatpush1.bf16.msra.mxu0 %v1884
    %2486 = vmatprep.subr.bf16.mxu0 0
    %2487 = vmatpush1.bf16.msra.mxu0 0
    %2488 = vmatprep.subr.bf16.mxu0 0
    %2489 = vmatpush1.bf16.msra.mxu0 0
    %2490 = vmatprep.subr.bf16.mxu0 0
    %2491 = vmatpush1.bf16.msra.mxu0 0
    %2492 = vmatprep.subr.bf16.mxu0 0
    %2493 = vmatpush1.bf16.msra.mxu0 0
    %2494 = vmatprep.subr.bf16.mxu0 0
    %2495 = vmatpush1.bf16.msra.mxu0 0
    %2496 = vmatprep.subr.bf16.mxu0 0
    %2497 = vmatpush1.bf16.msra.mxu0 0
    %2498 = vmatprep.subr.bf16.mxu0 0
    %2499 = vmatpush1.bf16.msra.mxu0 0
    %2500 = vmatprep.subr.bf16.mxu0 0
    %2501 = vmatpush1.bf16.msra.mxu0 0
    %2502 = vmatprep.subr.bf16.mxu0 0
    %2503 = vmatpush1.bf16.msra.mxu0 0
    %2504 = vmatprep.subr.bf16.mxu0 0
    %2505 = vmatpush1.bf16.msra.mxu0 0
    %2506 = vmatprep.subr.bf16.mxu0 0
    %2507 = vmatpush1.bf16.msra.mxu0 0
    %2508 = vmatprep.subr.bf16.mxu0 0
    %2509 = vmatpush1.bf16.msra.mxu0 0
    %2510 = vmatprep.subr.bf16.mxu0 0
    %2511 = vmatpush1.bf16.msra.mxu0 0
    %2512 = vmatprep.subr.bf16.mxu0 0
    %2513 = vmatpush1.bf16.msra.mxu0 0
    %2514 = vmatprep.mubr.bf16.mxu0 0
    %2515 = vmatmul.mubr.bf16.gmra.mrb[0].mxu0 %v2480
    %v2516 = vpop.f32.mrb[0].mxu0
    %v2517 = vadd.f32 0.0, %v2516
    %v2518 = vpop.f32.mrb[0].mxu0
    %v2519 = vpop.f32.mrb[0].mxu0
    %v2520 = vpop.f32.mrb[0].mxu0
    %2521 = vdwg.mxu0
    %v2522 = vsel %vm368, %v2517, 0.0
    %v2523 = vrot.slane %v2522, 4
    %v2524 = vadd.f32 %v2522, %v2523
    %v2525 = vrot.slane %v2524, 2
    %v2526 = vadd.f32 %v2524, %v2525
    %v2527 = vrot.slane %v2526, 1
    %v2528 = vadd.f32 %v2526, %v2527
    %v2529 = vmul.f32 %v2528, %v376
    %v2530 = vsub.f32 %v2517, %v2529
    %v2531 = vmul.f32 %v2530, %v2530
    %v2532 = vsel %vm368, %v2531, 0.0
    %v2533 = vrot.slane %v2532, 4
    %v2534 = vadd.f32 %v2532, %v2533
    %v2535 = vrot.slane %v2534, 2
    %v2536 = vadd.f32 %v2534, %v2535
    %v2537 = vrot.slane %v2536, 1
    %v2538 = vadd.f32 %v2536, %v2537
    %v2539 = vmul.f32 %v2538, 0.33333334
    %v2540 = vmul.f32 %v2539, 0.9
    %v2541 = vadd.f32 %v2540, 0.1
    %v2542 = vadd.f32 %v2541, 1e-05
    %v2543 = vrcp.pop %v2542
    %v2544 = vmul.f32 %v1893, %v2543
    %v2545 = vmul.f32 %v2529, 0.9
    %v2546 = vsub.f32 %v2517, %v2545
    %v2548 = vlaneseq
    %v2549 = vshrl.u32 %v2548, 7
    %v2550 = vsub.s32 0, %v2549
    %v2551 = vrot.slane %v2544, %v2550
    %v2553 = vmul.f32 %v2546, %v2551
    %v2555 = vrot.slane %v2474, 4
    %v2557 = vadd.f32 %v2553, %v2555
    %v2558 = vadd.f32 %v2557, %v1890
    %v2559 = vxor.u32 %v2558, 2147483648
    %v2560 = vmul.f32 %v2559, 1.442695
    %v2561 = vpow.pop %v2560
    %v2562 = vadd.f32 %v2561, 1.0
    %v2563 = vrcp.pop %v2562
    %v2564 = vmul.f32 1.0, %v2563
    %v2565 = vtanh.pop %v2558
    %v2566 = vmul.f32 %v2564, %v2391
    %2568 = vrot.lane.b32.xlu0 %v2565, 64
    %v2569 = vpop.permute.xlu0 %2568
    %v2571 = vmul.f32 %v2564, %v2569
    %2573 = vrot.lane.b32.xlu0 %v2571, 96
    %v2574 = vpop.permute.xlu0 %2573
    %v2576 = vadd.f32 %v2566, %v2574
    %v2577 = vsel %vm498, %v2576, 0.0
    %v2578 = vrot.slane %v2577, 4
    %v2579 = vadd.f32 %v2577, %v2578
    %v2580 = vrot.slane %v2579, 2
    %v2581 = vadd.f32 %v2579, %v2580
    %v2582 = vrot.slane %v2581, 1
    %v2583 = vadd.f32 %v2581, %v2582
    %v2584 = vmul.f32 %v2583, %v376
    %v2585 = vsub.f32 %v2576, %v2584
    %v2586 = vmul.f32 %v2585, %v2585
    %v2587 = vsel %vm498, %v2586, 0.0
    %v2588 = vrot.slane %v2587, 4
    %v2589 = vadd.f32 %v2587, %v2588
    %v2590 = vrot.slane %v2589, 2
    %v2591 = vadd.f32 %v2589, %v2590
    %v2592 = vrot.slane %v2591, 1
    %v2593 = vadd.f32 %v2591, %v2592
    %v2594 = vmul.f32 %v2593, 0.33333334
    %v2595 = vmul.f32 %v2594, 0.9
    %v2596 = vadd.f32 %v2595, 0.1
    %v2597 = vadd.f32 %v2596, 1e-05
    %v2598 = vrcp.pop %v2597
    %v2599 = vmul.f32 %v1894, %v2598
    %v2600 = vmul.f32 %v2584, 0.9
    %v2601 = vsub.f32 %v2576, %v2600
    %v2603 = vlaneseq
    %v2604 = vshrl.u32 %v2603, 7
    %v2605 = vsub.s32 0, %v2604
    %v2606 = vrot.slane %v2599, %v2605
    %v2608 = vmul.f32 %v2601, %v2606
    %v2609 = vadd.f32 %v2608, %v2062
    %v2610 = vtanh.pop %v2609
    %2612 = vrot.lane.b32.xlu0 %v2610, 64
    %v2613 = vpop.permute.xlu0 %2612
    %v2615 = vmul.f32 %v2564, %v2613
    %2617 = vrot.lane.b32.xlu0 %v2615, 64
    %v2618 = vpop.permute.xlu0 %2617
    %s2620 = scalar_lea.vmem [#allocation34], 12
    %2621 = vst.msk [vmem:[%s2620] sm:$0xf] %vm498, %v2618
    %v2622 = vsel %vm368, %v1873, 0.0
    %v2623 = vrot.slane %v2622, 4
    %v2624 = vadd.f32 %v2622, %v2623
    %v2625 = vrot.slane %v2624, 2
    %v2626 = vadd.f32 %v2624, %v2625
    %v2627 = vrot.slane %v2626, 1
    %v2628 = vadd.f32 %v2626, %v2627
    %v2629 = vmul.f32 %v2628, %v376
    %v2630 = vsub.f32 %v1873, %v2629
    %v2631 = vmul.f32 %v2630, %v2630
    %v2632 = vsel %vm368, %v2631, 0.0
    %v2633 = vrot.slane %v2632, 4
    %v2634 = vadd.f32 %v2632, %v2633
    %v2635 = vrot.slane %v2634, 2
    %v2636 = vadd.f32 %v2634, %v2635
    %v2637 = vrot.slane %v2636, 1
    %v2638 = vadd.f32 %v2636, %v2637
    %v2639 = vmul.f32 %v2638, 0.33333334
    %v2640 = vmul.f32 %v2639, 0.9
    %v2641 = vadd.f32 %v2640, 0.1
    %v2642 = vadd.f32 %v2641, 1e-05
    %v2643 = vrcp.pop %v2642
    %v2644 = vmul.f32 %v1892, %v2643
    %v2645 = vmul.f32 %v2629, 0.9
    %v2646 = vsub.f32 %v1873, %v2645
    %v2648 = vlaneseq
    %v2649 = vshrl.u32 %v2648, 7
    %v2650 = vsub.s32 0, %v2649
    %v2651 = vrot.slane %v2644, %v2650
    %v2653 = vmul.f32 %v2646, %v2651
    %v2654 = vpack.c.bf16 %v2615, %v2615
    %2656 = vrot.lane.b32.xlu0 %v2654, 64
    %v2657 = vpop.permute.xlu0 %2656
    %v2659 = vsel %vm293, %v2657, 0
    %2661 = vmatprep.subr.bf16.mxu0 0
    %2662 = vmatpush1.bf16.msra.mxu0 %v1883
    %2663 = vmatprep.subr.bf16.mxu0 0
    %2664 = vmatpush1.bf16.msra.mxu0 %v1884
    %2665 = vmatprep.subr.bf16.mxu0 0
    %2666 = vmatpush1.bf16.msra.mxu0 0
    %2667 = vmatprep.subr.bf16.mxu0 0
    %2668 = vmatpush1.bf16.msra.mxu0 0
    %2669 = vmatprep.subr.bf16.mxu0 0
    %2670 = vmatpush1.bf16.msra.mxu0 0
    %2671 = vmatprep.subr.bf16.mxu0 0
    %2672 = vmatpush1.bf16.msra.mxu0 0
    %2673 = vmatprep.subr.bf16.mxu0 0
    %2674 = vmatpush1.bf16.msra.mxu0 0
    %2675 = vmatprep.subr.bf16.mxu0 0
    %2676 = vmatpush1.bf16.msra.mxu0 0
    %2677 = vmatprep.subr.bf16.mxu0 0
    %2678 = vmatpush1.bf16.msra.mxu0 0
    %2679 = vmatprep.subr.bf16.mxu0 0
    %2680 = vmatpush1.bf16.msra.mxu0 0
    %2681 = vmatprep.subr.bf16.mxu0 0
    %2682 = vmatpush1.bf16.msra.mxu0 0
    %2683 = vmatprep.subr.bf16.mxu0 0
    %2684 = vmatpush1.bf16.msra.mxu0 0
    %2685 = vmatprep.subr.bf16.mxu0 0
    %2686 = vmatpush1.bf16.msra.mxu0 0
    %2687 = vmatprep.subr.bf16.mxu0 0
    %2688 = vmatpush1.bf16.msra.mxu0 0
    %2689 = vmatprep.subr.bf16.mxu0 0
    %2690 = vmatpush1.bf16.msra.mxu0 0
    %2691 = vmatprep.subr.bf16.mxu0 0
    %2692 = vmatpush1.bf16.msra.mxu0 0
    %2693 = vmatprep.mubr.bf16.mxu0 0
    %2694 = vmatmul.mubr.bf16.gmra.mrb[0].mxu0 %v2659
    %v2695 = vpop.f32.mrb[0].mxu0
    %v2696 = vadd.f32 0.0, %v2695
    %v2697 = vpop.f32.mrb[0].mxu0
    %v2698 = vpop.f32.mrb[0].mxu0
    %v2699 = vpop.f32.mrb[0].mxu0
    %2700 = vdwg.mxu0
    %v2701 = vsel %vm368, %v2696, 0.0
    %v2702 = vrot.slane %v2701, 4
    %v2703 = vadd.f32 %v2701, %v2702
    %v2704 = vrot.slane %v2703, 2
    %v2705 = vadd.f32 %v2703, %v2704
    %v2706 = vrot.slane %v2705, 1
    %v2707 = vadd.f32 %v2705, %v2706
    %v2708 = vmul.f32 %v2707, %v376
    %v2709 = vsub.f32 %v2696, %v2708
    %v2710 = vmul.f32 %v2709, %v2709
    %v2711 = vsel %vm368, %v2710, 0.0
    %v2712 = vrot.slane %v2711, 4
    %v2713 = vadd.f32 %v2711, %v2712
    %v2714 = vrot.slane %v2713, 2
    %v2715 = vadd.f32 %v2713, %v2714
    %v2716 = vrot.slane %v2715, 1
    %v2717 = vadd.f32 %v2715, %v2716
    %v2718 = vmul.f32 %v2717, 0.33333334
    %v2719 = vmul.f32 %v2718, 0.9
    %v2720 = vadd.f32 %v2719, 0.1
    %v2721 = vadd.f32 %v2720, 1e-05
    %v2722 = vrcp.pop %v2721
    %v2723 = vmul.f32 %v1893, %v2722
    %v2724 = vmul.f32 %v2708, 0.9
    %v2725 = vsub.f32 %v2696, %v2724
    %v2727 = vlaneseq
    %v2728 = vshrl.u32 %v2727, 7
    %v2729 = vsub.s32 0, %v2728
    %v2730 = vrot.slane %v2723, %v2729
    %v2732 = vmul.f32 %v2725, %v2730
    %v2733 = vadd.f32 %v2732, %v2653
    %v2734 = vadd.f32 %v2733, %v1890
    %v2735 = vxor.u32 %v2734, 2147483648
    %v2736 = vmul.f32 %v2735, 1.442695
    %v2737 = vpow.pop %v2736
    %v2738 = vadd.f32 %v2737, 1.0
    %v2739 = vrcp.pop %v2738
    %v2740 = vmul.f32 1.0, %v2739
    %v2741 = vtanh.pop %v2734
    %v2742 = vmul.f32 %v2740, %v2576
    %2744 = vrot.lane.b32.xlu0 %v2741, 64
    %v2745 = vpop.permute.xlu0 %2744
    %v2747 = vmul.f32 %v2740, %v2745
    %2749 = vrot.lane.b32.xlu0 %v2747, 96
    %v2750 = vpop.permute.xlu0 %2749
    %v2752 = vadd.f32 %v2742, %v2750
    %v2753 = vsel %vm498, %v2752, 0.0
    %v2754 = vrot.slane %v2753, 4
    %v2755 = vadd.f32 %v2753, %v2754
    %v2756 = vrot.slane %v2755, 2
    %v2757 = vadd.f32 %v2755, %v2756
    %v2758 = vrot.slane %v2757, 1
    %v2759 = vadd.f32 %v2757, %v2758
    %v2760 = vmul.f32 %v2759, %v376
    %v2761 = vsub.f32 %v2752, %v2760
    %v2762 = vmul.f32 %v2761, %v2761
    %v2763 = vsel %vm498, %v2762, 0.0
    %v2764 = vrot.slane %v2763, 4
    %v2765 = vadd.f32 %v2763, %v2764
    %v2766 = vrot.slane %v2765, 2
    %v2767 = vadd.f32 %v2765, %v2766
    %v2768 = vrot.slane %v2767, 1
    %v2769 = vadd.f32 %v2767, %v2768
    %v2770 = vmul.f32 %v2769, 0.33333334
    %v2771 = vmul.f32 %v2770, 0.9
    %v2772 = vadd.f32 %v2771, 0.1
    %v2773 = vadd.f32 %v2772, 1e-05
    %v2774 = vrcp.pop %v2773
    %v2775 = vmul.f32 %v1894, %v2774
    %v2776 = vmul.f32 %v2760, 0.9
    %v2777 = vsub.f32 %v2752, %v2776
    %v2779 = vlaneseq
    %v2780 = vshrl.u32 %v2779, 7
    %v2781 = vsub.s32 0, %v2780
    %v2782 = vrot.slane %v2775, %v2781
    %v2784 = vmul.f32 %v2777, %v2782
    %v2785 = vadd.f32 %v2784, %v2062
    %v2786 = vtanh.pop %v2785
    %2788 = vrot.lane.b32.xlu0 %v2786, 64
    %v2789 = vpop.permute.xlu0 %2788
    %v2791 = vmul.f32 %v2740, %v2789
    %2793 = vrot.lane.b32.xlu0 %v2791, 64
    %v2794 = vpop.permute.xlu0 %2793
    %s2796 = scalar_lea.vmem [#allocation34], 16
    %2797 = vst.msk [vmem:[%s2796] sm:$0xf] %vm498, %v2794
    %v2799 = vrot.slane %v1873, 4
    %v2801 = vsel %vm368, %v2799, 0.0
    %v2802 = vrot.slane %v2801, 4
    %v2803 = vadd.f32 %v2801, %v2802
    %v2804 = vrot.slane %v2803, 2
    %v2805 = vadd.f32 %v2803, %v2804
    %v2806 = vrot.slane %v2805, 1
    %v2807 = vadd.f32 %v2805, %v2806
    %v2808 = vmul.f32 %v2807, %v376
    %v2809 = vsub.f32 %v1873, %v2808
    %v2810 = vmul.f32 %v2809, %v2809
    %v2812 = vrot.slane %v2810, 4
    %v2814 = vsel %vm368, %v2812, 0.0
    %v2815 = vrot.slane %v2814, 4
    %v2816 = vadd.f32 %v2814, %v2815
    %v2817 = vrot.slane %v2816, 2
    %v2818 = vadd.f32 %v2816, %v2817
    %v2819 = vrot.slane %v2818, 1
    %v2820 = vadd.f32 %v2818, %v2819
    %v2821 = vmul.f32 %v2820, 0.33333334
    %v2822 = vmul.f32 %v2821, 0.9
    %v2823 = vadd.f32 %v2822, 0.1
    %v2824 = vadd.f32 %v2823, 1e-05
    %v2825 = vrcp.pop %v2824
    %v2826 = vmul.f32 %v1892, %v2825
    %v2827 = vmul.f32 %v2808, 0.9
    %v2828 = vsub.f32 %v1873, %v2827
    %v2830 = vlaneseq
    %v2831 = vshrl.u32 %v2830, 7
    %v2832 = vsub.s32 0, %v2831
    %v2833 = vrot.slane %v2826, %v2832
    %v2835 = vmul.f32 %v2828, %v2833
    %v2836 = vpack.c.bf16 %v2791, %v2791
    %2838 = vrot.lane.b32.xlu0 %v2836, 64
    %v2839 = vpop.permute.xlu0 %2838
    %v2841 = vsel %vm293, %v2839, 0
    %2843 = vmatprep.subr.bf16.mxu0 0
    %2844 = vmatpush1.bf16.msra.mxu0 %v1883
    %2845 = vmatprep.subr.bf16.mxu0 0
    %2846 = vmatpush1.bf16.msra.mxu0 %v1884
    %2847 = vmatprep.subr.bf16.mxu0 0
    %2848 = vmatpush1.bf16.msra.mxu0 0
    %2849 = vmatprep.subr.bf16.mxu0 0
    %2850 = vmatpush1.bf16.msra.mxu0 0
    %2851 = vmatprep.subr.bf16.mxu0 0
    %2852 = vmatpush1.bf16.msra.mxu0 0
    %2853 = vmatprep.subr.bf16.mxu0 0
    %2854 = vmatpush1.bf16.msra.mxu0 0
    %2855 = vmatprep.subr.bf16.mxu0 0
    %2856 = vmatpush1.bf16.msra.mxu0 0
    %2857 = vmatprep.subr.bf16.mxu0 0
    %2858 = vmatpush1.bf16.msra.mxu0 0
    %2859 = vmatprep.subr.bf16.mxu0 0
    %2860 = vmatpush1.bf16.msra.mxu0 0
    %2861 = vmatprep.subr.bf16.mxu0 0
    %2862 = vmatpush1.bf16.msra.mxu0 0
    %2863 = vmatprep.subr.bf16.mxu0 0
    %2864 = vmatpush1.bf16.msra.mxu0 0
    %2865 = vmatprep.subr.bf16.mxu0 0
    %2866 = vmatpush1.bf16.msra.mxu0 0
    %2867 = vmatprep.subr.bf16.mxu0 0
    %2868 = vmatpush1.bf16.msra.mxu0 0
    %2869 = vmatprep.subr.bf16.mxu0 0
    %2870 = vmatpush1.bf16.msra.mxu0 0
    %2871 = vmatprep.subr.bf16.mxu0 0
    %2872 = vmatpush1.bf16.msra.mxu0 0
    %2873 = vmatprep.subr.bf16.mxu0 0
    %2874 = vmatpush1.bf16.msra.mxu0 0
    %2875 = vmatprep.mubr.bf16.mxu0 0
    %2876 = vmatmul.mubr.bf16.gmra.mrb[0].mxu0 %v2841
    %v2877 = vpop.f32.mrb[0].mxu0
    %v2878 = vadd.f32 0.0, %v2877
    %v2879 = vpop.f32.mrb[0].mxu0
    %v2880 = vpop.f32.mrb[0].mxu0
    %v2881 = vpop.f32.mrb[0].mxu0
    %2882 = vdwg.mxu0
    %v2883 = vsel %vm368, %v2878, 0.0
    %v2884 = vrot.slane %v2883, 4
    %v2885 = vadd.f32 %v2883, %v2884
    %v2886 = vrot.slane %v2885, 2
    %v2887 = vadd.f32 %v2885, %v2886
    %v2888 = vrot.slane %v2887, 1
    %v2889 = vadd.f32 %v2887, %v2888
    %v2890 = vmul.f32 %v2889, %v376
    %v2891 = vsub.f32 %v2878, %v2890
    %v2892 = vmul.f32 %v2891, %v2891
    %v2893 = vsel %vm368, %v2892, 0.0
    %v2894 = vrot.slane %v2893, 4
    %v2895 = vadd.f32 %v2893, %v2894
    %v2896 = vrot.slane %v2895, 2
    %v2897 = vadd.f32 %v2895, %v2896
    %v2898 = vrot.slane %v2897, 1
    %v2899 = vadd.f32 %v2897, %v2898
    %v2900 = vmul.f32 %v2899, 0.33333334
    %v2901 = vmul.f32 %v2900, 0.9
    %v2902 = vadd.f32 %v2901, 0.1
    %v2903 = vadd.f32 %v2902, 1e-05
    %v2904 = vrcp.pop %v2903
    %v2905 = vmul.f32 %v1893, %v2904
    %v2906 = vmul.f32 %v2890, 0.9
    %v2907 = vsub.f32 %v2878, %v2906
    %v2909 = vlaneseq
    %v2910 = vshrl.u32 %v2909, 7
    %v2911 = vsub.s32 0, %v2910
    %v2912 = vrot.slane %v2905, %v2911
    %v2914 = vmul.f32 %v2907, %v2912
    %v2916 = vrot.slane %v2835, 4
    %v2918 = vadd.f32 %v2914, %v2916
    %v2919 = vadd.f32 %v2918, %v1890
    %v2920 = vxor.u32 %v2919, 2147483648
    %v2921 = vmul.f32 %v2920, 1.442695
    %v2922 = vpow.pop %v2921
    %v2923 = vadd.f32 %v2922, 1.0
    %v2924 = vrcp.pop %v2923
    %v2925 = vmul.f32 1.0, %v2924
    %v2926 = vtanh.pop %v2919
    %v2927 = vmul.f32 %v2925, %v2752
    %2929 = vrot.lane.b32.xlu0 %v2926, 64
    %v2930 = vpop.permute.xlu0 %2929
    %v2932 = vmul.f32 %v2925, %v2930
    %2934 = vrot.lane.b32.xlu0 %v2932, 96
    %v2935 = vpop.permute.xlu0 %2934
    %v2937 = vadd.f32 %v2927, %v2935
    %v2938 = vsel %vm498, %v2937, 0.0
    %v2939 = vrot.slane %v2938, 4
    %v2940 = vadd.f32 %v2938, %v2939
    %v2941 = vrot.slane %v2940, 2
    %v2942 = vadd.f32 %v2940, %v2941
    %v2943 = vrot.slane %v2942, 1
    %v2944 = vadd.f32 %v2942, %v2943
    %v2945 = vmul.f32 %v2944, %v376
    %v2946 = vsub.f32 %v2937, %v2945
    %v2947 = vmul.f32 %v2946, %v2946
    %v2948 = vsel %vm498, %v2947, 0.0
    %v2949 = vrot.slane %v2948, 4
    %v2950 = vadd.f32 %v2948, %v2949
    %v2951 = vrot.slane %v2950, 2
    %v2952 = vadd.f32 %v2950, %v2951
    %v2953 = vrot.slane %v2952, 1
    %v2954 = vadd.f32 %v2952, %v2953
    %v2955 = vmul.f32 %v2954, 0.33333334
    %v2956 = vmul.f32 %v2955, 0.9
    %v2957 = vadd.f32 %v2956, 0.1
    %v2958 = vadd.f32 %v2957, 1e-05
    %v2959 = vrcp.pop %v2958
    %v2960 = vmul.f32 %v1894, %v2959
    %v2961 = vmul.f32 %v2945, 0.9
    %v2962 = vsub.f32 %v2937, %v2961
    %v2964 = vlaneseq
    %v2965 = vshrl.u32 %v2964, 7
    %v2966 = vsub.s32 0, %v2965
    %v2967 = vrot.slane %v2960, %v2966
    %v2969 = vmul.f32 %v2962, %v2967
    %v2970 = vadd.f32 %v2969, %v2062
    %v2971 = vtanh.pop %v2970
    %2973 = vrot.lane.b32.xlu0 %v2971, 64
    %v2974 = vpop.permute.xlu0 %2973
    %v2976 = vmul.f32 %v2925, %v2974
    %2978 = vrot.lane.b32.xlu0 %v2976, 64
    %v2979 = vpop.permute.xlu0 %2978
    %s2981 = scalar_lea.vmem [#allocation34], 20
    %2982 = vst.msk [vmem:[%s2981] sm:$0xf] %vm498, %v2979
    %v2983 = vsel %vm368, %v1876, 0.0
    %v2984 = vrot.slane %v2983, 4
    %v2985 = vadd.f32 %v2983, %v2984
    %v2986 = vrot.slane %v2985, 2
    %v2987 = vadd.f32 %v2985, %v2986
    %v2988 = vrot.slane %v2987, 1
    %v2989 = vadd.f32 %v2987, %v2988
    %v2990 = vmul.f32 %v2989, %v376
    %v2991 = vsub.f32 %v1876, %v2990
    %v2992 = vmul.f32 %v2991, %v2991
    %v2993 = vsel %vm368, %v2992, 0.0
    %v2994 = vrot.slane %v2993, 4
    %v2995 = vadd.f32 %v2993, %v2994
    %v2996 = vrot.slane %v2995, 2
    %v2997 = vadd.f32 %v2995, %v2996
    %v2998 = vrot.slane %v2997, 1
    %v2999 = vadd.f32 %v2997, %v2998
    %v3000 = vmul.f32 %v2999, 0.33333334
    %v3001 = vmul.f32 %v3000, 0.9
    %v3002 = vadd.f32 %v3001, 0.1
    %v3003 = vadd.f32 %v3002, 1e-05
    %v3004 = vrcp.pop %v3003
    %v3005 = vmul.f32 %v1892, %v3004
    %v3006 = vmul.f32 %v2990, 0.9
    %v3007 = vsub.f32 %v1876, %v3006
    %v3009 = vlaneseq
    %v3010 = vshrl.u32 %v3009, 7
    %v3011 = vsub.s32 0, %v3010
    %v3012 = vrot.slane %v3005, %v3011
    %v3014 = vmul.f32 %v3007, %v3012
    %v3015 = vpack.c.bf16 %v2976, %v2976
    %3017 = vrot.lane.b32.xlu0 %v3015, 64
    %v3018 = vpop.permute.xlu0 %3017
    %v3020 = vsel %vm293, %v3018, 0
    %3022 = vmatprep.subr.bf16.mxu0 0
    %3023 = vmatpush1.bf16.msra.mxu0 %v1883
    %3024 = vmatprep.subr.bf16.mxu0 0
    %3025 = vmatpush1.bf16.msra.mxu0 %v1884
    %3026 = vmatprep.subr.bf16.mxu0 0
    %3027 = vmatpush1.bf16.msra.mxu0 0
    %3028 = vmatprep.subr.bf16.mxu0 0
    %3029 = vmatpush1.bf16.msra.mxu0 0
    %3030 = vmatprep.subr.bf16.mxu0 0
    %3031 = vmatpush1.bf16.msra.mxu0 0
    %3032 = vmatprep.subr.bf16.mxu0 0
    %3033 = vmatpush1.bf16.msra.mxu0 0
    %3034 = vmatprep.subr.bf16.mxu0 0
    %3035 = vmatpush1.bf16.msra.mxu0 0
    %3036 = vmatprep.subr.bf16.mxu0 0
    %3037 = vmatpush1.bf16.msra.mxu0 0
    %3038 = vmatprep.subr.bf16.mxu0 0
    %3039 = vmatpush1.bf16.msra.mxu0 0
    %3040 = vmatprep.subr.bf16.mxu0 0
    %3041 = vmatpush1.bf16.msra.mxu0 0
    %3042 = vmatprep.subr.bf16.mxu0 0
    %3043 = vmatpush1.bf16.msra.mxu0 0
    %3044 = vmatprep.subr.bf16.mxu0 0
    %3045 = vmatpush1.bf16.msra.mxu0 0
    %3046 = vmatprep.subr.bf16.mxu0 0
    %3047 = vmatpush1.bf16.msra.mxu0 0
    %3048 = vmatprep.subr.bf16.mxu0 0
    %3049 = vmatpush1.bf16.msra.mxu0 0
    %3050 = vmatprep.subr.bf16.mxu0 0
    %3051 = vmatpush1.bf16.msra.mxu0 0
    %3052 = vmatprep.subr.bf16.mxu0 0
    %3053 = vmatpush1.bf16.msra.mxu0 0
    %3054 = vmatprep.mubr.bf16.mxu0 0
    %3055 = vmatmul.mubr.bf16.gmra.mrb[0].mxu0 %v3020
    %v3056 = vpop.f32.mrb[0].mxu0
    %v3057 = vadd.f32 0.0, %v3056
    %v3058 = vpop.f32.mrb[0].mxu0
    %v3059 = vpop.f32.mrb[0].mxu0
    %v3060 = vpop.f32.mrb[0].mxu0
    %3061 = vdwg.mxu0
    %v3062 = vsel %vm368, %v3057, 0.0
    %v3063 = vrot.slane %v3062, 4
    %v3064 = vadd.f32 %v3062, %v3063
    %v3065 = vrot.slane %v3064, 2
    %v3066 = vadd.f32 %v3064, %v3065
    %v3067 = vrot.slane %v3066, 1
    %v3068 = vadd.f32 %v3066, %v3067
    %v3069 = vmul.f32 %v3068, %v376
    %v3070 = vsub.f32 %v3057, %v3069
    %v3071 = vmul.f32 %v3070, %v3070
    %v3072 = vsel %vm368, %v3071, 0.0
    %v3073 = vrot.slane %v3072, 4
    %v3074 = vadd.f32 %v3072, %v3073
    %v3075 = vrot.slane %v3074, 2
    %v3076 = vadd.f32 %v3074, %v3075
    %v3077 = vrot.slane %v3076, 1
    %v3078 = vadd.f32 %v3076, %v3077
    %v3079 = vmul.f32 %v3078, 0.33333334
    %v3080 = vmul.f32 %v3079, 0.9
    %v3081 = vadd.f32 %v3080, 0.1
    %v3082 = vadd.f32 %v3081, 1e-05
    %v3083 = vrcp.pop %v3082
    %v3084 = vmul.f32 %v1893, %v3083
    %v3085 = vmul.f32 %v3069, 0.9
    %v3086 = vsub.f32 %v3057, %v3085
    %v3088 = vlaneseq
    %v3089 = vshrl.u32 %v3088, 7
    %v3090 = vsub.s32 0, %v3089
    %v3091 = vrot.slane %v3084, %v3090
    %v3093 = vmul.f32 %v3086, %v3091
    %v3094 = vadd.f32 %v3093, %v3014
    %v3095 = vadd.f32 %v3094, %v1890
    %v3096 = vxor.u32 %v3095, 2147483648
    %v3097 = vmul.f32 %v3096, 1.442695
    %v3098 = vpow.pop %v3097
    %v3099 = vadd.f32 %v3098, 1.0
    %v3100 = vrcp.pop %v3099
    %v3101 = vmul.f32 1.0, %v3100
    %v3102 = vtanh.pop %v3095
    %v3103 = vmul.f32 %v3101, %v2937
    %3105 = vrot.lane.b32.xlu0 %v3102, 64
    %v3106 = vpop.permute.xlu0 %3105
    %v3108 = vmul.f32 %v3101, %v3106
    %3110 = vrot.lane.b32.xlu0 %v3108, 96
    %v3111 = vpop.permute.xlu0 %3110
    %v3113 = vadd.f32 %v3103, %v3111
    %v3114 = vsel %vm498, %v3113, 0.0
    %v3115 = vrot.slane %v3114, 4
    %v3116 = vadd.f32 %v3114, %v3115
    %v3117 = vrot.slane %v3116, 2
    %v3118 = vadd.f32 %v3116, %v3117
    %v3119 = vrot.slane %v3118, 1
    %v3120 = vadd.f32 %v3118, %v3119
    %v3121 = vmul.f32 %v3120, %v376
    %v3122 = vsub.f32 %v3113, %v3121
    %v3123 = vmul.f32 %v3122, %v3122
    %v3124 = vsel %vm498, %v3123, 0.0
    %v3125 = vrot.slane %v3124, 4
    %v3126 = vadd.f32 %v3124, %v3125
    %v3127 = vrot.slane %v3126, 2
    %v3128 = vadd.f32 %v3126, %v3127
    %v3129 = vrot.slane %v3128, 1
    %v3130 = vadd.f32 %v3128, %v3129
    %v3131 = vmul.f32 %v3130, 0.33333334
    %v3132 = vmul.f32 %v3131, 0.9
    %v3133 = vadd.f32 %v3132, 0.1
    %v3134 = vadd.f32 %v3133, 1e-05
    %v3135 = vrcp.pop %v3134
    %v3136 = vmul.f32 %v1894, %v3135
    %v3137 = vmul.f32 %v3121, 0.9
    %v3138 = vsub.f32 %v3113, %v3137
    %v3140 = vlaneseq
    %v3141 = vshrl.u32 %v3140, 7
    %v3142 = vsub.s32 0, %v3141
    %v3143 = vrot.slane %v3136, %v3142
    %v3145 = vmul.f32 %v3138, %v3143
    %v3146 = vadd.f32 %v3145, %v2062
    %v3147 = vtanh.pop %v3146
    %3149 = vrot.lane.b32.xlu0 %v3147, 64
    %v3150 = vpop.permute.xlu0 %3149
    %v3152 = vmul.f32 %v3101, %v3150
    %3154 = vrot.lane.b32.xlu0 %v3152, 64
    %v3155 = vpop.permute.xlu0 %3154
    %s3157 = scalar_lea.vmem [#allocation34], 24
    %3158 = vst.msk [vmem:[%s3157] sm:$0xf] %vm498, %v3155
    %v3160 = vrot.slane %v1876, 4
    %v3162 = vsel %vm368, %v3160, 0.0
    %v3163 = vrot.slane %v3162, 4
    %v3164 = vadd.f32 %v3162, %v3163
    %v3165 = vrot.slane %v3164, 2
    %v3166 = vadd.f32 %v3164, %v3165
    %v3167 = vrot.slane %v3166, 1
    %v3168 = vadd.f32 %v3166, %v3167
    %v3169 = vmul.f32 %v3168, %v376
    %v3170 = vsub.f32 %v1876, %v3169
    %v3171 = vmul.f32 %v3170, %v3170
    %v3173 = vrot.slane %v3171, 4
    %v3175 = vsel %vm368, %v3173, 0.0
    %v3176 = vrot.slane %v3175, 4
    %v3177 = vadd.f32 %v3175, %v3176
    %v3178 = vrot.slane %v3177, 2
    %v3179 = vadd.f32 %v3177, %v3178
    %v3180 = vrot.slane %v3179, 1
    %v3181 = vadd.f32 %v3179, %v3180
    %v3182 = vmul.f32 %v3181, 0.33333334
    %v3183 = vmul.f32 %v3182, 0.9
    %v3184 = vadd.f32 %v3183, 0.1
    %v3185 = vadd.f32 %v3184, 1e-05
    %v3186 = vrcp.pop %v3185
    %v3187 = vmul.f32 %v1892, %v3186
    %v3188 = vmul.f32 %v3169, 0.9
    %v3189 = vsub.f32 %v1876, %v3188
    %v3191 = vlaneseq
    %v3192 = vshrl.u32 %v3191, 7
    %v3193 = vsub.s32 0, %v3192
    %v3194 = vrot.slane %v3187, %v3193
    %v3196 = vmul.f32 %v3189, %v3194
    %v3197 = vpack.c.bf16 %v3152, %v3152
    %3199 = vrot.lane.b32.xlu0 %v3197, 64
    %v3200 = vpop.permute.xlu0 %3199
    %v3202 = vsel %vm293, %v3200, 0
    %3204 = vmatprep.subr.bf16.mxu0 0
    %3205 = vmatpush1.bf16.msra.mxu0 %v1883
    %3206 = vmatprep.subr.bf16.mxu0 0
    %3207 = vmatpush1.bf16.msra.mxu0 %v1884
    %3208 = vmatprep.subr.bf16.mxu0 0
    %3209 = vmatpush1.bf16.msra.mxu0 0
    %3210 = vmatprep.subr.bf16.mxu0 0
    %3211 = vmatpush1.bf16.msra.mxu0 0
    %3212 = vmatprep.subr.bf16.mxu0 0
    %3213 = vmatpush1.bf16.msra.mxu0 0
    %3214 = vmatprep.subr.bf16.mxu0 0
    %3215 = vmatpush1.bf16.msra.mxu0 0
    %3216 = vmatprep.subr.bf16.mxu0 0
    %3217 = vmatpush1.bf16.msra.mxu0 0
    %3218 = vmatprep.subr.bf16.mxu0 0
    %3219 = vmatpush1.bf16.msra.mxu0 0
    %3220 = vmatprep.subr.bf16.mxu0 0
    %3221 = vmatpush1.bf16.msra.mxu0 0
    %3222 = vmatprep.subr.bf16.mxu0 0
    %3223 = vmatpush1.bf16.msra.mxu0 0
    %3224 = vmatprep.subr.bf16.mxu0 0
    %3225 = vmatpush1.bf16.msra.mxu0 0
    %3226 = vmatprep.subr.bf16.mxu0 0
    %3227 = vmatpush1.bf16.msra.mxu0 0
    %3228 = vmatprep.subr.bf16.mxu0 0
    %3229 = vmatpush1.bf16.msra.mxu0 0
    %3230 = vmatprep.subr.bf16.mxu0 0
    %3231 = vmatpush1.bf16.msra.mxu0 0
    %3232 = vmatprep.subr.bf16.mxu0 0
    %3233 = vmatpush1.bf16.msra.mxu0 0
    %3234 = vmatprep.subr.bf16.mxu0 0
    %3235 = vmatpush1.bf16.msra.mxu0 0
    %3236 = vmatprep.mubr.bf16.mxu0 0
    %3237 = vmatmul.mubr.bf16.gmra.mrb[0].mxu0 %v3202
    %v3238 = vpop.f32.mrb[0].mxu0
    %v3239 = vadd.f32 0.0, %v3238
    %v3240 = vpop.f32.mrb[0].mxu0
    %v3241 = vpop.f32.mrb[0].mxu0
    %v3242 = vpop.f32.mrb[0].mxu0
    %3243 = vdwg.mxu0
    %v3244 = vsel %vm368, %v3239, 0.0
    %v3245 = vrot.slane %v3244, 4
    %v3246 = vadd.f32 %v3244, %v3245
    %v3247 = vrot.slane %v3246, 2
    %v3248 = vadd.f32 %v3246, %v3247
    %v3249 = vrot.slane %v3248, 1
    %v3250 = vadd.f32 %v3248, %v3249
    %v3251 = vmul.f32 %v3250, %v376
    %v3252 = vsub.f32 %v3239, %v3251
    %v3253 = vmul.f32 %v3252, %v3252
    %v3254 = vsel %vm368, %v3253, 0.0
    %v3255 = vrot.slane %v3254, 4
    %v3256 = vadd.f32 %v3254, %v3255
    %v3257 = vrot.slane %v3256, 2
    %v3258 = vadd.f32 %v3256, %v3257
    %v3259 = vrot.slane %v3258, 1
    %v3260 = vadd.f32 %v3258, %v3259
    %v3261 = vmul.f32 %v3260, 0.33333334
    %v3262 = vmul.f32 %v3261, 0.9
    %v3263 = vadd.f32 %v3262, 0.1
    %v3264 = vadd.f32 %v3263, 1e-05
    %v3265 = vrcp.pop %v3264
    %v3266 = vmul.f32 %v1893, %v3265
    %v3267 = vmul.f32 %v3251, 0.9
    %v3268 = vsub.f32 %v3239, %v3267
    %v3270 = vlaneseq
    %v3271 = vshrl.u32 %v3270, 7
    %v3272 = vsub.s32 0, %v3271
    %v3273 = vrot.slane %v3266, %v3272
    %v3275 = vmul.f32 %v3268, %v3273
    %v3277 = vrot.slane %v3196, 4
    %v3279 = vadd.f32 %v3275, %v3277
    %v3280 = vadd.f32 %v3279, %v1890
    %v3281 = vxor.u32 %v3280, 2147483648
    %v3282 = vmul.f32 %v3281, 1.442695
    %v3283 = vpow.pop %v3282
    %v3284 = vadd.f32 %v3283, 1.0
    %v3285 = vrcp.pop %v3284
    %v3286 = vmul.f32 1.0, %v3285
    %v3287 = vtanh.pop %v3280
    %v3288 = vmul.f32 %v3286, %v3113
    %3290 = vrot.lane.b32.xlu0 %v3287, 64
    %v3291 = vpop.permute.xlu0 %3290
    %v3293 = vmul.f32 %v3286, %v3291
    %3295 = vrot.lane.b32.xlu0 %v3293, 96
    %v3296 = vpop.permute.xlu0 %3295
    %v3298 = vadd.f32 %v3288, %v3296
    %v3299 = vsel %vm498, %v3298, 0.0
    %v3300 = vrot.slane %v3299, 4
    %v3301 = vadd.f32 %v3299, %v3300
    %v3302 = vrot.slane %v3301, 2
    %v3303 = vadd.f32 %v3301, %v3302
    %v3304 = vrot.slane %v3303, 1
    %v3305 = vadd.f32 %v3303, %v3304
    %v3306 = vmul.f32 %v3305, %v376
    %v3307 = vsub.f32 %v3298, %v3306
    %v3308 = vmul.f32 %v3307, %v3307
    %v3309 = vsel %vm498, %v3308, 0.0
    %v3310 = vrot.slane %v3309, 4
    %v3311 = vadd.f32 %v3309, %v3310
    %v3312 = vrot.slane %v3311, 2
    %v3313 = vadd.f32 %v3311, %v3312
    %v3314 = vrot.slane %v3313, 1
    %v3315 = vadd.f32 %v3313, %v3314
    %v3316 = vmul.f32 %v3315, 0.33333334
    %v3317 = vmul.f32 %v3316, 0.9
    %v3318 = vadd.f32 %v3317, 0.1
    %v3319 = vadd.f32 %v3318, 1e-05
    %v3320 = vrcp.pop %v3319
    %v3321 = vmul.f32 %v1894, %v3320
    %v3322 = vmul.f32 %v3306, 0.9
    %v3323 = vsub.f32 %v3298, %v3322
    %v3325 = vlaneseq
    %v3326 = vshrl.u32 %v3325, 7
    %v3327 = vsub.s32 0, %v3326
    %v3328 = vrot.slane %v3321, %v3327
    %v3330 = vmul.f32 %v3323, %v3328
    %v3331 = vadd.f32 %v3330, %v2062
    %v3332 = vtanh.pop %v3331
    %3334 = vrot.lane.b32.xlu0 %v3332, 64
    %v3335 = vpop.permute.xlu0 %3334
    %v3337 = vmul.f32 %v3286, %v3335
    %3339 = vrot.lane.b32.xlu0 %v3337, 64
    %v3340 = vpop.permute.xlu0 %3339
    %s3342 = scalar_lea.vmem [#allocation34], 28
    %3343 = vst.msk [vmem:[%s3342] sm:$0xf] %vm498, %v3340
    %3344 = vst.msk [vmem:[#allocation3] sm:$0xf] %vm498, %v3340
    %3345 = vst.msk [vmem:[#allocation5] sm:$0xf] %vm498, %v3298
    // Predicated region
    $region142: #{tpu_custom_call.1} parent=1 // pred_check
      %p3346 = pneg %p268
    $region143: #{tpu_custom_call.1} parent=1 // pred_check_branch
      %3348 = sbr.rel (%p3346) target = $region145
    $region144: #{tpu_custom_call.1} parent=1 // pred_region
      %3349 = vst.msk [vmem:[#allocation37] sm:$0xf] %vm498, %v3298
      %vm3350 = vcmask 781824
      %v3351 = vsel %vm3350, %v3337, 0.0
      %v3352 = vrot.slane %v3351, 4
      %v3353 = vadd.f32 %v3351, %v3352
      %v3354 = vrot.slane %v3353, 2
      %v3355 = vadd.f32 %v3353, %v3354
      %v3356 = vrot.slane %v3355, 1
      %v3357 = vadd.f32 %v3355, %v3356
      %v3358 = vmul.f32 %v3357, %v376
      %v3359 = vsub.f32 %v3337, %v3358
      %v3360 = vmul.f32 %v3359, %v3359
      %v3361 = vsel %vm3350, %v3360, 0.0
      %v3362 = vrot.slane %v3361, 4
      %v3363 = vadd.f32 %v3361, %v3362
      %v3364 = vrot.slane %v3363, 2
      %v3365 = vadd.f32 %v3363, %v3364
      %v3366 = vrot.slane %v3365, 1
      %v3367 = vadd.f32 %v3365, %v3366
      %v3368 = vmul.f32 %v3367, %v376
      %v3369 = vadd.f32 %v3368, 1e-05
      %v3370 = vrsqrt.pop %v3369
      %v3371 = vmul.f32 %v3359, %v3370
      %v3372 = vtanh.pop %v3371
      %3374 = vrot.lane.b32.xlu0 %v3372, 64
      %v3375 = vpop.permute.xlu0 %3374
      %3377 = vst.msk [vmem:[#allocation35] sm:$0xf] %vm498, %v3375
    $region145: #{tpu_custom_call.1} parent=1 // pred_fallthru
      _
    // Predicated region
    $region146: #{tpu_custom_call.1} parent=1 // pred_check
      _
    $region147: #{tpu_custom_call.1} parent=1 // pred_check_branch
      %3379 = sbr.rel (0) target = $region149
    $region148: #{tpu_custom_call.1} parent=1 // pred_region
      %s3381 = ssub.s32 512, 512
      %3382 = vsyncadd [#allocation9], %s3381
      %s3383 = sshll.u32 [#allocation34], 4
      %s3384 = int_to_ptr.vmem [resolvable:$true] %s3383
      %3389 = dma.vmem_to_hbm [thread:$0]  %s3384, 512, %s17, [#allocation9], 64, 64, 4
    $region149: #{tpu_custom_call.1} parent=1 // pred_fallthru
      _
    // Predicated region
    $region150: #{tpu_custom_call.1} parent=1 // pred_check
      _
    $region151: #{tpu_custom_call.1} parent=1 // pred_check_branch
      %3391 = sbr.rel (0) target = $region153
    $region152: #{tpu_custom_call.1} parent=1 // pred_region
      %s3393 = ssub.s32 64, 64
      %3394 = vsyncadd [#allocation36], %s3393
      %s3396 = sshll.u32 [#allocation35], 4
      %s3397 = int_to_ptr.vmem [resolvable:$true] %s3396
      %3399 = dma.vmem_to_hbm [thread:$0]  %s3397, 64, %s18, [#allocation36]
    $region153: #{tpu_custom_call.1} parent=1 // pred_fallthru
      _
    // Predicated region
    $region154: #{tpu_custom_call.1} parent=1 // pred_check
      _
    $region155: #{tpu_custom_call.1} parent=1 // pred_check_branch
      %3401 = sbr.rel (0) target = $region157
    $region156: #{tpu_custom_call.1} parent=1 // pred_region
      %s3403 = ssub.s32 64, 64
      %3404 = vsyncadd [#allocation36], %s3403
      %s3406 = sshll.u32 [#allocation37], 4
      %s3407 = int_to_ptr.vmem [resolvable:$true] %s3406
      %3409 = dma.vmem_to_hbm [thread:$0]  %s3407, 64, %s19, [#allocation36]
    $region157: #{tpu_custom_call.1} parent=1 // pred_fallthru
      _
    // Predicated region
    $region158: #{tpu_custom_call.1} parent=1 // pred_check
      _
    $region159: #{tpu_custom_call.1} parent=1 // pred_check_branch
      %3411 = sbr.rel (0) target = $region161
    $region160: #{tpu_custom_call.1} parent=1 // pred_region
      %3412 = dma.done [#allocation9], 512
    $region161: #{tpu_custom_call.1} parent=1 // pred_fallthru
      _
    // Predicated region
    $region162: #{tpu_custom_call.1} parent=1 // pred_check
      _
    $region163: #{tpu_custom_call.1} parent=1 // pred_check_branch
      %3414 = sbr.rel (0) target = $region165
    $region164: #{tpu_custom_call.1} parent=1 // pred_region
      %3415 = dma.done [#allocation36], 64
    $region165: #{tpu_custom_call.1} parent=1 // pred_fallthru
      _
    // Predicated region
    $region166: #{tpu_custom_call.1} parent=1 // pred_check
      _
    $region167: #{tpu_custom_call.1} parent=1 // pred_check_branch
      %3417 = sbr.rel (0) target = $region169
    $region168: #{tpu_custom_call.1} parent=1 // pred_region
      %3418 = dma.done [#allocation36], 64
    $region169: #{tpu_custom_call.1} parent=1 // pred_fallthru
      _
    %3419 = vsyncpa [#allocation8], 1
    %3420 = vsyncpa [#allocation11], 1
    %3421 = vsyncpa [#allocation14], 1
    %3422 = vsyncpa [#allocation17], 1
    %3423 = vsyncpa [#allocation20], 1
    %3424 = vsyncpa [#allocation23], 1
    %3425 = vsyncpa [#allocation26], 1
    %3426 = vsyncpa [#allocation29], 1
    %3427 = vsyncpa [#allocation32], 1
    %3428 = vsyncpa [#allocation9], 1
    %3429 = vsyncpa [#allocation36], 1

</llo_original>
